<compile_context>
chip_gen: v6e
topology: v6e:2x2x1
jax: 0.10.0
libtpu: 0.0.40
codegen_flags: <defaults>
</compile_context>

<pallas_src>
import numpy as np

import jax
import jax.numpy as jnp
from jax.experimental import pallas as pl
from jax.experimental.pallas import tpu as pltpu


# --------------------------- fused LeNet kernel ---------------------------- #

def _lenet_kernel(x_ref, c1m_ref, c1b_ref, c2m_ref, c2b_ref,
                  f1m_ref, f1b_ref, sel_ref, f2w_ref, f2b_ref,
                  f3w_ref, f3b_ref, out_ref):
    """Whole LeNet forward for one block of B samples (one grid step).

    The B samples live in one flattened (B*32, lanes) row slab: 5x5 valid convs
    are banded MXU matmuls accumulated over pltpu.roll'ed copies of the slab
    (row offsets), 2x2/2 max-pools are lane/sublane rolls + max, and the pool
    downsampling is folded into the roll strides of the next stage / the zero
    rows of the re-laid-out weights.  Only rows 32*b + {valid h} and even-w
    columns ever hold real data; roll wrap garbage stays in rows/columns that
    no downstream weight reads.
    """
    f32 = jnp.float32

    def dot(a, b):
        return jnp.dot(a, b, preferred_element_type=f32)

    def pull(v, k, axis):
        """out[.., i, ..] = v[.., (i + k) mod n, ..]  -- static XLU roll."""
        if k == 0:
            return v
        n = v.shape[axis]
        return pltpu.roll(v, shift=(n - k) % n, axis=axis)

    x = x_ref[...]                                         # (B*32, 96)

    # conv1 + bias + ReLU.  Slab rows r = 32*b + h; output cols = w*8 + o.
    y = dot(x, c1m_ref[0])
    for di in range(1, 5):
        y = y + dot(pull(x, di, 0), c1m_ref[di])
    y = jnp.maximum(y + c1b_ref[...], 0.0)                 # (B*32, 256)

    # maxpool 2x2/2: w-pair max via lane roll, h-pair max via sublane roll.
    # Even-w / even-h downsampling is folded into conv2's band zeros / strides.
    y = jnp.maximum(y, pull(y, 8, 1))
    y = jnp.maximum(y, pull(y, 1, 0))

    # conv2 + bias + ReLU.  Output row h2 lives at slab row 32*b + 2*h2,
    # output cols = w2*16 + o.
    z = dot(y, c2m_ref[0])
    for di in range(1, 5):
        z = z + dot(pull(y, 2 * di, 0), c2m_ref[di])
    z = jnp.maximum(z + c2b_ref[...], 0.0)                 # (B*32, 256)

    # maxpool 2x2/2 again (pooled row h3 ends up at slab row 32*b + 4*h3).
    z = jnp.maximum(z, pull(z, 16, 1))
    z = jnp.maximum(z, pull(z, 2, 0))

    # fc1: torch.flatten(NCHW) is folded into per-h3 weight slabs; accumulate
    # on the slab (valid at rows 32*b), then compact to one row per sample
    # with a tiny 0/1 selection matmul.
    f = dot(z, f1m_ref[0])
    for h in range(1, 5):
        f = f + dot(pull(z, 4 * h, 0), f1m_ref[h])         # (B*32, 120)
    f = dot(sel_ref[...], f)                               # (B, 120)
    f = jnp.maximum(f + f1b_ref[...], 0.0)

    # fc2 + ReLU, fc3 (output lanes padded to 128; logits are cols [:10]).
    # (logSoftmax exists in __init__ but is unused in forward.)
    f = jnp.maximum(dot(f, f2w_ref[...]) + f2b_ref[...], 0.0)
    out_ref[...] = dot(f, f3w_ref[...]) + f3b_ref[...]


# ----------------------- one-time weight re-layout ------------------------- #

def _conv_band(weight, k_cols, src_group, out_w, dst_group):
    """Banded (block-Toeplitz) matrices turning a valid 5x5 conv into per-
    kernel-row matmuls:
        band[di, (w+dj)*src_group + c, w*dst_group + o] = weight[o, c, di, dj]
    """
    o_n, c_n, kh, kw = weight.shape
    di_i, dj_i, src_i, dst_i, o_i, c_i = [], [], [], [], [], []
    for di in range(kh):
        for dj in range(kw):
            for w in range(out_w):
                for c in range(c_n):
                    for o in range(o_n):
                        di_i.append(di)
                        dj_i.append(dj)
                        src_i.append((w + dj) * src_group + c)
                        dst_i.append(w * dst_group + o)
                        o_i.append(o)
                        c_i.append(c)

    def idx(lst):
        return np.asarray(lst, np.int32)

    vals = weight[idx(o_i), idx(c_i), idx(di_i), idx(dj_i)]
    band = jnp.zeros((kh, k_cols, out_w * dst_group), jnp.float32)
    return band.at[idx(di_i), idx(src_i), idx(dst_i)].set(vals)


def _pad_to(a, shape):
    """Zero-pad an array at the end of each axis up to `shape`."""
    return jnp.pad(a, [(0, t - s) for s, t in zip(a.shape, shape)])


def prepare_params(params):
    """Re-lay the PyTorch-style parameters into the band / weight-slab matrices
    consumed by the fused kernel.  Done once, not per forward step.  Lane dims
    are padded to 256 (conv stages) / 128 (logits) for aligned rolls and a
    lane-dense output store; all padding is zeros, so it never changes math."""
    c1b = jnp.concatenate([params["conv1_b"], jnp.zeros((2,), jnp.float32)])
    # fc1: fold torch.flatten's NCHW (c*25 + h*5 + w) ordering into per-h slabs
    # indexed by the pooled layout column = w_raw*16 + c (only even w_raw used).
    f1w = params["fc1_w"].reshape(120, 16, 5, 5)            # (j, c, h, w)
    f1w = jnp.transpose(f1w, (2, 3, 1, 0))                   # (h, w, c, j)
    f1m = jnp.zeros((5, 10, 16, 120), jnp.float32).at[:, ::2, :, :].set(f1w)
    return {
        "c1m": _pad_to(_conv_band(params["conv1_w"], 96, 3, 28, 8),
                       (5, 96, 256)),                        # (5, 96, 256)
        "c1b": _pad_to(jnp.tile(c1b, 28).reshape(1, 224), (1, 256)),
        "c2m": _pad_to(_conv_band(params["conv2_w"], 224, 16, 10, 16),
                       (5, 256, 256)),                       # (5, 256, 256)
        "c2b": _pad_to(jnp.tile(params["conv2_b"], 10).reshape(1, 160), (1, 256)),
        "f1m": _pad_to(f1m.reshape(5, 160, 120), (5, 256, 120)),
        "f1b": params["fc1_b"].reshape(1, 120),
        "f2w": params["fc2_w"].T,
        "f2b": params["fc2_b"].reshape(1, 84),
        "f3w": _pad_to(params["fc3_w"].T, (84, 128)),
        "f3b": _pad_to(params["fc3_b"].reshape(1, 10), (1, 128)),
    }


# ------------------------------- forward ----------------------------------- #

def lenet_forward(kp, x_nchw, block_b=8):
    n, c, h, w = x_nchw.shape
    assert (c, h, w) == (3, 32, 32), "fc1 = Linear(16*5*5, 120) forces 3x32x32 input"
    assert block_b % 8 == 0, "keep the (B, 128) output block sublane-aligned"

    n_pad = ((n + block_b - 1) // block_b) * block_b
    # NCHW -> (N, H, W*C) -> flattened (N*32, 96) row slab: rows = (sample, h),
    # lane dim packs (w, c) with c minor.
    x2d = jnp.transpose(x_nchw, (0, 2, 3, 1)).reshape(n, 32, 96)
    if n_pad != n:
        x2d = jnp.pad(x2d, ((0, n_pad - n), (0, 0), (0, 0)))
    x2d = x2d.reshape(n_pad * 32, 96)

    rows = block_b * 32
    steps = n_pad // block_b

    # 0/1 compaction matrix: picks slab row 32*b (the fc1 result row) per sample.
    sel = np.zeros((block_b, rows), np.float32)
    sel[np.arange(block_b), 32 * np.arange(block_b)] = 1.0
    sel = jnp.asarray(sel)

    weight_elems = sum(int(np.prod(v.shape)) for v in kp.values()) + sel.size
    flops = 2 * steps * (5 * rows * 96 * 256      # conv1 bands
                         + 5 * rows * 256 * 256   # conv2 bands
                         + 5 * rows * 256 * 120   # fc1 slabs
                         + block_b * rows * 120   # row compaction
                         + block_b * 120 * 84 + block_b * 84 * 128)
    bytes_accessed = 4 * (n_pad * 32 * 96 + weight_elems + n_pad * 128)

    out = pl.pallas_call(
        _lenet_kernel,
        out_shape=jax.ShapeDtypeStruct((n_pad, 128), jnp.float32),
        grid=(steps,),
        in_specs=[
            pl.BlockSpec((rows, 96), lambda i: (i, 0)),         # x slab (per block)
            pl.BlockSpec((5, 96, 256), lambda i: (0, 0, 0)),    # conv1 bands
            pl.BlockSpec((1, 256), lambda i: (0, 0)),           # conv1 bias row
            pl.BlockSpec((5, 256, 256), lambda i: (0, 0, 0)),   # conv2 bands
            pl.BlockSpec((1, 256), lambda i: (0, 0)),           # conv2 bias row
            pl.BlockSpec((5, 256, 120), lambda i: (0, 0, 0)),   # fc1 slabs
            pl.BlockSpec((1, 120), lambda i: (0, 0)),           # fc1 bias
            pl.BlockSpec((block_b, rows), lambda i: (0, 0)),    # row compaction
            pl.BlockSpec((120, 84), lambda i: (0, 0)),          # fc2 weight^T
            pl.BlockSpec((1, 84), lambda i: (0, 0)),            # fc2 bias
            pl.BlockSpec((84, 128), lambda i: (0, 0)),          # fc3 weight^T (padded)
            pl.BlockSpec((1, 128), lambda i: (0, 0)),           # fc3 bias (padded)
        ],
        out_specs=pl.BlockSpec((block_b, 128), lambda i: (i, 0)),
        compiler_params=pltpu.CompilerParams(
            dimension_semantics=("parallel",),
            vmem_limit_bytes=32 * 1024 * 1024),
        cost_estimate=pl.CostEstimate(flops=flops, transcendentals=0,
                                      bytes_accessed=bytes_accessed),
    )(x2d, kp["c1m"], kp["c1b"], kp["c2m"], kp["c2b"],
      kp["f1m"], kp["f1b"], sel, kp["f2w"], kp["f2b"], kp["f3w"], kp["f3b"])
    return out[:n, :10]


# --------------------- init + pure-JAX reference check --------------------- #

def init_params(key):
    """Deterministic PyTorch-style (uniform +-1/sqrt(fan_in)) init."""
    ks = jax.random.split(key, 10)

    def u(k, shape, fan_in):
        bound = 1.0 / jnp.sqrt(jnp.float32(fan_in))
        return jax.random.uniform(k, shape, jnp.float32, -bound, bound)

    return {
        "conv1_w": u(ks[0], (6, 3, 5, 5), 3 * 25),
        "conv1_b": u(ks[1], (6,), 3 * 25),
        "conv2_w": u(ks[2], (16, 6, 5, 5), 6 * 25),
        "conv2_b": u(ks[3], (16,), 6 * 25),
        "fc1_w": u(ks[4], (120, 400), 400),
        "fc1_b": u(ks[5], (120,), 400),
        "fc2_w": u(ks[6], (84, 120), 120),
        "fc2_b": u(ks[7], (84,), 120),
        "fc3_w": u(ks[8], (10, 84), 84),
        "fc3_b": u(ks[9], (10,), 84),
    }


def lenet_reference(params, x):
    """Plain-JAX (non-Pallas) forward used only to validate the kernel.
    HIGHEST matmul/conv precision so the f32 Pallas path can be checked at 1e-3."""
    hp = jax.lax.Precision.HIGHEST
    dn = ("NCHW", "OIHW", "NCHW")
    y = jax.lax.conv_general_dilated(x, params["conv1_w"], (1, 1), "VALID",
                                     dimension_numbers=dn, precision=hp)
    y = jax.nn.relu(y + params["conv1_b"][None, :, None, None])
    n, c, h, w = y.shape
    y = y.reshape(n, c, h // 2, 2, w // 2, 2).max(axis=(3, 5))
    y = jax.lax.conv_general_dilated(y, params["conv2_w"], (1, 1), "VALID",
                                     dimension_numbers=dn, precision=hp)
    y = jax.nn.relu(y + params["conv2_b"][None, :, None, None])
    n, c, h, w = y.shape
    y = y.reshape(n, c, h // 2, 2, w // 2, 2).max(axis=(3, 5))
    y = y.reshape(n, -1)                                    # torch.flatten(x, 1)
    y = jax.nn.relu(jnp.dot(y, params["fc1_w"].T, precision=hp) + params["fc1_b"])
    y = jax.nn.relu(jnp.dot(y, params["fc2_w"].T, precision=hp) + params["fc2_b"])
    return jnp.dot(y, params["fc3_w"].T, precision=hp) + params["fc3_b"]


if __name__ == "__main__":
    key = jax.random.PRNGKey(0)
    pkey, xkey = jax.random.split(key)
    params = init_params(pkey)
    kparams = prepare_params(params)

    # fc1 = Linear(16*5*5, 120) forces 32x32 spatial input (CIFAR-sized LeNet).
    # n=10 with B=8 exercises batch padding and >= 2 grid steps.
    x = jax.random.normal(xkey, (10, 3, 32, 32), jnp.float32)

    fwd = jax.jit(lenet_forward)
    out = jax.block_until_ready(fwd(kparams, x))
    assert out.shape == (10, 10) and out.dtype == jnp.float32

    # Validate the fused kernel against the plain-JAX reference forward pass.
    ref = lenet_reference(params, x)
    max_err = float(jnp.max(jnp.abs(out - ref)))
    assert max_err < 1e-3, f"kernel/reference mismatch: max abs err {max_err}"

    print("KERNEL_OK")
</pallas_src>

<mosaic_0001>
module attributes {stable_mosaic.version = 11 : i64} {
  func.func @_lenet_kernel(%arg0: i32, %arg1: memref<256x96xf32, #tpu.memory_space<vmem>>, %arg2: memref<5x96x256xf32, #tpu.memory_space<vmem>>, %arg3: memref<1x256xf32, #tpu.memory_space<vmem>>, %arg4: memref<5x256x256xf32, #tpu.memory_space<vmem>>, %arg5: memref<1x256xf32, #tpu.memory_space<vmem>>, %arg6: memref<5x256x120xf32, #tpu.memory_space<vmem>>, %arg7: memref<1x120xf32, #tpu.memory_space<vmem>>, %arg8: memref<8x256xf32, #tpu.memory_space<vmem>>, %arg9: memref<120x84xf32, #tpu.memory_space<vmem>>, %arg10: memref<1x84xf32, #tpu.memory_space<vmem>>, %arg11: memref<84x128xf32, #tpu.memory_space<vmem>>, %arg12: memref<1x128xf32, #tpu.memory_space<vmem>>, %arg13: memref<8x128xf32, #tpu.memory_space<vmem>>) attributes {dimension_semantics = [#tpu.dimension_semantics<parallel>], iteration_bounds = array<i64: 2>, scalar_prefetch = 0 : i64, scratch_operands = 0 : i64, tpu.core_type = #tpu.core_type<tc>, window_params = [{transform_indices = @transform_0, window_bounds = array<i64: 256, 96>}, {pipeline_mode = #tpu.pipeline_mode<synchronous>, transform_indices = @transform_1, window_bounds = array<i64: 5, 96, 256>}, {pipeline_mode = #tpu.pipeline_mode<synchronous>, transform_indices = @transform_2, window_bounds = array<i64: 1, 256>}, {pipeline_mode = #tpu.pipeline_mode<synchronous>, transform_indices = @transform_3, window_bounds = array<i64: 5, 256, 256>}, {pipeline_mode = #tpu.pipeline_mode<synchronous>, transform_indices = @transform_4, window_bounds = array<i64: 1, 256>}, {pipeline_mode = #tpu.pipeline_mode<synchronous>, transform_indices = @transform_5, window_bounds = array<i64: 5, 256, 120>}, {pipeline_mode = #tpu.pipeline_mode<synchronous>, transform_indices = @transform_6, window_bounds = array<i64: 1, 120>}, {pipeline_mode = #tpu.pipeline_mode<synchronous>, transform_indices = @transform_7, window_bounds = array<i64: 8, 256>}, {pipeline_mode = #tpu.pipeline_mode<synchronous>, transform_indices = @transform_8, window_bounds = array<i64: 120, 84>}, {pipeline_mode = #tpu.pipeline_mode<synchronous>, transform_indices = @transform_9, window_bounds = array<i64: 1, 84>}, {pipeline_mode = #tpu.pipeline_mode<synchronous>, transform_indices = @transform_10, window_bounds = array<i64: 84, 128>}, {pipeline_mode = #tpu.pipeline_mode<synchronous>, transform_indices = @transform_11, window_bounds = array<i64: 1, 128>}, {transform_indices = @transform_12, window_bounds = array<i64: 8, 128>}]} {
    %c0 = arith.constant 0 : index
    %c0_0 = arith.constant 0 : index
    %0 = vector.load %arg1[%c0, %c0_0] : memref<256x96xf32, #tpu.memory_space<vmem>>, vector<256x96xf32>
    %c0_1 = arith.constant 0 : index
    %c0_2 = arith.constant 0 : index
    %c0_3 = arith.constant 0 : index
    %1 = vector.load %arg2[%c0_1, %c0_2, %c0_3] : memref<5x96x256xf32, #tpu.memory_space<vmem>>, vector<1x96x256xf32>
    %2 = vector.shape_cast %1 : vector<1x96x256xf32> to vector<96x256xf32>
    %cst = arith.constant dense<0.000000e+00> : vector<256x256xf32>
    %3 = tpu.matmul %0, %2, %cst {dimension_numbers = #tpu.dot_dimension_numbers<[1], [0], [0], [1], [0, 0, 1, 1], [], []>} : vector<256x96xf32>, vector<96x256xf32>, vector<256x256xf32> -> vector<256x256xf32>
    %c255_i32 = arith.constant 255 : i32
    %4 = tpu.dynamic_rotate %0 by %c255_i32 dim 0 : vector<256x96xf32>, i32 -> vector<256x96xf32>
    %c1 = arith.constant 1 : index
    %c0_4 = arith.constant 0 : index
    %c0_5 = arith.constant 0 : index
    %5 = vector.load %arg2[%c1, %c0_4, %c0_5] : memref<5x96x256xf32, #tpu.memory_space<vmem>>, vector<1x96x256xf32>
    %6 = vector.shape_cast %5 : vector<1x96x256xf32> to vector<96x256xf32>
    %cst_6 = arith.constant dense<0.000000e+00> : vector<256x256xf32>
    %7 = tpu.matmul %4, %6, %cst_6 {dimension_numbers = #tpu.dot_dimension_numbers<[1], [0], [0], [1], [0, 0, 1, 1], [], []>} : vector<256x96xf32>, vector<96x256xf32>, vector<256x256xf32> -> vector<256x256xf32>
    %8 = arith.addf %3, %7 : vector<256x256xf32>
    %c254_i32 = arith.constant 254 : i32
    %9 = tpu.dynamic_rotate %0 by %c254_i32 dim 0 : vector<256x96xf32>, i32 -> vector<256x96xf32>
    %c2 = arith.constant 2 : index
    %c0_7 = arith.constant 0 : index
    %c0_8 = arith.constant 0 : index
    %10 = vector.load %arg2[%c2, %c0_7, %c0_8] : memref<5x96x256xf32, #tpu.memory_space<vmem>>, vector<1x96x256xf32>
    %11 = vector.shape_cast %10 : vector<1x96x256xf32> to vector<96x256xf32>
    %cst_9 = arith.constant dense<0.000000e+00> : vector<256x256xf32>
    %12 = tpu.matmul %9, %11, %cst_9 {dimension_numbers = #tpu.dot_dimension_numbers<[1], [0], [0], [1], [0, 0, 1, 1], [], []>} : vector<256x96xf32>, vector<96x256xf32>, vector<256x256xf32> -> vector<256x256xf32>
    %13 = arith.addf %8, %12 : vector<256x256xf32>
    %c253_i32 = arith.constant 253 : i32
    %14 = tpu.dynamic_rotate %0 by %c253_i32 dim 0 : vector<256x96xf32>, i32 -> vector<256x96xf32>
    %c3 = arith.constant 3 : index
    %c0_10 = arith.constant 0 : index
    %c0_11 = arith.constant 0 : index
    %15 = vector.load %arg2[%c3, %c0_10, %c0_11] : memref<5x96x256xf32, #tpu.memory_space<vmem>>, vector<1x96x256xf32>
    %16 = vector.shape_cast %15 : vector<1x96x256xf32> to vector<96x256xf32>
    %cst_12 = arith.constant dense<0.000000e+00> : vector<256x256xf32>
    %17 = tpu.matmul %14, %16, %cst_12 {dimension_numbers = #tpu.dot_dimension_numbers<[1], [0], [0], [1], [0, 0, 1, 1], [], []>} : vector<256x96xf32>, vector<96x256xf32>, vector<256x256xf32> -> vector<256x256xf32>
    %18 = arith.addf %13, %17 : vector<256x256xf32>
    %c252_i32 = arith.constant 252 : i32
    %19 = tpu.dynamic_rotate %0 by %c252_i32 dim 0 : vector<256x96xf32>, i32 -> vector<256x96xf32>
    %c4 = arith.constant 4 : index
    %c0_13 = arith.constant 0 : index
    %c0_14 = arith.constant 0 : index
    %20 = vector.load %arg2[%c4, %c0_13, %c0_14] : memref<5x96x256xf32, #tpu.memory_space<vmem>>, vector<1x96x256xf32>
    %21 = vector.shape_cast %20 : vector<1x96x256xf32> to vector<96x256xf32>
    %cst_15 = arith.constant dense<0.000000e+00> : vector<256x256xf32>
    %22 = tpu.matmul %19, %21, %cst_15 {dimension_numbers = #tpu.dot_dimension_numbers<[1], [0], [0], [1], [0, 0, 1, 1], [], []>} : vector<256x96xf32>, vector<96x256xf32>, vector<256x256xf32> -> vector<256x256xf32>
    %23 = arith.addf %18, %22 : vector<256x256xf32>
    %c0_16 = arith.constant 0 : index
    %c0_17 = arith.constant 0 : index
    %24 = vector.load %arg3[%c0_16, %c0_17] : memref<1x256xf32, #tpu.memory_space<vmem>>, vector<1x256xf32>
    %25 = vector.broadcast %24 : vector<1x256xf32> to vector<256x256xf32>
    %26 = arith.addf %23, %25 : vector<256x256xf32>
    %cst_18 = arith.constant 0.000000e+00 : f32
    %27 = vector.broadcast %cst_18 : f32 to vector<256x256xf32>
    %28 = arith.maximumf %26, %27 : vector<256x256xf32>
    %c248_i32 = arith.constant 248 : i32
    %29 = tpu.dynamic_rotate %28 by %c248_i32 dim 1 : vector<256x256xf32>, i32 -> vector<256x256xf32>
    %30 = arith.maximumf %28, %29 : vector<256x256xf32>
    %c255_i32_19 = arith.constant 255 : i32
    %31 = tpu.dynamic_rotate %30 by %c255_i32_19 dim 0 : vector<256x256xf32>, i32 -> vector<256x256xf32>
    %32 = arith.maximumf %30, %31 : vector<256x256xf32>
    %c0_20 = arith.constant 0 : index
    %c0_21 = arith.constant 0 : index
    %c0_22 = arith.constant 0 : index
    %33 = vector.load %arg4[%c0_20, %c0_21, %c0_22] : memref<5x256x256xf32, #tpu.memory_space<vmem>>, vector<1x256x256xf32>
    %34 = vector.shape_cast %33 : vector<1x256x256xf32> to vector<256x256xf32>
    %cst_23 = arith.constant dense<0.000000e+00> : vector<256x256xf32>
    %35 = tpu.matmul %32, %34, %cst_23 {dimension_numbers = #tpu.dot_dimension_numbers<[1], [0], [0], [1], [0, 0, 1, 1], [], []>} : vector<256x256xf32>, vector<256x256xf32>, vector<256x256xf32> -> vector<256x256xf32>
    %c254_i32_24 = arith.constant 254 : i32
    %36 = tpu.dynamic_rotate %32 by %c254_i32_24 dim 0 : vector<256x256xf32>, i32 -> vector<256x256xf32>
    %c1_25 = arith.constant 1 : index
    %c0_26 = arith.constant 0 : index
    %c0_27 = arith.constant 0 : index
    %37 = vector.load %arg4[%c1_25, %c0_26, %c0_27] : memref<5x256x256xf32, #tpu.memory_space<vmem>>, vector<1x256x256xf32>
    %38 = vector.shape_cast %37 : vector<1x256x256xf32> to vector<256x256xf32>
    %cst_28 = arith.constant dense<0.000000e+00> : vector<256x256xf32>
    %39 = tpu.matmul %36, %38, %cst_28 {dimension_numbers = #tpu.dot_dimension_numbers<[1], [0], [0], [1], [0, 0, 1, 1], [], []>} : vector<256x256xf32>, vector<256x256xf32>, vector<256x256xf32> -> vector<256x256xf32>
    %40 = arith.addf %35, %39 : vector<256x256xf32>
    %c252_i32_29 = arith.constant 252 : i32
    %41 = tpu.dynamic_rotate %32 by %c252_i32_29 dim 0 : vector<256x256xf32>, i32 -> vector<256x256xf32>
    %c2_30 = arith.constant 2 : index
    %c0_31 = arith.constant 0 : index
    %c0_32 = arith.constant 0 : index
    %42 = vector.load %arg4[%c2_30, %c0_31, %c0_32] : memref<5x256x256xf32, #tpu.memory_space<vmem>>, vector<1x256x256xf32>
    %43 = vector.shape_cast %42 : vector<1x256x256xf32> to vector<256x256xf32>
    %cst_33 = arith.constant dense<0.000000e+00> : vector<256x256xf32>
    %44 = tpu.matmul %41, %43, %cst_33 {dimension_numbers = #tpu.dot_dimension_numbers<[1], [0], [0], [1], [0, 0, 1, 1], [], []>} : vector<256x256xf32>, vector<256x256xf32>, vector<256x256xf32> -> vector<256x256xf32>
    %45 = arith.addf %40, %44 : vector<256x256xf32>
    %c250_i32 = arith.constant 250 : i32
    %46 = tpu.dynamic_rotate %32 by %c250_i32 dim 0 : vector<256x256xf32>, i32 -> vector<256x256xf32>
    %c3_34 = arith.constant 3 : index
    %c0_35 = arith.constant 0 : index
    %c0_36 = arith.constant 0 : index
    %47 = vector.load %arg4[%c3_34, %c0_35, %c0_36] : memref<5x256x256xf32, #tpu.memory_space<vmem>>, vector<1x256x256xf32>
    %48 = vector.shape_cast %47 : vector<1x256x256xf32> to vector<256x256xf32>
    %cst_37 = arith.constant dense<0.000000e+00> : vector<256x256xf32>
    %49 = tpu.matmul %46, %48, %cst_37 {dimension_numbers = #tpu.dot_dimension_numbers<[1], [0], [0], [1], [0, 0, 1, 1], [], []>} : vector<256x256xf32>, vector<256x256xf32>, vector<256x256xf32> -> vector<256x256xf32>
    %50 = arith.addf %45, %49 : vector<256x256xf32>
    %c248_i32_38 = arith.constant 248 : i32
    %51 = tpu.dynamic_rotate %32 by %c248_i32_38 dim 0 : vector<256x256xf32>, i32 -> vector<256x256xf32>
    %c4_39 = arith.constant 4 : index
    %c0_40 = arith.constant 0 : index
    %c0_41 = arith.constant 0 : index
    %52 = vector.load %arg4[%c4_39, %c0_40, %c0_41] : memref<5x256x256xf32, #tpu.memory_space<vmem>>, vector<1x256x256xf32>
    %53 = vector.shape_cast %52 : vector<1x256x256xf32> to vector<256x256xf32>
    %cst_42 = arith.constant dense<0.000000e+00> : vector<256x256xf32>
    %54 = tpu.matmul %51, %53, %cst_42 {dimension_numbers = #tpu.dot_dimension_numbers<[1], [0], [0], [1], [0, 0, 1, 1], [], []>} : vector<256x256xf32>, vector<256x256xf32>, vector<256x256xf32> -> vector<256x256xf32>
    %55 = arith.addf %50, %54 : vector<256x256xf32>
    %c0_43 = arith.constant 0 : index
    %c0_44 = arith.constant 0 : index
    %56 = vector.load %arg5[%c0_43, %c0_44] : memref<1x256xf32, #tpu.memory_space<vmem>>, vector<1x256xf32>
    %57 = vector.broadcast %56 : vector<1x256xf32> to vector<256x256xf32>
    %58 = arith.addf %55, %57 : vector<256x256xf32>
    %cst_45 = arith.constant 0.000000e+00 : f32
    %59 = vector.broadcast %cst_45 : f32 to vector<256x256xf32>
    %60 = arith.maximumf %58, %59 : vector<256x256xf32>
    %c240_i32 = arith.constant 240 : i32
    %61 = tpu.dynamic_rotate %60 by %c240_i32 dim 1 : vector<256x256xf32>, i32 -> vector<256x256xf32>
    %62 = arith.maximumf %60, %61 : vector<256x256xf32>
    %c254_i32_46 = arith.constant 254 : i32
    %63 = tpu.dynamic_rotate %62 by %c254_i32_46 dim 0 : vector<256x256xf32>, i32 -> vector<256x256xf32>
    %64 = arith.maximumf %62, %63 : vector<256x256xf32>
    %c0_47 = arith.constant 0 : index
    %c0_48 = arith.constant 0 : index
    %c0_49 = arith.constant 0 : index
    %65 = vector.load %arg6[%c0_47, %c0_48, %c0_49] : memref<5x256x120xf32, #tpu.memory_space<vmem>>, vector<1x256x120xf32>
    %66 = vector.shape_cast %65 : vector<1x256x120xf32> to vector<256x120xf32>
    %cst_50 = arith.constant dense<0.000000e+00> : vector<256x120xf32>
    %67 = tpu.matmul %64, %66, %cst_50 {dimension_numbers = #tpu.dot_dimension_numbers<[1], [0], [0], [1], [0, 0, 1, 1], [], []>} : vector<256x256xf32>, vector<256x120xf32>, vector<256x120xf32> -> vector<256x120xf32>
    %c252_i32_51 = arith.constant 252 : i32
    %68 = tpu.dynamic_rotate %64 by %c252_i32_51 dim 0 : vector<256x256xf32>, i32 -> vector<256x256xf32>
    %c1_52 = arith.constant 1 : index
    %c0_53 = arith.constant 0 : index
    %c0_54 = arith.constant 0 : index
    %69 = vector.load %arg6[%c1_52, %c0_53, %c0_54] : memref<5x256x120xf32, #tpu.memory_space<vmem>>, vector<1x256x120xf32>
    %70 = vector.shape_cast %69 : vector<1x256x120xf32> to vector<256x120xf32>
    %cst_55 = arith.constant dense<0.000000e+00> : vector<256x120xf32>
    %71 = tpu.matmul %68, %70, %cst_55 {dimension_numbers = #tpu.dot_dimension_numbers<[1], [0], [0], [1], [0, 0, 1, 1], [], []>} : vector<256x256xf32>, vector<256x120xf32>, vector<256x120xf32> -> vector<256x120xf32>
    %72 = arith.addf %67, %71 : vector<256x120xf32>
    %c248_i32_56 = arith.constant 248 : i32
    %73 = tpu.dynamic_rotate %64 by %c248_i32_56 dim 0 : vector<256x256xf32>, i32 -> vector<256x256xf32>
    %c2_57 = arith.constant 2 : index
    %c0_58 = arith.constant 0 : index
    %c0_59 = arith.constant 0 : index
    %74 = vector.load %arg6[%c2_57, %c0_58, %c0_59] : memref<5x256x120xf32, #tpu.memory_space<vmem>>, vector<1x256x120xf32>
    %75 = vector.shape_cast %74 : vector<1x256x120xf32> to vector<256x120xf32>
    %cst_60 = arith.constant dense<0.000000e+00> : vector<256x120xf32>
    %76 = tpu.matmul %73, %75, %cst_60 {dimension_numbers = #tpu.dot_dimension_numbers<[1], [0], [0], [1], [0, 0, 1, 1], [], []>} : vector<256x256xf32>, vector<256x120xf32>, vector<256x120xf32> -> vector<256x120xf32>
    %77 = arith.addf %72, %76 : vector<256x120xf32>
    %c244_i32 = arith.constant 244 : i32
    %78 = tpu.dynamic_rotate %64 by %c244_i32 dim 0 : vector<256x256xf32>, i32 -> vector<256x256xf32>
    %c3_61 = arith.constant 3 : index
    %c0_62 = arith.constant 0 : index
    %c0_63 = arith.constant 0 : index
    %79 = vector.load %arg6[%c3_61, %c0_62, %c0_63] : memref<5x256x120xf32, #tpu.memory_space<vmem>>, vector<1x256x120xf32>
    %80 = vector.shape_cast %79 : vector<1x256x120xf32> to vector<256x120xf32>
    %cst_64 = arith.constant dense<0.000000e+00> : vector<256x120xf32>
    %81 = tpu.matmul %78, %80, %cst_64 {dimension_numbers = #tpu.dot_dimension_numbers<[1], [0], [0], [1], [0, 0, 1, 1], [], []>} : vector<256x256xf32>, vector<256x120xf32>, vector<256x120xf32> -> vector<256x120xf32>
    %82 = arith.addf %77, %81 : vector<256x120xf32>
    %c240_i32_65 = arith.constant 240 : i32
    %83 = tpu.dynamic_rotate %64 by %c240_i32_65 dim 0 : vector<256x256xf32>, i32 -> vector<256x256xf32>
    %c4_66 = arith.constant 4 : index
    %c0_67 = arith.constant 0 : index
    %c0_68 = arith.constant 0 : index
    %84 = vector.load %arg6[%c4_66, %c0_67, %c0_68] : memref<5x256x120xf32, #tpu.memory_space<vmem>>, vector<1x256x120xf32>
    %85 = vector.shape_cast %84 : vector<1x256x120xf32> to vector<256x120xf32>
    %cst_69 = arith.constant dense<0.000000e+00> : vector<256x120xf32>
    %86 = tpu.matmul %83, %85, %cst_69 {dimension_numbers = #tpu.dot_dimension_numbers<[1], [0], [0], [1], [0, 0, 1, 1], [], []>} : vector<256x256xf32>, vector<256x120xf32>, vector<256x120xf32> -> vector<256x120xf32>
    %87 = arith.addf %82, %86 : vector<256x120xf32>
    %c0_70 = arith.constant 0 : index
    %c0_71 = arith.constant 0 : index
    %88 = vector.load %arg8[%c0_70, %c0_71] : memref<8x256xf32, #tpu.memory_space<vmem>>, vector<8x256xf32>
    %cst_72 = arith.constant dense<0.000000e+00> : vector<8x120xf32>
    %89 = tpu.matmul %88, %87, %cst_72 {dimension_numbers = #tpu.dot_dimension_numbers<[1], [0], [0], [1], [0, 0, 1, 1], [], []>} : vector<8x256xf32>, vector<256x120xf32>, vector<8x120xf32> -> vector<8x120xf32>
    %c0_73 = arith.constant 0 : index
    %c0_74 = arith.constant 0 : index
    %90 = vector.load %arg7[%c0_73, %c0_74] : memref<1x120xf32, #tpu.memory_space<vmem>>, vector<1x120xf32>
    %91 = vector.broadcast %90 : vector<1x120xf32> to vector<8x120xf32>
    %92 = arith.addf %89, %91 : vector<8x120xf32>
    %cst_75 = arith.constant 0.000000e+00 : f32
    %93 = vector.broadcast %cst_75 : f32 to vector<8x120xf32>
    %94 = arith.maximumf %92, %93 : vector<8x120xf32>
    %c0_76 = arith.constant 0 : index
    %c0_77 = arith.constant 0 : index
    %95 = vector.load %arg9[%c0_76, %c0_77] : memref<120x84xf32, #tpu.memory_space<vmem>>, vector<120x84xf32>
    %cst_78 = arith.constant dense<0.000000e+00> : vector<8x84xf32>
    %96 = tpu.matmul %94, %95, %cst_78 {dimension_numbers = #tpu.dot_dimension_numbers<[1], [0], [0], [1], [0, 0, 1, 1], [], []>} : vector<8x120xf32>, vector<120x84xf32>, vector<8x84xf32> -> vector<8x84xf32>
    %c0_79 = arith.constant 0 : index
    %c0_80 = arith.constant 0 : index
    %97 = vector.load %arg10[%c0_79, %c0_80] : memref<1x84xf32, #tpu.memory_space<vmem>>, vector<1x84xf32>
    %98 = vector.broadcast %97 : vector<1x84xf32> to vector<8x84xf32>
    %99 = arith.addf %96, %98 : vector<8x84xf32>
    %cst_81 = arith.constant 0.000000e+00 : f32
    %100 = vector.broadcast %cst_81 : f32 to vector<8x84xf32>
    %101 = arith.maximumf %99, %100 : vector<8x84xf32>
    %c0_82 = arith.constant 0 : index
    %c0_83 = arith.constant 0 : index
    %102 = vector.load %arg11[%c0_82, %c0_83] : memref<84x128xf32, #tpu.memory_space<vmem>>, vector<84x128xf32>
    %cst_84 = arith.constant dense<0.000000e+00> : vector<8x128xf32>
    %103 = tpu.matmul %101, %102, %cst_84 {dimension_numbers = #tpu.dot_dimension_numbers<[1], [0], [0], [1], [0, 0, 1, 1], [], []>} : vector<8x84xf32>, vector<84x128xf32>, vector<8x128xf32> -> vector<8x128xf32>
    %c0_85 = arith.constant 0 : index
    %c0_86 = arith.constant 0 : index
    %104 = vector.load %arg12[%c0_85, %c0_86] : memref<1x128xf32, #tpu.memory_space<vmem>>, vector<1x128xf32>
    %105 = vector.broadcast %104 : vector<1x128xf32> to vector<8x128xf32>
    %106 = arith.addf %103, %105 : vector<8x128xf32>
    %c0_87 = arith.constant 0 : index
    %c0_88 = arith.constant 0 : index
    %107 = vector.load %arg13[%c0_87, %c0_88] : memref<8x128xf32, #tpu.memory_space<vmem>>, vector<8x128xf32>
    tpu.vector_store %arg13[%c0_87, %c0_88], %106 {strides = array<i32>} : memref<8x128xf32, #tpu.memory_space<vmem>>, vector<8x128xf32>,
    return
  }
  func.func @transform_0(%arg0: i32) -> (i32, i32) {
    %c0_i32 = arith.constant 0 : i32
    %c0_i32_0 = arith.constant 0 : i32
    return %arg0, %c0_i32 : i32, i32
  }
  func.func @transform_1(%arg0: i32) -> (i32, i32, i32) {
    %c0_i32 = arith.constant 0 : i32
    %c0_i32_0 = arith.constant 0 : i32
    %c0_i32_1 = arith.constant 0 : i32
    %c0_i32_2 = arith.constant 0 : i32
    return %c0_i32, %c0_i32_0, %c0_i32_1 : i32, i32, i32
  }
  func.func @transform_2(%arg0: i32) -> (i32, i32) {
    %c0_i32 = arith.constant 0 : i32
    %c0_i32_0 = arith.constant 0 : i32
    %c0_i32_1 = arith.constant 0 : i32
    return %c0_i32, %c0_i32_0 : i32, i32
  }
  func.func @transform_3(%arg0: i32) -> (i32, i32, i32) {
    %c0_i32 = arith.constant 0 : i32
    %c0_i32_0 = arith.constant 0 : i32
    %c0_i32_1 = arith.constant 0 : i32
    %c0_i32_2 = arith.constant 0 : i32
    return %c0_i32, %c0_i32_0, %c0_i32_1 : i32, i32, i32
  }
  func.func @transform_4(%arg0: i32) -> (i32, i32) {
    %c0_i32 = arith.constant 0 : i32
    %c0_i32_0 = arith.constant 0 : i32
    %c0_i32_1 = arith.constant 0 : i32
    return %c0_i32, %c0_i32_0 : i32, i32
  }
  func.func @transform_5(%arg0: i32) -> (i32, i32, i32) {
    %c0_i32 = arith.constant 0 : i32
    %c0_i32_0 = arith.constant 0 : i32
    %c0_i32_1 = arith.constant 0 : i32
    %c0_i32_2 = arith.constant 0 : i32
    return %c0_i32, %c0_i32_0, %c0_i32_1 : i32, i32, i32
  }
  func.func @transform_6(%arg0: i32) -> (i32, i32) {
    %c0_i32 = arith.constant 0 : i32
    %c0_i32_0 = arith.constant 0 : i32
    %c0_i32_1 = arith.constant 0 : i32
    return %c0_i32, %c0_i32_0 : i32, i32
  }
  func.func @transform_7(%arg0: i32) -> (i32, i32) {
    %c0_i32 = arith.constant 0 : i32
    %c0_i32_0 = arith.constant 0 : i32
    %c0_i32_1 = arith.constant 0 : i32
    return %c0_i32, %c0_i32_0 : i32, i32
  }
  func.func @transform_8(%arg0: i32) -> (i32, i32) {
    %c0_i32 = arith.constant 0 : i32
    %c0_i32_0 = arith.constant 0 : i32
    %c0_i32_1 = arith.constant 0 : i32
    return %c0_i32, %c0_i32_0 : i32, i32
  }
  func.func @transform_9(%arg0: i32) -> (i32, i32) {
    %c0_i32 = arith.constant 0 : i32
    %c0_i32_0 = arith.constant 0 : i32
    %c0_i32_1 = arith.constant 0 : i32
    return %c0_i32, %c0_i32_0 : i32, i32
  }
  func.func @transform_10(%arg0: i32) -> (i32, i32) {
    %c0_i32 = arith.constant 0 : i32
    %c0_i32_0 = arith.constant 0 : i32
    %c0_i32_1 = arith.constant 0 : i32
    return %c0_i32, %c0_i32_0 : i32, i32
  }
  func.func @transform_11(%arg0: i32) -> (i32, i32) {
    %c0_i32 = arith.constant 0 : i32
    %c0_i32_0 = arith.constant 0 : i32
    %c0_i32_1 = arith.constant 0 : i32
    return %c0_i32, %c0_i32_0 : i32, i32
  }
  func.func @transform_12(%arg0: i32) -> (i32, i32) {
    %c0_i32 = arith.constant 0 : i32
    %c0_i32_0 = arith.constant 0 : i32
    return %arg0, %c0_i32 : i32, i32
  }
}

</mosaic_0001>

<llo_original>
// kernel: lenet_forward.1
$region0: #{lenet_forward.1}
  #allocation0 [shape = 'u32[]', space=smem, size = 0x4, offset = 0x4, fixed_abs, tag = 'smem constant byte address 0x4 - core index']
  #allocation1 [shape = 'u32[144,128]{1,0:T(1,128)}', space=vmem, size = 0x12000, scoped, tag = 'internal scratch']
  %s0 = inlined_call_operand.vmem [shape: f32[512,96], index: 0, kind: input, shape index: {}]
  %s1 = inlined_call_operand.vmem [shape: f32[5,96,256], index: 1, kind: input, shape index: {}]
  %s2 = inlined_call_operand.vmem [shape: f32[1,256], index: 2, kind: input, shape index: {}]
  %s3 = inlined_call_operand.vmem [shape: f32[5,256,256], index: 3, kind: input, shape index: {}]
  %s4 = inlined_call_operand.vmem [shape: f32[1,256], index: 4, kind: input, shape index: {}]
  %s5 = inlined_call_operand.vmem [shape: f32[5,256,120], index: 5, kind: input, shape index: {}]
  %s6 = inlined_call_operand.vmem [shape: f32[1,120], index: 6, kind: input, shape index: {}]
  %s7 = inlined_call_operand.vmem [shape: f32[8,256], index: 7, kind: input, shape index: {}]
  %s8 = inlined_call_operand.vmem [shape: f32[120,84], index: 8, kind: input, shape index: {}]
  %s9 = inlined_call_operand.vmem [shape: f32[1,84], index: 9, kind: input, shape index: {}]
  %s10 = inlined_call_operand.vmem [shape: f32[84,128], index: 10, kind: input, shape index: {}]
  %s11 = inlined_call_operand.vmem [shape: f32[1,128], index: 11, kind: input, shape index: {}]
  %s12 = inlined_call_operand.hbm [shape: f32[16,128], index: 12, kind: output, shape index: {}]
  %s13 = sld [smem:[#allocation0]]
  $region81: #{lenet_forward.1} parent=0
    _
  %s15 = ssub.s32 1, %s13
  %s16 = scalar_select 0, %s15, %s13
  $region1: #{lenet_forward.1} parent=0
    #allocation2 [shape = 'u8[8192]{0}', space=vmem, size = 0x2000, scoped, tag = 'output window, operand 0']
    #allocation3 [shape = 's32[2]{0}', space=sflag, size = 0x8, scoped, tag = 'scoped memory for lenet_forward.1']
    %17 = vsyncpa [#allocation3], 0
    %s18 = scalar_lea.sflag [#allocation3], 1
    %19 = vsyncpa %s18, 0
    loop: start=0, step=1, limit=4
    $region2: #{lenet_forward.1} parent=1 // loop_pre_header
      _
    $region3: #{lenet_forward.1} parent=1 // loop_header
      %s21 = sphi 0, %s25
      %p22 = scmp.ge.s32.totalorder %s21, 4
      %s31 = sphi 0, %s33
      %s34 = sphi 0, %s31
      %s35 = sphi 0, %s34
      %s51 = sphi 0, %s35
      %s55 = sphi 0, %s55
      %s57 = sphi 0, %s55
      %s58 = sphi 0, %s57
      %s72 = sphi 0, %s58
      %s76 = sphi 0, %s76
      %s78 = sphi 0, %s76
      %s79 = sphi 0, %s78
      %s93 = sphi 0, %s79
      %s97 = sphi 0, %s97
      %s99 = sphi 0, %s97
      %s100 = sphi 0, %s99
      %s114 = sphi 0, %s100
      %s118 = sphi 0, %s118
      %s120 = sphi 0, %s118
      %s121 = sphi 0, %s120
      %s135 = sphi 0, %s121
      %s139 = sphi 0, %s139
      %s141 = sphi 0, %s139
      %s142 = sphi 0, %s141
      %s156 = sphi 0, %s142
      %s160 = sphi 0, %s160
      %s162 = sphi 0, %s160
      %s163 = sphi 0, %s162
      %s177 = sphi 0, %s163
      %s181 = sphi 0, %s181
      %s183 = sphi 0, %s181
      %s184 = sphi 0, %s183
      %s198 = sphi 0, %s184
      %s202 = sphi 0, %s202
      %s204 = sphi 0, %s202
      %s205 = sphi 0, %s204
      %s219 = sphi 0, %s205
      %s223 = sphi 0, %s223
      %s225 = sphi 0, %s223
      %s226 = sphi 0, %s225
      %s240 = sphi 0, %s226
      %s244 = sphi 0, %s244
      %s246 = sphi 0, %s244
      %s247 = sphi 0, %s246
      %s261 = sphi 0, %s247
      %s265 = sphi 0, %s265
      %s267 = sphi 0, %s265
      %s268 = sphi 0, %s267
      %s282 = sphi 0, %s268
      %s288 = sphi 0, %s290
      %s291 = sphi 0, %s288
      %s292 = sphi 0, %s291
      %s308 = sphi 0, %s292
    $region4: #{lenet_forward.1} parent=1 // loop_header_branch
      %24 = sbr.rel (%p22) target = $region8
    $region5: #{lenet_forward.1} parent=1 // loop_body
      %s26 = ssub.s32 %s21, 1
      %s27 = ssub.s32 %s21, 2
      %s28 = sadd.s32 %s21, 1
      %s29 = ssub.s32 %s21, %s28
      %p30 = scmp.eq.s32.totalorder %s29, 0
      %s32 = sadd.s32 %s31, 1
      %s33 = scalar_select %p30, %s31, %s32
      %p36 = pneg %p30
      %p37 = scmp.eq.s32.totalorder %s21, 1
      %p38 = por %p36, %p37
      %p39 = scmp.ne.s32.totalorder %s31, %s34
      %p40 = scmp.eq.s32.totalorder %s21, 0
      %p41 = por %p39, %p40
      %p42 = scmp.ne.s32.totalorder %s31, %s34
      %p43 = scmp.eq.s32.totalorder %s26, 1
      %p44 = por %p42, %p43
      %p45 = scmp.ne.s32.totalorder %s34, %s35
      %p46 = scmp.eq.s32.totalorder %s26, 0
      %p47 = por %p45, %p46
      %p48 = scmp.ne.s32.totalorder %s34, %s35
      %p49 = scmp.eq.s32.totalorder %s27, 1
      %p50 = por %p48, %p49
      %p52 = scmp.ne.s32.totalorder %s35, %s51
      %p53 = scmp.eq.s32.totalorder %s27, 0
      %p54 = por %p52, %p53
      %s56 = sadd.s32 %s55, 1
      %p59 = scmp.eq.s32.totalorder %s21, 1
      %p60 = scmp.ne.s32.totalorder %s55, %s57
      %p61 = scmp.eq.s32.totalorder %s21, 0
      %p62 = por %p60, %p61
      %p63 = scmp.ne.s32.totalorder %s55, %s57
      %p64 = scmp.eq.s32.totalorder %s26, 1
      %p65 = por %p63, %p64
      %p66 = scmp.ne.s32.totalorder %s57, %s58
      %p67 = scmp.eq.s32.totalorder %s26, 0
      %p68 = por %p66, %p67
      %p69 = scmp.ne.s32.totalorder %s57, %s58
      %p70 = scmp.eq.s32.totalorder %s27, 1
      %p71 = por %p69, %p70
      %p73 = scmp.ne.s32.totalorder %s58, %s72
      %p74 = scmp.eq.s32.totalorder %s27, 0
      %p75 = por %p73, %p74
      %s77 = sadd.s32 %s76, 1
      %p80 = scmp.eq.s32.totalorder %s21, 1
      %p81 = scmp.ne.s32.totalorder %s76, %s78
      %p82 = scmp.eq.s32.totalorder %s21, 0
      %p83 = por %p81, %p82
      %p84 = scmp.ne.s32.totalorder %s76, %s78
      %p85 = scmp.eq.s32.totalorder %s26, 1
      %p86 = por %p84, %p85
      %p87 = scmp.ne.s32.totalorder %s78, %s79
      %p88 = scmp.eq.s32.totalorder %s26, 0
      %p89 = por %p87, %p88
      %p90 = scmp.ne.s32.totalorder %s78, %s79
      %p91 = scmp.eq.s32.totalorder %s27, 1
      %p92 = por %p90, %p91
      %p94 = scmp.ne.s32.totalorder %s79, %s93
      %p95 = scmp.eq.s32.totalorder %s27, 0
      %p96 = por %p94, %p95
      %s98 = sadd.s32 %s97, 1
      %p101 = scmp.eq.s32.totalorder %s21, 1
      %p102 = scmp.ne.s32.totalorder %s97, %s99
      %p103 = scmp.eq.s32.totalorder %s21, 0
      %p104 = por %p102, %p103
      %p105 = scmp.ne.s32.totalorder %s97, %s99
      %p106 = scmp.eq.s32.totalorder %s26, 1
      %p107 = por %p105, %p106
      %p108 = scmp.ne.s32.totalorder %s99, %s100
      %p109 = scmp.eq.s32.totalorder %s26, 0
      %p110 = por %p108, %p109
      %p111 = scmp.ne.s32.totalorder %s99, %s100
      %p112 = scmp.eq.s32.totalorder %s27, 1
      %p113 = por %p111, %p112
      %p115 = scmp.ne.s32.totalorder %s100, %s114
      %p116 = scmp.eq.s32.totalorder %s27, 0
      %p117 = por %p115, %p116
      %s119 = sadd.s32 %s118, 1
      %p122 = scmp.eq.s32.totalorder %s21, 1
      %p123 = scmp.ne.s32.totalorder %s118, %s120
      %p124 = scmp.eq.s32.totalorder %s21, 0
      %p125 = por %p123, %p124
      %p126 = scmp.ne.s32.totalorder %s118, %s120
      %p127 = scmp.eq.s32.totalorder %s26, 1
      %p128 = por %p126, %p127
      %p129 = scmp.ne.s32.totalorder %s120, %s121
      %p130 = scmp.eq.s32.totalorder %s26, 0
      %p131 = por %p129, %p130
      %p132 = scmp.ne.s32.totalorder %s120, %s121
      %p133 = scmp.eq.s32.totalorder %s27, 1
      %p134 = por %p132, %p133
      %p136 = scmp.ne.s32.totalorder %s121, %s135
      %p137 = scmp.eq.s32.totalorder %s27, 0
      %p138 = por %p136, %p137
      %s140 = sadd.s32 %s139, 1
      %p143 = scmp.eq.s32.totalorder %s21, 1
      %p144 = scmp.ne.s32.totalorder %s139, %s141
      %p145 = scmp.eq.s32.totalorder %s21, 0
      %p146 = por %p144, %p145
      %p147 = scmp.ne.s32.totalorder %s139, %s141
      %p148 = scmp.eq.s32.totalorder %s26, 1
      %p149 = por %p147, %p148
      %p150 = scmp.ne.s32.totalorder %s141, %s142
      %p151 = scmp.eq.s32.totalorder %s26, 0
      %p152 = por %p150, %p151
      %p153 = scmp.ne.s32.totalorder %s141, %s142
      %p154 = scmp.eq.s32.totalorder %s27, 1
      %p155 = por %p153, %p154
      %p157 = scmp.ne.s32.totalorder %s142, %s156
      %p158 = scmp.eq.s32.totalorder %s27, 0
      %p159 = por %p157, %p158
      %s161 = sadd.s32 %s160, 1
      %p164 = scmp.eq.s32.totalorder %s21, 1
      %p165 = scmp.ne.s32.totalorder %s160, %s162
      %p166 = scmp.eq.s32.totalorder %s21, 0
      %p167 = por %p165, %p166
      %p168 = scmp.ne.s32.totalorder %s160, %s162
      %p169 = scmp.eq.s32.totalorder %s26, 1
      %p170 = por %p168, %p169
      %p171 = scmp.ne.s32.totalorder %s162, %s163
      %p172 = scmp.eq.s32.totalorder %s26, 0
      %p173 = por %p171, %p172
      %p174 = scmp.ne.s32.totalorder %s162, %s163
      %p175 = scmp.eq.s32.totalorder %s27, 1
      %p176 = por %p174, %p175
      %p178 = scmp.ne.s32.totalorder %s163, %s177
      %p179 = scmp.eq.s32.totalorder %s27, 0
      %p180 = por %p178, %p179
      %s182 = sadd.s32 %s181, 1
      %p185 = scmp.eq.s32.totalorder %s21, 1
      %p186 = scmp.ne.s32.totalorder %s181, %s183
      %p187 = scmp.eq.s32.totalorder %s21, 0
      %p188 = por %p186, %p187
      %p189 = scmp.ne.s32.totalorder %s181, %s183
      %p190 = scmp.eq.s32.totalorder %s26, 1
      %p191 = por %p189, %p190
      %p192 = scmp.ne.s32.totalorder %s183, %s184
      %p193 = scmp.eq.s32.totalorder %s26, 0
      %p194 = por %p192, %p193
      %p195 = scmp.ne.s32.totalorder %s183, %s184
      %p196 = scmp.eq.s32.totalorder %s27, 1
      %p197 = por %p195, %p196
      %p199 = scmp.ne.s32.totalorder %s184, %s198
      %p200 = scmp.eq.s32.totalorder %s27, 0
      %p201 = por %p199, %p200
      %s203 = sadd.s32 %s202, 1
      %p206 = scmp.eq.s32.totalorder %s21, 1
      %p207 = scmp.ne.s32.totalorder %s202, %s204
      %p208 = scmp.eq.s32.totalorder %s21, 0
      %p209 = por %p207, %p208
      %p210 = scmp.ne.s32.totalorder %s202, %s204
      %p211 = scmp.eq.s32.totalorder %s26, 1
      %p212 = por %p210, %p211
      %p213 = scmp.ne.s32.totalorder %s204, %s205
      %p214 = scmp.eq.s32.totalorder %s26, 0
      %p215 = por %p213, %p214
      %p216 = scmp.ne.s32.totalorder %s204, %s205
      %p217 = scmp.eq.s32.totalorder %s27, 1
      %p218 = por %p216, %p217
      %p220 = scmp.ne.s32.totalorder %s205, %s219
      %p221 = scmp.eq.s32.totalorder %s27, 0
      %p222 = por %p220, %p221
      %s224 = sadd.s32 %s223, 1
      %p227 = scmp.eq.s32.totalorder %s21, 1
      %p228 = scmp.ne.s32.totalorder %s223, %s225
      %p229 = scmp.eq.s32.totalorder %s21, 0
      %p230 = por %p228, %p229
      %p231 = scmp.ne.s32.totalorder %s223, %s225
      %p232 = scmp.eq.s32.totalorder %s26, 1
      %p233 = por %p231, %p232
      %p234 = scmp.ne.s32.totalorder %s225, %s226
      %p235 = scmp.eq.s32.totalorder %s26, 0
      %p236 = por %p234, %p235
      %p237 = scmp.ne.s32.totalorder %s225, %s226
      %p238 = scmp.eq.s32.totalorder %s27, 1
      %p239 = por %p237, %p238
      %p241 = scmp.ne.s32.totalorder %s226, %s240
      %p242 = scmp.eq.s32.totalorder %s27, 0
      %p243 = por %p241, %p242
      %s245 = sadd.s32 %s244, 1
      %p248 = scmp.eq.s32.totalorder %s21, 1
      %p249 = scmp.ne.s32.totalorder %s244, %s246
      %p250 = scmp.eq.s32.totalorder %s21, 0
      %p251 = por %p249, %p250
      %p252 = scmp.ne.s32.totalorder %s244, %s246
      %p253 = scmp.eq.s32.totalorder %s26, 1
      %p254 = por %p252, %p253
      %p255 = scmp.ne.s32.totalorder %s246, %s247
      %p256 = scmp.eq.s32.totalorder %s26, 0
      %p257 = por %p255, %p256
      %p258 = scmp.ne.s32.totalorder %s246, %s247
      %p259 = scmp.eq.s32.totalorder %s27, 1
      %p260 = por %p258, %p259
      %p262 = scmp.ne.s32.totalorder %s247, %s261
      %p263 = scmp.eq.s32.totalorder %s27, 0
      %p264 = por %p262, %p263
      %s266 = sadd.s32 %s265, 1
      %p269 = scmp.eq.s32.totalorder %s21, 1
      %p270 = scmp.ne.s32.totalorder %s265, %s267
      %p271 = scmp.eq.s32.totalorder %s21, 0
      %p272 = por %p270, %p271
      %p273 = scmp.ne.s32.totalorder %s265, %s267
      %p274 = scmp.eq.s32.totalorder %s26, 1
      %p275 = por %p273, %p274
      %p276 = scmp.ne.s32.totalorder %s267, %s268
      %p277 = scmp.eq.s32.totalorder %s26, 0
      %p278 = por %p276, %p277
      %p279 = scmp.ne.s32.totalorder %s267, %s268
      %p280 = scmp.eq.s32.totalorder %s27, 1
      %p281 = por %p279, %p280
      %p283 = scmp.ne.s32.totalorder %s268, %s282
      %p284 = scmp.eq.s32.totalorder %s27, 0
      %p285 = por %p283, %p284
      %s286 = ssub.s32 %s21, %s28
      %p287 = scmp.eq.s32.totalorder %s286, 0
      %s289 = sadd.s32 %s288, 1
      %s290 = scalar_select %p287, %s288, %s289
      %p293 = pneg %p287
      %p294 = scmp.eq.s32.totalorder %s21, 1
      %p295 = por %p293, %p294
      %p296 = scmp.ne.s32.totalorder %s288, %s291
      %p297 = scmp.eq.s32.totalorder %s21, 0
      %p298 = por %p296, %p297
      %p299 = scmp.ne.s32.totalorder %s288, %s291
      %p300 = scmp.eq.s32.totalorder %s26, 1
      %p301 = por %p299, %p300
      %p302 = scmp.ne.s32.totalorder %s291, %s292
      %p303 = scmp.eq.s32.totalorder %s26, 0
      %p304 = por %p302, %p303
      %p305 = scmp.ne.s32.totalorder %s291, %s292
      %p306 = scmp.eq.s32.totalorder %s27, 1
      %p307 = por %p305, %p306
      %p309 = scmp.ne.s32.totalorder %s292, %s308
      %p310 = scmp.eq.s32.totalorder %s27, 0
      %p311 = por %p309, %p310
      %p312 = scmp.le.s32.totalorder 1, %s21
      %p313 = scmp.lt.s32.totalorder %s21, 3
      %p314 = pnand %p312, %p313
      %p315 = pneg %p314
      // Predicated region
      $region9: #{lenet_forward.1} parent=5 // pred_check
        _
      $region10: #{lenet_forward.1} parent=5 // pred_check_branch
        %317 = sbr.rel (%p314) target = $region12
      $region11: #{lenet_forward.1} parent=5 // pred_region
        %s318 = ssub.s32 %s21, 1
        // Predicated region
        $region13: #{lenet_forward.1} parent=11 // pred_check
          %p319 = pneg %p68
        $region14: #{lenet_forward.1} parent=11 // pred_check_branch
          %321 = sbr.rel (%p319) target = $region16
        $region15: #{lenet_forward.1} parent=11 // pred_region
          _
        $region16: #{lenet_forward.1} parent=11 // pred_fallthru
          _
        // Predicated region
        $region17: #{lenet_forward.1} parent=11 // pred_check
          %p322 = pneg %p89
        $region18: #{lenet_forward.1} parent=11 // pred_check_branch
          %324 = sbr.rel (%p322) target = $region20
        $region19: #{lenet_forward.1} parent=11 // pred_region
          _
        $region20: #{lenet_forward.1} parent=11 // pred_fallthru
          _
        // Predicated region
        $region21: #{lenet_forward.1} parent=11 // pred_check
          %p325 = pneg %p110
        $region22: #{lenet_forward.1} parent=11 // pred_check_branch
          %327 = sbr.rel (%p325) target = $region24
        $region23: #{lenet_forward.1} parent=11 // pred_region
          _
        $region24: #{lenet_forward.1} parent=11 // pred_fallthru
          _
        // Predicated region
        $region25: #{lenet_forward.1} parent=11 // pred_check
          %p328 = pneg %p131
        $region26: #{lenet_forward.1} parent=11 // pred_check_branch
          %330 = sbr.rel (%p328) target = $region28
        $region27: #{lenet_forward.1} parent=11 // pred_region
          _
        $region28: #{lenet_forward.1} parent=11 // pred_fallthru
          _
        // Predicated region
        $region29: #{lenet_forward.1} parent=11 // pred_check
          %p331 = pneg %p152
        $region30: #{lenet_forward.1} parent=11 // pred_check_branch
          %333 = sbr.rel (%p331) target = $region32
        $region31: #{lenet_forward.1} parent=11 // pred_region
          _
        $region32: #{lenet_forward.1} parent=11 // pred_fallthru
          _
        // Predicated region
        $region33: #{lenet_forward.1} parent=11 // pred_check
          %p334 = pneg %p173
        $region34: #{lenet_forward.1} parent=11 // pred_check_branch
          %336 = sbr.rel (%p334) target = $region36
        $region35: #{lenet_forward.1} parent=11 // pred_region
          _
        $region36: #{lenet_forward.1} parent=11 // pred_fallthru
          _
        // Predicated region
        $region37: #{lenet_forward.1} parent=11 // pred_check
          %p337 = pneg %p194
        $region38: #{lenet_forward.1} parent=11 // pred_check_branch
          %339 = sbr.rel (%p337) target = $region40
        $region39: #{lenet_forward.1} parent=11 // pred_region
          _
        $region40: #{lenet_forward.1} parent=11 // pred_fallthru
          _
        // Predicated region
        $region41: #{lenet_forward.1} parent=11 // pred_check
          %p340 = pneg %p215
        $region42: #{lenet_forward.1} parent=11 // pred_check_branch
          %342 = sbr.rel (%p340) target = $region44
        $region43: #{lenet_forward.1} parent=11 // pred_region
          _
        $region44: #{lenet_forward.1} parent=11 // pred_fallthru
          _
        // Predicated region
        $region45: #{lenet_forward.1} parent=11 // pred_check
          %p343 = pneg %p236
        $region46: #{lenet_forward.1} parent=11 // pred_check_branch
          %345 = sbr.rel (%p343) target = $region48
        $region47: #{lenet_forward.1} parent=11 // pred_region
          _
        $region48: #{lenet_forward.1} parent=11 // pred_fallthru
          _
        // Predicated region
        $region49: #{lenet_forward.1} parent=11 // pred_check
          %p346 = pneg %p257
        $region50: #{lenet_forward.1} parent=11 // pred_check_branch
          %348 = sbr.rel (%p346) target = $region52
        $region51: #{lenet_forward.1} parent=11 // pred_region
          _
        $region52: #{lenet_forward.1} parent=11 // pred_fallthru
          _
        // Predicated region
        $region53: #{lenet_forward.1} parent=11 // pred_check
          %p349 = pneg %p278
        $region54: #{lenet_forward.1} parent=11 // pred_check_branch
          %351 = sbr.rel (%p349) target = $region56
        $region55: #{lenet_forward.1} parent=11 // pred_region
          _
        $region56: #{lenet_forward.1} parent=11 // pred_fallthru
          _
      $region12: #{lenet_forward.1} parent=5 // pred_fallthru
        _
      %p352 = scmp.lt.s32.totalorder %s21, 2
      // Predicated region
      $region57: #{lenet_forward.1} parent=5 // pred_check
        %p353 = pneg %p352
      $region58: #{lenet_forward.1} parent=5 // pred_check_branch
        %355 = sbr.rel (%p353) target = $region60
      $region59: #{lenet_forward.1} parent=5 // pred_region
        // Predicated region
        $region61: #{lenet_forward.1} parent=59 // pred_check
          %p356 = pneg %p41
        $region62: #{lenet_forward.1} parent=59 // pred_check_branch
          %358 = sbr.rel (%p356) target = $region64
        $region63: #{lenet_forward.1} parent=59 // pred_region
          %s359 = smul.u32 32, %s21
          %p360 = scmp.lt.s32.totalorder %s359, 63
          %s361 = scalar_select %p360, %s359, 63
          %s362 = smul.addr %s361, 8
          %s363 = scalar_lea.vmem %s0, %s362
          %s364 = smul.u32 32, %s21
        $region64: #{lenet_forward.1} parent=59 // pred_fallthru
          _
      $region60: #{lenet_forward.1} parent=5 // pred_fallthru
        _
      %p365 = scmp.le.s32.totalorder 1, %s21
      %p366 = scmp.lt.s32.totalorder %s21, 3
      %p367 = pnand %p365, %p366
      %p368 = pneg %p367
      // Predicated region
      $region65: #{lenet_forward.1} parent=5 // pred_check
        _
      $region66: #{lenet_forward.1} parent=5 // pred_check_branch
        %370 = sbr.rel (%p367) target = $region68
      $region67: #{lenet_forward.1} parent=5 // pred_region
        %s371 = ssub.s32 %s21, 1
        %s372 = smul.u32 32, %s26
        %p373 = scmp.lt.s32.totalorder %s372, 63
        %s374 = scalar_select %p373, %s372, 63
        %s375 = smul.addr %s374, 8
        %s376 = scalar_lea.vmem %s0, %s375
        %p377 = pneg %p47
        %p378 = pneg %p44
        %p379 = pneg %p68
        %p380 = pneg %p65
        %p381 = pneg %p89
        %p382 = pneg %p86
        %p383 = pneg %p110
        %p384 = pneg %p107
        %p385 = pneg %p131
        %p386 = pneg %p128
        %p387 = pneg %p152
        %p388 = pneg %p149
        %p389 = pneg %p173
        %p390 = pneg %p170
        %p391 = pneg %p194
        %p392 = pneg %p191
        %p393 = pneg %p215
        %p394 = pneg %p212
        %p395 = pneg %p236
        %p396 = pneg %p233
        %p397 = pneg %p257
        %p398 = pneg %p254
        %p399 = pneg %p278
        %p400 = pneg %p275
        %p401 = pneg %p304
        %p402 = pneg %p301
        %s403 = sand.u32 %s291, 1
        %s404 = scalar_lea.sflag [#allocation3], %s403
        %s405 = sand.u32 %s291, 1
        %s406 = smul.addr %s405, 8
        %s407 = scalar_lea.vmem [#allocation2], %s406
        %s408 = smul.u32 32, %s26
        %p409 = scmp.lt.s32.totalorder %s408, 63
        %s410 = scalar_select %p409, %s408, 63
        %s411 = smul.addr %s410, 8
        %s412 = scalar_lea.vmem %s0, %s411
        %s413 = smul.u32 32, %s26
        %v414 = vld [vmem:[%s412] sm:$0xff]
        %v415 = vld [vmem:[%s412 + $0x8] sm:$0xff]
        %v416 = vld [vmem:[%s412 + $0x10] sm:$0xff]
        %v417 = vld [vmem:[%s412 + $0x18] sm:$0xff]
        %v418 = vld [vmem:[%s412 + $0x20] sm:$0xff]
        %v419 = vld [vmem:[%s412 + $0x28] sm:$0xff]
        %v420 = vld [vmem:[%s412 + $0x30] sm:$0xff]
        %v421 = vld [vmem:[%s412 + $0x38] sm:$0xff]
        %v422 = vld [vmem:[%s412 + $0x40] sm:$0xff]
        %v423 = vld [vmem:[%s412 + $0x48] sm:$0xff]
        %v424 = vld [vmem:[%s412 + $0x50] sm:$0xff]
        %v425 = vld [vmem:[%s412 + $0x58] sm:$0xff]
        %v426 = vld [vmem:[%s412 + $0x60] sm:$0xff]
        %v427 = vld [vmem:[%s412 + $0x68] sm:$0xff]
        %v428 = vld [vmem:[%s412 + $0x70] sm:$0xff]
        %v429 = vld [vmem:[%s412 + $0x78] sm:$0xff]
        %v430 = vld [vmem:[%s412 + $0x80] sm:$0xff]
        %v431 = vld [vmem:[%s412 + $0x88] sm:$0xff]
        %v432 = vld [vmem:[%s412 + $0x90] sm:$0xff]
        %v433 = vld [vmem:[%s412 + $0x98] sm:$0xff]
        %v434 = vld [vmem:[%s412 + $0xa0] sm:$0xff]
        %v435 = vld [vmem:[%s412 + $0xa8] sm:$0xff]
        %v436 = vld [vmem:[%s412 + $0xb0] sm:$0xff]
        %v437 = vld [vmem:[%s412 + $0xb8] sm:$0xff]
        %v438 = vld [vmem:[%s412 + $0xc0] sm:$0xff]
        %v439 = vld [vmem:[%s412 + $0xc8] sm:$0xff]
        %v440 = vld [vmem:[%s412 + $0xd0] sm:$0xff]
        %v441 = vld [vmem:[%s412 + $0xd8] sm:$0xff]
        %v442 = vld [vmem:[%s412 + $0xe0] sm:$0xff]
        %v443 = vld [vmem:[%s412 + $0xe8] sm:$0xff]
        %v444 = vld [vmem:[%s412 + $0xf0] sm:$0xff]
        %v445 = vld [vmem:[%s412 + $0xf8] sm:$0xff]
        %v446 = vld [vmem:[%s1] sm:$0xff]
        %v447 = vld [vmem:[%s1 + $0x8] sm:$0xff]
        %v448 = vld [vmem:[%s1 + $0x10] sm:$0xff]
        %v449 = vld [vmem:[%s1 + $0x18] sm:$0xff]
        %v450 = vld [vmem:[%s1 + $0x20] sm:$0xff]
        %v451 = vld [vmem:[%s1 + $0x28] sm:$0xff]
        %v452 = vld [vmem:[%s1 + $0x30] sm:$0xff]
        %v453 = vld [vmem:[%s1 + $0x38] sm:$0xff]
        %v454 = vld [vmem:[%s1 + $0x40] sm:$0xff]
        %v455 = vld [vmem:[%s1 + $0x48] sm:$0xff]
        %v456 = vld [vmem:[%s1 + $0x50] sm:$0xff]
        %v457 = vld [vmem:[%s1 + $0x58] sm:$0xff]
        %v458 = vld [vmem:[%s1 + $0x60] sm:$0xff]
        %v459 = vld [vmem:[%s1 + $0x68] sm:$0xff]
        %v460 = vld [vmem:[%s1 + $0x70] sm:$0xff]
        %v461 = vld [vmem:[%s1 + $0x78] sm:$0xff]
        %v462 = vld [vmem:[%s1 + $0x80] sm:$0xff]
        %v463 = vld [vmem:[%s1 + $0x88] sm:$0xff]
        %v464 = vld [vmem:[%s1 + $0x90] sm:$0xff]
        %v465 = vld [vmem:[%s1 + $0x98] sm:$0xff]
        %v466 = vld [vmem:[%s1 + $0xa0] sm:$0xff]
        %v467 = vld [vmem:[%s1 + $0xa8] sm:$0xff]
        %v468 = vld [vmem:[%s1 + $0xb0] sm:$0xff]
        %v469 = vld [vmem:[%s1 + $0xb8] sm:$0xff]
        %v470 = vrot.slane %v414, 1
        %v471 = vrot.slane %v415, 1
        %v472 = vrot.slane %v416, 1
        %v473 = vrot.slane %v417, 1
        %v474 = vrot.slane %v418, 1
        %v475 = vrot.slane %v419, 1
        %v476 = vrot.slane %v420, 1
        %v477 = vrot.slane %v421, 1
        %v478 = vrot.slane %v422, 1
        %v479 = vrot.slane %v423, 1
        %v480 = vrot.slane %v424, 1
        %v481 = vrot.slane %v425, 1
        %v482 = vrot.slane %v426, 1
        %v483 = vrot.slane %v427, 1
        %v484 = vrot.slane %v428, 1
        %v485 = vrot.slane %v429, 1
        %v486 = vrot.slane %v430, 1
        %v487 = vrot.slane %v431, 1
        %v488 = vrot.slane %v432, 1
        %v489 = vrot.slane %v433, 1
        %v490 = vrot.slane %v434, 1
        %v491 = vrot.slane %v435, 1
        %v492 = vrot.slane %v436, 1
        %v493 = vrot.slane %v437, 1
        %v494 = vrot.slane %v438, 1
        %v495 = vrot.slane %v439, 1
        %v496 = vrot.slane %v440, 1
        %v497 = vrot.slane %v441, 1
        %v498 = vrot.slane %v442, 1
        %v499 = vrot.slane %v443, 1
        %v500 = vrot.slane %v444, 1
        %v501 = vrot.slane %v445, 1
        %v502 = vlaneseq
        %v503 = vshrl.u32 %v502, 7
        %vm504 = vcmp.lt.s32.totalorder %v503, 7
        %v505 = vsel %vm504, %v500, %v501
        %v506 = vsel %vm504, %v499, %v500
        %v507 = vsel %vm504, %v498, %v499
        %v508 = vsel %vm504, %v497, %v498
        %v509 = vsel %vm504, %v496, %v497
        %v510 = vsel %vm504, %v495, %v496
        %v511 = vsel %vm504, %v494, %v495
        %v512 = vsel %vm504, %v493, %v494
        %v513 = vsel %vm504, %v492, %v493
        %v514 = vsel %vm504, %v491, %v492
        %v515 = vsel %vm504, %v490, %v491
        %v516 = vsel %vm504, %v489, %v490
        %v517 = vsel %vm504, %v488, %v489
        %v518 = vsel %vm504, %v487, %v488
        %v519 = vsel %vm504, %v486, %v487
        %v520 = vsel %vm504, %v485, %v486
        %v521 = vsel %vm504, %v484, %v485
        %v522 = vsel %vm504, %v483, %v484
        %v523 = vsel %vm504, %v482, %v483
        %v524 = vsel %vm504, %v481, %v482
        %v525 = vsel %vm504, %v480, %v481
        %v526 = vsel %vm504, %v479, %v480
        %v527 = vsel %vm504, %v478, %v479
        %v528 = vsel %vm504, %v477, %v478
        %v529 = vsel %vm504, %v476, %v477
        %v530 = vsel %vm504, %v475, %v476
        %v531 = vsel %vm504, %v474, %v475
        %v532 = vsel %vm504, %v473, %v474
        %v533 = vsel %vm504, %v472, %v473
        %v534 = vsel %vm504, %v471, %v472
        %v535 = vsel %vm504, %v470, %v471
        %v536 = vsel %vm504, %v501, %v470
        %s537 = scalar_lea.vmem %s1, 192
        %v538 = vld [vmem:[%s537] sm:$0xff]
        %v539 = vld [vmem:[%s537 + $0x8] sm:$0xff]
        %v540 = vld [vmem:[%s537 + $0x10] sm:$0xff]
        %v541 = vld [vmem:[%s537 + $0x18] sm:$0xff]
        %v542 = vld [vmem:[%s537 + $0x20] sm:$0xff]
        %v543 = vld [vmem:[%s537 + $0x28] sm:$0xff]
        %v544 = vld [vmem:[%s537 + $0x30] sm:$0xff]
        %v545 = vld [vmem:[%s537 + $0x38] sm:$0xff]
        %v546 = vld [vmem:[%s537 + $0x40] sm:$0xff]
        %v547 = vld [vmem:[%s537 + $0x48] sm:$0xff]
        %v548 = vld [vmem:[%s537 + $0x50] sm:$0xff]
        %v549 = vld [vmem:[%s537 + $0x58] sm:$0xff]
        %v550 = vld [vmem:[%s537 + $0x60] sm:$0xff]
        %v551 = vld [vmem:[%s537 + $0x68] sm:$0xff]
        %v552 = vld [vmem:[%s537 + $0x70] sm:$0xff]
        %v553 = vld [vmem:[%s537 + $0x78] sm:$0xff]
        %v554 = vld [vmem:[%s537 + $0x80] sm:$0xff]
        %v555 = vld [vmem:[%s537 + $0x88] sm:$0xff]
        %v556 = vld [vmem:[%s537 + $0x90] sm:$0xff]
        %v557 = vld [vmem:[%s537 + $0x98] sm:$0xff]
        %v558 = vld [vmem:[%s537 + $0xa0] sm:$0xff]
        %v559 = vld [vmem:[%s537 + $0xa8] sm:$0xff]
        %v560 = vld [vmem:[%s537 + $0xb0] sm:$0xff]
        %v561 = vld [vmem:[%s537 + $0xb8] sm:$0xff]
        %vm562 = vcmask 785408
        %v564 = vsel %vm562, %v535, 0
        %v567 = vsel %vm562, %v534, 0
        %v570 = vsel %vm562, %v533, 0
        %v573 = vsel %vm562, %v532, 0
        %v576 = vsel %vm562, %v531, 0
        %v579 = vsel %vm562, %v530, 0
        %v582 = vsel %vm562, %v529, 0
        %v585 = vsel %vm562, %v528, 0
        %v588 = vsel %vm562, %v527, 0
        %v591 = vsel %vm562, %v526, 0
        %v594 = vsel %vm562, %v525, 0
        %v597 = vsel %vm562, %v524, 0
        %v600 = vsel %vm562, %v523, 0
        %v603 = vsel %vm562, %v522, 0
        %v606 = vsel %vm562, %v521, 0
        %v609 = vsel %vm562, %v520, 0
        %v612 = vsel %vm562, %v519, 0
        %v615 = vsel %vm562, %v518, 0
        %v618 = vsel %vm562, %v517, 0
        %v621 = vsel %vm562, %v516, 0
        %v624 = vsel %vm562, %v515, 0
        %v627 = vsel %vm562, %v514, 0
        %v630 = vsel %vm562, %v513, 0
        %v633 = vsel %vm562, %v512, 0
        %v636 = vsel %vm562, %v511, 0
        %v639 = vsel %vm562, %v510, 0
        %v642 = vsel %vm562, %v509, 0
        %v645 = vsel %vm562, %v508, 0
        %v648 = vsel %vm562, %v507, 0
        %v651 = vsel %vm562, %v506, 0
        %v654 = vsel %vm562, %v505, 0
        %v657 = vsel %vm562, %v536, 0
        %659 = vmatprep.subr.mxu0 0.0
        %660 = vmatpush1.msra.mxu0 0.0
        %661 = vmatprep.subr.mxu0 0.0
        %662 = vmatpush1.msra.mxu0 0.0
        %663 = vmatprep.subr.mxu0 0.0
        %664 = vmatpush1.msra.mxu0 0.0
        %665 = vmatprep.subr.mxu0 0.0
        %666 = vmatpush1.msra.mxu0 0.0
        %667 = vmatprep.subr.mxu0 %v561
        %668 = vmatpush1.msra.mxu0 %v560
        %669 = vmatprep.subr.mxu0 %v559
        %670 = vmatpush1.msra.mxu0 %v558
        %671 = vmatprep.subr.mxu0 %v557
        %672 = vmatpush1.msra.mxu0 %v556
        %673 = vmatprep.subr.mxu0 %v555
        %674 = vmatpush1.msra.mxu0 %v554
        %675 = vmatprep.subr.mxu0 %v553
        %676 = vmatpush1.msra.mxu0 %v552
        %677 = vmatprep.subr.mxu0 %v551
        %678 = vmatpush1.msra.mxu0 %v550
        %679 = vmatprep.subr.mxu0 %v549
        %680 = vmatpush1.msra.mxu0 %v548
        %681 = vmatprep.subr.mxu0 %v547
        %682 = vmatpush1.msra.mxu0 %v546
        %683 = vmatprep.subr.mxu0 %v545
        %684 = vmatpush1.msra.mxu0 %v544
        %685 = vmatprep.subr.mxu0 %v543
        %686 = vmatpush1.msra.mxu0 %v542
        %687 = vmatprep.subr.mxu0 %v541
        %688 = vmatpush1.msra.mxu0 %v540
        %689 = vmatprep.subr.mxu0 %v539
        %690 = vmatpush1.msra.mxu0 %v538
        %691 = vmatprep.subr.mxu0 0.0
        %692 = vmatpush2.msra.mxu0 0.0
        %693 = vmatprep.subr.mxu0 0.0
        %694 = vmatpush2.msra.mxu0 0.0
        %695 = vmatprep.subr.mxu0 0.0
        %696 = vmatpush2.msra.mxu0 0.0
        %697 = vmatprep.subr.mxu0 0.0
        %698 = vmatpush2.msra.mxu0 0.0
        %699 = vmatprep.subr.mxu0 0.0
        %700 = vmatpush2.msra.mxu0 0.0
        %701 = vmatprep.subr.mxu0 0.0
        %702 = vmatpush2.msra.mxu0 0.0
        %703 = vmatprep.subr.mxu0 0.0
        %704 = vmatpush2.msra.mxu0 0.0
        %705 = vmatprep.subr.mxu0 0.0
        %706 = vmatpush2.msra.mxu0 0.0
        %707 = vmatprep.subr.mxu0 0.0
        %708 = vmatpush2.msra.mxu0 0.0
        %709 = vmatprep.subr.mxu0 0.0
        %710 = vmatpush2.msra.mxu0 0.0
        %711 = vmatprep.subr.mxu0 0.0
        %712 = vmatpush2.msra.mxu0 0.0
        %713 = vmatprep.subr.mxu0 0.0
        %714 = vmatpush2.msra.mxu0 0.0
        %715 = vmatprep.subr.mxu0 0.0
        %716 = vmatpush2.msra.mxu0 0.0
        %717 = vmatprep.subr.mxu0 0.0
        %718 = vmatpush2.msra.mxu0 0.0
        %719 = vmatprep.subr.mxu0 0.0
        %720 = vmatpush2.msra.mxu0 0.0
        %721 = vmatprep.subr.mxu0 0.0
        %722 = vmatpush2.msra.mxu0 0.0
        %723 = vmatprep.mubr.f32.mxu0 0.0
        %724 = vmatmul.mubr.f32.gmra.mxu0 %v564
        %v725 = vpop.f32.mrf.mxu0
        %v726 = vadd.f32 0.0, %v725
        %v727 = vpop.f32.mrf.mxu0
        %v728 = vadd.f32 0.0, %v727
        %729 = vmatprep.mubr.f32.mxu0 0.0
        %730 = vmatmul.mubr.f32.gmra.mxu0 %v567
        %v731 = vpop.f32.mrf.mxu0
        %v732 = vadd.f32 0.0, %v731
        %v733 = vpop.f32.mrf.mxu0
        %v734 = vadd.f32 0.0, %v733
        %735 = vmatprep.mubr.f32.mxu0 0.0
        %736 = vmatmul.mubr.f32.gmra.mxu0 %v570
        %v737 = vpop.f32.mrf.mxu0
        %v738 = vadd.f32 0.0, %v737
        %v739 = vpop.f32.mrf.mxu0
        %v740 = vadd.f32 0.0, %v739
        %741 = vmatprep.mubr.f32.mxu0 0.0
        %742 = vmatmul.mubr.f32.gmra.mxu0 %v573
        %v743 = vpop.f32.mrf.mxu0
        %v744 = vadd.f32 0.0, %v743
        %v745 = vpop.f32.mrf.mxu0
        %v746 = vadd.f32 0.0, %v745
        %747 = vmatprep.mubr.f32.mxu0 0.0
        %748 = vmatmul.mubr.f32.gmra.mxu0 %v576
        %v749 = vpop.f32.mrf.mxu0
        %v750 = vadd.f32 0.0, %v749
        %v751 = vpop.f32.mrf.mxu0
        %v752 = vadd.f32 0.0, %v751
        %753 = vmatprep.mubr.f32.mxu0 0.0
        %754 = vmatmul.mubr.f32.gmra.mxu0 %v579
        %v755 = vpop.f32.mrf.mxu0
        %v756 = vadd.f32 0.0, %v755
        %v757 = vpop.f32.mrf.mxu0
        %v758 = vadd.f32 0.0, %v757
        %759 = vmatprep.mubr.f32.mxu0 0.0
        %760 = vmatmul.mubr.f32.gmra.mxu0 %v582
        %v761 = vpop.f32.mrf.mxu0
        %v762 = vadd.f32 0.0, %v761
        %v763 = vpop.f32.mrf.mxu0
        %v764 = vadd.f32 0.0, %v763
        %765 = vmatprep.mubr.f32.mxu0 0.0
        %766 = vmatmul.mubr.f32.gmra.mxu0 %v585
        %v767 = vpop.f32.mrf.mxu0
        %v768 = vadd.f32 0.0, %v767
        %v769 = vpop.f32.mrf.mxu0
        %v770 = vadd.f32 0.0, %v769
        %771 = vmatprep.mubr.f32.mxu0 0.0
        %772 = vmatmul.mubr.f32.gmra.mxu0 %v588
        %v773 = vpop.f32.mrf.mxu0
        %v774 = vadd.f32 0.0, %v773
        %v775 = vpop.f32.mrf.mxu0
        %v776 = vadd.f32 0.0, %v775
        %777 = vmatprep.mubr.f32.mxu0 0.0
        %778 = vmatmul.mubr.f32.gmra.mxu0 %v591
        %v779 = vpop.f32.mrf.mxu0
        %v780 = vadd.f32 0.0, %v779
        %v781 = vpop.f32.mrf.mxu0
        %v782 = vadd.f32 0.0, %v781
        %783 = vmatprep.mubr.f32.mxu0 0.0
        %784 = vmatmul.mubr.f32.gmra.mxu0 %v594
        %v785 = vpop.f32.mrf.mxu0
        %v786 = vadd.f32 0.0, %v785
        %v787 = vpop.f32.mrf.mxu0
        %v788 = vadd.f32 0.0, %v787
        %789 = vmatprep.mubr.f32.mxu0 0.0
        %790 = vmatmul.mubr.f32.gmra.mxu0 %v597
        %v791 = vpop.f32.mrf.mxu0
        %v792 = vadd.f32 0.0, %v791
        %v793 = vpop.f32.mrf.mxu0
        %v794 = vadd.f32 0.0, %v793
        %795 = vmatprep.mubr.f32.mxu0 0.0
        %796 = vmatmul.mubr.f32.gmra.mxu0 %v600
        %v797 = vpop.f32.mrf.mxu0
        %v798 = vadd.f32 0.0, %v797
        %v799 = vpop.f32.mrf.mxu0
        %v800 = vadd.f32 0.0, %v799
        %801 = vmatprep.mubr.f32.mxu0 0.0
        %802 = vmatmul.mubr.f32.gmra.mxu0 %v603
        %v803 = vpop.f32.mrf.mxu0
        %v804 = vadd.f32 0.0, %v803
        %v805 = vpop.f32.mrf.mxu0
        %v806 = vadd.f32 0.0, %v805
        %807 = vmatprep.mubr.f32.mxu0 0.0
        %808 = vmatmul.mubr.f32.gmra.mxu0 %v606
        %v809 = vpop.f32.mrf.mxu0
        %v810 = vadd.f32 0.0, %v809
        %v811 = vpop.f32.mrf.mxu0
        %v812 = vadd.f32 0.0, %v811
        %813 = vmatprep.mubr.f32.mxu0 0.0
        %814 = vmatmul.mubr.f32.gmra.mxu0 %v609
        %v815 = vpop.f32.mrf.mxu0
        %v816 = vadd.f32 0.0, %v815
        %v817 = vpop.f32.mrf.mxu0
        %v818 = vadd.f32 0.0, %v817
        %819 = vmatprep.mubr.f32.mxu0 0.0
        %820 = vmatmul.mubr.f32.gmra.mxu0 %v612
        %v821 = vpop.f32.mrf.mxu0
        %v822 = vadd.f32 0.0, %v821
        %v823 = vpop.f32.mrf.mxu0
        %v824 = vadd.f32 0.0, %v823
        %825 = vmatprep.mubr.f32.mxu0 0.0
        %826 = vmatmul.mubr.f32.gmra.mxu0 %v615
        %v827 = vpop.f32.mrf.mxu0
        %v828 = vadd.f32 0.0, %v827
        %v829 = vpop.f32.mrf.mxu0
        %v830 = vadd.f32 0.0, %v829
        %831 = vmatprep.mubr.f32.mxu0 0.0
        %832 = vmatmul.mubr.f32.gmra.mxu0 %v618
        %v833 = vpop.f32.mrf.mxu0
        %v834 = vadd.f32 0.0, %v833
        %v835 = vpop.f32.mrf.mxu0
        %v836 = vadd.f32 0.0, %v835
        %837 = vmatprep.mubr.f32.mxu0 0.0
        %838 = vmatmul.mubr.f32.gmra.mxu0 %v621
        %v839 = vpop.f32.mrf.mxu0
        %v840 = vadd.f32 0.0, %v839
        %v841 = vpop.f32.mrf.mxu0
        %v842 = vadd.f32 0.0, %v841
        %843 = vmatprep.mubr.f32.mxu0 0.0
        %844 = vmatmul.mubr.f32.gmra.mxu0 %v624
        %v845 = vpop.f32.mrf.mxu0
        %v846 = vadd.f32 0.0, %v845
        %v847 = vpop.f32.mrf.mxu0
        %v848 = vadd.f32 0.0, %v847
        %849 = vmatprep.mubr.f32.mxu0 0.0
        %850 = vmatmul.mubr.f32.gmra.mxu0 %v627
        %v851 = vpop.f32.mrf.mxu0
        %v852 = vadd.f32 0.0, %v851
        %v853 = vpop.f32.mrf.mxu0
        %v854 = vadd.f32 0.0, %v853
        %855 = vmatprep.mubr.f32.mxu0 0.0
        %856 = vmatmul.mubr.f32.gmra.mxu0 %v630
        %v857 = vpop.f32.mrf.mxu0
        %v858 = vadd.f32 0.0, %v857
        %v859 = vpop.f32.mrf.mxu0
        %v860 = vadd.f32 0.0, %v859
        %861 = vmatprep.mubr.f32.mxu0 0.0
        %862 = vmatmul.mubr.f32.gmra.mxu0 %v633
        %v863 = vpop.f32.mrf.mxu0
        %v864 = vadd.f32 0.0, %v863
        %v865 = vpop.f32.mrf.mxu0
        %v866 = vadd.f32 0.0, %v865
        %867 = vmatprep.mubr.f32.mxu0 0.0
        %868 = vmatmul.mubr.f32.gmra.mxu0 %v636
        %v869 = vpop.f32.mrf.mxu0
        %v870 = vadd.f32 0.0, %v869
        %v871 = vpop.f32.mrf.mxu0
        %v872 = vadd.f32 0.0, %v871
        %873 = vmatprep.mubr.f32.mxu0 0.0
        %874 = vmatmul.mubr.f32.gmra.mxu0 %v639
        %v875 = vpop.f32.mrf.mxu0
        %v876 = vadd.f32 0.0, %v875
        %v877 = vpop.f32.mrf.mxu0
        %v878 = vadd.f32 0.0, %v877
        %879 = vmatprep.mubr.f32.mxu0 0.0
        %880 = vmatmul.mubr.f32.gmra.mxu0 %v642
        %v881 = vpop.f32.mrf.mxu0
        %v882 = vadd.f32 0.0, %v881
        %v883 = vpop.f32.mrf.mxu0
        %v884 = vadd.f32 0.0, %v883
        %885 = vmatprep.mubr.f32.mxu0 0.0
        %886 = vmatmul.mubr.f32.gmra.mxu0 %v645
        %v887 = vpop.f32.mrf.mxu0
        %v888 = vadd.f32 0.0, %v887
        %v889 = vpop.f32.mrf.mxu0
        %v890 = vadd.f32 0.0, %v889
        %891 = vmatprep.mubr.f32.mxu0 0.0
        %892 = vmatmul.mubr.f32.gmra.mxu0 %v648
        %v893 = vpop.f32.mrf.mxu0
        %v894 = vadd.f32 0.0, %v893
        %v895 = vpop.f32.mrf.mxu0
        %v896 = vadd.f32 0.0, %v895
        %897 = vmatprep.mubr.f32.mxu0 0.0
        %898 = vmatmul.mubr.f32.gmra.mxu0 %v651
        %v899 = vpop.f32.mrf.mxu0
        %v900 = vadd.f32 0.0, %v899
        %v901 = vpop.f32.mrf.mxu0
        %v902 = vadd.f32 0.0, %v901
        %903 = vmatprep.mubr.f32.mxu0 0.0
        %904 = vmatmul.mubr.f32.gmra.mxu0 %v654
        %v905 = vpop.f32.mrf.mxu0
        %v906 = vadd.f32 0.0, %v905
        %v907 = vpop.f32.mrf.mxu0
        %v908 = vadd.f32 0.0, %v907
        %909 = vmatprep.mubr.f32.mxu0 0.0
        %910 = vmatmul.mubr.f32.gmra.mxu0 %v657
        %v911 = vpop.f32.mrf.mxu0
        %v912 = vadd.f32 0.0, %v911
        %v913 = vpop.f32.mrf.mxu0
        %v914 = vadd.f32 0.0, %v913
        %915 = vdwg.mxu0
        %v917 = vsel %vm562, %v414, 0
        %v920 = vsel %vm562, %v415, 0
        %v923 = vsel %vm562, %v416, 0
        %v926 = vsel %vm562, %v417, 0
        %v929 = vsel %vm562, %v418, 0
        %v932 = vsel %vm562, %v419, 0
        %v935 = vsel %vm562, %v420, 0
        %v938 = vsel %vm562, %v421, 0
        %v941 = vsel %vm562, %v422, 0
        %v944 = vsel %vm562, %v423, 0
        %v947 = vsel %vm562, %v424, 0
        %v950 = vsel %vm562, %v425, 0
        %v953 = vsel %vm562, %v426, 0
        %v956 = vsel %vm562, %v427, 0
        %v959 = vsel %vm562, %v428, 0
        %v962 = vsel %vm562, %v429, 0
        %v965 = vsel %vm562, %v430, 0
        %v968 = vsel %vm562, %v431, 0
        %v971 = vsel %vm562, %v432, 0
        %v974 = vsel %vm562, %v433, 0
        %v977 = vsel %vm562, %v434, 0
        %v980 = vsel %vm562, %v435, 0
        %v983 = vsel %vm562, %v436, 0
        %v986 = vsel %vm562, %v437, 0
        %v989 = vsel %vm562, %v438, 0
        %v992 = vsel %vm562, %v439, 0
        %v995 = vsel %vm562, %v440, 0
        %v998 = vsel %vm562, %v441, 0
        %v1001 = vsel %vm562, %v442, 0
        %v1004 = vsel %vm562, %v443, 0
        %v1007 = vsel %vm562, %v444, 0
        %v1010 = vsel %vm562, %v445, 0
        %1012 = vmatprep.subr.mxu0 0.0
        %1013 = vmatpush1.msra.mxu0 0.0
        %1014 = vmatprep.subr.mxu0 0.0
        %1015 = vmatpush1.msra.mxu0 0.0
        %1016 = vmatprep.subr.mxu0 0.0
        %1017 = vmatpush1.msra.mxu0 0.0
        %1018 = vmatprep.subr.mxu0 0.0
        %1019 = vmatpush1.msra.mxu0 0.0
        %1020 = vmatprep.subr.mxu0 %v469
        %1021 = vmatpush1.msra.mxu0 %v468
        %1022 = vmatprep.subr.mxu0 %v467
        %1023 = vmatpush1.msra.mxu0 %v466
        %1024 = vmatprep.subr.mxu0 %v465
        %1025 = vmatpush1.msra.mxu0 %v464
        %1026 = vmatprep.subr.mxu0 %v463
        %1027 = vmatpush1.msra.mxu0 %v462
        %1028 = vmatprep.subr.mxu0 %v461
        %1029 = vmatpush1.msra.mxu0 %v460
        %1030 = vmatprep.subr.mxu0 %v459
        %1031 = vmatpush1.msra.mxu0 %v458
        %1032 = vmatprep.subr.mxu0 %v457
        %1033 = vmatpush1.msra.mxu0 %v456
        %1034 = vmatprep.subr.mxu0 %v455
        %1035 = vmatpush1.msra.mxu0 %v454
        %1036 = vmatprep.subr.mxu0 %v453
        %1037 = vmatpush1.msra.mxu0 %v452
        %1038 = vmatprep.subr.mxu0 %v451
        %1039 = vmatpush1.msra.mxu0 %v450
        %1040 = vmatprep.subr.mxu0 %v449
        %1041 = vmatpush1.msra.mxu0 %v448
        %1042 = vmatprep.subr.mxu0 %v447
        %1043 = vmatpush1.msra.mxu0 %v446
        %1044 = vmatprep.subr.mxu0 0.0
        %1045 = vmatpush2.msra.mxu0 0.0
        %1046 = vmatprep.subr.mxu0 0.0
        %1047 = vmatpush2.msra.mxu0 0.0
        %1048 = vmatprep.subr.mxu0 0.0
        %1049 = vmatpush2.msra.mxu0 0.0
        %1050 = vmatprep.subr.mxu0 0.0
        %1051 = vmatpush2.msra.mxu0 0.0
        %1052 = vmatprep.subr.mxu0 0.0
        %1053 = vmatpush2.msra.mxu0 0.0
        %1054 = vmatprep.subr.mxu0 0.0
        %1055 = vmatpush2.msra.mxu0 0.0
        %1056 = vmatprep.subr.mxu0 0.0
        %1057 = vmatpush2.msra.mxu0 0.0
        %1058 = vmatprep.subr.mxu0 0.0
        %1059 = vmatpush2.msra.mxu0 0.0
        %1060 = vmatprep.subr.mxu0 0.0
        %1061 = vmatpush2.msra.mxu0 0.0
        %1062 = vmatprep.subr.mxu0 0.0
        %1063 = vmatpush2.msra.mxu0 0.0
        %1064 = vmatprep.subr.mxu0 0.0
        %1065 = vmatpush2.msra.mxu0 0.0
        %1066 = vmatprep.subr.mxu0 0.0
        %1067 = vmatpush2.msra.mxu0 0.0
        %1068 = vmatprep.subr.mxu0 0.0
        %1069 = vmatpush2.msra.mxu0 0.0
        %1070 = vmatprep.subr.mxu0 0.0
        %1071 = vmatpush2.msra.mxu0 0.0
        %1072 = vmatprep.subr.mxu0 0.0
        %1073 = vmatpush2.msra.mxu0 0.0
        %1074 = vmatprep.subr.mxu0 0.0
        %1075 = vmatpush2.msra.mxu0 0.0
        %1076 = vmatprep.mubr.f32.mxu0 0.0
        %1077 = vmatmul.mubr.f32.gmra.mxu0 %v917
        %v1078 = vpop.f32.mrf.mxu0
        %v1079 = vadd.f32 %v726, %v1078
        %v1080 = vpop.f32.mrf.mxu0
        %v1081 = vadd.f32 %v728, %v1080
        %1082 = vmatprep.mubr.f32.mxu0 0.0
        %1083 = vmatmul.mubr.f32.gmra.mxu0 %v920
        %v1084 = vpop.f32.mrf.mxu0
        %v1085 = vadd.f32 %v732, %v1084
        %v1086 = vpop.f32.mrf.mxu0
        %v1087 = vadd.f32 %v734, %v1086
        %1088 = vmatprep.mubr.f32.mxu0 0.0
        %1089 = vmatmul.mubr.f32.gmra.mxu0 %v923
        %v1090 = vpop.f32.mrf.mxu0
        %v1091 = vadd.f32 %v738, %v1090
        %v1092 = vpop.f32.mrf.mxu0
        %v1093 = vadd.f32 %v740, %v1092
        %1094 = vmatprep.mubr.f32.mxu0 0.0
        %1095 = vmatmul.mubr.f32.gmra.mxu0 %v926
        %v1096 = vpop.f32.mrf.mxu0
        %v1097 = vadd.f32 %v744, %v1096
        %v1098 = vpop.f32.mrf.mxu0
        %v1099 = vadd.f32 %v746, %v1098
        %1100 = vmatprep.mubr.f32.mxu0 0.0
        %1101 = vmatmul.mubr.f32.gmra.mxu0 %v929
        %v1102 = vpop.f32.mrf.mxu0
        %v1103 = vadd.f32 %v750, %v1102
        %v1104 = vpop.f32.mrf.mxu0
        %v1105 = vadd.f32 %v752, %v1104
        %1106 = vmatprep.mubr.f32.mxu0 0.0
        %1107 = vmatmul.mubr.f32.gmra.mxu0 %v932
        %v1108 = vpop.f32.mrf.mxu0
        %v1109 = vadd.f32 %v756, %v1108
        %v1110 = vpop.f32.mrf.mxu0
        %v1111 = vadd.f32 %v758, %v1110
        %1112 = vmatprep.mubr.f32.mxu0 0.0
        %1113 = vmatmul.mubr.f32.gmra.mxu0 %v935
        %v1114 = vpop.f32.mrf.mxu0
        %v1115 = vadd.f32 %v762, %v1114
        %v1116 = vpop.f32.mrf.mxu0
        %v1117 = vadd.f32 %v764, %v1116
        %1118 = vmatprep.mubr.f32.mxu0 0.0
        %1119 = vmatmul.mubr.f32.gmra.mxu0 %v938
        %v1120 = vpop.f32.mrf.mxu0
        %v1121 = vadd.f32 %v768, %v1120
        %v1122 = vpop.f32.mrf.mxu0
        %v1123 = vadd.f32 %v770, %v1122
        %1124 = vmatprep.mubr.f32.mxu0 0.0
        %1125 = vmatmul.mubr.f32.gmra.mxu0 %v941
        %v1126 = vpop.f32.mrf.mxu0
        %v1127 = vadd.f32 %v774, %v1126
        %v1128 = vpop.f32.mrf.mxu0
        %v1129 = vadd.f32 %v776, %v1128
        %1130 = vmatprep.mubr.f32.mxu0 0.0
        %1131 = vmatmul.mubr.f32.gmra.mxu0 %v944
        %v1132 = vpop.f32.mrf.mxu0
        %v1133 = vadd.f32 %v780, %v1132
        %v1134 = vpop.f32.mrf.mxu0
        %v1135 = vadd.f32 %v782, %v1134
        %1136 = vmatprep.mubr.f32.mxu0 0.0
        %1137 = vmatmul.mubr.f32.gmra.mxu0 %v947
        %v1138 = vpop.f32.mrf.mxu0
        %v1139 = vadd.f32 %v786, %v1138
        %v1140 = vpop.f32.mrf.mxu0
        %v1141 = vadd.f32 %v788, %v1140
        %1142 = vmatprep.mubr.f32.mxu0 0.0
        %1143 = vmatmul.mubr.f32.gmra.mxu0 %v950
        %v1144 = vpop.f32.mrf.mxu0
        %v1145 = vadd.f32 %v792, %v1144
        %v1146 = vpop.f32.mrf.mxu0
        %v1147 = vadd.f32 %v794, %v1146
        %1148 = vmatprep.mubr.f32.mxu0 0.0
        %1149 = vmatmul.mubr.f32.gmra.mxu0 %v953
        %v1150 = vpop.f32.mrf.mxu0
        %v1151 = vadd.f32 %v798, %v1150
        %v1152 = vpop.f32.mrf.mxu0
        %v1153 = vadd.f32 %v800, %v1152
        %1154 = vmatprep.mubr.f32.mxu0 0.0
        %1155 = vmatmul.mubr.f32.gmra.mxu0 %v956
        %v1156 = vpop.f32.mrf.mxu0
        %v1157 = vadd.f32 %v804, %v1156
        %v1158 = vpop.f32.mrf.mxu0
        %v1159 = vadd.f32 %v806, %v1158
        %1160 = vmatprep.mubr.f32.mxu0 0.0
        %1161 = vmatmul.mubr.f32.gmra.mxu0 %v959
        %v1162 = vpop.f32.mrf.mxu0
        %v1163 = vadd.f32 %v810, %v1162
        %v1164 = vpop.f32.mrf.mxu0
        %v1165 = vadd.f32 %v812, %v1164
        %1166 = vmatprep.mubr.f32.mxu0 0.0
        %1167 = vmatmul.mubr.f32.gmra.mxu0 %v962
        %v1168 = vpop.f32.mrf.mxu0
        %v1169 = vadd.f32 %v816, %v1168
        %v1170 = vpop.f32.mrf.mxu0
        %v1171 = vadd.f32 %v818, %v1170
        %1172 = vmatprep.mubr.f32.mxu0 0.0
        %1173 = vmatmul.mubr.f32.gmra.mxu0 %v965
        %v1174 = vpop.f32.mrf.mxu0
        %v1175 = vadd.f32 %v822, %v1174
        %v1176 = vpop.f32.mrf.mxu0
        %v1177 = vadd.f32 %v824, %v1176
        %1178 = vmatprep.mubr.f32.mxu0 0.0
        %1179 = vmatmul.mubr.f32.gmra.mxu0 %v968
        %v1180 = vpop.f32.mrf.mxu0
        %v1181 = vadd.f32 %v828, %v1180
        %v1182 = vpop.f32.mrf.mxu0
        %v1183 = vadd.f32 %v830, %v1182
        %1184 = vmatprep.mubr.f32.mxu0 0.0
        %1185 = vmatmul.mubr.f32.gmra.mxu0 %v971
        %v1186 = vpop.f32.mrf.mxu0
        %v1187 = vadd.f32 %v834, %v1186
        %v1188 = vpop.f32.mrf.mxu0
        %v1189 = vadd.f32 %v836, %v1188
        %1190 = vmatprep.mubr.f32.mxu0 0.0
        %1191 = vmatmul.mubr.f32.gmra.mxu0 %v974
        %v1192 = vpop.f32.mrf.mxu0
        %v1193 = vadd.f32 %v840, %v1192
        %v1194 = vpop.f32.mrf.mxu0
        %v1195 = vadd.f32 %v842, %v1194
        %1196 = vmatprep.mubr.f32.mxu0 0.0
        %1197 = vmatmul.mubr.f32.gmra.mxu0 %v977
        %v1198 = vpop.f32.mrf.mxu0
        %v1199 = vadd.f32 %v846, %v1198
        %v1200 = vpop.f32.mrf.mxu0
        %v1201 = vadd.f32 %v848, %v1200
        %1202 = vmatprep.mubr.f32.mxu0 0.0
        %1203 = vmatmul.mubr.f32.gmra.mxu0 %v980
        %v1204 = vpop.f32.mrf.mxu0
        %v1205 = vadd.f32 %v852, %v1204
        %v1206 = vpop.f32.mrf.mxu0
        %v1207 = vadd.f32 %v854, %v1206
        %1208 = vmatprep.mubr.f32.mxu0 0.0
        %1209 = vmatmul.mubr.f32.gmra.mxu0 %v983
        %v1210 = vpop.f32.mrf.mxu0
        %v1211 = vadd.f32 %v858, %v1210
        %v1212 = vpop.f32.mrf.mxu0
        %v1213 = vadd.f32 %v860, %v1212
        %1214 = vmatprep.mubr.f32.mxu0 0.0
        %1215 = vmatmul.mubr.f32.gmra.mxu0 %v986
        %v1216 = vpop.f32.mrf.mxu0
        %v1217 = vadd.f32 %v864, %v1216
        %v1218 = vpop.f32.mrf.mxu0
        %v1219 = vadd.f32 %v866, %v1218
        %1220 = vmatprep.mubr.f32.mxu0 0.0
        %1221 = vmatmul.mubr.f32.gmra.mxu0 %v989
        %v1222 = vpop.f32.mrf.mxu0
        %v1223 = vadd.f32 %v870, %v1222
        %v1224 = vpop.f32.mrf.mxu0
        %v1225 = vadd.f32 %v872, %v1224
        %1226 = vmatprep.mubr.f32.mxu0 0.0
        %1227 = vmatmul.mubr.f32.gmra.mxu0 %v992
        %v1228 = vpop.f32.mrf.mxu0
        %v1229 = vadd.f32 %v876, %v1228
        %v1230 = vpop.f32.mrf.mxu0
        %v1231 = vadd.f32 %v878, %v1230
        %1232 = vmatprep.mubr.f32.mxu0 0.0
        %1233 = vmatmul.mubr.f32.gmra.mxu0 %v995
        %v1234 = vpop.f32.mrf.mxu0
        %v1235 = vadd.f32 %v882, %v1234
        %v1236 = vpop.f32.mrf.mxu0
        %v1237 = vadd.f32 %v884, %v1236
        %1238 = vmatprep.mubr.f32.mxu0 0.0
        %1239 = vmatmul.mubr.f32.gmra.mxu0 %v998
        %v1240 = vpop.f32.mrf.mxu0
        %v1241 = vadd.f32 %v888, %v1240
        %v1242 = vpop.f32.mrf.mxu0
        %v1243 = vadd.f32 %v890, %v1242
        %1244 = vmatprep.mubr.f32.mxu0 0.0
        %1245 = vmatmul.mubr.f32.gmra.mxu0 %v1001
        %v1246 = vpop.f32.mrf.mxu0
        %v1247 = vadd.f32 %v894, %v1246
        %v1248 = vpop.f32.mrf.mxu0
        %v1249 = vadd.f32 %v896, %v1248
        %1250 = vmatprep.mubr.f32.mxu0 0.0
        %1251 = vmatmul.mubr.f32.gmra.mxu0 %v1004
        %v1252 = vpop.f32.mrf.mxu0
        %v1253 = vadd.f32 %v900, %v1252
        %v1254 = vpop.f32.mrf.mxu0
        %v1255 = vadd.f32 %v902, %v1254
        %1256 = vmatprep.mubr.f32.mxu0 0.0
        %1257 = vmatmul.mubr.f32.gmra.mxu0 %v1007
        %v1258 = vpop.f32.mrf.mxu0
        %v1259 = vadd.f32 %v906, %v1258
        %v1260 = vpop.f32.mrf.mxu0
        %v1261 = vadd.f32 %v908, %v1260
        %1262 = vmatprep.mubr.f32.mxu0 0.0
        %1263 = vmatmul.mubr.f32.gmra.mxu0 %v1010
        %v1264 = vpop.f32.mrf.mxu0
        %v1265 = vadd.f32 %v912, %v1264
        %v1266 = vpop.f32.mrf.mxu0
        %v1267 = vadd.f32 %v914, %v1266
        %1268 = vdwg.mxu0
        %v1269 = vrot.slane %v414, 2
        %v1270 = vrot.slane %v415, 2
        %v1271 = vrot.slane %v416, 2
        %v1272 = vrot.slane %v417, 2
        %v1273 = vrot.slane %v418, 2
        %v1274 = vrot.slane %v419, 2
        %v1275 = vrot.slane %v420, 2
        %v1276 = vrot.slane %v421, 2
        %v1277 = vrot.slane %v422, 2
        %v1278 = vrot.slane %v423, 2
        %v1279 = vrot.slane %v424, 2
        %v1280 = vrot.slane %v425, 2
        %v1281 = vrot.slane %v426, 2
        %v1282 = vrot.slane %v427, 2
        %v1283 = vrot.slane %v428, 2
        %v1284 = vrot.slane %v429, 2
        %v1285 = vrot.slane %v430, 2
        %v1286 = vrot.slane %v431, 2
        %v1287 = vrot.slane %v432, 2
        %v1288 = vrot.slane %v433, 2
        %v1289 = vrot.slane %v434, 2
        %v1290 = vrot.slane %v435, 2
        %v1291 = vrot.slane %v436, 2
        %v1292 = vrot.slane %v437, 2
        %v1293 = vrot.slane %v438, 2
        %v1294 = vrot.slane %v439, 2
        %v1295 = vrot.slane %v440, 2
        %v1296 = vrot.slane %v441, 2
        %v1297 = vrot.slane %v442, 2
        %v1298 = vrot.slane %v443, 2
        %v1299 = vrot.slane %v444, 2
        %v1300 = vrot.slane %v445, 2
        %vm1301 = vcmp.lt.s32.totalorder %v503, 6
        %v1302 = vsel %vm1301, %v1299, %v1300
        %v1303 = vsel %vm1301, %v1298, %v1299
        %v1304 = vsel %vm1301, %v1297, %v1298
        %v1305 = vsel %vm1301, %v1296, %v1297
        %v1306 = vsel %vm1301, %v1295, %v1296
        %v1307 = vsel %vm1301, %v1294, %v1295
        %v1308 = vsel %vm1301, %v1293, %v1294
        %v1309 = vsel %vm1301, %v1292, %v1293
        %v1310 = vsel %vm1301, %v1291, %v1292
        %v1311 = vsel %vm1301, %v1290, %v1291
        %v1312 = vsel %vm1301, %v1289, %v1290
        %v1313 = vsel %vm1301, %v1288, %v1289
        %v1314 = vsel %vm1301, %v1287, %v1288
        %v1315 = vsel %vm1301, %v1286, %v1287
        %v1316 = vsel %vm1301, %v1285, %v1286
        %v1317 = vsel %vm1301, %v1284, %v1285
        %v1318 = vsel %vm1301, %v1283, %v1284
        %v1319 = vsel %vm1301, %v1282, %v1283
        %v1320 = vsel %vm1301, %v1281, %v1282
        %v1321 = vsel %vm1301, %v1280, %v1281
        %v1322 = vsel %vm1301, %v1279, %v1280
        %v1323 = vsel %vm1301, %v1278, %v1279
        %v1324 = vsel %vm1301, %v1277, %v1278
        %v1325 = vsel %vm1301, %v1276, %v1277
        %v1326 = vsel %vm1301, %v1275, %v1276
        %v1327 = vsel %vm1301, %v1274, %v1275
        %v1328 = vsel %vm1301, %v1273, %v1274
        %v1329 = vsel %vm1301, %v1272, %v1273
        %v1330 = vsel %vm1301, %v1271, %v1272
        %v1331 = vsel %vm1301, %v1270, %v1271
        %v1332 = vsel %vm1301, %v1269, %v1270
        %v1333 = vsel %vm1301, %v1300, %v1269
        %s1334 = scalar_lea.vmem %s1, 384
        %v1335 = vld [vmem:[%s1334] sm:$0xff]
        %v1336 = vld [vmem:[%s1334 + $0x8] sm:$0xff]
        %v1337 = vld [vmem:[%s1334 + $0x10] sm:$0xff]
        %v1338 = vld [vmem:[%s1334 + $0x18] sm:$0xff]
        %v1339 = vld [vmem:[%s1334 + $0x20] sm:$0xff]
        %v1340 = vld [vmem:[%s1334 + $0x28] sm:$0xff]
        %v1341 = vld [vmem:[%s1334 + $0x30] sm:$0xff]
        %v1342 = vld [vmem:[%s1334 + $0x38] sm:$0xff]
        %v1343 = vld [vmem:[%s1334 + $0x40] sm:$0xff]
        %v1344 = vld [vmem:[%s1334 + $0x48] sm:$0xff]
        %v1345 = vld [vmem:[%s1334 + $0x50] sm:$0xff]
        %v1346 = vld [vmem:[%s1334 + $0x58] sm:$0xff]
        %v1347 = vld [vmem:[%s1334 + $0x60] sm:$0xff]
        %v1348 = vld [vmem:[%s1334 + $0x68] sm:$0xff]
        %v1349 = vld [vmem:[%s1334 + $0x70] sm:$0xff]
        %v1350 = vld [vmem:[%s1334 + $0x78] sm:$0xff]
        %v1351 = vld [vmem:[%s1334 + $0x80] sm:$0xff]
        %v1352 = vld [vmem:[%s1334 + $0x88] sm:$0xff]
        %v1353 = vld [vmem:[%s1334 + $0x90] sm:$0xff]
        %v1354 = vld [vmem:[%s1334 + $0x98] sm:$0xff]
        %v1355 = vld [vmem:[%s1334 + $0xa0] sm:$0xff]
        %v1356 = vld [vmem:[%s1334 + $0xa8] sm:$0xff]
        %v1357 = vld [vmem:[%s1334 + $0xb0] sm:$0xff]
        %v1358 = vld [vmem:[%s1334 + $0xb8] sm:$0xff]
        %v1360 = vsel %vm562, %v1332, 0
        %v1363 = vsel %vm562, %v1331, 0
        %v1366 = vsel %vm562, %v1330, 0
        %v1369 = vsel %vm562, %v1329, 0
        %v1372 = vsel %vm562, %v1328, 0
        %v1375 = vsel %vm562, %v1327, 0
        %v1378 = vsel %vm562, %v1326, 0
        %v1381 = vsel %vm562, %v1325, 0
        %v1384 = vsel %vm562, %v1324, 0
        %v1387 = vsel %vm562, %v1323, 0
        %v1390 = vsel %vm562, %v1322, 0
        %v1393 = vsel %vm562, %v1321, 0
        %v1396 = vsel %vm562, %v1320, 0
        %v1399 = vsel %vm562, %v1319, 0
        %v1402 = vsel %vm562, %v1318, 0
        %v1405 = vsel %vm562, %v1317, 0
        %v1408 = vsel %vm562, %v1316, 0
        %v1411 = vsel %vm562, %v1315, 0
        %v1414 = vsel %vm562, %v1314, 0
        %v1417 = vsel %vm562, %v1313, 0
        %v1420 = vsel %vm562, %v1312, 0
        %v1423 = vsel %vm562, %v1311, 0
        %v1426 = vsel %vm562, %v1310, 0
        %v1429 = vsel %vm562, %v1309, 0
        %v1432 = vsel %vm562, %v1308, 0
        %v1435 = vsel %vm562, %v1307, 0
        %v1438 = vsel %vm562, %v1306, 0
        %v1441 = vsel %vm562, %v1305, 0
        %v1444 = vsel %vm562, %v1304, 0
        %v1447 = vsel %vm562, %v1303, 0
        %v1450 = vsel %vm562, %v1302, 0
        %v1453 = vsel %vm562, %v1333, 0
        %1455 = vmatprep.subr.mxu0 0.0
        %1456 = vmatpush1.msra.mxu0 0.0
        %1457 = vmatprep.subr.mxu0 0.0
        %1458 = vmatpush1.msra.mxu0 0.0
        %1459 = vmatprep.subr.mxu0 0.0
        %1460 = vmatpush1.msra.mxu0 0.0
        %1461 = vmatprep.subr.mxu0 0.0
        %1462 = vmatpush1.msra.mxu0 0.0
        %1463 = vmatprep.subr.mxu0 %v1358
        %1464 = vmatpush1.msra.mxu0 %v1357
        %1465 = vmatprep.subr.mxu0 %v1356
        %1466 = vmatpush1.msra.mxu0 %v1355
        %1467 = vmatprep.subr.mxu0 %v1354
        %1468 = vmatpush1.msra.mxu0 %v1353
        %1469 = vmatprep.subr.mxu0 %v1352
        %1470 = vmatpush1.msra.mxu0 %v1351
        %1471 = vmatprep.subr.mxu0 %v1350
        %1472 = vmatpush1.msra.mxu0 %v1349
        %1473 = vmatprep.subr.mxu0 %v1348
        %1474 = vmatpush1.msra.mxu0 %v1347
        %1475 = vmatprep.subr.mxu0 %v1346
        %1476 = vmatpush1.msra.mxu0 %v1345
        %1477 = vmatprep.subr.mxu0 %v1344
        %1478 = vmatpush1.msra.mxu0 %v1343
        %1479 = vmatprep.subr.mxu0 %v1342
        %1480 = vmatpush1.msra.mxu0 %v1341
        %1481 = vmatprep.subr.mxu0 %v1340
        %1482 = vmatpush1.msra.mxu0 %v1339
        %1483 = vmatprep.subr.mxu0 %v1338
        %1484 = vmatpush1.msra.mxu0 %v1337
        %1485 = vmatprep.subr.mxu0 %v1336
        %1486 = vmatpush1.msra.mxu0 %v1335
        %1487 = vmatprep.subr.mxu0 0.0
        %1488 = vmatpush2.msra.mxu0 0.0
        %1489 = vmatprep.subr.mxu0 0.0
        %1490 = vmatpush2.msra.mxu0 0.0
        %1491 = vmatprep.subr.mxu0 0.0
        %1492 = vmatpush2.msra.mxu0 0.0
        %1493 = vmatprep.subr.mxu0 0.0
        %1494 = vmatpush2.msra.mxu0 0.0
        %1495 = vmatprep.subr.mxu0 0.0
        %1496 = vmatpush2.msra.mxu0 0.0
        %1497 = vmatprep.subr.mxu0 0.0
        %1498 = vmatpush2.msra.mxu0 0.0
        %1499 = vmatprep.subr.mxu0 0.0
        %1500 = vmatpush2.msra.mxu0 0.0
        %1501 = vmatprep.subr.mxu0 0.0
        %1502 = vmatpush2.msra.mxu0 0.0
        %1503 = vmatprep.subr.mxu0 0.0
        %1504 = vmatpush2.msra.mxu0 0.0
        %1505 = vmatprep.subr.mxu0 0.0
        %1506 = vmatpush2.msra.mxu0 0.0
        %1507 = vmatprep.subr.mxu0 0.0
        %1508 = vmatpush2.msra.mxu0 0.0
        %1509 = vmatprep.subr.mxu0 0.0
        %1510 = vmatpush2.msra.mxu0 0.0
        %1511 = vmatprep.subr.mxu0 0.0
        %1512 = vmatpush2.msra.mxu0 0.0
        %1513 = vmatprep.subr.mxu0 0.0
        %1514 = vmatpush2.msra.mxu0 0.0
        %1515 = vmatprep.subr.mxu0 0.0
        %1516 = vmatpush2.msra.mxu0 0.0
        %1517 = vmatprep.subr.mxu0 0.0
        %1518 = vmatpush2.msra.mxu0 0.0
        %1519 = vmatprep.mubr.f32.mxu0 0.0
        %1520 = vmatmul.mubr.f32.gmra.mxu0 %v1360
        %v1521 = vpop.f32.mrf.mxu0
        %v1522 = vadd.f32 0.0, %v1521
        %v1523 = vpop.f32.mrf.mxu0
        %v1524 = vadd.f32 0.0, %v1523
        %1525 = vmatprep.mubr.f32.mxu0 0.0
        %1526 = vmatmul.mubr.f32.gmra.mxu0 %v1363
        %v1527 = vpop.f32.mrf.mxu0
        %v1528 = vadd.f32 0.0, %v1527
        %v1529 = vpop.f32.mrf.mxu0
        %v1530 = vadd.f32 0.0, %v1529
        %1531 = vmatprep.mubr.f32.mxu0 0.0
        %1532 = vmatmul.mubr.f32.gmra.mxu0 %v1366
        %v1533 = vpop.f32.mrf.mxu0
        %v1534 = vadd.f32 0.0, %v1533
        %v1535 = vpop.f32.mrf.mxu0
        %v1536 = vadd.f32 0.0, %v1535
        %1537 = vmatprep.mubr.f32.mxu0 0.0
        %1538 = vmatmul.mubr.f32.gmra.mxu0 %v1369
        %v1539 = vpop.f32.mrf.mxu0
        %v1540 = vadd.f32 0.0, %v1539
        %v1541 = vpop.f32.mrf.mxu0
        %v1542 = vadd.f32 0.0, %v1541
        %1543 = vmatprep.mubr.f32.mxu0 0.0
        %1544 = vmatmul.mubr.f32.gmra.mxu0 %v1372
        %v1545 = vpop.f32.mrf.mxu0
        %v1546 = vadd.f32 0.0, %v1545
        %v1547 = vpop.f32.mrf.mxu0
        %v1548 = vadd.f32 0.0, %v1547
        %1549 = vmatprep.mubr.f32.mxu0 0.0
        %1550 = vmatmul.mubr.f32.gmra.mxu0 %v1375
        %v1551 = vpop.f32.mrf.mxu0
        %v1552 = vadd.f32 0.0, %v1551
        %v1553 = vpop.f32.mrf.mxu0
        %v1554 = vadd.f32 0.0, %v1553
        %1555 = vmatprep.mubr.f32.mxu0 0.0
        %1556 = vmatmul.mubr.f32.gmra.mxu0 %v1378
        %v1557 = vpop.f32.mrf.mxu0
        %v1558 = vadd.f32 0.0, %v1557
        %v1559 = vpop.f32.mrf.mxu0
        %v1560 = vadd.f32 0.0, %v1559
        %1561 = vmatprep.mubr.f32.mxu0 0.0
        %1562 = vmatmul.mubr.f32.gmra.mxu0 %v1381
        %v1563 = vpop.f32.mrf.mxu0
        %v1564 = vadd.f32 0.0, %v1563
        %v1565 = vpop.f32.mrf.mxu0
        %v1566 = vadd.f32 0.0, %v1565
        %1567 = vmatprep.mubr.f32.mxu0 0.0
        %1568 = vmatmul.mubr.f32.gmra.mxu0 %v1384
        %v1569 = vpop.f32.mrf.mxu0
        %v1570 = vadd.f32 0.0, %v1569
        %v1571 = vpop.f32.mrf.mxu0
        %v1572 = vadd.f32 0.0, %v1571
        %1573 = vmatprep.mubr.f32.mxu0 0.0
        %1574 = vmatmul.mubr.f32.gmra.mxu0 %v1387
        %v1575 = vpop.f32.mrf.mxu0
        %v1576 = vadd.f32 0.0, %v1575
        %v1577 = vpop.f32.mrf.mxu0
        %v1578 = vadd.f32 0.0, %v1577
        %1579 = vmatprep.mubr.f32.mxu0 0.0
        %1580 = vmatmul.mubr.f32.gmra.mxu0 %v1390
        %v1581 = vpop.f32.mrf.mxu0
        %v1582 = vadd.f32 0.0, %v1581
        %v1583 = vpop.f32.mrf.mxu0
        %v1584 = vadd.f32 0.0, %v1583
        %1585 = vmatprep.mubr.f32.mxu0 0.0
        %1586 = vmatmul.mubr.f32.gmra.mxu0 %v1393
        %v1587 = vpop.f32.mrf.mxu0
        %v1588 = vadd.f32 0.0, %v1587
        %v1589 = vpop.f32.mrf.mxu0
        %v1590 = vadd.f32 0.0, %v1589
        %1591 = vmatprep.mubr.f32.mxu0 0.0
        %1592 = vmatmul.mubr.f32.gmra.mxu0 %v1396
        %v1593 = vpop.f32.mrf.mxu0
        %v1594 = vadd.f32 0.0, %v1593
        %v1595 = vpop.f32.mrf.mxu0
        %v1596 = vadd.f32 0.0, %v1595
        %1597 = vmatprep.mubr.f32.mxu0 0.0
        %1598 = vmatmul.mubr.f32.gmra.mxu0 %v1399
        %v1599 = vpop.f32.mrf.mxu0
        %v1600 = vadd.f32 0.0, %v1599
        %v1601 = vpop.f32.mrf.mxu0
        %v1602 = vadd.f32 0.0, %v1601
        %1603 = vmatprep.mubr.f32.mxu0 0.0
        %1604 = vmatmul.mubr.f32.gmra.mxu0 %v1402
        %v1605 = vpop.f32.mrf.mxu0
        %v1606 = vadd.f32 0.0, %v1605
        %v1607 = vpop.f32.mrf.mxu0
        %v1608 = vadd.f32 0.0, %v1607
        %1609 = vmatprep.mubr.f32.mxu0 0.0
        %1610 = vmatmul.mubr.f32.gmra.mxu0 %v1405
        %v1611 = vpop.f32.mrf.mxu0
        %v1612 = vadd.f32 0.0, %v1611
        %v1613 = vpop.f32.mrf.mxu0
        %v1614 = vadd.f32 0.0, %v1613
        %1615 = vmatprep.mubr.f32.mxu0 0.0
        %1616 = vmatmul.mubr.f32.gmra.mxu0 %v1408
        %v1617 = vpop.f32.mrf.mxu0
        %v1618 = vadd.f32 0.0, %v1617
        %v1619 = vpop.f32.mrf.mxu0
        %v1620 = vadd.f32 0.0, %v1619
        %1621 = vmatprep.mubr.f32.mxu0 0.0
        %1622 = vmatmul.mubr.f32.gmra.mxu0 %v1411
        %v1623 = vpop.f32.mrf.mxu0
        %v1624 = vadd.f32 0.0, %v1623
        %v1625 = vpop.f32.mrf.mxu0
        %v1626 = vadd.f32 0.0, %v1625
        %1627 = vmatprep.mubr.f32.mxu0 0.0
        %1628 = vmatmul.mubr.f32.gmra.mxu0 %v1414
        %v1629 = vpop.f32.mrf.mxu0
        %v1630 = vadd.f32 0.0, %v1629
        %v1631 = vpop.f32.mrf.mxu0
        %v1632 = vadd.f32 0.0, %v1631
        %1633 = vmatprep.mubr.f32.mxu0 0.0
        %1634 = vmatmul.mubr.f32.gmra.mxu0 %v1417
        %v1635 = vpop.f32.mrf.mxu0
        %v1636 = vadd.f32 0.0, %v1635
        %v1637 = vpop.f32.mrf.mxu0
        %v1638 = vadd.f32 0.0, %v1637
        %1639 = vmatprep.mubr.f32.mxu0 0.0
        %1640 = vmatmul.mubr.f32.gmra.mxu0 %v1420
        %v1641 = vpop.f32.mrf.mxu0
        %v1642 = vadd.f32 0.0, %v1641
        %v1643 = vpop.f32.mrf.mxu0
        %v1644 = vadd.f32 0.0, %v1643
        %1645 = vmatprep.mubr.f32.mxu0 0.0
        %1646 = vmatmul.mubr.f32.gmra.mxu0 %v1423
        %v1647 = vpop.f32.mrf.mxu0
        %v1648 = vadd.f32 0.0, %v1647
        %v1649 = vpop.f32.mrf.mxu0
        %v1650 = vadd.f32 0.0, %v1649
        %1651 = vmatprep.mubr.f32.mxu0 0.0
        %1652 = vmatmul.mubr.f32.gmra.mxu0 %v1426
        %v1653 = vpop.f32.mrf.mxu0
        %v1654 = vadd.f32 0.0, %v1653
        %v1655 = vpop.f32.mrf.mxu0
        %v1656 = vadd.f32 0.0, %v1655
        %1657 = vmatprep.mubr.f32.mxu0 0.0
        %1658 = vmatmul.mubr.f32.gmra.mxu0 %v1429
        %v1659 = vpop.f32.mrf.mxu0
        %v1660 = vadd.f32 0.0, %v1659
        %v1661 = vpop.f32.mrf.mxu0
        %v1662 = vadd.f32 0.0, %v1661
        %1663 = vmatprep.mubr.f32.mxu0 0.0
        %1664 = vmatmul.mubr.f32.gmra.mxu0 %v1432
        %v1665 = vpop.f32.mrf.mxu0
        %v1666 = vadd.f32 0.0, %v1665
        %v1667 = vpop.f32.mrf.mxu0
        %v1668 = vadd.f32 0.0, %v1667
        %1669 = vmatprep.mubr.f32.mxu0 0.0
        %1670 = vmatmul.mubr.f32.gmra.mxu0 %v1435
        %v1671 = vpop.f32.mrf.mxu0
        %v1672 = vadd.f32 0.0, %v1671
        %v1673 = vpop.f32.mrf.mxu0
        %v1674 = vadd.f32 0.0, %v1673
        %1675 = vmatprep.mubr.f32.mxu0 0.0
        %1676 = vmatmul.mubr.f32.gmra.mxu0 %v1438
        %v1677 = vpop.f32.mrf.mxu0
        %v1678 = vadd.f32 0.0, %v1677
        %v1679 = vpop.f32.mrf.mxu0
        %v1680 = vadd.f32 0.0, %v1679
        %1681 = vmatprep.mubr.f32.mxu0 0.0
        %1682 = vmatmul.mubr.f32.gmra.mxu0 %v1441
        %v1683 = vpop.f32.mrf.mxu0
        %v1684 = vadd.f32 0.0, %v1683
        %v1685 = vpop.f32.mrf.mxu0
        %v1686 = vadd.f32 0.0, %v1685
        %1687 = vmatprep.mubr.f32.mxu0 0.0
        %1688 = vmatmul.mubr.f32.gmra.mxu0 %v1444
        %v1689 = vpop.f32.mrf.mxu0
        %v1690 = vadd.f32 0.0, %v1689
        %v1691 = vpop.f32.mrf.mxu0
        %v1692 = vadd.f32 0.0, %v1691
        %1693 = vmatprep.mubr.f32.mxu0 0.0
        %1694 = vmatmul.mubr.f32.gmra.mxu0 %v1447
        %v1695 = vpop.f32.mrf.mxu0
        %v1696 = vadd.f32 0.0, %v1695
        %v1697 = vpop.f32.mrf.mxu0
        %v1698 = vadd.f32 0.0, %v1697
        %1699 = vmatprep.mubr.f32.mxu0 0.0
        %1700 = vmatmul.mubr.f32.gmra.mxu0 %v1450
        %v1701 = vpop.f32.mrf.mxu0
        %v1702 = vadd.f32 0.0, %v1701
        %v1703 = vpop.f32.mrf.mxu0
        %v1704 = vadd.f32 0.0, %v1703
        %1705 = vmatprep.mubr.f32.mxu0 0.0
        %1706 = vmatmul.mubr.f32.gmra.mxu0 %v1453
        %v1707 = vpop.f32.mrf.mxu0
        %v1708 = vadd.f32 0.0, %v1707
        %v1709 = vpop.f32.mrf.mxu0
        %v1710 = vadd.f32 0.0, %v1709
        %1711 = vdwg.mxu0
        %v1712 = vadd.f32 %v1079, %v1522
        %v1713 = vadd.f32 %v1081, %v1524
        %v1714 = vadd.f32 %v1085, %v1528
        %v1715 = vadd.f32 %v1087, %v1530
        %v1716 = vadd.f32 %v1091, %v1534
        %v1717 = vadd.f32 %v1093, %v1536
        %v1718 = vadd.f32 %v1097, %v1540
        %v1719 = vadd.f32 %v1099, %v1542
        %v1720 = vadd.f32 %v1103, %v1546
        %v1721 = vadd.f32 %v1105, %v1548
        %v1722 = vadd.f32 %v1109, %v1552
        %v1723 = vadd.f32 %v1111, %v1554
        %v1724 = vadd.f32 %v1115, %v1558
        %v1725 = vadd.f32 %v1117, %v1560
        %v1726 = vadd.f32 %v1121, %v1564
        %v1727 = vadd.f32 %v1123, %v1566
        %v1728 = vadd.f32 %v1127, %v1570
        %v1729 = vadd.f32 %v1129, %v1572
        %v1730 = vadd.f32 %v1133, %v1576
        %v1731 = vadd.f32 %v1135, %v1578
        %v1732 = vadd.f32 %v1139, %v1582
        %v1733 = vadd.f32 %v1141, %v1584
        %v1734 = vadd.f32 %v1145, %v1588
        %v1735 = vadd.f32 %v1147, %v1590
        %v1736 = vadd.f32 %v1151, %v1594
        %v1737 = vadd.f32 %v1153, %v1596
        %v1738 = vadd.f32 %v1157, %v1600
        %v1739 = vadd.f32 %v1159, %v1602
        %v1740 = vadd.f32 %v1163, %v1606
        %v1741 = vadd.f32 %v1165, %v1608
        %v1742 = vadd.f32 %v1169, %v1612
        %v1743 = vadd.f32 %v1171, %v1614
        %v1744 = vadd.f32 %v1175, %v1618
        %v1745 = vadd.f32 %v1177, %v1620
        %v1746 = vadd.f32 %v1181, %v1624
        %v1747 = vadd.f32 %v1183, %v1626
        %v1748 = vadd.f32 %v1187, %v1630
        %v1749 = vadd.f32 %v1189, %v1632
        %v1750 = vadd.f32 %v1193, %v1636
        %v1751 = vadd.f32 %v1195, %v1638
        %v1752 = vadd.f32 %v1199, %v1642
        %v1753 = vadd.f32 %v1201, %v1644
        %v1754 = vadd.f32 %v1205, %v1648
        %v1755 = vadd.f32 %v1207, %v1650
        %v1756 = vadd.f32 %v1211, %v1654
        %v1757 = vadd.f32 %v1213, %v1656
        %v1758 = vadd.f32 %v1217, %v1660
        %v1759 = vadd.f32 %v1219, %v1662
        %v1760 = vadd.f32 %v1223, %v1666
        %v1761 = vadd.f32 %v1225, %v1668
        %v1762 = vadd.f32 %v1229, %v1672
        %v1763 = vadd.f32 %v1231, %v1674
        %v1764 = vadd.f32 %v1235, %v1678
        %v1765 = vadd.f32 %v1237, %v1680
        %v1766 = vadd.f32 %v1241, %v1684
        %v1767 = vadd.f32 %v1243, %v1686
        %v1768 = vadd.f32 %v1247, %v1690
        %v1769 = vadd.f32 %v1249, %v1692
        %v1770 = vadd.f32 %v1253, %v1696
        %v1771 = vadd.f32 %v1255, %v1698
        %v1772 = vadd.f32 %v1259, %v1702
        %v1773 = vadd.f32 %v1261, %v1704
        %v1774 = vadd.f32 %v1265, %v1708
        %v1775 = vadd.f32 %v1267, %v1710
        %v1776 = vrot.slane %v414, 3
        %v1777 = vrot.slane %v415, 3
        %v1778 = vrot.slane %v416, 3
        %v1779 = vrot.slane %v417, 3
        %v1780 = vrot.slane %v418, 3
        %v1781 = vrot.slane %v419, 3
        %v1782 = vrot.slane %v420, 3
        %v1783 = vrot.slane %v421, 3
        %v1784 = vrot.slane %v422, 3
        %v1785 = vrot.slane %v423, 3
        %v1786 = vrot.slane %v424, 3
        %v1787 = vrot.slane %v425, 3
        %v1788 = vrot.slane %v426, 3
        %v1789 = vrot.slane %v427, 3
        %v1790 = vrot.slane %v428, 3
        %v1791 = vrot.slane %v429, 3
        %v1792 = vrot.slane %v430, 3
        %v1793 = vrot.slane %v431, 3
        %v1794 = vrot.slane %v432, 3
        %v1795 = vrot.slane %v433, 3
        %v1796 = vrot.slane %v434, 3
        %v1797 = vrot.slane %v435, 3
        %v1798 = vrot.slane %v436, 3
        %v1799 = vrot.slane %v437, 3
        %v1800 = vrot.slane %v438, 3
        %v1801 = vrot.slane %v439, 3
        %v1802 = vrot.slane %v440, 3
        %v1803 = vrot.slane %v441, 3
        %v1804 = vrot.slane %v442, 3
        %v1805 = vrot.slane %v443, 3
        %v1806 = vrot.slane %v444, 3
        %v1807 = vrot.slane %v445, 3
        %vm1808 = vcmp.lt.s32.totalorder %v503, 5
        %v1809 = vsel %vm1808, %v1806, %v1807
        %v1810 = vsel %vm1808, %v1805, %v1806
        %v1811 = vsel %vm1808, %v1804, %v1805
        %v1812 = vsel %vm1808, %v1803, %v1804
        %v1813 = vsel %vm1808, %v1802, %v1803
        %v1814 = vsel %vm1808, %v1801, %v1802
        %v1815 = vsel %vm1808, %v1800, %v1801
        %v1816 = vsel %vm1808, %v1799, %v1800
        %v1817 = vsel %vm1808, %v1798, %v1799
        %v1818 = vsel %vm1808, %v1797, %v1798
        %v1819 = vsel %vm1808, %v1796, %v1797
        %v1820 = vsel %vm1808, %v1795, %v1796
        %v1821 = vsel %vm1808, %v1794, %v1795
        %v1822 = vsel %vm1808, %v1793, %v1794
        %v1823 = vsel %vm1808, %v1792, %v1793
        %v1824 = vsel %vm1808, %v1791, %v1792
        %v1825 = vsel %vm1808, %v1790, %v1791
        %v1826 = vsel %vm1808, %v1789, %v1790
        %v1827 = vsel %vm1808, %v1788, %v1789
        %v1828 = vsel %vm1808, %v1787, %v1788
        %v1829 = vsel %vm1808, %v1786, %v1787
        %v1830 = vsel %vm1808, %v1785, %v1786
        %v1831 = vsel %vm1808, %v1784, %v1785
        %v1832 = vsel %vm1808, %v1783, %v1784
        %v1833 = vsel %vm1808, %v1782, %v1783
        %v1834 = vsel %vm1808, %v1781, %v1782
        %v1835 = vsel %vm1808, %v1780, %v1781
        %v1836 = vsel %vm1808, %v1779, %v1780
        %v1837 = vsel %vm1808, %v1778, %v1779
        %v1838 = vsel %vm1808, %v1777, %v1778
        %v1839 = vsel %vm1808, %v1776, %v1777
        %v1840 = vsel %vm1808, %v1807, %v1776
        %s1841 = scalar_lea.vmem %s1, 576
        %v1842 = vld [vmem:[%s1841] sm:$0xff]
        %v1843 = vld [vmem:[%s1841 + $0x8] sm:$0xff]
        %v1844 = vld [vmem:[%s1841 + $0x10] sm:$0xff]
        %v1845 = vld [vmem:[%s1841 + $0x18] sm:$0xff]
        %v1846 = vld [vmem:[%s1841 + $0x20] sm:$0xff]
        %v1847 = vld [vmem:[%s1841 + $0x28] sm:$0xff]
        %v1848 = vld [vmem:[%s1841 + $0x30] sm:$0xff]
        %v1849 = vld [vmem:[%s1841 + $0x38] sm:$0xff]
        %v1850 = vld [vmem:[%s1841 + $0x40] sm:$0xff]
        %v1851 = vld [vmem:[%s1841 + $0x48] sm:$0xff]
        %v1852 = vld [vmem:[%s1841 + $0x50] sm:$0xff]
        %v1853 = vld [vmem:[%s1841 + $0x58] sm:$0xff]
        %v1854 = vld [vmem:[%s1841 + $0x60] sm:$0xff]
        %v1855 = vld [vmem:[%s1841 + $0x68] sm:$0xff]
        %v1856 = vld [vmem:[%s1841 + $0x70] sm:$0xff]
        %v1857 = vld [vmem:[%s1841 + $0x78] sm:$0xff]
        %v1858 = vld [vmem:[%s1841 + $0x80] sm:$0xff]
        %v1859 = vld [vmem:[%s1841 + $0x88] sm:$0xff]
        %v1860 = vld [vmem:[%s1841 + $0x90] sm:$0xff]
        %v1861 = vld [vmem:[%s1841 + $0x98] sm:$0xff]
        %v1862 = vld [vmem:[%s1841 + $0xa0] sm:$0xff]
        %v1863 = vld [vmem:[%s1841 + $0xa8] sm:$0xff]
        %v1864 = vld [vmem:[%s1841 + $0xb0] sm:$0xff]
        %v1865 = vld [vmem:[%s1841 + $0xb8] sm:$0xff]
        %v1867 = vsel %vm562, %v1839, 0
        %v1870 = vsel %vm562, %v1838, 0
        %v1873 = vsel %vm562, %v1837, 0
        %v1876 = vsel %vm562, %v1836, 0
        %v1879 = vsel %vm562, %v1835, 0
        %v1882 = vsel %vm562, %v1834, 0
        %v1885 = vsel %vm562, %v1833, 0
        %v1888 = vsel %vm562, %v1832, 0
        %v1891 = vsel %vm562, %v1831, 0
        %v1894 = vsel %vm562, %v1830, 0
        %v1897 = vsel %vm562, %v1829, 0
        %v1900 = vsel %vm562, %v1828, 0
        %v1903 = vsel %vm562, %v1827, 0
        %v1906 = vsel %vm562, %v1826, 0
        %v1909 = vsel %vm562, %v1825, 0
        %v1912 = vsel %vm562, %v1824, 0
        %v1915 = vsel %vm562, %v1823, 0
        %v1918 = vsel %vm562, %v1822, 0
        %v1921 = vsel %vm562, %v1821, 0
        %v1924 = vsel %vm562, %v1820, 0
        %v1927 = vsel %vm562, %v1819, 0
        %v1930 = vsel %vm562, %v1818, 0
        %v1933 = vsel %vm562, %v1817, 0
        %v1936 = vsel %vm562, %v1816, 0
        %v1939 = vsel %vm562, %v1815, 0
        %v1942 = vsel %vm562, %v1814, 0
        %v1945 = vsel %vm562, %v1813, 0
        %v1948 = vsel %vm562, %v1812, 0
        %v1951 = vsel %vm562, %v1811, 0
        %v1954 = vsel %vm562, %v1810, 0
        %v1957 = vsel %vm562, %v1809, 0
        %v1960 = vsel %vm562, %v1840, 0
        %1962 = vmatprep.subr.mxu0 0.0
        %1963 = vmatpush1.msra.mxu0 0.0
        %1964 = vmatprep.subr.mxu0 0.0
        %1965 = vmatpush1.msra.mxu0 0.0
        %1966 = vmatprep.subr.mxu0 0.0
        %1967 = vmatpush1.msra.mxu0 0.0
        %1968 = vmatprep.subr.mxu0 0.0
        %1969 = vmatpush1.msra.mxu0 0.0
        %1970 = vmatprep.subr.mxu0 %v1865
        %1971 = vmatpush1.msra.mxu0 %v1864
        %1972 = vmatprep.subr.mxu0 %v1863
        %1973 = vmatpush1.msra.mxu0 %v1862
        %1974 = vmatprep.subr.mxu0 %v1861
        %1975 = vmatpush1.msra.mxu0 %v1860
        %1976 = vmatprep.subr.mxu0 %v1859
        %1977 = vmatpush1.msra.mxu0 %v1858
        %1978 = vmatprep.subr.mxu0 %v1857
        %1979 = vmatpush1.msra.mxu0 %v1856
        %1980 = vmatprep.subr.mxu0 %v1855
        %1981 = vmatpush1.msra.mxu0 %v1854
        %1982 = vmatprep.subr.mxu0 %v1853
        %1983 = vmatpush1.msra.mxu0 %v1852
        %1984 = vmatprep.subr.mxu0 %v1851
        %1985 = vmatpush1.msra.mxu0 %v1850
        %1986 = vmatprep.subr.mxu0 %v1849
        %1987 = vmatpush1.msra.mxu0 %v1848
        %1988 = vmatprep.subr.mxu0 %v1847
        %1989 = vmatpush1.msra.mxu0 %v1846
        %1990 = vmatprep.subr.mxu0 %v1845
        %1991 = vmatpush1.msra.mxu0 %v1844
        %1992 = vmatprep.subr.mxu0 %v1843
        %1993 = vmatpush1.msra.mxu0 %v1842
        %1994 = vmatprep.subr.mxu0 0.0
        %1995 = vmatpush2.msra.mxu0 0.0
        %1996 = vmatprep.subr.mxu0 0.0
        %1997 = vmatpush2.msra.mxu0 0.0
        %1998 = vmatprep.subr.mxu0 0.0
        %1999 = vmatpush2.msra.mxu0 0.0
        %2000 = vmatprep.subr.mxu0 0.0
        %2001 = vmatpush2.msra.mxu0 0.0
        %2002 = vmatprep.subr.mxu0 0.0
        %2003 = vmatpush2.msra.mxu0 0.0
        %2004 = vmatprep.subr.mxu0 0.0
        %2005 = vmatpush2.msra.mxu0 0.0
        %2006 = vmatprep.subr.mxu0 0.0
        %2007 = vmatpush2.msra.mxu0 0.0
        %2008 = vmatprep.subr.mxu0 0.0
        %2009 = vmatpush2.msra.mxu0 0.0
        %2010 = vmatprep.subr.mxu0 0.0
        %2011 = vmatpush2.msra.mxu0 0.0
        %2012 = vmatprep.subr.mxu0 0.0
        %2013 = vmatpush2.msra.mxu0 0.0
        %2014 = vmatprep.subr.mxu0 0.0
        %2015 = vmatpush2.msra.mxu0 0.0
        %2016 = vmatprep.subr.mxu0 0.0
        %2017 = vmatpush2.msra.mxu0 0.0
        %2018 = vmatprep.subr.mxu0 0.0
        %2019 = vmatpush2.msra.mxu0 0.0
        %2020 = vmatprep.subr.mxu0 0.0
        %2021 = vmatpush2.msra.mxu0 0.0
        %2022 = vmatprep.subr.mxu0 0.0
        %2023 = vmatpush2.msra.mxu0 0.0
        %2024 = vmatprep.subr.mxu0 0.0
        %2025 = vmatpush2.msra.mxu0 0.0
        %2026 = vmatprep.mubr.f32.mxu0 0.0
        %2027 = vmatmul.mubr.f32.gmra.mxu0 %v1867
        %v2028 = vpop.f32.mrf.mxu0
        %v2029 = vadd.f32 0.0, %v2028
        %v2030 = vpop.f32.mrf.mxu0
        %v2031 = vadd.f32 0.0, %v2030
        %2032 = vmatprep.mubr.f32.mxu0 0.0
        %2033 = vmatmul.mubr.f32.gmra.mxu0 %v1870
        %v2034 = vpop.f32.mrf.mxu0
        %v2035 = vadd.f32 0.0, %v2034
        %v2036 = vpop.f32.mrf.mxu0
        %v2037 = vadd.f32 0.0, %v2036
        %2038 = vmatprep.mubr.f32.mxu0 0.0
        %2039 = vmatmul.mubr.f32.gmra.mxu0 %v1873
        %v2040 = vpop.f32.mrf.mxu0
        %v2041 = vadd.f32 0.0, %v2040
        %v2042 = vpop.f32.mrf.mxu0
        %v2043 = vadd.f32 0.0, %v2042
        %2044 = vmatprep.mubr.f32.mxu0 0.0
        %2045 = vmatmul.mubr.f32.gmra.mxu0 %v1876
        %v2046 = vpop.f32.mrf.mxu0
        %v2047 = vadd.f32 0.0, %v2046
        %v2048 = vpop.f32.mrf.mxu0
        %v2049 = vadd.f32 0.0, %v2048
        %2050 = vmatprep.mubr.f32.mxu0 0.0
        %2051 = vmatmul.mubr.f32.gmra.mxu0 %v1879
        %v2052 = vpop.f32.mrf.mxu0
        %v2053 = vadd.f32 0.0, %v2052
        %v2054 = vpop.f32.mrf.mxu0
        %v2055 = vadd.f32 0.0, %v2054
        %2056 = vmatprep.mubr.f32.mxu0 0.0
        %2057 = vmatmul.mubr.f32.gmra.mxu0 %v1882
        %v2058 = vpop.f32.mrf.mxu0
        %v2059 = vadd.f32 0.0, %v2058
        %v2060 = vpop.f32.mrf.mxu0
        %v2061 = vadd.f32 0.0, %v2060
        %2062 = vmatprep.mubr.f32.mxu0 0.0
        %2063 = vmatmul.mubr.f32.gmra.mxu0 %v1885
        %v2064 = vpop.f32.mrf.mxu0
        %v2065 = vadd.f32 0.0, %v2064
        %v2066 = vpop.f32.mrf.mxu0
        %v2067 = vadd.f32 0.0, %v2066
        %2068 = vmatprep.mubr.f32.mxu0 0.0
        %2069 = vmatmul.mubr.f32.gmra.mxu0 %v1888
        %v2070 = vpop.f32.mrf.mxu0
        %v2071 = vadd.f32 0.0, %v2070
        %v2072 = vpop.f32.mrf.mxu0
        %v2073 = vadd.f32 0.0, %v2072
        %2074 = vmatprep.mubr.f32.mxu0 0.0
        %2075 = vmatmul.mubr.f32.gmra.mxu0 %v1891
        %v2076 = vpop.f32.mrf.mxu0
        %v2077 = vadd.f32 0.0, %v2076
        %v2078 = vpop.f32.mrf.mxu0
        %v2079 = vadd.f32 0.0, %v2078
        %2080 = vmatprep.mubr.f32.mxu0 0.0
        %2081 = vmatmul.mubr.f32.gmra.mxu0 %v1894
        %v2082 = vpop.f32.mrf.mxu0
        %v2083 = vadd.f32 0.0, %v2082
        %v2084 = vpop.f32.mrf.mxu0
        %v2085 = vadd.f32 0.0, %v2084
        %2086 = vmatprep.mubr.f32.mxu0 0.0
        %2087 = vmatmul.mubr.f32.gmra.mxu0 %v1897
        %v2088 = vpop.f32.mrf.mxu0
        %v2089 = vadd.f32 0.0, %v2088
        %v2090 = vpop.f32.mrf.mxu0
        %v2091 = vadd.f32 0.0, %v2090
        %2092 = vmatprep.mubr.f32.mxu0 0.0
        %2093 = vmatmul.mubr.f32.gmra.mxu0 %v1900
        %v2094 = vpop.f32.mrf.mxu0
        %v2095 = vadd.f32 0.0, %v2094
        %v2096 = vpop.f32.mrf.mxu0
        %v2097 = vadd.f32 0.0, %v2096
        %2098 = vmatprep.mubr.f32.mxu0 0.0
        %2099 = vmatmul.mubr.f32.gmra.mxu0 %v1903
        %v2100 = vpop.f32.mrf.mxu0
        %v2101 = vadd.f32 0.0, %v2100
        %v2102 = vpop.f32.mrf.mxu0
        %v2103 = vadd.f32 0.0, %v2102
        %2104 = vmatprep.mubr.f32.mxu0 0.0
        %2105 = vmatmul.mubr.f32.gmra.mxu0 %v1906
        %v2106 = vpop.f32.mrf.mxu0
        %v2107 = vadd.f32 0.0, %v2106
        %v2108 = vpop.f32.mrf.mxu0
        %v2109 = vadd.f32 0.0, %v2108
        %2110 = vmatprep.mubr.f32.mxu0 0.0
        %2111 = vmatmul.mubr.f32.gmra.mxu0 %v1909
        %v2112 = vpop.f32.mrf.mxu0
        %v2113 = vadd.f32 0.0, %v2112
        %v2114 = vpop.f32.mrf.mxu0
        %v2115 = vadd.f32 0.0, %v2114
        %2116 = vmatprep.mubr.f32.mxu0 0.0
        %2117 = vmatmul.mubr.f32.gmra.mxu0 %v1912
        %v2118 = vpop.f32.mrf.mxu0
        %v2119 = vadd.f32 0.0, %v2118
        %v2120 = vpop.f32.mrf.mxu0
        %v2121 = vadd.f32 0.0, %v2120
        %2122 = vmatprep.mubr.f32.mxu0 0.0
        %2123 = vmatmul.mubr.f32.gmra.mxu0 %v1915
        %v2124 = vpop.f32.mrf.mxu0
        %v2125 = vadd.f32 0.0, %v2124
        %v2126 = vpop.f32.mrf.mxu0
        %v2127 = vadd.f32 0.0, %v2126
        %2128 = vmatprep.mubr.f32.mxu0 0.0
        %2129 = vmatmul.mubr.f32.gmra.mxu0 %v1918
        %v2130 = vpop.f32.mrf.mxu0
        %v2131 = vadd.f32 0.0, %v2130
        %v2132 = vpop.f32.mrf.mxu0
        %v2133 = vadd.f32 0.0, %v2132
        %2134 = vmatprep.mubr.f32.mxu0 0.0
        %2135 = vmatmul.mubr.f32.gmra.mxu0 %v1921
        %v2136 = vpop.f32.mrf.mxu0
        %v2137 = vadd.f32 0.0, %v2136
        %v2138 = vpop.f32.mrf.mxu0
        %v2139 = vadd.f32 0.0, %v2138
        %2140 = vmatprep.mubr.f32.mxu0 0.0
        %2141 = vmatmul.mubr.f32.gmra.mxu0 %v1924
        %v2142 = vpop.f32.mrf.mxu0
        %v2143 = vadd.f32 0.0, %v2142
        %v2144 = vpop.f32.mrf.mxu0
        %v2145 = vadd.f32 0.0, %v2144
        %2146 = vmatprep.mubr.f32.mxu0 0.0
        %2147 = vmatmul.mubr.f32.gmra.mxu0 %v1927
        %v2148 = vpop.f32.mrf.mxu0
        %v2149 = vadd.f32 0.0, %v2148
        %v2150 = vpop.f32.mrf.mxu0
        %v2151 = vadd.f32 0.0, %v2150
        %2152 = vmatprep.mubr.f32.mxu0 0.0
        %2153 = vmatmul.mubr.f32.gmra.mxu0 %v1930
        %v2154 = vpop.f32.mrf.mxu0
        %v2155 = vadd.f32 0.0, %v2154
        %v2156 = vpop.f32.mrf.mxu0
        %v2157 = vadd.f32 0.0, %v2156
        %2158 = vmatprep.mubr.f32.mxu0 0.0
        %2159 = vmatmul.mubr.f32.gmra.mxu0 %v1933
        %v2160 = vpop.f32.mrf.mxu0
        %v2161 = vadd.f32 0.0, %v2160
        %v2162 = vpop.f32.mrf.mxu0
        %v2163 = vadd.f32 0.0, %v2162
        %2164 = vmatprep.mubr.f32.mxu0 0.0
        %2165 = vmatmul.mubr.f32.gmra.mxu0 %v1936
        %v2166 = vpop.f32.mrf.mxu0
        %v2167 = vadd.f32 0.0, %v2166
        %v2168 = vpop.f32.mrf.mxu0
        %v2169 = vadd.f32 0.0, %v2168
        %2170 = vmatprep.mubr.f32.mxu0 0.0
        %2171 = vmatmul.mubr.f32.gmra.mxu0 %v1939
        %v2172 = vpop.f32.mrf.mxu0
        %v2173 = vadd.f32 0.0, %v2172
        %v2174 = vpop.f32.mrf.mxu0
        %v2175 = vadd.f32 0.0, %v2174
        %2176 = vmatprep.mubr.f32.mxu0 0.0
        %2177 = vmatmul.mubr.f32.gmra.mxu0 %v1942
        %v2178 = vpop.f32.mrf.mxu0
        %v2179 = vadd.f32 0.0, %v2178
        %v2180 = vpop.f32.mrf.mxu0
        %v2181 = vadd.f32 0.0, %v2180
        %2182 = vmatprep.mubr.f32.mxu0 0.0
        %2183 = vmatmul.mubr.f32.gmra.mxu0 %v1945
        %v2184 = vpop.f32.mrf.mxu0
        %v2185 = vadd.f32 0.0, %v2184
        %v2186 = vpop.f32.mrf.mxu0
        %v2187 = vadd.f32 0.0, %v2186
        %2188 = vmatprep.mubr.f32.mxu0 0.0
        %2189 = vmatmul.mubr.f32.gmra.mxu0 %v1948
        %v2190 = vpop.f32.mrf.mxu0
        %v2191 = vadd.f32 0.0, %v2190
        %v2192 = vpop.f32.mrf.mxu0
        %v2193 = vadd.f32 0.0, %v2192
        %2194 = vmatprep.mubr.f32.mxu0 0.0
        %2195 = vmatmul.mubr.f32.gmra.mxu0 %v1951
        %v2196 = vpop.f32.mrf.mxu0
        %v2197 = vadd.f32 0.0, %v2196
        %v2198 = vpop.f32.mrf.mxu0
        %v2199 = vadd.f32 0.0, %v2198
        %2200 = vmatprep.mubr.f32.mxu0 0.0
        %2201 = vmatmul.mubr.f32.gmra.mxu0 %v1954
        %v2202 = vpop.f32.mrf.mxu0
        %v2203 = vadd.f32 0.0, %v2202
        %v2204 = vpop.f32.mrf.mxu0
        %v2205 = vadd.f32 0.0, %v2204
        %2206 = vmatprep.mubr.f32.mxu0 0.0
        %2207 = vmatmul.mubr.f32.gmra.mxu0 %v1957
        %v2208 = vpop.f32.mrf.mxu0
        %v2209 = vadd.f32 0.0, %v2208
        %v2210 = vpop.f32.mrf.mxu0
        %v2211 = vadd.f32 0.0, %v2210
        %2212 = vmatprep.mubr.f32.mxu0 0.0
        %2213 = vmatmul.mubr.f32.gmra.mxu0 %v1960
        %v2214 = vpop.f32.mrf.mxu0
        %v2215 = vadd.f32 0.0, %v2214
        %v2216 = vpop.f32.mrf.mxu0
        %v2217 = vadd.f32 0.0, %v2216
        %2218 = vdwg.mxu0
        %v2219 = vadd.f32 %v1712, %v2029
        %v2220 = vadd.f32 %v1713, %v2031
        %v2221 = vadd.f32 %v1714, %v2035
        %v2222 = vadd.f32 %v1715, %v2037
        %v2223 = vadd.f32 %v1716, %v2041
        %v2224 = vadd.f32 %v1717, %v2043
        %v2225 = vadd.f32 %v1718, %v2047
        %v2226 = vadd.f32 %v1719, %v2049
        %v2227 = vadd.f32 %v1720, %v2053
        %v2228 = vadd.f32 %v1721, %v2055
        %v2229 = vadd.f32 %v1722, %v2059
        %v2230 = vadd.f32 %v1723, %v2061
        %v2231 = vadd.f32 %v1724, %v2065
        %v2232 = vadd.f32 %v1725, %v2067
        %v2233 = vadd.f32 %v1726, %v2071
        %v2234 = vadd.f32 %v1727, %v2073
        %v2235 = vadd.f32 %v1728, %v2077
        %v2236 = vadd.f32 %v1729, %v2079
        %v2237 = vadd.f32 %v1730, %v2083
        %v2238 = vadd.f32 %v1731, %v2085
        %v2239 = vadd.f32 %v1732, %v2089
        %v2240 = vadd.f32 %v1733, %v2091
        %v2241 = vadd.f32 %v1734, %v2095
        %v2242 = vadd.f32 %v1735, %v2097
        %v2243 = vadd.f32 %v1736, %v2101
        %v2244 = vadd.f32 %v1737, %v2103
        %v2245 = vadd.f32 %v1738, %v2107
        %v2246 = vadd.f32 %v1739, %v2109
        %v2247 = vadd.f32 %v1740, %v2113
        %v2248 = vadd.f32 %v1741, %v2115
        %v2249 = vadd.f32 %v1742, %v2119
        %v2250 = vadd.f32 %v1743, %v2121
        %v2251 = vadd.f32 %v1744, %v2125
        %v2252 = vadd.f32 %v1745, %v2127
        %v2253 = vadd.f32 %v1746, %v2131
        %v2254 = vadd.f32 %v1747, %v2133
        %v2255 = vadd.f32 %v1748, %v2137
        %v2256 = vadd.f32 %v1749, %v2139
        %v2257 = vadd.f32 %v1750, %v2143
        %v2258 = vadd.f32 %v1751, %v2145
        %v2259 = vadd.f32 %v1752, %v2149
        %v2260 = vadd.f32 %v1753, %v2151
        %v2261 = vadd.f32 %v1754, %v2155
        %v2262 = vadd.f32 %v1755, %v2157
        %v2263 = vadd.f32 %v1756, %v2161
        %v2264 = vadd.f32 %v1757, %v2163
        %v2265 = vadd.f32 %v1758, %v2167
        %v2266 = vadd.f32 %v1759, %v2169
        %v2267 = vadd.f32 %v1760, %v2173
        %v2268 = vadd.f32 %v1761, %v2175
        %v2269 = vadd.f32 %v1762, %v2179
        %v2270 = vadd.f32 %v1763, %v2181
        %v2271 = vadd.f32 %v1764, %v2185
        %v2272 = vadd.f32 %v1765, %v2187
        %v2273 = vadd.f32 %v1766, %v2191
        %v2274 = vadd.f32 %v1767, %v2193
        %v2275 = vadd.f32 %v1768, %v2197
        %v2276 = vadd.f32 %v1769, %v2199
        %v2277 = vadd.f32 %v1770, %v2203
        %v2278 = vadd.f32 %v1771, %v2205
        %v2279 = vadd.f32 %v1772, %v2209
        %v2280 = vadd.f32 %v1773, %v2211
        %v2281 = vadd.f32 %v1774, %v2215
        %v2282 = vadd.f32 %v1775, %v2217
        %v2283 = vrot.slane %v414, 4
        %v2284 = vrot.slane %v415, 4
        %v2285 = vrot.slane %v416, 4
        %v2286 = vrot.slane %v417, 4
        %v2287 = vrot.slane %v418, 4
        %v2288 = vrot.slane %v419, 4
        %v2289 = vrot.slane %v420, 4
        %v2290 = vrot.slane %v421, 4
        %v2291 = vrot.slane %v422, 4
        %v2292 = vrot.slane %v423, 4
        %v2293 = vrot.slane %v424, 4
        %v2294 = vrot.slane %v425, 4
        %v2295 = vrot.slane %v426, 4
        %v2296 = vrot.slane %v427, 4
        %v2297 = vrot.slane %v428, 4
        %v2298 = vrot.slane %v429, 4
        %v2299 = vrot.slane %v430, 4
        %v2300 = vrot.slane %v431, 4
        %v2301 = vrot.slane %v432, 4
        %v2302 = vrot.slane %v433, 4
        %v2303 = vrot.slane %v434, 4
        %v2304 = vrot.slane %v435, 4
        %v2305 = vrot.slane %v436, 4
        %v2306 = vrot.slane %v437, 4
        %v2307 = vrot.slane %v438, 4
        %v2308 = vrot.slane %v439, 4
        %v2309 = vrot.slane %v440, 4
        %v2310 = vrot.slane %v441, 4
        %v2311 = vrot.slane %v442, 4
        %v2312 = vrot.slane %v443, 4
        %v2313 = vrot.slane %v444, 4
        %v2314 = vrot.slane %v445, 4
        %vm2315 = vcmp.lt.s32.totalorder %v503, 4
        %v2316 = vsel %vm2315, %v2313, %v2314
        %v2317 = vsel %vm2315, %v2312, %v2313
        %v2318 = vsel %vm2315, %v2311, %v2312
        %v2319 = vsel %vm2315, %v2310, %v2311
        %v2320 = vsel %vm2315, %v2309, %v2310
        %v2321 = vsel %vm2315, %v2308, %v2309
        %v2322 = vsel %vm2315, %v2307, %v2308
        %v2323 = vsel %vm2315, %v2306, %v2307
        %v2324 = vsel %vm2315, %v2305, %v2306
        %v2325 = vsel %vm2315, %v2304, %v2305
        %v2326 = vsel %vm2315, %v2303, %v2304
        %v2327 = vsel %vm2315, %v2302, %v2303
        %v2328 = vsel %vm2315, %v2301, %v2302
        %v2329 = vsel %vm2315, %v2300, %v2301
        %v2330 = vsel %vm2315, %v2299, %v2300
        %v2331 = vsel %vm2315, %v2298, %v2299
        %v2332 = vsel %vm2315, %v2297, %v2298
        %v2333 = vsel %vm2315, %v2296, %v2297
        %v2334 = vsel %vm2315, %v2295, %v2296
        %v2335 = vsel %vm2315, %v2294, %v2295
        %v2336 = vsel %vm2315, %v2293, %v2294
        %v2337 = vsel %vm2315, %v2292, %v2293
        %v2338 = vsel %vm2315, %v2291, %v2292
        %v2339 = vsel %vm2315, %v2290, %v2291
        %v2340 = vsel %vm2315, %v2289, %v2290
        %v2341 = vsel %vm2315, %v2288, %v2289
        %v2342 = vsel %vm2315, %v2287, %v2288
        %v2343 = vsel %vm2315, %v2286, %v2287
        %v2344 = vsel %vm2315, %v2285, %v2286
        %v2345 = vsel %vm2315, %v2284, %v2285
        %v2346 = vsel %vm2315, %v2283, %v2284
        %v2347 = vsel %vm2315, %v2314, %v2283
        %s2348 = scalar_lea.vmem %s1, 768
        %v2349 = vld [vmem:[%s2348] sm:$0xff]
        %v2350 = vld [vmem:[%s2348 + $0x8] sm:$0xff]
        %v2351 = vld [vmem:[%s2348 + $0x10] sm:$0xff]
        %v2352 = vld [vmem:[%s2348 + $0x18] sm:$0xff]
        %v2353 = vld [vmem:[%s2348 + $0x20] sm:$0xff]
        %v2354 = vld [vmem:[%s2348 + $0x28] sm:$0xff]
        %v2355 = vld [vmem:[%s2348 + $0x30] sm:$0xff]
        %v2356 = vld [vmem:[%s2348 + $0x38] sm:$0xff]
        %v2357 = vld [vmem:[%s2348 + $0x40] sm:$0xff]
        %v2358 = vld [vmem:[%s2348 + $0x48] sm:$0xff]
        %v2359 = vld [vmem:[%s2348 + $0x50] sm:$0xff]
        %v2360 = vld [vmem:[%s2348 + $0x58] sm:$0xff]
        %v2361 = vld [vmem:[%s2348 + $0x60] sm:$0xff]
        %v2362 = vld [vmem:[%s2348 + $0x68] sm:$0xff]
        %v2363 = vld [vmem:[%s2348 + $0x70] sm:$0xff]
        %v2364 = vld [vmem:[%s2348 + $0x78] sm:$0xff]
        %v2365 = vld [vmem:[%s2348 + $0x80] sm:$0xff]
        %v2366 = vld [vmem:[%s2348 + $0x88] sm:$0xff]
        %v2367 = vld [vmem:[%s2348 + $0x90] sm:$0xff]
        %v2368 = vld [vmem:[%s2348 + $0x98] sm:$0xff]
        %v2369 = vld [vmem:[%s2348 + $0xa0] sm:$0xff]
        %v2370 = vld [vmem:[%s2348 + $0xa8] sm:$0xff]
        %v2371 = vld [vmem:[%s2348 + $0xb0] sm:$0xff]
        %v2372 = vld [vmem:[%s2348 + $0xb8] sm:$0xff]
        %v2374 = vsel %vm562, %v2346, 0
        %v2377 = vsel %vm562, %v2345, 0
        %v2380 = vsel %vm562, %v2344, 0
        %v2383 = vsel %vm562, %v2343, 0
        %v2386 = vsel %vm562, %v2342, 0
        %v2389 = vsel %vm562, %v2341, 0
        %v2392 = vsel %vm562, %v2340, 0
        %v2395 = vsel %vm562, %v2339, 0
        %v2398 = vsel %vm562, %v2338, 0
        %v2401 = vsel %vm562, %v2337, 0
        %v2404 = vsel %vm562, %v2336, 0
        %v2407 = vsel %vm562, %v2335, 0
        %v2410 = vsel %vm562, %v2334, 0
        %v2413 = vsel %vm562, %v2333, 0
        %v2416 = vsel %vm562, %v2332, 0
        %v2419 = vsel %vm562, %v2331, 0
        %v2422 = vsel %vm562, %v2330, 0
        %v2425 = vsel %vm562, %v2329, 0
        %v2428 = vsel %vm562, %v2328, 0
        %v2431 = vsel %vm562, %v2327, 0
        %v2434 = vsel %vm562, %v2326, 0
        %v2437 = vsel %vm562, %v2325, 0
        %v2440 = vsel %vm562, %v2324, 0
        %v2443 = vsel %vm562, %v2323, 0
        %v2446 = vsel %vm562, %v2322, 0
        %v2449 = vsel %vm562, %v2321, 0
        %v2452 = vsel %vm562, %v2320, 0
        %v2455 = vsel %vm562, %v2319, 0
        %v2458 = vsel %vm562, %v2318, 0
        %v2461 = vsel %vm562, %v2317, 0
        %v2464 = vsel %vm562, %v2316, 0
        %v2467 = vsel %vm562, %v2347, 0
        %2469 = vmatprep.subr.mxu0 0.0
        %2470 = vmatpush1.msra.mxu0 0.0
        %2471 = vmatprep.subr.mxu0 0.0
        %2472 = vmatpush1.msra.mxu0 0.0
        %2473 = vmatprep.subr.mxu0 0.0
        %2474 = vmatpush1.msra.mxu0 0.0
        %2475 = vmatprep.subr.mxu0 0.0
        %2476 = vmatpush1.msra.mxu0 0.0
        %2477 = vmatprep.subr.mxu0 %v2372
        %2478 = vmatpush1.msra.mxu0 %v2371
        %2479 = vmatprep.subr.mxu0 %v2370
        %2480 = vmatpush1.msra.mxu0 %v2369
        %2481 = vmatprep.subr.mxu0 %v2368
        %2482 = vmatpush1.msra.mxu0 %v2367
        %2483 = vmatprep.subr.mxu0 %v2366
        %2484 = vmatpush1.msra.mxu0 %v2365
        %2485 = vmatprep.subr.mxu0 %v2364
        %2486 = vmatpush1.msra.mxu0 %v2363
        %2487 = vmatprep.subr.mxu0 %v2362
        %2488 = vmatpush1.msra.mxu0 %v2361
        %2489 = vmatprep.subr.mxu0 %v2360
        %2490 = vmatpush1.msra.mxu0 %v2359
        %2491 = vmatprep.subr.mxu0 %v2358
        %2492 = vmatpush1.msra.mxu0 %v2357
        %2493 = vmatprep.subr.mxu0 %v2356
        %2494 = vmatpush1.msra.mxu0 %v2355
        %2495 = vmatprep.subr.mxu0 %v2354
        %2496 = vmatpush1.msra.mxu0 %v2353
        %2497 = vmatprep.subr.mxu0 %v2352
        %2498 = vmatpush1.msra.mxu0 %v2351
        %2499 = vmatprep.subr.mxu0 %v2350
        %2500 = vmatpush1.msra.mxu0 %v2349
        %2501 = vmatprep.subr.mxu0 0.0
        %2502 = vmatpush2.msra.mxu0 0.0
        %2503 = vmatprep.subr.mxu0 0.0
        %2504 = vmatpush2.msra.mxu0 0.0
        %2505 = vmatprep.subr.mxu0 0.0
        %2506 = vmatpush2.msra.mxu0 0.0
        %2507 = vmatprep.subr.mxu0 0.0
        %2508 = vmatpush2.msra.mxu0 0.0
        %2509 = vmatprep.subr.mxu0 0.0
        %2510 = vmatpush2.msra.mxu0 0.0
        %2511 = vmatprep.subr.mxu0 0.0
        %2512 = vmatpush2.msra.mxu0 0.0
        %2513 = vmatprep.subr.mxu0 0.0
        %2514 = vmatpush2.msra.mxu0 0.0
        %2515 = vmatprep.subr.mxu0 0.0
        %2516 = vmatpush2.msra.mxu0 0.0
        %2517 = vmatprep.subr.mxu0 0.0
        %2518 = vmatpush2.msra.mxu0 0.0
        %2519 = vmatprep.subr.mxu0 0.0
        %2520 = vmatpush2.msra.mxu0 0.0
        %2521 = vmatprep.subr.mxu0 0.0
        %2522 = vmatpush2.msra.mxu0 0.0
        %2523 = vmatprep.subr.mxu0 0.0
        %2524 = vmatpush2.msra.mxu0 0.0
        %2525 = vmatprep.subr.mxu0 0.0
        %2526 = vmatpush2.msra.mxu0 0.0
        %2527 = vmatprep.subr.mxu0 0.0
        %2528 = vmatpush2.msra.mxu0 0.0
        %2529 = vmatprep.subr.mxu0 0.0
        %2530 = vmatpush2.msra.mxu0 0.0
        %2531 = vmatprep.subr.mxu0 0.0
        %2532 = vmatpush2.msra.mxu0 0.0
        %2533 = vmatprep.mubr.f32.mxu0 0.0
        %2534 = vmatmul.mubr.f32.gmra.mxu0 %v2374
        %v2535 = vpop.f32.mrf.mxu0
        %v2536 = vadd.f32 0.0, %v2535
        %v2537 = vpop.f32.mrf.mxu0
        %v2538 = vadd.f32 0.0, %v2537
        %2539 = vmatprep.mubr.f32.mxu0 0.0
        %2540 = vmatmul.mubr.f32.gmra.mxu0 %v2377
        %v2541 = vpop.f32.mrf.mxu0
        %v2542 = vadd.f32 0.0, %v2541
        %v2543 = vpop.f32.mrf.mxu0
        %v2544 = vadd.f32 0.0, %v2543
        %2545 = vmatprep.mubr.f32.mxu0 0.0
        %2546 = vmatmul.mubr.f32.gmra.mxu0 %v2380
        %v2547 = vpop.f32.mrf.mxu0
        %v2548 = vadd.f32 0.0, %v2547
        %v2549 = vpop.f32.mrf.mxu0
        %v2550 = vadd.f32 0.0, %v2549
        %2551 = vmatprep.mubr.f32.mxu0 0.0
        %2552 = vmatmul.mubr.f32.gmra.mxu0 %v2383
        %v2553 = vpop.f32.mrf.mxu0
        %v2554 = vadd.f32 0.0, %v2553
        %v2555 = vpop.f32.mrf.mxu0
        %v2556 = vadd.f32 0.0, %v2555
        %2557 = vmatprep.mubr.f32.mxu0 0.0
        %2558 = vmatmul.mubr.f32.gmra.mxu0 %v2386
        %v2559 = vpop.f32.mrf.mxu0
        %v2560 = vadd.f32 0.0, %v2559
        %v2561 = vpop.f32.mrf.mxu0
        %v2562 = vadd.f32 0.0, %v2561
        %2563 = vmatprep.mubr.f32.mxu0 0.0
        %2564 = vmatmul.mubr.f32.gmra.mxu0 %v2389
        %v2565 = vpop.f32.mrf.mxu0
        %v2566 = vadd.f32 0.0, %v2565
        %v2567 = vpop.f32.mrf.mxu0
        %v2568 = vadd.f32 0.0, %v2567
        %2569 = vmatprep.mubr.f32.mxu0 0.0
        %2570 = vmatmul.mubr.f32.gmra.mxu0 %v2392
        %v2571 = vpop.f32.mrf.mxu0
        %v2572 = vadd.f32 0.0, %v2571
        %v2573 = vpop.f32.mrf.mxu0
        %v2574 = vadd.f32 0.0, %v2573
        %2575 = vmatprep.mubr.f32.mxu0 0.0
        %2576 = vmatmul.mubr.f32.gmra.mxu0 %v2395
        %v2577 = vpop.f32.mrf.mxu0
        %v2578 = vadd.f32 0.0, %v2577
        %v2579 = vpop.f32.mrf.mxu0
        %v2580 = vadd.f32 0.0, %v2579
        %2581 = vmatprep.mubr.f32.mxu0 0.0
        %2582 = vmatmul.mubr.f32.gmra.mxu0 %v2398
        %v2583 = vpop.f32.mrf.mxu0
        %v2584 = vadd.f32 0.0, %v2583
        %v2585 = vpop.f32.mrf.mxu0
        %v2586 = vadd.f32 0.0, %v2585
        %2587 = vmatprep.mubr.f32.mxu0 0.0
        %2588 = vmatmul.mubr.f32.gmra.mxu0 %v2401
        %v2589 = vpop.f32.mrf.mxu0
        %v2590 = vadd.f32 0.0, %v2589
        %v2591 = vpop.f32.mrf.mxu0
        %v2592 = vadd.f32 0.0, %v2591
        %2593 = vmatprep.mubr.f32.mxu0 0.0
        %2594 = vmatmul.mubr.f32.gmra.mxu0 %v2404
        %v2595 = vpop.f32.mrf.mxu0
        %v2596 = vadd.f32 0.0, %v2595
        %v2597 = vpop.f32.mrf.mxu0
        %v2598 = vadd.f32 0.0, %v2597
        %2599 = vmatprep.mubr.f32.mxu0 0.0
        %2600 = vmatmul.mubr.f32.gmra.mxu0 %v2407
        %v2601 = vpop.f32.mrf.mxu0
        %v2602 = vadd.f32 0.0, %v2601
        %v2603 = vpop.f32.mrf.mxu0
        %v2604 = vadd.f32 0.0, %v2603
        %2605 = vmatprep.mubr.f32.mxu0 0.0
        %2606 = vmatmul.mubr.f32.gmra.mxu0 %v2410
        %v2607 = vpop.f32.mrf.mxu0
        %v2608 = vadd.f32 0.0, %v2607
        %v2609 = vpop.f32.mrf.mxu0
        %v2610 = vadd.f32 0.0, %v2609
        %2611 = vmatprep.mubr.f32.mxu0 0.0
        %2612 = vmatmul.mubr.f32.gmra.mxu0 %v2413
        %v2613 = vpop.f32.mrf.mxu0
        %v2614 = vadd.f32 0.0, %v2613
        %v2615 = vpop.f32.mrf.mxu0
        %v2616 = vadd.f32 0.0, %v2615
        %2617 = vmatprep.mubr.f32.mxu0 0.0
        %2618 = vmatmul.mubr.f32.gmra.mxu0 %v2416
        %v2619 = vpop.f32.mrf.mxu0
        %v2620 = vadd.f32 0.0, %v2619
        %v2621 = vpop.f32.mrf.mxu0
        %v2622 = vadd.f32 0.0, %v2621
        %2623 = vmatprep.mubr.f32.mxu0 0.0
        %2624 = vmatmul.mubr.f32.gmra.mxu0 %v2419
        %v2625 = vpop.f32.mrf.mxu0
        %v2626 = vadd.f32 0.0, %v2625
        %v2627 = vpop.f32.mrf.mxu0
        %v2628 = vadd.f32 0.0, %v2627
        %2629 = vmatprep.mubr.f32.mxu0 0.0
        %2630 = vmatmul.mubr.f32.gmra.mxu0 %v2422
        %v2631 = vpop.f32.mrf.mxu0
        %v2632 = vadd.f32 0.0, %v2631
        %v2633 = vpop.f32.mrf.mxu0
        %v2634 = vadd.f32 0.0, %v2633
        %2635 = vmatprep.mubr.f32.mxu0 0.0
        %2636 = vmatmul.mubr.f32.gmra.mxu0 %v2425
        %v2637 = vpop.f32.mrf.mxu0
        %v2638 = vadd.f32 0.0, %v2637
        %v2639 = vpop.f32.mrf.mxu0
        %v2640 = vadd.f32 0.0, %v2639
        %2641 = vmatprep.mubr.f32.mxu0 0.0
        %2642 = vmatmul.mubr.f32.gmra.mxu0 %v2428
        %v2643 = vpop.f32.mrf.mxu0
        %v2644 = vadd.f32 0.0, %v2643
        %v2645 = vpop.f32.mrf.mxu0
        %v2646 = vadd.f32 0.0, %v2645
        %2647 = vmatprep.mubr.f32.mxu0 0.0
        %2648 = vmatmul.mubr.f32.gmra.mxu0 %v2431
        %v2649 = vpop.f32.mrf.mxu0
        %v2650 = vadd.f32 0.0, %v2649
        %v2651 = vpop.f32.mrf.mxu0
        %v2652 = vadd.f32 0.0, %v2651
        %2653 = vmatprep.mubr.f32.mxu0 0.0
        %2654 = vmatmul.mubr.f32.gmra.mxu0 %v2434
        %v2655 = vpop.f32.mrf.mxu0
        %v2656 = vadd.f32 0.0, %v2655
        %v2657 = vpop.f32.mrf.mxu0
        %v2658 = vadd.f32 0.0, %v2657
        %2659 = vmatprep.mubr.f32.mxu0 0.0
        %2660 = vmatmul.mubr.f32.gmra.mxu0 %v2437
        %v2661 = vpop.f32.mrf.mxu0
        %v2662 = vadd.f32 0.0, %v2661
        %v2663 = vpop.f32.mrf.mxu0
        %v2664 = vadd.f32 0.0, %v2663
        %2665 = vmatprep.mubr.f32.mxu0 0.0
        %2666 = vmatmul.mubr.f32.gmra.mxu0 %v2440
        %v2667 = vpop.f32.mrf.mxu0
        %v2668 = vadd.f32 0.0, %v2667
        %v2669 = vpop.f32.mrf.mxu0
        %v2670 = vadd.f32 0.0, %v2669
        %2671 = vmatprep.mubr.f32.mxu0 0.0
        %2672 = vmatmul.mubr.f32.gmra.mxu0 %v2443
        %v2673 = vpop.f32.mrf.mxu0
        %v2674 = vadd.f32 0.0, %v2673
        %v2675 = vpop.f32.mrf.mxu0
        %v2676 = vadd.f32 0.0, %v2675
        %2677 = vmatprep.mubr.f32.mxu0 0.0
        %2678 = vmatmul.mubr.f32.gmra.mxu0 %v2446
        %v2679 = vpop.f32.mrf.mxu0
        %v2680 = vadd.f32 0.0, %v2679
        %v2681 = vpop.f32.mrf.mxu0
        %v2682 = vadd.f32 0.0, %v2681
        %2683 = vmatprep.mubr.f32.mxu0 0.0
        %2684 = vmatmul.mubr.f32.gmra.mxu0 %v2449
        %v2685 = vpop.f32.mrf.mxu0
        %v2686 = vadd.f32 0.0, %v2685
        %v2687 = vpop.f32.mrf.mxu0
        %v2688 = vadd.f32 0.0, %v2687
        %2689 = vmatprep.mubr.f32.mxu0 0.0
        %2690 = vmatmul.mubr.f32.gmra.mxu0 %v2452
        %v2691 = vpop.f32.mrf.mxu0
        %v2692 = vadd.f32 0.0, %v2691
        %v2693 = vpop.f32.mrf.mxu0
        %v2694 = vadd.f32 0.0, %v2693
        %2695 = vmatprep.mubr.f32.mxu0 0.0
        %2696 = vmatmul.mubr.f32.gmra.mxu0 %v2455
        %v2697 = vpop.f32.mrf.mxu0
        %v2698 = vadd.f32 0.0, %v2697
        %v2699 = vpop.f32.mrf.mxu0
        %v2700 = vadd.f32 0.0, %v2699
        %2701 = vmatprep.mubr.f32.mxu0 0.0
        %2702 = vmatmul.mubr.f32.gmra.mxu0 %v2458
        %v2703 = vpop.f32.mrf.mxu0
        %v2704 = vadd.f32 0.0, %v2703
        %v2705 = vpop.f32.mrf.mxu0
        %v2706 = vadd.f32 0.0, %v2705
        %2707 = vmatprep.mubr.f32.mxu0 0.0
        %2708 = vmatmul.mubr.f32.gmra.mxu0 %v2461
        %v2709 = vpop.f32.mrf.mxu0
        %v2710 = vadd.f32 0.0, %v2709
        %v2711 = vpop.f32.mrf.mxu0
        %v2712 = vadd.f32 0.0, %v2711
        %2713 = vmatprep.mubr.f32.mxu0 0.0
        %2714 = vmatmul.mubr.f32.gmra.mxu0 %v2464
        %v2715 = vpop.f32.mrf.mxu0
        %v2716 = vadd.f32 0.0, %v2715
        %v2717 = vpop.f32.mrf.mxu0
        %v2718 = vadd.f32 0.0, %v2717
        %2719 = vmatprep.mubr.f32.mxu0 0.0
        %2720 = vmatmul.mubr.f32.gmra.mxu0 %v2467
        %v2721 = vpop.f32.mrf.mxu0
        %v2722 = vadd.f32 0.0, %v2721
        %v2723 = vpop.f32.mrf.mxu0
        %v2724 = vadd.f32 0.0, %v2723
        %2725 = vdwg.mxu0
        %v2726 = vadd.f32 %v2219, %v2536
        %v2727 = vadd.f32 %v2220, %v2538
        %v2728 = vadd.f32 %v2221, %v2542
        %v2729 = vadd.f32 %v2222, %v2544
        %v2730 = vadd.f32 %v2223, %v2548
        %v2731 = vadd.f32 %v2224, %v2550
        %v2732 = vadd.f32 %v2225, %v2554
        %v2733 = vadd.f32 %v2226, %v2556
        %v2734 = vadd.f32 %v2227, %v2560
        %v2735 = vadd.f32 %v2228, %v2562
        %v2736 = vadd.f32 %v2229, %v2566
        %v2737 = vadd.f32 %v2230, %v2568
        %v2738 = vadd.f32 %v2231, %v2572
        %v2739 = vadd.f32 %v2232, %v2574
        %v2740 = vadd.f32 %v2233, %v2578
        %v2741 = vadd.f32 %v2234, %v2580
        %v2742 = vadd.f32 %v2235, %v2584
        %v2743 = vadd.f32 %v2236, %v2586
        %v2744 = vadd.f32 %v2237, %v2590
        %v2745 = vadd.f32 %v2238, %v2592
        %v2746 = vadd.f32 %v2239, %v2596
        %v2747 = vadd.f32 %v2240, %v2598
        %v2748 = vadd.f32 %v2241, %v2602
        %v2749 = vadd.f32 %v2242, %v2604
        %v2750 = vadd.f32 %v2243, %v2608
        %v2751 = vadd.f32 %v2244, %v2610
        %v2752 = vadd.f32 %v2245, %v2614
        %v2753 = vadd.f32 %v2246, %v2616
        %v2754 = vadd.f32 %v2247, %v2620
        %v2755 = vadd.f32 %v2248, %v2622
        %v2756 = vadd.f32 %v2249, %v2626
        %v2757 = vadd.f32 %v2250, %v2628
        %v2758 = vadd.f32 %v2251, %v2632
        %v2759 = vadd.f32 %v2252, %v2634
        %v2760 = vadd.f32 %v2253, %v2638
        %v2761 = vadd.f32 %v2254, %v2640
        %v2762 = vadd.f32 %v2255, %v2644
        %v2763 = vadd.f32 %v2256, %v2646
        %v2764 = vadd.f32 %v2257, %v2650
        %v2765 = vadd.f32 %v2258, %v2652
        %v2766 = vadd.f32 %v2259, %v2656
        %v2767 = vadd.f32 %v2260, %v2658
        %v2768 = vadd.f32 %v2261, %v2662
        %v2769 = vadd.f32 %v2262, %v2664
        %v2770 = vadd.f32 %v2263, %v2668
        %v2771 = vadd.f32 %v2264, %v2670
        %v2772 = vadd.f32 %v2265, %v2674
        %v2773 = vadd.f32 %v2266, %v2676
        %v2774 = vadd.f32 %v2267, %v2680
        %v2775 = vadd.f32 %v2268, %v2682
        %v2776 = vadd.f32 %v2269, %v2686
        %v2777 = vadd.f32 %v2270, %v2688
        %v2778 = vadd.f32 %v2271, %v2692
        %v2779 = vadd.f32 %v2272, %v2694
        %v2780 = vadd.f32 %v2273, %v2698
        %v2781 = vadd.f32 %v2274, %v2700
        %v2782 = vadd.f32 %v2275, %v2704
        %v2783 = vadd.f32 %v2276, %v2706
        %v2784 = vadd.f32 %v2277, %v2710
        %v2785 = vadd.f32 %v2278, %v2712
        %v2786 = vadd.f32 %v2279, %v2716
        %v2787 = vadd.f32 %v2280, %v2718
        %v2788 = vadd.f32 %v2281, %v2722
        %v2789 = vadd.f32 %v2282, %v2724
        %v2790 = vld [vmem:[%s2] sm:$0x3]
        %v2792 = vlaneseq
        %v2793 = vshrl.u32 %v2792, 7
        %v2794 = vsub.s32 0, %v2793
        %v2795 = vrot.slane %v2790, %v2794
        %v2796 = vlaneseq
        %v2797 = vshrl.u32 %v2796, 7
        %v2798 = vsub.s32 1, %v2797
        %v2799 = vrot.slane %v2790, %v2798
        %v2802 = vadd.f32 %v2726, %v2795
        %v2803 = vadd.f32 %v2727, %v2799
        %v2804 = vadd.f32 %v2728, %v2795
        %v2805 = vadd.f32 %v2729, %v2799
        %v2806 = vadd.f32 %v2730, %v2795
        %v2807 = vadd.f32 %v2731, %v2799
        %v2808 = vadd.f32 %v2732, %v2795
        %v2809 = vadd.f32 %v2733, %v2799
        %v2810 = vadd.f32 %v2734, %v2795
        %v2811 = vadd.f32 %v2735, %v2799
        %v2812 = vadd.f32 %v2736, %v2795
        %v2813 = vadd.f32 %v2737, %v2799
        %v2814 = vadd.f32 %v2738, %v2795
        %v2815 = vadd.f32 %v2739, %v2799
        %v2816 = vadd.f32 %v2740, %v2795
        %v2817 = vadd.f32 %v2741, %v2799
        %v2818 = vadd.f32 %v2742, %v2795
        %v2819 = vadd.f32 %v2743, %v2799
        %v2820 = vadd.f32 %v2744, %v2795
        %v2821 = vadd.f32 %v2745, %v2799
        %v2822 = vadd.f32 %v2746, %v2795
        %v2823 = vadd.f32 %v2747, %v2799
        %v2824 = vadd.f32 %v2748, %v2795
        %v2825 = vadd.f32 %v2749, %v2799
        %v2826 = vadd.f32 %v2750, %v2795
        %v2827 = vadd.f32 %v2751, %v2799
        %v2828 = vadd.f32 %v2752, %v2795
        %v2829 = vadd.f32 %v2753, %v2799
        %v2830 = vadd.f32 %v2754, %v2795
        %v2831 = vadd.f32 %v2755, %v2799
        %v2832 = vadd.f32 %v2756, %v2795
        %v2833 = vadd.f32 %v2757, %v2799
        %v2834 = vadd.f32 %v2758, %v2795
        %v2835 = vadd.f32 %v2759, %v2799
        %v2836 = vadd.f32 %v2760, %v2795
        %v2837 = vadd.f32 %v2761, %v2799
        %v2838 = vadd.f32 %v2762, %v2795
        %v2839 = vadd.f32 %v2763, %v2799
        %v2840 = vadd.f32 %v2764, %v2795
        %v2841 = vadd.f32 %v2765, %v2799
        %v2842 = vadd.f32 %v2766, %v2795
        %v2843 = vadd.f32 %v2767, %v2799
        %v2844 = vadd.f32 %v2768, %v2795
        %v2845 = vadd.f32 %v2769, %v2799
        %v2846 = vadd.f32 %v2770, %v2795
        %v2847 = vadd.f32 %v2771, %v2799
        %v2848 = vadd.f32 %v2772, %v2795
        %v2849 = vadd.f32 %v2773, %v2799
        %v2850 = vadd.f32 %v2774, %v2795
        %v2851 = vadd.f32 %v2775, %v2799
        %v2852 = vadd.f32 %v2776, %v2795
        %v2853 = vadd.f32 %v2777, %v2799
        %v2854 = vadd.f32 %v2778, %v2795
        %v2855 = vadd.f32 %v2779, %v2799
        %v2856 = vadd.f32 %v2780, %v2795
        %v2857 = vadd.f32 %v2781, %v2799
        %v2858 = vadd.f32 %v2782, %v2795
        %v2859 = vadd.f32 %v2783, %v2799
        %v2860 = vadd.f32 %v2784, %v2795
        %v2861 = vadd.f32 %v2785, %v2799
        %v2862 = vadd.f32 %v2786, %v2795
        %v2863 = vadd.f32 %v2787, %v2799
        %v2864 = vadd.f32 %v2788, %v2795
        %v2865 = vadd.f32 %v2789, %v2799
        %v2866 = vmax.f32 %v2802, 0.0
        %v2867 = vmax.f32 %v2803, 0.0
        %v2868 = vmax.f32 %v2804, 0.0
        %v2869 = vmax.f32 %v2805, 0.0
        %v2870 = vmax.f32 %v2806, 0.0
        %v2871 = vmax.f32 %v2807, 0.0
        %v2872 = vmax.f32 %v2808, 0.0
        %v2873 = vmax.f32 %v2809, 0.0
        %v2874 = vmax.f32 %v2810, 0.0
        %v2875 = vmax.f32 %v2811, 0.0
        %v2876 = vmax.f32 %v2812, 0.0
        %v2877 = vmax.f32 %v2813, 0.0
        %v2878 = vmax.f32 %v2814, 0.0
        %v2879 = vmax.f32 %v2815, 0.0
        %v2880 = vmax.f32 %v2816, 0.0
        %v2881 = vmax.f32 %v2817, 0.0
        %v2882 = vmax.f32 %v2818, 0.0
        %v2883 = vmax.f32 %v2819, 0.0
        %v2884 = vmax.f32 %v2820, 0.0
        %v2885 = vmax.f32 %v2821, 0.0
        %v2886 = vmax.f32 %v2822, 0.0
        %v2887 = vmax.f32 %v2823, 0.0
        %v2888 = vmax.f32 %v2824, 0.0
        %v2889 = vmax.f32 %v2825, 0.0
        %v2890 = vmax.f32 %v2826, 0.0
        %v2891 = vmax.f32 %v2827, 0.0
        %v2892 = vmax.f32 %v2828, 0.0
        %v2893 = vmax.f32 %v2829, 0.0
        %v2894 = vmax.f32 %v2830, 0.0
        %v2895 = vmax.f32 %v2831, 0.0
        %v2896 = vmax.f32 %v2832, 0.0
        %v2897 = vmax.f32 %v2833, 0.0
        %v2898 = vmax.f32 %v2834, 0.0
        %v2899 = vmax.f32 %v2835, 0.0
        %v2900 = vmax.f32 %v2836, 0.0
        %v2901 = vmax.f32 %v2837, 0.0
        %v2902 = vmax.f32 %v2838, 0.0
        %v2903 = vmax.f32 %v2839, 0.0
        %v2904 = vmax.f32 %v2840, 0.0
        %v2905 = vmax.f32 %v2841, 0.0
        %v2906 = vmax.f32 %v2842, 0.0
        %v2907 = vmax.f32 %v2843, 0.0
        %v2908 = vmax.f32 %v2844, 0.0
        %v2909 = vmax.f32 %v2845, 0.0
        %v2910 = vmax.f32 %v2846, 0.0
        %v2911 = vmax.f32 %v2847, 0.0
        %v2912 = vmax.f32 %v2848, 0.0
        %v2913 = vmax.f32 %v2849, 0.0
        %v2914 = vmax.f32 %v2850, 0.0
        %v2915 = vmax.f32 %v2851, 0.0
        %v2916 = vmax.f32 %v2852, 0.0
        %v2917 = vmax.f32 %v2853, 0.0
        %v2918 = vmax.f32 %v2854, 0.0
        %v2919 = vmax.f32 %v2855, 0.0
        %v2920 = vmax.f32 %v2856, 0.0
        %v2921 = vmax.f32 %v2857, 0.0
        %v2922 = vmax.f32 %v2858, 0.0
        %v2923 = vmax.f32 %v2859, 0.0
        %v2924 = vmax.f32 %v2860, 0.0
        %v2925 = vmax.f32 %v2861, 0.0
        %v2926 = vmax.f32 %v2862, 0.0
        %v2927 = vmax.f32 %v2863, 0.0
        %v2928 = vmax.f32 %v2864, 0.0
        %v2929 = vmax.f32 %v2865, 0.0
        %2930 = vrot.lane.b32.xlu0 %v2866, 120
        %v2931 = vpop.permute.xlu0 %2930
        %2932 = vrot.lane.b32.xlu0 %v2868, 120
        %v2933 = vpop.permute.xlu0 %2932
        %2934 = vrot.lane.b32.xlu0 %v2870, 120
        %v2935 = vpop.permute.xlu0 %2934
        %2936 = vrot.lane.b32.xlu0 %v2872, 120
        %v2937 = vpop.permute.xlu0 %2936
        %2938 = vrot.lane.b32.xlu0 %v2874, 120
        %v2939 = vpop.permute.xlu0 %2938
        %2940 = vrot.lane.b32.xlu0 %v2876, 120
        %v2941 = vpop.permute.xlu0 %2940
        %2942 = vrot.lane.b32.xlu0 %v2878, 120
        %v2943 = vpop.permute.xlu0 %2942
        %2944 = vrot.lane.b32.xlu0 %v2880, 120
        %v2945 = vpop.permute.xlu0 %2944
        %2946 = vrot.lane.b32.xlu0 %v2882, 120
        %v2947 = vpop.permute.xlu0 %2946
        %2948 = vrot.lane.b32.xlu0 %v2884, 120
        %v2949 = vpop.permute.xlu0 %2948
        %2950 = vrot.lane.b32.xlu0 %v2886, 120
        %v2951 = vpop.permute.xlu0 %2950
        %2952 = vrot.lane.b32.xlu0 %v2888, 120
        %v2953 = vpop.permute.xlu0 %2952
        %2954 = vrot.lane.b32.xlu0 %v2890, 120
        %v2955 = vpop.permute.xlu0 %2954
        %2956 = vrot.lane.b32.xlu0 %v2892, 120
        %v2957 = vpop.permute.xlu0 %2956
        %2958 = vrot.lane.b32.xlu0 %v2894, 120
        %v2959 = vpop.permute.xlu0 %2958
        %2960 = vrot.lane.b32.xlu0 %v2896, 120
        %v2961 = vpop.permute.xlu0 %2960
        %2962 = vrot.lane.b32.xlu0 %v2898, 120
        %v2963 = vpop.permute.xlu0 %2962
        %2964 = vrot.lane.b32.xlu0 %v2900, 120
        %v2965 = vpop.permute.xlu0 %2964
        %2966 = vrot.lane.b32.xlu0 %v2902, 120
        %v2967 = vpop.permute.xlu0 %2966
        %2968 = vrot.lane.b32.xlu0 %v2904, 120
        %v2969 = vpop.permute.xlu0 %2968
        %2970 = vrot.lane.b32.xlu0 %v2906, 120
        %v2971 = vpop.permute.xlu0 %2970
        %2972 = vrot.lane.b32.xlu0 %v2908, 120
        %v2973 = vpop.permute.xlu0 %2972
        %2974 = vrot.lane.b32.xlu0 %v2910, 120
        %v2975 = vpop.permute.xlu0 %2974
        %2976 = vrot.lane.b32.xlu0 %v2912, 120
        %v2977 = vpop.permute.xlu0 %2976
        %2978 = vrot.lane.b32.xlu0 %v2914, 120
        %v2979 = vpop.permute.xlu0 %2978
        %2980 = vrot.lane.b32.xlu0 %v2916, 120
        %v2981 = vpop.permute.xlu0 %2980
        %2982 = vrot.lane.b32.xlu0 %v2918, 120
        %v2983 = vpop.permute.xlu0 %2982
        %2984 = vrot.lane.b32.xlu0 %v2920, 120
        %v2985 = vpop.permute.xlu0 %2984
        %2986 = vrot.lane.b32.xlu0 %v2922, 120
        %v2987 = vpop.permute.xlu0 %2986
        %2988 = vrot.lane.b32.xlu0 %v2924, 120
        %v2989 = vpop.permute.xlu0 %2988
        %2990 = vrot.lane.b32.xlu0 %v2926, 120
        %v2991 = vpop.permute.xlu0 %2990
        %2992 = vrot.lane.b32.xlu0 %v2928, 120
        %v2993 = vpop.permute.xlu0 %2992
        %2994 = vrot.lane.b32.xlu0 %v2867, 120
        %v2995 = vpop.permute.xlu0 %2994
        %2996 = vrot.lane.b32.xlu0 %v2869, 120
        %v2997 = vpop.permute.xlu0 %2996
        %2998 = vrot.lane.b32.xlu0 %v2871, 120
        %v2999 = vpop.permute.xlu0 %2998
        %3000 = vrot.lane.b32.xlu0 %v2873, 120
        %v3001 = vpop.permute.xlu0 %3000
        %3002 = vrot.lane.b32.xlu0 %v2875, 120
        %v3003 = vpop.permute.xlu0 %3002
        %3004 = vrot.lane.b32.xlu0 %v2877, 120
        %v3005 = vpop.permute.xlu0 %3004
        %3006 = vrot.lane.b32.xlu0 %v2879, 120
        %v3007 = vpop.permute.xlu0 %3006
        %3008 = vrot.lane.b32.xlu0 %v2881, 120
        %v3009 = vpop.permute.xlu0 %3008
        %3010 = vrot.lane.b32.xlu0 %v2883, 120
        %v3011 = vpop.permute.xlu0 %3010
        %3012 = vrot.lane.b32.xlu0 %v2885, 120
        %v3013 = vpop.permute.xlu0 %3012
        %3014 = vrot.lane.b32.xlu0 %v2887, 120
        %v3015 = vpop.permute.xlu0 %3014
        %3016 = vrot.lane.b32.xlu0 %v2889, 120
        %v3017 = vpop.permute.xlu0 %3016
        %3018 = vrot.lane.b32.xlu0 %v2891, 120
        %v3019 = vpop.permute.xlu0 %3018
        %3020 = vrot.lane.b32.xlu0 %v2893, 120
        %v3021 = vpop.permute.xlu0 %3020
        %3022 = vrot.lane.b32.xlu0 %v2895, 120
        %v3023 = vpop.permute.xlu0 %3022
        %3024 = vrot.lane.b32.xlu0 %v2897, 120
        %v3025 = vpop.permute.xlu0 %3024
        %3026 = vrot.lane.b32.xlu0 %v2899, 120
        %v3027 = vpop.permute.xlu0 %3026
        %3028 = vrot.lane.b32.xlu0 %v2901, 120
        %v3029 = vpop.permute.xlu0 %3028
        %3030 = vrot.lane.b32.xlu0 %v2903, 120
        %v3031 = vpop.permute.xlu0 %3030
        %3032 = vrot.lane.b32.xlu0 %v2905, 120
        %v3033 = vpop.permute.xlu0 %3032
        %3034 = vrot.lane.b32.xlu0 %v2907, 120
        %v3035 = vpop.permute.xlu0 %3034
        %3036 = vrot.lane.b32.xlu0 %v2909, 120
        %v3037 = vpop.permute.xlu0 %3036
        %3038 = vrot.lane.b32.xlu0 %v2911, 120
        %v3039 = vpop.permute.xlu0 %3038
        %3040 = vrot.lane.b32.xlu0 %v2913, 120
        %v3041 = vpop.permute.xlu0 %3040
        %3042 = vrot.lane.b32.xlu0 %v2915, 120
        %v3043 = vpop.permute.xlu0 %3042
        %3044 = vrot.lane.b32.xlu0 %v2917, 120
        %v3045 = vpop.permute.xlu0 %3044
        %3046 = vrot.lane.b32.xlu0 %v2919, 120
        %v3047 = vpop.permute.xlu0 %3046
        %3048 = vrot.lane.b32.xlu0 %v2921, 120
        %v3049 = vpop.permute.xlu0 %3048
        %3050 = vrot.lane.b32.xlu0 %v2923, 120
        %v3051 = vpop.permute.xlu0 %3050
        %3052 = vrot.lane.b32.xlu0 %v2925, 120
        %v3053 = vpop.permute.xlu0 %3052
        %3054 = vrot.lane.b32.xlu0 %v2927, 120
        %v3055 = vpop.permute.xlu0 %3054
        %3056 = vrot.lane.b32.xlu0 %v2929, 120
        %v3057 = vpop.permute.xlu0 %3056
        %v3058 = vlaneseq
        %v3059 = vand.u32 %v3058, 127
        %vm3060 = vcmp.lt.s32.totalorder %v3059, 120
        %v3061 = vsel %vm3060, %v2931, %v2995
        %v3062 = vsel %vm3060, %v2933, %v2997
        %v3063 = vsel %vm3060, %v2935, %v2999
        %v3064 = vsel %vm3060, %v2937, %v3001
        %v3065 = vsel %vm3060, %v2939, %v3003
        %v3066 = vsel %vm3060, %v2941, %v3005
        %v3067 = vsel %vm3060, %v2943, %v3007
        %v3068 = vsel %vm3060, %v2945, %v3009
        %v3069 = vsel %vm3060, %v2947, %v3011
        %v3070 = vsel %vm3060, %v2949, %v3013
        %v3071 = vsel %vm3060, %v2951, %v3015
        %v3072 = vsel %vm3060, %v2953, %v3017
        %v3073 = vsel %vm3060, %v2955, %v3019
        %v3074 = vsel %vm3060, %v2957, %v3021
        %v3075 = vsel %vm3060, %v2959, %v3023
        %v3076 = vsel %vm3060, %v2961, %v3025
        %v3077 = vsel %vm3060, %v2963, %v3027
        %v3078 = vsel %vm3060, %v2965, %v3029
        %v3079 = vsel %vm3060, %v2967, %v3031
        %v3080 = vsel %vm3060, %v2969, %v3033
        %v3081 = vsel %vm3060, %v2971, %v3035
        %v3082 = vsel %vm3060, %v2973, %v3037
        %v3083 = vsel %vm3060, %v2975, %v3039
        %v3084 = vsel %vm3060, %v2977, %v3041
        %v3085 = vsel %vm3060, %v2979, %v3043
        %v3086 = vsel %vm3060, %v2981, %v3045
        %v3087 = vsel %vm3060, %v2983, %v3047
        %v3088 = vsel %vm3060, %v2985, %v3049
        %v3089 = vsel %vm3060, %v2987, %v3051
        %v3090 = vsel %vm3060, %v2989, %v3053
        %v3091 = vsel %vm3060, %v2991, %v3055
        %v3092 = vsel %vm3060, %v2993, %v3057
        %v3093 = vsel %vm3060, %v2995, %v2931
        %v3094 = vsel %vm3060, %v2997, %v2933
        %v3095 = vsel %vm3060, %v2999, %v2935
        %v3096 = vsel %vm3060, %v3001, %v2937
        %v3097 = vsel %vm3060, %v3003, %v2939
        %v3098 = vsel %vm3060, %v3005, %v2941
        %v3099 = vsel %vm3060, %v3007, %v2943
        %v3100 = vsel %vm3060, %v3009, %v2945
        %v3101 = vsel %vm3060, %v3011, %v2947
        %v3102 = vsel %vm3060, %v3013, %v2949
        %v3103 = vsel %vm3060, %v3015, %v2951
        %v3104 = vsel %vm3060, %v3017, %v2953
        %v3105 = vsel %vm3060, %v3019, %v2955
        %v3106 = vsel %vm3060, %v3021, %v2957
        %v3107 = vsel %vm3060, %v3023, %v2959
        %v3108 = vsel %vm3060, %v3025, %v2961
        %v3109 = vsel %vm3060, %v3027, %v2963
        %v3110 = vsel %vm3060, %v3029, %v2965
        %v3111 = vsel %vm3060, %v3031, %v2967
        %v3112 = vsel %vm3060, %v3033, %v2969
        %v3113 = vsel %vm3060, %v3035, %v2971
        %v3114 = vsel %vm3060, %v3037, %v2973
        %v3115 = vsel %vm3060, %v3039, %v2975
        %v3116 = vsel %vm3060, %v3041, %v2977
        %v3117 = vsel %vm3060, %v3043, %v2979
        %v3118 = vsel %vm3060, %v3045, %v2981
        %v3119 = vsel %vm3060, %v3047, %v2983
        %v3120 = vsel %vm3060, %v3049, %v2985
        %v3121 = vsel %vm3060, %v3051, %v2987
        %v3122 = vsel %vm3060, %v3053, %v2989
        %v3123 = vsel %vm3060, %v3055, %v2991
        %v3124 = vsel %vm3060, %v3057, %v2993
        %v3125 = vmax.f32 %v2866, %v3061
        %v3126 = vmax.f32 %v2867, %v3093
        %v3127 = vmax.f32 %v2868, %v3062
        %v3128 = vmax.f32 %v2869, %v3094
        %v3129 = vmax.f32 %v2870, %v3063
        %v3130 = vmax.f32 %v2871, %v3095
        %v3131 = vmax.f32 %v2872, %v3064
        %v3132 = vmax.f32 %v2873, %v3096
        %v3133 = vmax.f32 %v2874, %v3065
        %v3134 = vmax.f32 %v2875, %v3097
        %v3135 = vmax.f32 %v2876, %v3066
        %v3136 = vmax.f32 %v2877, %v3098
        %v3137 = vmax.f32 %v2878, %v3067
        %v3138 = vmax.f32 %v2879, %v3099
        %v3139 = vmax.f32 %v2880, %v3068
        %v3140 = vmax.f32 %v2881, %v3100
        %v3141 = vmax.f32 %v2882, %v3069
        %v3142 = vmax.f32 %v2883, %v3101
        %v3143 = vmax.f32 %v2884, %v3070
        %v3144 = vmax.f32 %v2885, %v3102
        %v3145 = vmax.f32 %v2886, %v3071
        %v3146 = vmax.f32 %v2887, %v3103
        %v3147 = vmax.f32 %v2888, %v3072
        %v3148 = vmax.f32 %v2889, %v3104
        %v3149 = vmax.f32 %v2890, %v3073
        %v3150 = vmax.f32 %v2891, %v3105
        %v3151 = vmax.f32 %v2892, %v3074
        %v3152 = vmax.f32 %v2893, %v3106
        %v3153 = vmax.f32 %v2894, %v3075
        %v3154 = vmax.f32 %v2895, %v3107
        %v3155 = vmax.f32 %v2896, %v3076
        %v3156 = vmax.f32 %v2897, %v3108
        %v3157 = vmax.f32 %v2898, %v3077
        %v3158 = vmax.f32 %v2899, %v3109
        %v3159 = vmax.f32 %v2900, %v3078
        %v3160 = vmax.f32 %v2901, %v3110
        %v3161 = vmax.f32 %v2902, %v3079
        %v3162 = vmax.f32 %v2903, %v3111
        %v3163 = vmax.f32 %v2904, %v3080
        %v3164 = vmax.f32 %v2905, %v3112
        %v3165 = vmax.f32 %v2906, %v3081
        %v3166 = vmax.f32 %v2907, %v3113
        %v3167 = vmax.f32 %v2908, %v3082
        %v3168 = vmax.f32 %v2909, %v3114
        %v3169 = vmax.f32 %v2910, %v3083
        %v3170 = vmax.f32 %v2911, %v3115
        %v3171 = vmax.f32 %v2912, %v3084
        %v3172 = vmax.f32 %v2913, %v3116
        %v3173 = vmax.f32 %v2914, %v3085
        %v3174 = vmax.f32 %v2915, %v3117
        %v3175 = vmax.f32 %v2916, %v3086
        %v3176 = vmax.f32 %v2917, %v3118
        %v3177 = vmax.f32 %v2918, %v3087
        %v3178 = vmax.f32 %v2919, %v3119
        %v3179 = vmax.f32 %v2920, %v3088
        %v3180 = vmax.f32 %v2921, %v3120
        %v3181 = vmax.f32 %v2922, %v3089
        %v3182 = vmax.f32 %v2923, %v3121
        %v3183 = vmax.f32 %v2924, %v3090
        %v3184 = vmax.f32 %v2925, %v3122
        %v3185 = vmax.f32 %v2926, %v3091
        %v3186 = vmax.f32 %v2927, %v3123
        %v3187 = vmax.f32 %v2928, %v3092
        %v3188 = vmax.f32 %v2929, %v3124
        %v3189 = vrot.slane %v3125, 1
        %v3190 = vrot.slane %v3126, 1
        %v3191 = vrot.slane %v3127, 1
        %v3192 = vrot.slane %v3128, 1
        %v3193 = vrot.slane %v3129, 1
        %v3194 = vrot.slane %v3130, 1
        %v3195 = vrot.slane %v3131, 1
        %v3196 = vrot.slane %v3132, 1
        %v3197 = vrot.slane %v3133, 1
        %v3198 = vrot.slane %v3134, 1
        %v3199 = vrot.slane %v3135, 1
        %v3200 = vrot.slane %v3136, 1
        %v3201 = vrot.slane %v3137, 1
        %v3202 = vrot.slane %v3138, 1
        %v3203 = vrot.slane %v3139, 1
        %v3204 = vrot.slane %v3140, 1
        %v3205 = vrot.slane %v3141, 1
        %v3206 = vrot.slane %v3142, 1
        %v3207 = vrot.slane %v3143, 1
        %v3208 = vrot.slane %v3144, 1
        %v3209 = vrot.slane %v3145, 1
        %v3210 = vrot.slane %v3146, 1
        %v3211 = vrot.slane %v3147, 1
        %v3212 = vrot.slane %v3148, 1
        %v3213 = vrot.slane %v3149, 1
        %v3214 = vrot.slane %v3150, 1
        %v3215 = vrot.slane %v3151, 1
        %v3216 = vrot.slane %v3152, 1
        %v3217 = vrot.slane %v3153, 1
        %v3218 = vrot.slane %v3154, 1
        %v3219 = vrot.slane %v3155, 1
        %v3220 = vrot.slane %v3156, 1
        %v3221 = vrot.slane %v3157, 1
        %v3222 = vrot.slane %v3158, 1
        %v3223 = vrot.slane %v3159, 1
        %v3224 = vrot.slane %v3160, 1
        %v3225 = vrot.slane %v3161, 1
        %v3226 = vrot.slane %v3162, 1
        %v3227 = vrot.slane %v3163, 1
        %v3228 = vrot.slane %v3164, 1
        %v3229 = vrot.slane %v3165, 1
        %v3230 = vrot.slane %v3166, 1
        %v3231 = vrot.slane %v3167, 1
        %v3232 = vrot.slane %v3168, 1
        %v3233 = vrot.slane %v3169, 1
        %v3234 = vrot.slane %v3170, 1
        %v3235 = vrot.slane %v3171, 1
        %v3236 = vrot.slane %v3172, 1
        %v3237 = vrot.slane %v3173, 1
        %v3238 = vrot.slane %v3174, 1
        %v3239 = vrot.slane %v3175, 1
        %v3240 = vrot.slane %v3176, 1
        %v3241 = vrot.slane %v3177, 1
        %v3242 = vrot.slane %v3178, 1
        %v3243 = vrot.slane %v3179, 1
        %v3244 = vrot.slane %v3180, 1
        %v3245 = vrot.slane %v3181, 1
        %v3246 = vrot.slane %v3182, 1
        %v3247 = vrot.slane %v3183, 1
        %v3248 = vrot.slane %v3184, 1
        %v3249 = vrot.slane %v3185, 1
        %v3250 = vrot.slane %v3186, 1
        %v3251 = vrot.slane %v3187, 1
        %v3252 = vrot.slane %v3188, 1
        %v3253 = vsel %vm504, %v3249, %v3251
        %v3254 = vsel %vm504, %v3250, %v3252
        %v3255 = vsel %vm504, %v3247, %v3249
        %v3256 = vsel %vm504, %v3248, %v3250
        %v3257 = vsel %vm504, %v3245, %v3247
        %v3258 = vsel %vm504, %v3246, %v3248
        %v3259 = vsel %vm504, %v3243, %v3245
        %v3260 = vsel %vm504, %v3244, %v3246
        %v3261 = vsel %vm504, %v3241, %v3243
        %v3262 = vsel %vm504, %v3242, %v3244
        %v3263 = vsel %vm504, %v3239, %v3241
        %v3264 = vsel %vm504, %v3240, %v3242
        %v3265 = vsel %vm504, %v3237, %v3239
        %v3266 = vsel %vm504, %v3238, %v3240
        %v3267 = vsel %vm504, %v3235, %v3237
        %v3268 = vsel %vm504, %v3236, %v3238
        %v3269 = vsel %vm504, %v3233, %v3235
        %v3270 = vsel %vm504, %v3234, %v3236
        %v3271 = vsel %vm504, %v3231, %v3233
        %v3272 = vsel %vm504, %v3232, %v3234
        %v3273 = vsel %vm504, %v3229, %v3231
        %v3274 = vsel %vm504, %v3230, %v3232
        %v3275 = vsel %vm504, %v3227, %v3229
        %v3276 = vsel %vm504, %v3228, %v3230
        %v3277 = vsel %vm504, %v3225, %v3227
        %v3278 = vsel %vm504, %v3226, %v3228
        %v3279 = vsel %vm504, %v3223, %v3225
        %v3280 = vsel %vm504, %v3224, %v3226
        %v3281 = vsel %vm504, %v3221, %v3223
        %v3282 = vsel %vm504, %v3222, %v3224
        %v3283 = vsel %vm504, %v3219, %v3221
        %v3284 = vsel %vm504, %v3220, %v3222
        %v3285 = vsel %vm504, %v3217, %v3219
        %v3286 = vsel %vm504, %v3218, %v3220
        %v3287 = vsel %vm504, %v3215, %v3217
        %v3288 = vsel %vm504, %v3216, %v3218
        %v3289 = vsel %vm504, %v3213, %v3215
        %v3290 = vsel %vm504, %v3214, %v3216
        %v3291 = vsel %vm504, %v3211, %v3213
        %v3292 = vsel %vm504, %v3212, %v3214
        %v3293 = vsel %vm504, %v3209, %v3211
        %v3294 = vsel %vm504, %v3210, %v3212
        %v3295 = vsel %vm504, %v3207, %v3209
        %v3296 = vsel %vm504, %v3208, %v3210
        %v3297 = vsel %vm504, %v3205, %v3207
        %v3298 = vsel %vm504, %v3206, %v3208
        %v3299 = vsel %vm504, %v3203, %v3205
        %v3300 = vsel %vm504, %v3204, %v3206
        %v3301 = vsel %vm504, %v3201, %v3203
        %v3302 = vsel %vm504, %v3202, %v3204
        %v3303 = vsel %vm504, %v3199, %v3201
        %v3304 = vsel %vm504, %v3200, %v3202
        %v3305 = vsel %vm504, %v3197, %v3199
        %v3306 = vsel %vm504, %v3198, %v3200
        %v3307 = vsel %vm504, %v3195, %v3197
        %v3308 = vsel %vm504, %v3196, %v3198
        %v3309 = vsel %vm504, %v3193, %v3195
        %v3310 = vsel %vm504, %v3194, %v3196
        %v3311 = vsel %vm504, %v3191, %v3193
        %v3312 = vsel %vm504, %v3192, %v3194
        %v3313 = vsel %vm504, %v3189, %v3191
        %v3314 = vsel %vm504, %v3190, %v3192
        %v3315 = vsel %vm504, %v3251, %v3189
        %v3316 = vsel %vm504, %v3252, %v3190
        %v3317 = vmax.f32 %v3125, %v3313
        %v3318 = vmax.f32 %v3126, %v3314
        %v3319 = vmax.f32 %v3127, %v3311
        %v3320 = vmax.f32 %v3128, %v3312
        %v3321 = vmax.f32 %v3129, %v3309
        %v3322 = vmax.f32 %v3130, %v3310
        %v3323 = vmax.f32 %v3131, %v3307
        %v3324 = vmax.f32 %v3132, %v3308
        %v3325 = vmax.f32 %v3133, %v3305
        %v3326 = vmax.f32 %v3134, %v3306
        %v3327 = vmax.f32 %v3135, %v3303
        %v3328 = vmax.f32 %v3136, %v3304
        %v3329 = vmax.f32 %v3137, %v3301
        %v3330 = vmax.f32 %v3138, %v3302
        %v3331 = vmax.f32 %v3139, %v3299
        %v3332 = vmax.f32 %v3140, %v3300
        %v3333 = vmax.f32 %v3141, %v3297
        %v3334 = vmax.f32 %v3142, %v3298
        %v3335 = vmax.f32 %v3143, %v3295
        %v3336 = vmax.f32 %v3144, %v3296
        %v3337 = vmax.f32 %v3145, %v3293
        %v3338 = vmax.f32 %v3146, %v3294
        %v3339 = vmax.f32 %v3147, %v3291
        %v3340 = vmax.f32 %v3148, %v3292
        %v3341 = vmax.f32 %v3149, %v3289
        %v3342 = vmax.f32 %v3150, %v3290
        %v3343 = vmax.f32 %v3151, %v3287
        %v3344 = vmax.f32 %v3152, %v3288
        %v3345 = vmax.f32 %v3153, %v3285
        %v3346 = vmax.f32 %v3154, %v3286
        %v3347 = vmax.f32 %v3155, %v3283
        %v3348 = vmax.f32 %v3156, %v3284
        %v3349 = vmax.f32 %v3157, %v3281
        %v3350 = vmax.f32 %v3158, %v3282
        %v3351 = vmax.f32 %v3159, %v3279
        %v3352 = vmax.f32 %v3160, %v3280
        %v3353 = vmax.f32 %v3161, %v3277
        %v3354 = vmax.f32 %v3162, %v3278
        %v3355 = vmax.f32 %v3163, %v3275
        %v3356 = vmax.f32 %v3164, %v3276
        %v3357 = vmax.f32 %v3165, %v3273
        %v3358 = vmax.f32 %v3166, %v3274
        %v3359 = vmax.f32 %v3167, %v3271
        %v3360 = vmax.f32 %v3168, %v3272
        %v3361 = vmax.f32 %v3169, %v3269
        %v3362 = vmax.f32 %v3170, %v3270
        %v3363 = vmax.f32 %v3171, %v3267
        %v3364 = vmax.f32 %v3172, %v3268
        %v3365 = vmax.f32 %v3173, %v3265
        %v3366 = vmax.f32 %v3174, %v3266
        %v3367 = vmax.f32 %v3175, %v3263
        %v3368 = vmax.f32 %v3176, %v3264
        %v3369 = vmax.f32 %v3177, %v3261
        %v3370 = vmax.f32 %v3178, %v3262
        %v3371 = vmax.f32 %v3179, %v3259
        %v3372 = vmax.f32 %v3180, %v3260
        %v3373 = vmax.f32 %v3181, %v3257
        %v3374 = vmax.f32 %v3182, %v3258
        %v3375 = vmax.f32 %v3183, %v3255
        %v3376 = vmax.f32 %v3184, %v3256
        %v3377 = vmax.f32 %v3185, %v3253
        %v3378 = vmax.f32 %v3186, %v3254
        %v3379 = vmax.f32 %v3187, %v3315
        %v3380 = vmax.f32 %v3188, %v3316
        %v3381 = vld [vmem:[%s3] sm:$0xff]
        %v3382 = vld [vmem:[%s3 + $0x8] sm:$0xff]
        %v3383 = vld [vmem:[%s3 + $0x10] sm:$0xff]
        %v3384 = vld [vmem:[%s3 + $0x18] sm:$0xff]
        %v3385 = vld [vmem:[%s3 + $0x20] sm:$0xff]
        %v3386 = vld [vmem:[%s3 + $0x28] sm:$0xff]
        %v3387 = vld [vmem:[%s3 + $0x30] sm:$0xff]
        %v3388 = vld [vmem:[%s3 + $0x38] sm:$0xff]
        %v3389 = vld [vmem:[%s3 + $0x40] sm:$0xff]
        %v3390 = vld [vmem:[%s3 + $0x48] sm:$0xff]
        %v3391 = vld [vmem:[%s3 + $0x50] sm:$0xff]
        %v3392 = vld [vmem:[%s3 + $0x58] sm:$0xff]
        %v3393 = vld [vmem:[%s3 + $0x60] sm:$0xff]
        %v3394 = vld [vmem:[%s3 + $0x68] sm:$0xff]
        %v3395 = vld [vmem:[%s3 + $0x70] sm:$0xff]
        %v3396 = vld [vmem:[%s3 + $0x78] sm:$0xff]
        %v3397 = vld [vmem:[%s3 + $0x80] sm:$0xff]
        %v3398 = vld [vmem:[%s3 + $0x88] sm:$0xff]
        %v3399 = vld [vmem:[%s3 + $0x90] sm:$0xff]
        %v3400 = vld [vmem:[%s3 + $0x98] sm:$0xff]
        %v3401 = vld [vmem:[%s3 + $0xa0] sm:$0xff]
        %v3402 = vld [vmem:[%s3 + $0xa8] sm:$0xff]
        %v3403 = vld [vmem:[%s3 + $0xb0] sm:$0xff]
        %v3404 = vld [vmem:[%s3 + $0xb8] sm:$0xff]
        %v3405 = vld [vmem:[%s3 + $0xc0] sm:$0xff]
        %v3406 = vld [vmem:[%s3 + $0xc8] sm:$0xff]
        %v3407 = vld [vmem:[%s3 + $0xd0] sm:$0xff]
        %v3408 = vld [vmem:[%s3 + $0xd8] sm:$0xff]
        %v3409 = vld [vmem:[%s3 + $0xe0] sm:$0xff]
        %v3410 = vld [vmem:[%s3 + $0xe8] sm:$0xff]
        %v3411 = vld [vmem:[%s3 + $0xf0] sm:$0xff]
        %v3412 = vld [vmem:[%s3 + $0xf8] sm:$0xff]
        %v3413 = vld [vmem:[%s3 + $0x100] sm:$0xff]
        %v3414 = vld [vmem:[%s3 + $0x108] sm:$0xff]
        %v3415 = vld [vmem:[%s3 + $0x110] sm:$0xff]
        %v3416 = vld [vmem:[%s3 + $0x118] sm:$0xff]
        %v3417 = vld [vmem:[%s3 + $0x120] sm:$0xff]
        %v3418 = vld [vmem:[%s3 + $0x128] sm:$0xff]
        %v3419 = vld [vmem:[%s3 + $0x130] sm:$0xff]
        %v3420 = vld [vmem:[%s3 + $0x138] sm:$0xff]
        %v3421 = vld [vmem:[%s3 + $0x140] sm:$0xff]
        %v3422 = vld [vmem:[%s3 + $0x148] sm:$0xff]
        %v3423 = vld [vmem:[%s3 + $0x150] sm:$0xff]
        %v3424 = vld [vmem:[%s3 + $0x158] sm:$0xff]
        %v3425 = vld [vmem:[%s3 + $0x160] sm:$0xff]
        %v3426 = vld [vmem:[%s3 + $0x168] sm:$0xff]
        %v3427 = vld [vmem:[%s3 + $0x170] sm:$0xff]
        %v3428 = vld [vmem:[%s3 + $0x178] sm:$0xff]
        %v3429 = vld [vmem:[%s3 + $0x180] sm:$0xff]
        %v3430 = vld [vmem:[%s3 + $0x188] sm:$0xff]
        %v3431 = vld [vmem:[%s3 + $0x190] sm:$0xff]
        %v3432 = vld [vmem:[%s3 + $0x198] sm:$0xff]
        %v3433 = vld [vmem:[%s3 + $0x1a0] sm:$0xff]
        %v3434 = vld [vmem:[%s3 + $0x1a8] sm:$0xff]
        %v3435 = vld [vmem:[%s3 + $0x1b0] sm:$0xff]
        %v3436 = vld [vmem:[%s3 + $0x1b8] sm:$0xff]
        %v3437 = vld [vmem:[%s3 + $0x1c0] sm:$0xff]
        %v3438 = vld [vmem:[%s3 + $0x1c8] sm:$0xff]
        %v3439 = vld [vmem:[%s3 + $0x1d0] sm:$0xff]
        %v3440 = vld [vmem:[%s3 + $0x1d8] sm:$0xff]
        %v3441 = vld [vmem:[%s3 + $0x1e0] sm:$0xff]
        %v3442 = vld [vmem:[%s3 + $0x1e8] sm:$0xff]
        %v3443 = vld [vmem:[%s3 + $0x1f0] sm:$0xff]
        %v3444 = vld [vmem:[%s3 + $0x1f8] sm:$0xff]
        %v3445 = vrot.slane %v3317, 2
        %v3446 = vrot.slane %v3318, 2
        %v3447 = vrot.slane %v3319, 2
        %v3448 = vrot.slane %v3320, 2
        %v3449 = vrot.slane %v3321, 2
        %v3450 = vrot.slane %v3322, 2
        %v3451 = vrot.slane %v3323, 2
        %v3452 = vrot.slane %v3324, 2
        %v3453 = vrot.slane %v3325, 2
        %v3454 = vrot.slane %v3326, 2
        %v3455 = vrot.slane %v3327, 2
        %v3456 = vrot.slane %v3328, 2
        %v3457 = vrot.slane %v3329, 2
        %v3458 = vrot.slane %v3330, 2
        %v3459 = vrot.slane %v3331, 2
        %v3460 = vrot.slane %v3332, 2
        %v3461 = vrot.slane %v3333, 2
        %v3462 = vrot.slane %v3334, 2
        %v3463 = vrot.slane %v3335, 2
        %v3464 = vrot.slane %v3336, 2
        %v3465 = vrot.slane %v3337, 2
        %v3466 = vrot.slane %v3338, 2
        %v3467 = vrot.slane %v3339, 2
        %v3468 = vrot.slane %v3340, 2
        %v3469 = vrot.slane %v3341, 2
        %v3470 = vrot.slane %v3342, 2
        %v3471 = vrot.slane %v3343, 2
        %v3472 = vrot.slane %v3344, 2
        %v3473 = vrot.slane %v3345, 2
        %v3474 = vrot.slane %v3346, 2
        %v3475 = vrot.slane %v3347, 2
        %v3476 = vrot.slane %v3348, 2
        %v3477 = vrot.slane %v3349, 2
        %v3478 = vrot.slane %v3350, 2
        %v3479 = vrot.slane %v3351, 2
        %v3480 = vrot.slane %v3352, 2
        %v3481 = vrot.slane %v3353, 2
        %v3482 = vrot.slane %v3354, 2
        %v3483 = vrot.slane %v3355, 2
        %v3484 = vrot.slane %v3356, 2
        %v3485 = vrot.slane %v3357, 2
        %v3486 = vrot.slane %v3358, 2
        %v3487 = vrot.slane %v3359, 2
        %v3488 = vrot.slane %v3360, 2
        %v3489 = vrot.slane %v3361, 2
        %v3490 = vrot.slane %v3362, 2
        %v3491 = vrot.slane %v3363, 2
        %v3492 = vrot.slane %v3364, 2
        %v3493 = vrot.slane %v3365, 2
        %v3494 = vrot.slane %v3366, 2
        %v3495 = vrot.slane %v3367, 2
        %v3496 = vrot.slane %v3368, 2
        %v3497 = vrot.slane %v3369, 2
        %v3498 = vrot.slane %v3370, 2
        %v3499 = vrot.slane %v3371, 2
        %v3500 = vrot.slane %v3372, 2
        %v3501 = vrot.slane %v3373, 2
        %v3502 = vrot.slane %v3374, 2
        %v3503 = vrot.slane %v3375, 2
        %v3504 = vrot.slane %v3376, 2
        %v3505 = vrot.slane %v3377, 2
        %v3506 = vrot.slane %v3378, 2
        %v3507 = vrot.slane %v3379, 2
        %v3508 = vrot.slane %v3380, 2
        %v3509 = vsel %vm1301, %v3505, %v3507
        %v3510 = vsel %vm1301, %v3506, %v3508
        %v3511 = vsel %vm1301, %v3503, %v3505
        %v3512 = vsel %vm1301, %v3504, %v3506
        %v3513 = vsel %vm1301, %v3501, %v3503
        %v3514 = vsel %vm1301, %v3502, %v3504
        %v3515 = vsel %vm1301, %v3499, %v3501
        %v3516 = vsel %vm1301, %v3500, %v3502
        %v3517 = vsel %vm1301, %v3497, %v3499
        %v3518 = vsel %vm1301, %v3498, %v3500
        %v3519 = vsel %vm1301, %v3495, %v3497
        %v3520 = vsel %vm1301, %v3496, %v3498
        %v3521 = vsel %vm1301, %v3493, %v3495
        %v3522 = vsel %vm1301, %v3494, %v3496
        %v3523 = vsel %vm1301, %v3491, %v3493
        %v3524 = vsel %vm1301, %v3492, %v3494
        %v3525 = vsel %vm1301, %v3489, %v3491
        %v3526 = vsel %vm1301, %v3490, %v3492
        %v3527 = vsel %vm1301, %v3487, %v3489
        %v3528 = vsel %vm1301, %v3488, %v3490
        %v3529 = vsel %vm1301, %v3485, %v3487
        %v3530 = vsel %vm1301, %v3486, %v3488
        %v3531 = vsel %vm1301, %v3483, %v3485
        %v3532 = vsel %vm1301, %v3484, %v3486
        %v3533 = vsel %vm1301, %v3481, %v3483
        %v3534 = vsel %vm1301, %v3482, %v3484
        %v3535 = vsel %vm1301, %v3479, %v3481
        %v3536 = vsel %vm1301, %v3480, %v3482
        %v3537 = vsel %vm1301, %v3477, %v3479
        %v3538 = vsel %vm1301, %v3478, %v3480
        %v3539 = vsel %vm1301, %v3475, %v3477
        %v3540 = vsel %vm1301, %v3476, %v3478
        %v3541 = vsel %vm1301, %v3473, %v3475
        %v3542 = vsel %vm1301, %v3474, %v3476
        %v3543 = vsel %vm1301, %v3471, %v3473
        %v3544 = vsel %vm1301, %v3472, %v3474
        %v3545 = vsel %vm1301, %v3469, %v3471
        %v3546 = vsel %vm1301, %v3470, %v3472
        %v3547 = vsel %vm1301, %v3467, %v3469
        %v3548 = vsel %vm1301, %v3468, %v3470
        %v3549 = vsel %vm1301, %v3465, %v3467
        %v3550 = vsel %vm1301, %v3466, %v3468
        %v3551 = vsel %vm1301, %v3463, %v3465
        %v3552 = vsel %vm1301, %v3464, %v3466
        %v3553 = vsel %vm1301, %v3461, %v3463
        %v3554 = vsel %vm1301, %v3462, %v3464
        %v3555 = vsel %vm1301, %v3459, %v3461
        %v3556 = vsel %vm1301, %v3460, %v3462
        %v3557 = vsel %vm1301, %v3457, %v3459
        %v3558 = vsel %vm1301, %v3458, %v3460
        %v3559 = vsel %vm1301, %v3455, %v3457
        %v3560 = vsel %vm1301, %v3456, %v3458
        %v3561 = vsel %vm1301, %v3453, %v3455
        %v3562 = vsel %vm1301, %v3454, %v3456
        %v3563 = vsel %vm1301, %v3451, %v3453
        %v3564 = vsel %vm1301, %v3452, %v3454
        %v3565 = vsel %vm1301, %v3449, %v3451
        %v3566 = vsel %vm1301, %v3450, %v3452
        %v3567 = vsel %vm1301, %v3447, %v3449
        %v3568 = vsel %vm1301, %v3448, %v3450
        %v3569 = vsel %vm1301, %v3445, %v3447
        %v3570 = vsel %vm1301, %v3446, %v3448
        %v3571 = vsel %vm1301, %v3507, %v3445
        %v3572 = vsel %vm1301, %v3508, %v3446
        %s3573 = scalar_lea.vmem %s3, 512
        %v3574 = vld [vmem:[%s3573] sm:$0xff]
        %v3575 = vld [vmem:[%s3573 + $0x8] sm:$0xff]
        %v3576 = vld [vmem:[%s3573 + $0x10] sm:$0xff]
        %v3577 = vld [vmem:[%s3573 + $0x18] sm:$0xff]
        %v3578 = vld [vmem:[%s3573 + $0x20] sm:$0xff]
        %v3579 = vld [vmem:[%s3573 + $0x28] sm:$0xff]
        %v3580 = vld [vmem:[%s3573 + $0x30] sm:$0xff]
        %v3581 = vld [vmem:[%s3573 + $0x38] sm:$0xff]
        %v3582 = vld [vmem:[%s3573 + $0x40] sm:$0xff]
        %v3583 = vld [vmem:[%s3573 + $0x48] sm:$0xff]
        %v3584 = vld [vmem:[%s3573 + $0x50] sm:$0xff]
        %v3585 = vld [vmem:[%s3573 + $0x58] sm:$0xff]
        %v3586 = vld [vmem:[%s3573 + $0x60] sm:$0xff]
        %v3587 = vld [vmem:[%s3573 + $0x68] sm:$0xff]
        %v3588 = vld [vmem:[%s3573 + $0x70] sm:$0xff]
        %v3589 = vld [vmem:[%s3573 + $0x78] sm:$0xff]
        %v3590 = vld [vmem:[%s3573 + $0x80] sm:$0xff]
        %v3591 = vld [vmem:[%s3573 + $0x88] sm:$0xff]
        %v3592 = vld [vmem:[%s3573 + $0x90] sm:$0xff]
        %v3593 = vld [vmem:[%s3573 + $0x98] sm:$0xff]
        %v3594 = vld [vmem:[%s3573 + $0xa0] sm:$0xff]
        %v3595 = vld [vmem:[%s3573 + $0xa8] sm:$0xff]
        %v3596 = vld [vmem:[%s3573 + $0xb0] sm:$0xff]
        %v3597 = vld [vmem:[%s3573 + $0xb8] sm:$0xff]
        %v3598 = vld [vmem:[%s3573 + $0xc0] sm:$0xff]
        %v3599 = vld [vmem:[%s3573 + $0xc8] sm:$0xff]
        %v3600 = vld [vmem:[%s3573 + $0xd0] sm:$0xff]
        %v3601 = vld [vmem:[%s3573 + $0xd8] sm:$0xff]
        %v3602 = vld [vmem:[%s3573 + $0xe0] sm:$0xff]
        %v3603 = vld [vmem:[%s3573 + $0xe8] sm:$0xff]
        %v3604 = vld [vmem:[%s3573 + $0xf0] sm:$0xff]
        %v3605 = vld [vmem:[%s3573 + $0xf8] sm:$0xff]
        %v3606 = vld [vmem:[%s3573 + $0x100] sm:$0xff]
        %v3607 = vld [vmem:[%s3573 + $0x108] sm:$0xff]
        %v3608 = vld [vmem:[%s3573 + $0x110] sm:$0xff]
        %v3609 = vld [vmem:[%s3573 + $0x118] sm:$0xff]
        %v3610 = vld [vmem:[%s3573 + $0x120] sm:$0xff]
        %v3611 = vld [vmem:[%s3573 + $0x128] sm:$0xff]
        %v3612 = vld [vmem:[%s3573 + $0x130] sm:$0xff]
        %v3613 = vld [vmem:[%s3573 + $0x138] sm:$0xff]
        %v3614 = vld [vmem:[%s3573 + $0x140] sm:$0xff]
        %v3615 = vld [vmem:[%s3573 + $0x148] sm:$0xff]
        %v3616 = vld [vmem:[%s3573 + $0x150] sm:$0xff]
        %v3617 = vld [vmem:[%s3573 + $0x158] sm:$0xff]
        %v3618 = vld [vmem:[%s3573 + $0x160] sm:$0xff]
        %v3619 = vld [vmem:[%s3573 + $0x168] sm:$0xff]
        %v3620 = vld [vmem:[%s3573 + $0x170] sm:$0xff]
        %v3621 = vld [vmem:[%s3573 + $0x178] sm:$0xff]
        %v3622 = vld [vmem:[%s3573 + $0x180] sm:$0xff]
        %v3623 = vld [vmem:[%s3573 + $0x188] sm:$0xff]
        %v3624 = vld [vmem:[%s3573 + $0x190] sm:$0xff]
        %v3625 = vld [vmem:[%s3573 + $0x198] sm:$0xff]
        %v3626 = vld [vmem:[%s3573 + $0x1a0] sm:$0xff]
        %v3627 = vld [vmem:[%s3573 + $0x1a8] sm:$0xff]
        %v3628 = vld [vmem:[%s3573 + $0x1b0] sm:$0xff]
        %v3629 = vld [vmem:[%s3573 + $0x1b8] sm:$0xff]
        %v3630 = vld [vmem:[%s3573 + $0x1c0] sm:$0xff]
        %v3631 = vld [vmem:[%s3573 + $0x1c8] sm:$0xff]
        %v3632 = vld [vmem:[%s3573 + $0x1d0] sm:$0xff]
        %v3633 = vld [vmem:[%s3573 + $0x1d8] sm:$0xff]
        %v3634 = vld [vmem:[%s3573 + $0x1e0] sm:$0xff]
        %v3635 = vld [vmem:[%s3573 + $0x1e8] sm:$0xff]
        %v3636 = vld [vmem:[%s3573 + $0x1f0] sm:$0xff]
        %v3637 = vld [vmem:[%s3573 + $0x1f8] sm:$0xff]
        %3638 = vmatprep.subr.mxu0 %v3605
        %3639 = vmatpush1.msra.mxu0 %v3604
        %3640 = vmatprep.subr.mxu0 %v3603
        %3641 = vmatpush1.msra.mxu0 %v3602
        %3642 = vmatprep.subr.mxu0 %v3601
        %3643 = vmatpush1.msra.mxu0 %v3600
        %3644 = vmatprep.subr.mxu0 %v3599
        %3645 = vmatpush1.msra.mxu0 %v3598
        %3646 = vmatprep.subr.mxu0 %v3597
        %3647 = vmatpush1.msra.mxu0 %v3596
        %3648 = vmatprep.subr.mxu0 %v3595
        %3649 = vmatpush1.msra.mxu0 %v3594
        %3650 = vmatprep.subr.mxu0 %v3593
        %3651 = vmatpush1.msra.mxu0 %v3592
        %3652 = vmatprep.subr.mxu0 %v3591
        %3653 = vmatpush1.msra.mxu0 %v3590
        %3654 = vmatprep.subr.mxu0 %v3589
        %3655 = vmatpush1.msra.mxu0 %v3588
        %3656 = vmatprep.subr.mxu0 %v3587
        %3657 = vmatpush1.msra.mxu0 %v3586
        %3658 = vmatprep.subr.mxu0 %v3585
        %3659 = vmatpush1.msra.mxu0 %v3584
        %3660 = vmatprep.subr.mxu0 %v3583
        %3661 = vmatpush1.msra.mxu0 %v3582
        %3662 = vmatprep.subr.mxu0 %v3581
        %3663 = vmatpush1.msra.mxu0 %v3580
        %3664 = vmatprep.subr.mxu0 %v3579
        %3665 = vmatpush1.msra.mxu0 %v3578
        %3666 = vmatprep.subr.mxu0 %v3577
        %3667 = vmatpush1.msra.mxu0 %v3576
        %3668 = vmatprep.subr.mxu0 %v3575
        %3669 = vmatpush1.msra.mxu0 %v3574
        %3670 = vmatprep.subr.mxu0 %v3637
        %3671 = vmatpush2.msra.mxu0 %v3636
        %3672 = vmatprep.subr.mxu0 %v3635
        %3673 = vmatpush2.msra.mxu0 %v3634
        %3674 = vmatprep.subr.mxu0 %v3633
        %3675 = vmatpush2.msra.mxu0 %v3632
        %3676 = vmatprep.subr.mxu0 %v3631
        %3677 = vmatpush2.msra.mxu0 %v3630
        %3678 = vmatprep.subr.mxu0 %v3629
        %3679 = vmatpush2.msra.mxu0 %v3628
        %3680 = vmatprep.subr.mxu0 %v3627
        %3681 = vmatpush2.msra.mxu0 %v3626
        %3682 = vmatprep.subr.mxu0 %v3625
        %3683 = vmatpush2.msra.mxu0 %v3624
        %3684 = vmatprep.subr.mxu0 %v3623
        %3685 = vmatpush2.msra.mxu0 %v3622
        %3686 = vmatprep.subr.mxu0 %v3621
        %3687 = vmatpush2.msra.mxu0 %v3620
        %3688 = vmatprep.subr.mxu0 %v3619
        %3689 = vmatpush2.msra.mxu0 %v3618
        %3690 = vmatprep.subr.mxu0 %v3617
        %3691 = vmatpush2.msra.mxu0 %v3616
        %3692 = vmatprep.subr.mxu0 %v3615
        %3693 = vmatpush2.msra.mxu0 %v3614
        %3694 = vmatprep.subr.mxu0 %v3613
        %3695 = vmatpush2.msra.mxu0 %v3612
        %3696 = vmatprep.subr.mxu0 %v3611
        %3697 = vmatpush2.msra.mxu0 %v3610
        %3698 = vmatprep.subr.mxu0 %v3609
        %3699 = vmatpush2.msra.mxu0 %v3608
        %3700 = vmatprep.subr.mxu0 %v3607
        %3701 = vmatpush2.msra.mxu0 %v3606
        %3702 = vmatprep.mubr.f32.mxu0 %v3570
        %3703 = vmatmul.mubr.f32.gmra.mxu0 %v3569
        %v3704 = vpop.f32.mrf.mxu0
        %v3705 = vadd.f32 0.0, %v3704
        %v3706 = vpop.f32.mrf.mxu0
        %v3707 = vadd.f32 0.0, %v3706
        %3708 = vmatprep.mubr.f32.mxu0 %v3568
        %3709 = vmatmul.mubr.f32.gmra.mxu0 %v3567
        %v3710 = vpop.f32.mrf.mxu0
        %v3711 = vadd.f32 0.0, %v3710
        %v3712 = vpop.f32.mrf.mxu0
        %v3713 = vadd.f32 0.0, %v3712
        %3714 = vmatprep.mubr.f32.mxu0 %v3566
        %3715 = vmatmul.mubr.f32.gmra.mxu0 %v3565
        %v3716 = vpop.f32.mrf.mxu0
        %v3717 = vadd.f32 0.0, %v3716
        %v3718 = vpop.f32.mrf.mxu0
        %v3719 = vadd.f32 0.0, %v3718
        %3720 = vmatprep.mubr.f32.mxu0 %v3564
        %3721 = vmatmul.mubr.f32.gmra.mxu0 %v3563
        %v3722 = vpop.f32.mrf.mxu0
        %v3723 = vadd.f32 0.0, %v3722
        %v3724 = vpop.f32.mrf.mxu0
        %v3725 = vadd.f32 0.0, %v3724
        %3726 = vmatprep.mubr.f32.mxu0 %v3562
        %3727 = vmatmul.mubr.f32.gmra.mxu0 %v3561
        %v3728 = vpop.f32.mrf.mxu0
        %v3729 = vadd.f32 0.0, %v3728
        %v3730 = vpop.f32.mrf.mxu0
        %v3731 = vadd.f32 0.0, %v3730
        %3732 = vmatprep.mubr.f32.mxu0 %v3560
        %3733 = vmatmul.mubr.f32.gmra.mxu0 %v3559
        %v3734 = vpop.f32.mrf.mxu0
        %v3735 = vadd.f32 0.0, %v3734
        %v3736 = vpop.f32.mrf.mxu0
        %v3737 = vadd.f32 0.0, %v3736
        %3738 = vmatprep.mubr.f32.mxu0 %v3558
        %3739 = vmatmul.mubr.f32.gmra.mxu0 %v3557
        %v3740 = vpop.f32.mrf.mxu0
        %v3741 = vadd.f32 0.0, %v3740
        %v3742 = vpop.f32.mrf.mxu0
        %v3743 = vadd.f32 0.0, %v3742
        %3744 = vmatprep.mubr.f32.mxu0 %v3556
        %3745 = vmatmul.mubr.f32.gmra.mxu0 %v3555
        %v3746 = vpop.f32.mrf.mxu0
        %v3747 = vadd.f32 0.0, %v3746
        %v3748 = vpop.f32.mrf.mxu0
        %v3749 = vadd.f32 0.0, %v3748
        %3750 = vmatprep.mubr.f32.mxu0 %v3554
        %3751 = vmatmul.mubr.f32.gmra.mxu0 %v3553
        %v3752 = vpop.f32.mrf.mxu0
        %v3753 = vadd.f32 0.0, %v3752
        %v3754 = vpop.f32.mrf.mxu0
        %v3755 = vadd.f32 0.0, %v3754
        %3756 = vmatprep.mubr.f32.mxu0 %v3552
        %3757 = vmatmul.mubr.f32.gmra.mxu0 %v3551
        %v3758 = vpop.f32.mrf.mxu0
        %v3759 = vadd.f32 0.0, %v3758
        %v3760 = vpop.f32.mrf.mxu0
        %v3761 = vadd.f32 0.0, %v3760
        %3762 = vmatprep.mubr.f32.mxu0 %v3550
        %3763 = vmatmul.mubr.f32.gmra.mxu0 %v3549
        %v3764 = vpop.f32.mrf.mxu0
        %v3765 = vadd.f32 0.0, %v3764
        %v3766 = vpop.f32.mrf.mxu0
        %v3767 = vadd.f32 0.0, %v3766
        %3768 = vmatprep.mubr.f32.mxu0 %v3548
        %3769 = vmatmul.mubr.f32.gmra.mxu0 %v3547
        %v3770 = vpop.f32.mrf.mxu0
        %v3771 = vadd.f32 0.0, %v3770
        %v3772 = vpop.f32.mrf.mxu0
        %v3773 = vadd.f32 0.0, %v3772
        %3774 = vmatprep.mubr.f32.mxu0 %v3546
        %3775 = vmatmul.mubr.f32.gmra.mxu0 %v3545
        %v3776 = vpop.f32.mrf.mxu0
        %v3777 = vadd.f32 0.0, %v3776
        %v3778 = vpop.f32.mrf.mxu0
        %v3779 = vadd.f32 0.0, %v3778
        %3780 = vmatprep.mubr.f32.mxu0 %v3544
        %3781 = vmatmul.mubr.f32.gmra.mxu0 %v3543
        %v3782 = vpop.f32.mrf.mxu0
        %v3783 = vadd.f32 0.0, %v3782
        %v3784 = vpop.f32.mrf.mxu0
        %v3785 = vadd.f32 0.0, %v3784
        %3786 = vmatprep.mubr.f32.mxu0 %v3542
        %3787 = vmatmul.mubr.f32.gmra.mxu0 %v3541
        %v3788 = vpop.f32.mrf.mxu0
        %v3789 = vadd.f32 0.0, %v3788
        %v3790 = vpop.f32.mrf.mxu0
        %v3791 = vadd.f32 0.0, %v3790
        %3792 = vmatprep.mubr.f32.mxu0 %v3540
        %3793 = vmatmul.mubr.f32.gmra.mxu0 %v3539
        %v3794 = vpop.f32.mrf.mxu0
        %v3795 = vadd.f32 0.0, %v3794
        %v3796 = vpop.f32.mrf.mxu0
        %v3797 = vadd.f32 0.0, %v3796
        %3798 = vmatprep.mubr.f32.mxu0 %v3538
        %3799 = vmatmul.mubr.f32.gmra.mxu0 %v3537
        %v3800 = vpop.f32.mrf.mxu0
        %v3801 = vadd.f32 0.0, %v3800
        %v3802 = vpop.f32.mrf.mxu0
        %v3803 = vadd.f32 0.0, %v3802
        %3804 = vmatprep.mubr.f32.mxu0 %v3536
        %3805 = vmatmul.mubr.f32.gmra.mxu0 %v3535
        %v3806 = vpop.f32.mrf.mxu0
        %v3807 = vadd.f32 0.0, %v3806
        %v3808 = vpop.f32.mrf.mxu0
        %v3809 = vadd.f32 0.0, %v3808
        %3810 = vmatprep.mubr.f32.mxu0 %v3534
        %3811 = vmatmul.mubr.f32.gmra.mxu0 %v3533
        %v3812 = vpop.f32.mrf.mxu0
        %v3813 = vadd.f32 0.0, %v3812
        %v3814 = vpop.f32.mrf.mxu0
        %v3815 = vadd.f32 0.0, %v3814
        %3816 = vmatprep.mubr.f32.mxu0 %v3532
        %3817 = vmatmul.mubr.f32.gmra.mxu0 %v3531
        %v3818 = vpop.f32.mrf.mxu0
        %v3819 = vadd.f32 0.0, %v3818
        %v3820 = vpop.f32.mrf.mxu0
        %v3821 = vadd.f32 0.0, %v3820
        %3822 = vmatprep.mubr.f32.mxu0 %v3530
        %3823 = vmatmul.mubr.f32.gmra.mxu0 %v3529
        %v3824 = vpop.f32.mrf.mxu0
        %v3825 = vadd.f32 0.0, %v3824
        %v3826 = vpop.f32.mrf.mxu0
        %v3827 = vadd.f32 0.0, %v3826
        %3828 = vmatprep.mubr.f32.mxu0 %v3528
        %3829 = vmatmul.mubr.f32.gmra.mxu0 %v3527
        %v3830 = vpop.f32.mrf.mxu0
        %v3831 = vadd.f32 0.0, %v3830
        %v3832 = vpop.f32.mrf.mxu0
        %v3833 = vadd.f32 0.0, %v3832
        %3834 = vmatprep.mubr.f32.mxu0 %v3526
        %3835 = vmatmul.mubr.f32.gmra.mxu0 %v3525
        %v3836 = vpop.f32.mrf.mxu0
        %v3837 = vadd.f32 0.0, %v3836
        %v3838 = vpop.f32.mrf.mxu0
        %v3839 = vadd.f32 0.0, %v3838
        %3840 = vmatprep.mubr.f32.mxu0 %v3524
        %3841 = vmatmul.mubr.f32.gmra.mxu0 %v3523
        %v3842 = vpop.f32.mrf.mxu0
        %v3843 = vadd.f32 0.0, %v3842
        %v3844 = vpop.f32.mrf.mxu0
        %v3845 = vadd.f32 0.0, %v3844
        %3846 = vmatprep.mubr.f32.mxu0 %v3522
        %3847 = vmatmul.mubr.f32.gmra.mxu0 %v3521
        %v3848 = vpop.f32.mrf.mxu0
        %v3849 = vadd.f32 0.0, %v3848
        %v3850 = vpop.f32.mrf.mxu0
        %v3851 = vadd.f32 0.0, %v3850
        %3852 = vmatprep.mubr.f32.mxu0 %v3520
        %3853 = vmatmul.mubr.f32.gmra.mxu0 %v3519
        %v3854 = vpop.f32.mrf.mxu0
        %v3855 = vadd.f32 0.0, %v3854
        %v3856 = vpop.f32.mrf.mxu0
        %v3857 = vadd.f32 0.0, %v3856
        %3858 = vmatprep.mubr.f32.mxu0 %v3518
        %3859 = vmatmul.mubr.f32.gmra.mxu0 %v3517
        %v3860 = vpop.f32.mrf.mxu0
        %v3861 = vadd.f32 0.0, %v3860
        %v3862 = vpop.f32.mrf.mxu0
        %v3863 = vadd.f32 0.0, %v3862
        %3864 = vmatprep.mubr.f32.mxu0 %v3516
        %3865 = vmatmul.mubr.f32.gmra.mxu0 %v3515
        %v3866 = vpop.f32.mrf.mxu0
        %v3867 = vadd.f32 0.0, %v3866
        %v3868 = vpop.f32.mrf.mxu0
        %v3869 = vadd.f32 0.0, %v3868
        %3870 = vmatprep.mubr.f32.mxu0 %v3514
        %3871 = vmatmul.mubr.f32.gmra.mxu0 %v3513
        %v3872 = vpop.f32.mrf.mxu0
        %v3873 = vadd.f32 0.0, %v3872
        %v3874 = vpop.f32.mrf.mxu0
        %v3875 = vadd.f32 0.0, %v3874
        %3876 = vmatprep.mubr.f32.mxu0 %v3512
        %3877 = vmatmul.mubr.f32.gmra.mxu0 %v3511
        %v3878 = vpop.f32.mrf.mxu0
        %v3879 = vadd.f32 0.0, %v3878
        %v3880 = vpop.f32.mrf.mxu0
        %v3881 = vadd.f32 0.0, %v3880
        %3882 = vmatprep.mubr.f32.mxu0 %v3510
        %3883 = vmatmul.mubr.f32.gmra.mxu0 %v3509
        %v3884 = vpop.f32.mrf.mxu0
        %v3885 = vadd.f32 0.0, %v3884
        %v3886 = vpop.f32.mrf.mxu0
        %v3887 = vadd.f32 0.0, %v3886
        %3888 = vmatprep.mubr.f32.mxu0 %v3572
        %3889 = vmatmul.mubr.f32.gmra.mxu0 %v3571
        %v3890 = vpop.f32.mrf.mxu0
        %v3891 = vadd.f32 0.0, %v3890
        %v3892 = vpop.f32.mrf.mxu0
        %v3893 = vadd.f32 0.0, %v3892
        %3894 = vdwg.mxu0
        %3895 = vmatprep.subr.mxu0 %v3412
        %3896 = vmatpush1.msra.mxu0 %v3411
        %3897 = vmatprep.subr.mxu0 %v3410
        %3898 = vmatpush1.msra.mxu0 %v3409
        %3899 = vmatprep.subr.mxu0 %v3408
        %3900 = vmatpush1.msra.mxu0 %v3407
        %3901 = vmatprep.subr.mxu0 %v3406
        %3902 = vmatpush1.msra.mxu0 %v3405
        %3903 = vmatprep.subr.mxu0 %v3404
        %3904 = vmatpush1.msra.mxu0 %v3403
        %3905 = vmatprep.subr.mxu0 %v3402
        %3906 = vmatpush1.msra.mxu0 %v3401
        %3907 = vmatprep.subr.mxu0 %v3400
        %3908 = vmatpush1.msra.mxu0 %v3399
        %3909 = vmatprep.subr.mxu0 %v3398
        %3910 = vmatpush1.msra.mxu0 %v3397
        %3911 = vmatprep.subr.mxu0 %v3396
        %3912 = vmatpush1.msra.mxu0 %v3395
        %3913 = vmatprep.subr.mxu0 %v3394
        %3914 = vmatpush1.msra.mxu0 %v3393
        %3915 = vmatprep.subr.mxu0 %v3392
        %3916 = vmatpush1.msra.mxu0 %v3391
        %3917 = vmatprep.subr.mxu0 %v3390
        %3918 = vmatpush1.msra.mxu0 %v3389
        %3919 = vmatprep.subr.mxu0 %v3388
        %3920 = vmatpush1.msra.mxu0 %v3387
        %3921 = vmatprep.subr.mxu0 %v3386
        %3922 = vmatpush1.msra.mxu0 %v3385
        %3923 = vmatprep.subr.mxu0 %v3384
        %3924 = vmatpush1.msra.mxu0 %v3383
        %3925 = vmatprep.subr.mxu0 %v3382
        %3926 = vmatpush1.msra.mxu0 %v3381
        %3927 = vmatprep.subr.mxu0 %v3444
        %3928 = vmatpush2.msra.mxu0 %v3443
        %3929 = vmatprep.subr.mxu0 %v3442
        %3930 = vmatpush2.msra.mxu0 %v3441
        %3931 = vmatprep.subr.mxu0 %v3440
        %3932 = vmatpush2.msra.mxu0 %v3439
        %3933 = vmatprep.subr.mxu0 %v3438
        %3934 = vmatpush2.msra.mxu0 %v3437
        %3935 = vmatprep.subr.mxu0 %v3436
        %3936 = vmatpush2.msra.mxu0 %v3435
        %3937 = vmatprep.subr.mxu0 %v3434
        %3938 = vmatpush2.msra.mxu0 %v3433
        %3939 = vmatprep.subr.mxu0 %v3432
        %3940 = vmatpush2.msra.mxu0 %v3431
        %3941 = vmatprep.subr.mxu0 %v3430
        %3942 = vmatpush2.msra.mxu0 %v3429
        %3943 = vmatprep.subr.mxu0 %v3428
        %3944 = vmatpush2.msra.mxu0 %v3427
        %3945 = vmatprep.subr.mxu0 %v3426
        %3946 = vmatpush2.msra.mxu0 %v3425
        %3947 = vmatprep.subr.mxu0 %v3424
        %3948 = vmatpush2.msra.mxu0 %v3423
        %3949 = vmatprep.subr.mxu0 %v3422
        %3950 = vmatpush2.msra.mxu0 %v3421
        %3951 = vmatprep.subr.mxu0 %v3420
        %3952 = vmatpush2.msra.mxu0 %v3419
        %3953 = vmatprep.subr.mxu0 %v3418
        %3954 = vmatpush2.msra.mxu0 %v3417
        %3955 = vmatprep.subr.mxu0 %v3416
        %3956 = vmatpush2.msra.mxu0 %v3415
        %3957 = vmatprep.subr.mxu0 %v3414
        %3958 = vmatpush2.msra.mxu0 %v3413
        %3959 = vmatprep.mubr.f32.mxu0 %v3318
        %3960 = vmatmul.mubr.f32.gmra.mxu0 %v3317
        %v3961 = vpop.f32.mrf.mxu0
        %v3962 = vadd.f32 %v3705, %v3961
        %v3963 = vpop.f32.mrf.mxu0
        %v3964 = vadd.f32 %v3707, %v3963
        %3965 = vmatprep.mubr.f32.mxu0 %v3320
        %3966 = vmatmul.mubr.f32.gmra.mxu0 %v3319
        %v3967 = vpop.f32.mrf.mxu0
        %v3968 = vadd.f32 %v3711, %v3967
        %v3969 = vpop.f32.mrf.mxu0
        %v3970 = vadd.f32 %v3713, %v3969
        %3971 = vmatprep.mubr.f32.mxu0 %v3322
        %3972 = vmatmul.mubr.f32.gmra.mxu0 %v3321
        %v3973 = vpop.f32.mrf.mxu0
        %v3974 = vadd.f32 %v3717, %v3973
        %v3975 = vpop.f32.mrf.mxu0
        %v3976 = vadd.f32 %v3719, %v3975
        %3977 = vmatprep.mubr.f32.mxu0 %v3324
        %3978 = vmatmul.mubr.f32.gmra.mxu0 %v3323
        %v3979 = vpop.f32.mrf.mxu0
        %v3980 = vadd.f32 %v3723, %v3979
        %v3981 = vpop.f32.mrf.mxu0
        %v3982 = vadd.f32 %v3725, %v3981
        %3983 = vmatprep.mubr.f32.mxu0 %v3326
        %3984 = vmatmul.mubr.f32.gmra.mxu0 %v3325
        %v3985 = vpop.f32.mrf.mxu0
        %v3986 = vadd.f32 %v3729, %v3985
        %v3987 = vpop.f32.mrf.mxu0
        %v3988 = vadd.f32 %v3731, %v3987
        %3989 = vmatprep.mubr.f32.mxu0 %v3328
        %3990 = vmatmul.mubr.f32.gmra.mxu0 %v3327
        %v3991 = vpop.f32.mrf.mxu0
        %v3992 = vadd.f32 %v3735, %v3991
        %v3993 = vpop.f32.mrf.mxu0
        %v3994 = vadd.f32 %v3737, %v3993
        %3995 = vmatprep.mubr.f32.mxu0 %v3330
        %3996 = vmatmul.mubr.f32.gmra.mxu0 %v3329
        %v3997 = vpop.f32.mrf.mxu0
        %v3998 = vadd.f32 %v3741, %v3997
        %v3999 = vpop.f32.mrf.mxu0
        %v4000 = vadd.f32 %v3743, %v3999
        %4001 = vmatprep.mubr.f32.mxu0 %v3332
        %4002 = vmatmul.mubr.f32.gmra.mxu0 %v3331
        %v4003 = vpop.f32.mrf.mxu0
        %v4004 = vadd.f32 %v3747, %v4003
        %v4005 = vpop.f32.mrf.mxu0
        %v4006 = vadd.f32 %v3749, %v4005
        %4007 = vmatprep.mubr.f32.mxu0 %v3334
        %4008 = vmatmul.mubr.f32.gmra.mxu0 %v3333
        %v4009 = vpop.f32.mrf.mxu0
        %v4010 = vadd.f32 %v3753, %v4009
        %v4011 = vpop.f32.mrf.mxu0
        %v4012 = vadd.f32 %v3755, %v4011
        %4013 = vmatprep.mubr.f32.mxu0 %v3336
        %4014 = vmatmul.mubr.f32.gmra.mxu0 %v3335
        %v4015 = vpop.f32.mrf.mxu0
        %v4016 = vadd.f32 %v3759, %v4015
        %v4017 = vpop.f32.mrf.mxu0
        %v4018 = vadd.f32 %v3761, %v4017
        %4019 = vmatprep.mubr.f32.mxu0 %v3338
        %4020 = vmatmul.mubr.f32.gmra.mxu0 %v3337
        %v4021 = vpop.f32.mrf.mxu0
        %v4022 = vadd.f32 %v3765, %v4021
        %v4023 = vpop.f32.mrf.mxu0
        %v4024 = vadd.f32 %v3767, %v4023
        %4025 = vmatprep.mubr.f32.mxu0 %v3340
        %4026 = vmatmul.mubr.f32.gmra.mxu0 %v3339
        %v4027 = vpop.f32.mrf.mxu0
        %v4028 = vadd.f32 %v3771, %v4027
        %v4029 = vpop.f32.mrf.mxu0
        %v4030 = vadd.f32 %v3773, %v4029
        %4031 = vmatprep.mubr.f32.mxu0 %v3342
        %4032 = vmatmul.mubr.f32.gmra.mxu0 %v3341
        %v4033 = vpop.f32.mrf.mxu0
        %v4034 = vadd.f32 %v3777, %v4033
        %v4035 = vpop.f32.mrf.mxu0
        %v4036 = vadd.f32 %v3779, %v4035
        %4037 = vmatprep.mubr.f32.mxu0 %v3344
        %4038 = vmatmul.mubr.f32.gmra.mxu0 %v3343
        %v4039 = vpop.f32.mrf.mxu0
        %v4040 = vadd.f32 %v3783, %v4039
        %v4041 = vpop.f32.mrf.mxu0
        %v4042 = vadd.f32 %v3785, %v4041
        %4043 = vmatprep.mubr.f32.mxu0 %v3346
        %4044 = vmatmul.mubr.f32.gmra.mxu0 %v3345
        %v4045 = vpop.f32.mrf.mxu0
        %v4046 = vadd.f32 %v3789, %v4045
        %v4047 = vpop.f32.mrf.mxu0
        %v4048 = vadd.f32 %v3791, %v4047
        %4049 = vmatprep.mubr.f32.mxu0 %v3348
        %4050 = vmatmul.mubr.f32.gmra.mxu0 %v3347
        %v4051 = vpop.f32.mrf.mxu0
        %v4052 = vadd.f32 %v3795, %v4051
        %v4053 = vpop.f32.mrf.mxu0
        %v4054 = vadd.f32 %v3797, %v4053
        %4055 = vmatprep.mubr.f32.mxu0 %v3350
        %4056 = vmatmul.mubr.f32.gmra.mxu0 %v3349
        %v4057 = vpop.f32.mrf.mxu0
        %v4058 = vadd.f32 %v3801, %v4057
        %v4059 = vpop.f32.mrf.mxu0
        %v4060 = vadd.f32 %v3803, %v4059
        %4061 = vmatprep.mubr.f32.mxu0 %v3352
        %4062 = vmatmul.mubr.f32.gmra.mxu0 %v3351
        %v4063 = vpop.f32.mrf.mxu0
        %v4064 = vadd.f32 %v3807, %v4063
        %v4065 = vpop.f32.mrf.mxu0
        %v4066 = vadd.f32 %v3809, %v4065
        %4067 = vmatprep.mubr.f32.mxu0 %v3354
        %4068 = vmatmul.mubr.f32.gmra.mxu0 %v3353
        %v4069 = vpop.f32.mrf.mxu0
        %v4070 = vadd.f32 %v3813, %v4069
        %v4071 = vpop.f32.mrf.mxu0
        %v4072 = vadd.f32 %v3815, %v4071
        %4073 = vmatprep.mubr.f32.mxu0 %v3356
        %4074 = vmatmul.mubr.f32.gmra.mxu0 %v3355
        %v4075 = vpop.f32.mrf.mxu0
        %v4076 = vadd.f32 %v3819, %v4075
        %v4077 = vpop.f32.mrf.mxu0
        %v4078 = vadd.f32 %v3821, %v4077
        %4079 = vmatprep.mubr.f32.mxu0 %v3358
        %4080 = vmatmul.mubr.f32.gmra.mxu0 %v3357
        %v4081 = vpop.f32.mrf.mxu0
        %v4082 = vadd.f32 %v3825, %v4081
        %v4083 = vpop.f32.mrf.mxu0
        %v4084 = vadd.f32 %v3827, %v4083
        %4085 = vmatprep.mubr.f32.mxu0 %v3360
        %4086 = vmatmul.mubr.f32.gmra.mxu0 %v3359
        %v4087 = vpop.f32.mrf.mxu0
        %v4088 = vadd.f32 %v3831, %v4087
        %v4089 = vpop.f32.mrf.mxu0
        %v4090 = vadd.f32 %v3833, %v4089
        %4091 = vmatprep.mubr.f32.mxu0 %v3362
        %4092 = vmatmul.mubr.f32.gmra.mxu0 %v3361
        %v4093 = vpop.f32.mrf.mxu0
        %v4094 = vadd.f32 %v3837, %v4093
        %v4095 = vpop.f32.mrf.mxu0
        %v4096 = vadd.f32 %v3839, %v4095
        %4097 = vmatprep.mubr.f32.mxu0 %v3364
        %4098 = vmatmul.mubr.f32.gmra.mxu0 %v3363
        %v4099 = vpop.f32.mrf.mxu0
        %v4100 = vadd.f32 %v3843, %v4099
        %v4101 = vpop.f32.mrf.mxu0
        %v4102 = vadd.f32 %v3845, %v4101
        %4103 = vmatprep.mubr.f32.mxu0 %v3366
        %4104 = vmatmul.mubr.f32.gmra.mxu0 %v3365
        %v4105 = vpop.f32.mrf.mxu0
        %v4106 = vadd.f32 %v3849, %v4105
        %v4107 = vpop.f32.mrf.mxu0
        %v4108 = vadd.f32 %v3851, %v4107
        %4109 = vmatprep.mubr.f32.mxu0 %v3368
        %4110 = vmatmul.mubr.f32.gmra.mxu0 %v3367
        %v4111 = vpop.f32.mrf.mxu0
        %v4112 = vadd.f32 %v3855, %v4111
        %v4113 = vpop.f32.mrf.mxu0
        %v4114 = vadd.f32 %v3857, %v4113
        %4115 = vmatprep.mubr.f32.mxu0 %v3370
        %4116 = vmatmul.mubr.f32.gmra.mxu0 %v3369
        %v4117 = vpop.f32.mrf.mxu0
        %v4118 = vadd.f32 %v3861, %v4117
        %v4119 = vpop.f32.mrf.mxu0
        %v4120 = vadd.f32 %v3863, %v4119
        %4121 = vmatprep.mubr.f32.mxu0 %v3372
        %4122 = vmatmul.mubr.f32.gmra.mxu0 %v3371
        %v4123 = vpop.f32.mrf.mxu0
        %v4124 = vadd.f32 %v3867, %v4123
        %v4125 = vpop.f32.mrf.mxu0
        %v4126 = vadd.f32 %v3869, %v4125
        %4127 = vmatprep.mubr.f32.mxu0 %v3374
        %4128 = vmatmul.mubr.f32.gmra.mxu0 %v3373
        %v4129 = vpop.f32.mrf.mxu0
        %v4130 = vadd.f32 %v3873, %v4129
        %v4131 = vpop.f32.mrf.mxu0
        %v4132 = vadd.f32 %v3875, %v4131
        %4133 = vmatprep.mubr.f32.mxu0 %v3376
        %4134 = vmatmul.mubr.f32.gmra.mxu0 %v3375
        %v4135 = vpop.f32.mrf.mxu0
        %v4136 = vadd.f32 %v3879, %v4135
        %v4137 = vpop.f32.mrf.mxu0
        %v4138 = vadd.f32 %v3881, %v4137
        %4139 = vmatprep.mubr.f32.mxu0 %v3378
        %4140 = vmatmul.mubr.f32.gmra.mxu0 %v3377
        %v4141 = vpop.f32.mrf.mxu0
        %v4142 = vadd.f32 %v3885, %v4141
        %v4143 = vpop.f32.mrf.mxu0
        %v4144 = vadd.f32 %v3887, %v4143
        %4145 = vmatprep.mubr.f32.mxu0 %v3380
        %4146 = vmatmul.mubr.f32.gmra.mxu0 %v3379
        %v4147 = vpop.f32.mrf.mxu0
        %v4148 = vadd.f32 %v3891, %v4147
        %v4149 = vpop.f32.mrf.mxu0
        %v4150 = vadd.f32 %v3893, %v4149
        %4151 = vdwg.mxu0
        %v4152 = vrot.slane %v3317, 4
        %v4153 = vrot.slane %v3318, 4
        %v4154 = vrot.slane %v3319, 4
        %v4155 = vrot.slane %v3320, 4
        %v4156 = vrot.slane %v3321, 4
        %v4157 = vrot.slane %v3322, 4
        %v4158 = vrot.slane %v3323, 4
        %v4159 = vrot.slane %v3324, 4
        %v4160 = vrot.slane %v3325, 4
        %v4161 = vrot.slane %v3326, 4
        %v4162 = vrot.slane %v3327, 4
        %v4163 = vrot.slane %v3328, 4
        %v4164 = vrot.slane %v3329, 4
        %v4165 = vrot.slane %v3330, 4
        %v4166 = vrot.slane %v3331, 4
        %v4167 = vrot.slane %v3332, 4
        %v4168 = vrot.slane %v3333, 4
        %v4169 = vrot.slane %v3334, 4
        %v4170 = vrot.slane %v3335, 4
        %v4171 = vrot.slane %v3336, 4
        %v4172 = vrot.slane %v3337, 4
        %v4173 = vrot.slane %v3338, 4
        %v4174 = vrot.slane %v3339, 4
        %v4175 = vrot.slane %v3340, 4
        %v4176 = vrot.slane %v3341, 4
        %v4177 = vrot.slane %v3342, 4
        %v4178 = vrot.slane %v3343, 4
        %v4179 = vrot.slane %v3344, 4
        %v4180 = vrot.slane %v3345, 4
        %v4181 = vrot.slane %v3346, 4
        %v4182 = vrot.slane %v3347, 4
        %v4183 = vrot.slane %v3348, 4
        %v4184 = vrot.slane %v3349, 4
        %v4185 = vrot.slane %v3350, 4
        %v4186 = vrot.slane %v3351, 4
        %v4187 = vrot.slane %v3352, 4
        %v4188 = vrot.slane %v3353, 4
        %v4189 = vrot.slane %v3354, 4
        %v4190 = vrot.slane %v3355, 4
        %v4191 = vrot.slane %v3356, 4
        %v4192 = vrot.slane %v3357, 4
        %v4193 = vrot.slane %v3358, 4
        %v4194 = vrot.slane %v3359, 4
        %v4195 = vrot.slane %v3360, 4
        %v4196 = vrot.slane %v3361, 4
        %v4197 = vrot.slane %v3362, 4
        %v4198 = vrot.slane %v3363, 4
        %v4199 = vrot.slane %v3364, 4
        %v4200 = vrot.slane %v3365, 4
        %v4201 = vrot.slane %v3366, 4
        %v4202 = vrot.slane %v3367, 4
        %v4203 = vrot.slane %v3368, 4
        %v4204 = vrot.slane %v3369, 4
        %v4205 = vrot.slane %v3370, 4
        %v4206 = vrot.slane %v3371, 4
        %v4207 = vrot.slane %v3372, 4
        %v4208 = vrot.slane %v3373, 4
        %v4209 = vrot.slane %v3374, 4
        %v4210 = vrot.slane %v3375, 4
        %v4211 = vrot.slane %v3376, 4
        %v4212 = vrot.slane %v3377, 4
        %v4213 = vrot.slane %v3378, 4
        %v4214 = vrot.slane %v3379, 4
        %v4215 = vrot.slane %v3380, 4
        %v4216 = vsel %vm2315, %v4212, %v4214
        %v4217 = vsel %vm2315, %v4213, %v4215
        %v4218 = vsel %vm2315, %v4210, %v4212
        %v4219 = vsel %vm2315, %v4211, %v4213
        %v4220 = vsel %vm2315, %v4208, %v4210
        %v4221 = vsel %vm2315, %v4209, %v4211
        %v4222 = vsel %vm2315, %v4206, %v4208
        %v4223 = vsel %vm2315, %v4207, %v4209
        %v4224 = vsel %vm2315, %v4204, %v4206
        %v4225 = vsel %vm2315, %v4205, %v4207
        %v4226 = vsel %vm2315, %v4202, %v4204
        %v4227 = vsel %vm2315, %v4203, %v4205
        %v4228 = vsel %vm2315, %v4200, %v4202
        %v4229 = vsel %vm2315, %v4201, %v4203
        %v4230 = vsel %vm2315, %v4198, %v4200
        %v4231 = vsel %vm2315, %v4199, %v4201
        %v4232 = vsel %vm2315, %v4196, %v4198
        %v4233 = vsel %vm2315, %v4197, %v4199
        %v4234 = vsel %vm2315, %v4194, %v4196
        %v4235 = vsel %vm2315, %v4195, %v4197
        %v4236 = vsel %vm2315, %v4192, %v4194
        %v4237 = vsel %vm2315, %v4193, %v4195
        %v4238 = vsel %vm2315, %v4190, %v4192
        %v4239 = vsel %vm2315, %v4191, %v4193
        %v4240 = vsel %vm2315, %v4188, %v4190
        %v4241 = vsel %vm2315, %v4189, %v4191
        %v4242 = vsel %vm2315, %v4186, %v4188
        %v4243 = vsel %vm2315, %v4187, %v4189
        %v4244 = vsel %vm2315, %v4184, %v4186
        %v4245 = vsel %vm2315, %v4185, %v4187
        %v4246 = vsel %vm2315, %v4182, %v4184
        %v4247 = vsel %vm2315, %v4183, %v4185
        %v4248 = vsel %vm2315, %v4180, %v4182
        %v4249 = vsel %vm2315, %v4181, %v4183
        %v4250 = vsel %vm2315, %v4178, %v4180
        %v4251 = vsel %vm2315, %v4179, %v4181
        %v4252 = vsel %vm2315, %v4176, %v4178
        %v4253 = vsel %vm2315, %v4177, %v4179
        %v4254 = vsel %vm2315, %v4174, %v4176
        %v4255 = vsel %vm2315, %v4175, %v4177
        %v4256 = vsel %vm2315, %v4172, %v4174
        %v4257 = vsel %vm2315, %v4173, %v4175
        %v4258 = vsel %vm2315, %v4170, %v4172
        %v4259 = vsel %vm2315, %v4171, %v4173
        %v4260 = vsel %vm2315, %v4168, %v4170
        %v4261 = vsel %vm2315, %v4169, %v4171
        %v4262 = vsel %vm2315, %v4166, %v4168
        %v4263 = vsel %vm2315, %v4167, %v4169
        %v4264 = vsel %vm2315, %v4164, %v4166
        %v4265 = vsel %vm2315, %v4165, %v4167
        %v4266 = vsel %vm2315, %v4162, %v4164
        %v4267 = vsel %vm2315, %v4163, %v4165
        %v4268 = vsel %vm2315, %v4160, %v4162
        %v4269 = vsel %vm2315, %v4161, %v4163
        %v4270 = vsel %vm2315, %v4158, %v4160
        %v4271 = vsel %vm2315, %v4159, %v4161
        %v4272 = vsel %vm2315, %v4156, %v4158
        %v4273 = vsel %vm2315, %v4157, %v4159
        %v4274 = vsel %vm2315, %v4154, %v4156
        %v4275 = vsel %vm2315, %v4155, %v4157
        %v4276 = vsel %vm2315, %v4152, %v4154
        %v4277 = vsel %vm2315, %v4153, %v4155
        %v4278 = vsel %vm2315, %v4214, %v4152
        %v4279 = vsel %vm2315, %v4215, %v4153
        %s4280 = scalar_lea.vmem %s3, 1024
        %v4281 = vld [vmem:[%s4280] sm:$0xff]
        %v4282 = vld [vmem:[%s4280 + $0x8] sm:$0xff]
        %v4283 = vld [vmem:[%s4280 + $0x10] sm:$0xff]
        %v4284 = vld [vmem:[%s4280 + $0x18] sm:$0xff]
        %v4285 = vld [vmem:[%s4280 + $0x20] sm:$0xff]
        %v4286 = vld [vmem:[%s4280 + $0x28] sm:$0xff]
        %v4287 = vld [vmem:[%s4280 + $0x30] sm:$0xff]
        %v4288 = vld [vmem:[%s4280 + $0x38] sm:$0xff]
        %v4289 = vld [vmem:[%s4280 + $0x40] sm:$0xff]
        %v4290 = vld [vmem:[%s4280 + $0x48] sm:$0xff]
        %v4291 = vld [vmem:[%s4280 + $0x50] sm:$0xff]
        %v4292 = vld [vmem:[%s4280 + $0x58] sm:$0xff]
        %v4293 = vld [vmem:[%s4280 + $0x60] sm:$0xff]
        %v4294 = vld [vmem:[%s4280 + $0x68] sm:$0xff]
        %v4295 = vld [vmem:[%s4280 + $0x70] sm:$0xff]
        %v4296 = vld [vmem:[%s4280 + $0x78] sm:$0xff]
        %v4297 = vld [vmem:[%s4280 + $0x80] sm:$0xff]
        %v4298 = vld [vmem:[%s4280 + $0x88] sm:$0xff]
        %v4299 = vld [vmem:[%s4280 + $0x90] sm:$0xff]
        %v4300 = vld [vmem:[%s4280 + $0x98] sm:$0xff]
        %v4301 = vld [vmem:[%s4280 + $0xa0] sm:$0xff]
        %v4302 = vld [vmem:[%s4280 + $0xa8] sm:$0xff]
        %v4303 = vld [vmem:[%s4280 + $0xb0] sm:$0xff]
        %v4304 = vld [vmem:[%s4280 + $0xb8] sm:$0xff]
        %v4305 = vld [vmem:[%s4280 + $0xc0] sm:$0xff]
        %v4306 = vld [vmem:[%s4280 + $0xc8] sm:$0xff]
        %v4307 = vld [vmem:[%s4280 + $0xd0] sm:$0xff]
        %v4308 = vld [vmem:[%s4280 + $0xd8] sm:$0xff]
        %v4309 = vld [vmem:[%s4280 + $0xe0] sm:$0xff]
        %v4310 = vld [vmem:[%s4280 + $0xe8] sm:$0xff]
        %v4311 = vld [vmem:[%s4280 + $0xf0] sm:$0xff]
        %v4312 = vld [vmem:[%s4280 + $0xf8] sm:$0xff]
        %v4313 = vld [vmem:[%s4280 + $0x100] sm:$0xff]
        %v4314 = vld [vmem:[%s4280 + $0x108] sm:$0xff]
        %v4315 = vld [vmem:[%s4280 + $0x110] sm:$0xff]
        %v4316 = vld [vmem:[%s4280 + $0x118] sm:$0xff]
        %v4317 = vld [vmem:[%s4280 + $0x120] sm:$0xff]
        %v4318 = vld [vmem:[%s4280 + $0x128] sm:$0xff]
        %v4319 = vld [vmem:[%s4280 + $0x130] sm:$0xff]
        %v4320 = vld [vmem:[%s4280 + $0x138] sm:$0xff]
        %v4321 = vld [vmem:[%s4280 + $0x140] sm:$0xff]
        %v4322 = vld [vmem:[%s4280 + $0x148] sm:$0xff]
        %v4323 = vld [vmem:[%s4280 + $0x150] sm:$0xff]
        %v4324 = vld [vmem:[%s4280 + $0x158] sm:$0xff]
        %v4325 = vld [vmem:[%s4280 + $0x160] sm:$0xff]
        %v4326 = vld [vmem:[%s4280 + $0x168] sm:$0xff]
        %v4327 = vld [vmem:[%s4280 + $0x170] sm:$0xff]
        %v4328 = vld [vmem:[%s4280 + $0x178] sm:$0xff]
        %v4329 = vld [vmem:[%s4280 + $0x180] sm:$0xff]
        %v4330 = vld [vmem:[%s4280 + $0x188] sm:$0xff]
        %v4331 = vld [vmem:[%s4280 + $0x190] sm:$0xff]
        %v4332 = vld [vmem:[%s4280 + $0x198] sm:$0xff]
        %v4333 = vld [vmem:[%s4280 + $0x1a0] sm:$0xff]
        %v4334 = vld [vmem:[%s4280 + $0x1a8] sm:$0xff]
        %v4335 = vld [vmem:[%s4280 + $0x1b0] sm:$0xff]
        %v4336 = vld [vmem:[%s4280 + $0x1b8] sm:$0xff]
        %v4337 = vld [vmem:[%s4280 + $0x1c0] sm:$0xff]
        %v4338 = vld [vmem:[%s4280 + $0x1c8] sm:$0xff]
        %v4339 = vld [vmem:[%s4280 + $0x1d0] sm:$0xff]
        %v4340 = vld [vmem:[%s4280 + $0x1d8] sm:$0xff]
        %v4341 = vld [vmem:[%s4280 + $0x1e0] sm:$0xff]
        %v4342 = vld [vmem:[%s4280 + $0x1e8] sm:$0xff]
        %v4343 = vld [vmem:[%s4280 + $0x1f0] sm:$0xff]
        %v4344 = vld [vmem:[%s4280 + $0x1f8] sm:$0xff]
        %4345 = vmatprep.subr.mxu0 %v4312
        %4346 = vmatpush1.msra.mxu0 %v4311
        %4347 = vmatprep.subr.mxu0 %v4310
        %4348 = vmatpush1.msra.mxu0 %v4309
        %4349 = vmatprep.subr.mxu0 %v4308
        %4350 = vmatpush1.msra.mxu0 %v4307
        %4351 = vmatprep.subr.mxu0 %v4306
        %4352 = vmatpush1.msra.mxu0 %v4305
        %4353 = vmatprep.subr.mxu0 %v4304
        %4354 = vmatpush1.msra.mxu0 %v4303
        %4355 = vmatprep.subr.mxu0 %v4302
        %4356 = vmatpush1.msra.mxu0 %v4301
        %4357 = vmatprep.subr.mxu0 %v4300
        %4358 = vmatpush1.msra.mxu0 %v4299
        %4359 = vmatprep.subr.mxu0 %v4298
        %4360 = vmatpush1.msra.mxu0 %v4297
        %4361 = vmatprep.subr.mxu0 %v4296
        %4362 = vmatpush1.msra.mxu0 %v4295
        %4363 = vmatprep.subr.mxu0 %v4294
        %4364 = vmatpush1.msra.mxu0 %v4293
        %4365 = vmatprep.subr.mxu0 %v4292
        %4366 = vmatpush1.msra.mxu0 %v4291
        %4367 = vmatprep.subr.mxu0 %v4290
        %4368 = vmatpush1.msra.mxu0 %v4289
        %4369 = vmatprep.subr.mxu0 %v4288
        %4370 = vmatpush1.msra.mxu0 %v4287
        %4371 = vmatprep.subr.mxu0 %v4286
        %4372 = vmatpush1.msra.mxu0 %v4285
        %4373 = vmatprep.subr.mxu0 %v4284
        %4374 = vmatpush1.msra.mxu0 %v4283
        %4375 = vmatprep.subr.mxu0 %v4282
        %4376 = vmatpush1.msra.mxu0 %v4281
        %4377 = vmatprep.subr.mxu0 %v4344
        %4378 = vmatpush2.msra.mxu0 %v4343
        %4379 = vmatprep.subr.mxu0 %v4342
        %4380 = vmatpush2.msra.mxu0 %v4341
        %4381 = vmatprep.subr.mxu0 %v4340
        %4382 = vmatpush2.msra.mxu0 %v4339
        %4383 = vmatprep.subr.mxu0 %v4338
        %4384 = vmatpush2.msra.mxu0 %v4337
        %4385 = vmatprep.subr.mxu0 %v4336
        %4386 = vmatpush2.msra.mxu0 %v4335
        %4387 = vmatprep.subr.mxu0 %v4334
        %4388 = vmatpush2.msra.mxu0 %v4333
        %4389 = vmatprep.subr.mxu0 %v4332
        %4390 = vmatpush2.msra.mxu0 %v4331
        %4391 = vmatprep.subr.mxu0 %v4330
        %4392 = vmatpush2.msra.mxu0 %v4329
        %4393 = vmatprep.subr.mxu0 %v4328
        %4394 = vmatpush2.msra.mxu0 %v4327
        %4395 = vmatprep.subr.mxu0 %v4326
        %4396 = vmatpush2.msra.mxu0 %v4325
        %4397 = vmatprep.subr.mxu0 %v4324
        %4398 = vmatpush2.msra.mxu0 %v4323
        %4399 = vmatprep.subr.mxu0 %v4322
        %4400 = vmatpush2.msra.mxu0 %v4321
        %4401 = vmatprep.subr.mxu0 %v4320
        %4402 = vmatpush2.msra.mxu0 %v4319
        %4403 = vmatprep.subr.mxu0 %v4318
        %4404 = vmatpush2.msra.mxu0 %v4317
        %4405 = vmatprep.subr.mxu0 %v4316
        %4406 = vmatpush2.msra.mxu0 %v4315
        %4407 = vmatprep.subr.mxu0 %v4314
        %4408 = vmatpush2.msra.mxu0 %v4313
        %4409 = vmatprep.mubr.f32.mxu0 %v4277
        %4410 = vmatmul.mubr.f32.gmra.mxu0 %v4276
        %v4411 = vpop.f32.mrf.mxu0
        %v4412 = vadd.f32 0.0, %v4411
        %v4413 = vpop.f32.mrf.mxu0
        %v4414 = vadd.f32 0.0, %v4413
        %4415 = vmatprep.mubr.f32.mxu0 %v4275
        %4416 = vmatmul.mubr.f32.gmra.mxu0 %v4274
        %v4417 = vpop.f32.mrf.mxu0
        %v4418 = vadd.f32 0.0, %v4417
        %v4419 = vpop.f32.mrf.mxu0
        %v4420 = vadd.f32 0.0, %v4419
        %4421 = vmatprep.mubr.f32.mxu0 %v4273
        %4422 = vmatmul.mubr.f32.gmra.mxu0 %v4272
        %v4423 = vpop.f32.mrf.mxu0
        %v4424 = vadd.f32 0.0, %v4423
        %v4425 = vpop.f32.mrf.mxu0
        %v4426 = vadd.f32 0.0, %v4425
        %4427 = vmatprep.mubr.f32.mxu0 %v4271
        %4428 = vmatmul.mubr.f32.gmra.mxu0 %v4270
        %v4429 = vpop.f32.mrf.mxu0
        %v4430 = vadd.f32 0.0, %v4429
        %v4431 = vpop.f32.mrf.mxu0
        %v4432 = vadd.f32 0.0, %v4431
        %4433 = vmatprep.mubr.f32.mxu0 %v4269
        %4434 = vmatmul.mubr.f32.gmra.mxu0 %v4268
        %v4435 = vpop.f32.mrf.mxu0
        %v4436 = vadd.f32 0.0, %v4435
        %v4437 = vpop.f32.mrf.mxu0
        %v4438 = vadd.f32 0.0, %v4437
        %4439 = vmatprep.mubr.f32.mxu0 %v4267
        %4440 = vmatmul.mubr.f32.gmra.mxu0 %v4266
        %v4441 = vpop.f32.mrf.mxu0
        %v4442 = vadd.f32 0.0, %v4441
        %v4443 = vpop.f32.mrf.mxu0
        %v4444 = vadd.f32 0.0, %v4443
        %4445 = vmatprep.mubr.f32.mxu0 %v4265
        %4446 = vmatmul.mubr.f32.gmra.mxu0 %v4264
        %v4447 = vpop.f32.mrf.mxu0
        %v4448 = vadd.f32 0.0, %v4447
        %v4449 = vpop.f32.mrf.mxu0
        %v4450 = vadd.f32 0.0, %v4449
        %4451 = vmatprep.mubr.f32.mxu0 %v4263
        %4452 = vmatmul.mubr.f32.gmra.mxu0 %v4262
        %v4453 = vpop.f32.mrf.mxu0
        %v4454 = vadd.f32 0.0, %v4453
        %v4455 = vpop.f32.mrf.mxu0
        %v4456 = vadd.f32 0.0, %v4455
        %4457 = vmatprep.mubr.f32.mxu0 %v4261
        %4458 = vmatmul.mubr.f32.gmra.mxu0 %v4260
        %v4459 = vpop.f32.mrf.mxu0
        %v4460 = vadd.f32 0.0, %v4459
        %v4461 = vpop.f32.mrf.mxu0
        %v4462 = vadd.f32 0.0, %v4461
        %4463 = vmatprep.mubr.f32.mxu0 %v4259
        %4464 = vmatmul.mubr.f32.gmra.mxu0 %v4258
        %v4465 = vpop.f32.mrf.mxu0
        %v4466 = vadd.f32 0.0, %v4465
        %v4467 = vpop.f32.mrf.mxu0
        %v4468 = vadd.f32 0.0, %v4467
        %4469 = vmatprep.mubr.f32.mxu0 %v4257
        %4470 = vmatmul.mubr.f32.gmra.mxu0 %v4256
        %v4471 = vpop.f32.mrf.mxu0
        %v4472 = vadd.f32 0.0, %v4471
        %v4473 = vpop.f32.mrf.mxu0
        %v4474 = vadd.f32 0.0, %v4473
        %4475 = vmatprep.mubr.f32.mxu0 %v4255
        %4476 = vmatmul.mubr.f32.gmra.mxu0 %v4254
        %v4477 = vpop.f32.mrf.mxu0
        %v4478 = vadd.f32 0.0, %v4477
        %v4479 = vpop.f32.mrf.mxu0
        %v4480 = vadd.f32 0.0, %v4479
        %4481 = vmatprep.mubr.f32.mxu0 %v4253
        %4482 = vmatmul.mubr.f32.gmra.mxu0 %v4252
        %v4483 = vpop.f32.mrf.mxu0
        %v4484 = vadd.f32 0.0, %v4483
        %v4485 = vpop.f32.mrf.mxu0
        %v4486 = vadd.f32 0.0, %v4485
        %4487 = vmatprep.mubr.f32.mxu0 %v4251
        %4488 = vmatmul.mubr.f32.gmra.mxu0 %v4250
        %v4489 = vpop.f32.mrf.mxu0
        %v4490 = vadd.f32 0.0, %v4489
        %v4491 = vpop.f32.mrf.mxu0
        %v4492 = vadd.f32 0.0, %v4491
        %4493 = vmatprep.mubr.f32.mxu0 %v4249
        %4494 = vmatmul.mubr.f32.gmra.mxu0 %v4248
        %v4495 = vpop.f32.mrf.mxu0
        %v4496 = vadd.f32 0.0, %v4495
        %v4497 = vpop.f32.mrf.mxu0
        %v4498 = vadd.f32 0.0, %v4497
        %4499 = vmatprep.mubr.f32.mxu0 %v4247
        %4500 = vmatmul.mubr.f32.gmra.mxu0 %v4246
        %v4501 = vpop.f32.mrf.mxu0
        %v4502 = vadd.f32 0.0, %v4501
        %v4503 = vpop.f32.mrf.mxu0
        %v4504 = vadd.f32 0.0, %v4503
        %4505 = vmatprep.mubr.f32.mxu0 %v4245
        %4506 = vmatmul.mubr.f32.gmra.mxu0 %v4244
        %v4507 = vpop.f32.mrf.mxu0
        %v4508 = vadd.f32 0.0, %v4507
        %v4509 = vpop.f32.mrf.mxu0
        %v4510 = vadd.f32 0.0, %v4509
        %4511 = vmatprep.mubr.f32.mxu0 %v4243
        %4512 = vmatmul.mubr.f32.gmra.mxu0 %v4242
        %v4513 = vpop.f32.mrf.mxu0
        %v4514 = vadd.f32 0.0, %v4513
        %v4515 = vpop.f32.mrf.mxu0
        %v4516 = vadd.f32 0.0, %v4515
        %4517 = vmatprep.mubr.f32.mxu0 %v4241
        %4518 = vmatmul.mubr.f32.gmra.mxu0 %v4240
        %v4519 = vpop.f32.mrf.mxu0
        %v4520 = vadd.f32 0.0, %v4519
        %v4521 = vpop.f32.mrf.mxu0
        %v4522 = vadd.f32 0.0, %v4521
        %4523 = vmatprep.mubr.f32.mxu0 %v4239
        %4524 = vmatmul.mubr.f32.gmra.mxu0 %v4238
        %v4525 = vpop.f32.mrf.mxu0
        %v4526 = vadd.f32 0.0, %v4525
        %v4527 = vpop.f32.mrf.mxu0
        %v4528 = vadd.f32 0.0, %v4527
        %4529 = vmatprep.mubr.f32.mxu0 %v4237
        %4530 = vmatmul.mubr.f32.gmra.mxu0 %v4236
        %v4531 = vpop.f32.mrf.mxu0
        %v4532 = vadd.f32 0.0, %v4531
        %v4533 = vpop.f32.mrf.mxu0
        %v4534 = vadd.f32 0.0, %v4533
        %4535 = vmatprep.mubr.f32.mxu0 %v4235
        %4536 = vmatmul.mubr.f32.gmra.mxu0 %v4234
        %v4537 = vpop.f32.mrf.mxu0
        %v4538 = vadd.f32 0.0, %v4537
        %v4539 = vpop.f32.mrf.mxu0
        %v4540 = vadd.f32 0.0, %v4539
        %4541 = vmatprep.mubr.f32.mxu0 %v4233
        %4542 = vmatmul.mubr.f32.gmra.mxu0 %v4232
        %v4543 = vpop.f32.mrf.mxu0
        %v4544 = vadd.f32 0.0, %v4543
        %v4545 = vpop.f32.mrf.mxu0
        %v4546 = vadd.f32 0.0, %v4545
        %4547 = vmatprep.mubr.f32.mxu0 %v4231
        %4548 = vmatmul.mubr.f32.gmra.mxu0 %v4230
        %v4549 = vpop.f32.mrf.mxu0
        %v4550 = vadd.f32 0.0, %v4549
        %v4551 = vpop.f32.mrf.mxu0
        %v4552 = vadd.f32 0.0, %v4551
        %4553 = vmatprep.mubr.f32.mxu0 %v4229
        %4554 = vmatmul.mubr.f32.gmra.mxu0 %v4228
        %v4555 = vpop.f32.mrf.mxu0
        %v4556 = vadd.f32 0.0, %v4555
        %v4557 = vpop.f32.mrf.mxu0
        %v4558 = vadd.f32 0.0, %v4557
        %4559 = vmatprep.mubr.f32.mxu0 %v4227
        %4560 = vmatmul.mubr.f32.gmra.mxu0 %v4226
        %v4561 = vpop.f32.mrf.mxu0
        %v4562 = vadd.f32 0.0, %v4561
        %v4563 = vpop.f32.mrf.mxu0
        %v4564 = vadd.f32 0.0, %v4563
        %4565 = vmatprep.mubr.f32.mxu0 %v4225
        %4566 = vmatmul.mubr.f32.gmra.mxu0 %v4224
        %v4567 = vpop.f32.mrf.mxu0
        %v4568 = vadd.f32 0.0, %v4567
        %v4569 = vpop.f32.mrf.mxu0
        %v4570 = vadd.f32 0.0, %v4569
        %4571 = vmatprep.mubr.f32.mxu0 %v4223
        %4572 = vmatmul.mubr.f32.gmra.mxu0 %v4222
        %v4573 = vpop.f32.mrf.mxu0
        %v4574 = vadd.f32 0.0, %v4573
        %v4575 = vpop.f32.mrf.mxu0
        %v4576 = vadd.f32 0.0, %v4575
        %4577 = vmatprep.mubr.f32.mxu0 %v4221
        %4578 = vmatmul.mubr.f32.gmra.mxu0 %v4220
        %v4579 = vpop.f32.mrf.mxu0
        %v4580 = vadd.f32 0.0, %v4579
        %v4581 = vpop.f32.mrf.mxu0
        %v4582 = vadd.f32 0.0, %v4581
        %4583 = vmatprep.mubr.f32.mxu0 %v4219
        %4584 = vmatmul.mubr.f32.gmra.mxu0 %v4218
        %v4585 = vpop.f32.mrf.mxu0
        %v4586 = vadd.f32 0.0, %v4585
        %v4587 = vpop.f32.mrf.mxu0
        %v4588 = vadd.f32 0.0, %v4587
        %4589 = vmatprep.mubr.f32.mxu0 %v4217
        %4590 = vmatmul.mubr.f32.gmra.mxu0 %v4216
        %v4591 = vpop.f32.mrf.mxu0
        %v4592 = vadd.f32 0.0, %v4591
        %v4593 = vpop.f32.mrf.mxu0
        %v4594 = vadd.f32 0.0, %v4593
        %4595 = vmatprep.mubr.f32.mxu0 %v4279
        %4596 = vmatmul.mubr.f32.gmra.mxu0 %v4278
        %v4597 = vpop.f32.mrf.mxu0
        %v4598 = vadd.f32 0.0, %v4597
        %v4599 = vpop.f32.mrf.mxu0
        %v4600 = vadd.f32 0.0, %v4599
        %4601 = vdwg.mxu0
        %v4602 = vadd.f32 %v3962, %v4412
        %v4603 = vadd.f32 %v3964, %v4414
        %v4604 = vadd.f32 %v3968, %v4418
        %v4605 = vadd.f32 %v3970, %v4420
        %v4606 = vadd.f32 %v3974, %v4424
        %v4607 = vadd.f32 %v3976, %v4426
        %v4608 = vadd.f32 %v3980, %v4430
        %v4609 = vadd.f32 %v3982, %v4432
        %v4610 = vadd.f32 %v3986, %v4436
        %v4611 = vadd.f32 %v3988, %v4438
        %v4612 = vadd.f32 %v3992, %v4442
        %v4613 = vadd.f32 %v3994, %v4444
        %v4614 = vadd.f32 %v3998, %v4448
        %v4615 = vadd.f32 %v4000, %v4450
        %v4616 = vadd.f32 %v4004, %v4454
        %v4617 = vadd.f32 %v4006, %v4456
        %v4618 = vadd.f32 %v4010, %v4460
        %v4619 = vadd.f32 %v4012, %v4462
        %v4620 = vadd.f32 %v4016, %v4466
        %v4621 = vadd.f32 %v4018, %v4468
        %v4622 = vadd.f32 %v4022, %v4472
        %v4623 = vadd.f32 %v4024, %v4474
        %v4624 = vadd.f32 %v4028, %v4478
        %v4625 = vadd.f32 %v4030, %v4480
        %v4626 = vadd.f32 %v4034, %v4484
        %v4627 = vadd.f32 %v4036, %v4486
        %v4628 = vadd.f32 %v4040, %v4490
        %v4629 = vadd.f32 %v4042, %v4492
        %v4630 = vadd.f32 %v4046, %v4496
        %v4631 = vadd.f32 %v4048, %v4498
        %v4632 = vadd.f32 %v4052, %v4502
        %v4633 = vadd.f32 %v4054, %v4504
        %v4634 = vadd.f32 %v4058, %v4508
        %v4635 = vadd.f32 %v4060, %v4510
        %v4636 = vadd.f32 %v4064, %v4514
        %v4637 = vadd.f32 %v4066, %v4516
        %v4638 = vadd.f32 %v4070, %v4520
        %v4639 = vadd.f32 %v4072, %v4522
        %v4640 = vadd.f32 %v4076, %v4526
        %v4641 = vadd.f32 %v4078, %v4528
        %v4642 = vadd.f32 %v4082, %v4532
        %v4643 = vadd.f32 %v4084, %v4534
        %v4644 = vadd.f32 %v4088, %v4538
        %v4645 = vadd.f32 %v4090, %v4540
        %v4646 = vadd.f32 %v4094, %v4544
        %v4647 = vadd.f32 %v4096, %v4546
        %v4648 = vadd.f32 %v4100, %v4550
        %v4649 = vadd.f32 %v4102, %v4552
        %v4650 = vadd.f32 %v4106, %v4556
        %v4651 = vadd.f32 %v4108, %v4558
        %v4652 = vadd.f32 %v4112, %v4562
        %v4653 = vadd.f32 %v4114, %v4564
        %v4654 = vadd.f32 %v4118, %v4568
        %v4655 = vadd.f32 %v4120, %v4570
        %v4656 = vadd.f32 %v4124, %v4574
        %v4657 = vadd.f32 %v4126, %v4576
        %v4658 = vadd.f32 %v4130, %v4580
        %v4659 = vadd.f32 %v4132, %v4582
        %v4660 = vadd.f32 %v4136, %v4586
        %v4661 = vadd.f32 %v4138, %v4588
        %v4662 = vadd.f32 %v4142, %v4592
        %v4663 = vadd.f32 %v4144, %v4594
        %v4664 = vadd.f32 %v4148, %v4598
        %v4665 = vadd.f32 %v4150, %v4600
        %v4666 = vrot.slane %v3317, 6
        %v4667 = vrot.slane %v3318, 6
        %v4668 = vrot.slane %v3319, 6
        %v4669 = vrot.slane %v3320, 6
        %v4670 = vrot.slane %v3321, 6
        %v4671 = vrot.slane %v3322, 6
        %v4672 = vrot.slane %v3323, 6
        %v4673 = vrot.slane %v3324, 6
        %v4674 = vrot.slane %v3325, 6
        %v4675 = vrot.slane %v3326, 6
        %v4676 = vrot.slane %v3327, 6
        %v4677 = vrot.slane %v3328, 6
        %v4678 = vrot.slane %v3329, 6
        %v4679 = vrot.slane %v3330, 6
        %v4680 = vrot.slane %v3331, 6
        %v4681 = vrot.slane %v3332, 6
        %v4682 = vrot.slane %v3333, 6
        %v4683 = vrot.slane %v3334, 6
        %v4684 = vrot.slane %v3335, 6
        %v4685 = vrot.slane %v3336, 6
        %v4686 = vrot.slane %v3337, 6
        %v4687 = vrot.slane %v3338, 6
        %v4688 = vrot.slane %v3339, 6
        %v4689 = vrot.slane %v3340, 6
        %v4690 = vrot.slane %v3341, 6
        %v4691 = vrot.slane %v3342, 6
        %v4692 = vrot.slane %v3343, 6
        %v4693 = vrot.slane %v3344, 6
        %v4694 = vrot.slane %v3345, 6
        %v4695 = vrot.slane %v3346, 6
        %v4696 = vrot.slane %v3347, 6
        %v4697 = vrot.slane %v3348, 6
        %v4698 = vrot.slane %v3349, 6
        %v4699 = vrot.slane %v3350, 6
        %v4700 = vrot.slane %v3351, 6
        %v4701 = vrot.slane %v3352, 6
        %v4702 = vrot.slane %v3353, 6
        %v4703 = vrot.slane %v3354, 6
        %v4704 = vrot.slane %v3355, 6
        %v4705 = vrot.slane %v3356, 6
        %v4706 = vrot.slane %v3357, 6
        %v4707 = vrot.slane %v3358, 6
        %v4708 = vrot.slane %v3359, 6
        %v4709 = vrot.slane %v3360, 6
        %v4710 = vrot.slane %v3361, 6
        %v4711 = vrot.slane %v3362, 6
        %v4712 = vrot.slane %v3363, 6
        %v4713 = vrot.slane %v3364, 6
        %v4714 = vrot.slane %v3365, 6
        %v4715 = vrot.slane %v3366, 6
        %v4716 = vrot.slane %v3367, 6
        %v4717 = vrot.slane %v3368, 6
        %v4718 = vrot.slane %v3369, 6
        %v4719 = vrot.slane %v3370, 6
        %v4720 = vrot.slane %v3371, 6
        %v4721 = vrot.slane %v3372, 6
        %v4722 = vrot.slane %v3373, 6
        %v4723 = vrot.slane %v3374, 6
        %v4724 = vrot.slane %v3375, 6
        %v4725 = vrot.slane %v3376, 6
        %v4726 = vrot.slane %v3377, 6
        %v4727 = vrot.slane %v3378, 6
        %v4728 = vrot.slane %v3379, 6
        %v4729 = vrot.slane %v3380, 6
        %vm4730 = vcmp.lt.s32.totalorder %v503, 2
        %v4731 = vsel %vm4730, %v4726, %v4728
        %v4732 = vsel %vm4730, %v4727, %v4729
        %v4733 = vsel %vm4730, %v4724, %v4726
        %v4734 = vsel %vm4730, %v4725, %v4727
        %v4735 = vsel %vm4730, %v4722, %v4724
        %v4736 = vsel %vm4730, %v4723, %v4725
        %v4737 = vsel %vm4730, %v4720, %v4722
        %v4738 = vsel %vm4730, %v4721, %v4723
        %v4739 = vsel %vm4730, %v4718, %v4720
        %v4740 = vsel %vm4730, %v4719, %v4721
        %v4741 = vsel %vm4730, %v4716, %v4718
        %v4742 = vsel %vm4730, %v4717, %v4719
        %v4743 = vsel %vm4730, %v4714, %v4716
        %v4744 = vsel %vm4730, %v4715, %v4717
        %v4745 = vsel %vm4730, %v4712, %v4714
        %v4746 = vsel %vm4730, %v4713, %v4715
        %v4747 = vsel %vm4730, %v4710, %v4712
        %v4748 = vsel %vm4730, %v4711, %v4713
        %v4749 = vsel %vm4730, %v4708, %v4710
        %v4750 = vsel %vm4730, %v4709, %v4711
        %v4751 = vsel %vm4730, %v4706, %v4708
        %v4752 = vsel %vm4730, %v4707, %v4709
        %v4753 = vsel %vm4730, %v4704, %v4706
        %v4754 = vsel %vm4730, %v4705, %v4707
        %v4755 = vsel %vm4730, %v4702, %v4704
        %v4756 = vsel %vm4730, %v4703, %v4705
        %v4757 = vsel %vm4730, %v4700, %v4702
        %v4758 = vsel %vm4730, %v4701, %v4703
        %v4759 = vsel %vm4730, %v4698, %v4700
        %v4760 = vsel %vm4730, %v4699, %v4701
        %v4761 = vsel %vm4730, %v4696, %v4698
        %v4762 = vsel %vm4730, %v4697, %v4699
        %v4763 = vsel %vm4730, %v4694, %v4696
        %v4764 = vsel %vm4730, %v4695, %v4697
        %v4765 = vsel %vm4730, %v4692, %v4694
        %v4766 = vsel %vm4730, %v4693, %v4695
        %v4767 = vsel %vm4730, %v4690, %v4692
        %v4768 = vsel %vm4730, %v4691, %v4693
        %v4769 = vsel %vm4730, %v4688, %v4690
        %v4770 = vsel %vm4730, %v4689, %v4691
        %v4771 = vsel %vm4730, %v4686, %v4688
        %v4772 = vsel %vm4730, %v4687, %v4689
        %v4773 = vsel %vm4730, %v4684, %v4686
        %v4774 = vsel %vm4730, %v4685, %v4687
        %v4775 = vsel %vm4730, %v4682, %v4684
        %v4776 = vsel %vm4730, %v4683, %v4685
        %v4777 = vsel %vm4730, %v4680, %v4682
        %v4778 = vsel %vm4730, %v4681, %v4683
        %v4779 = vsel %vm4730, %v4678, %v4680
        %v4780 = vsel %vm4730, %v4679, %v4681
        %v4781 = vsel %vm4730, %v4676, %v4678
        %v4782 = vsel %vm4730, %v4677, %v4679
        %v4783 = vsel %vm4730, %v4674, %v4676
        %v4784 = vsel %vm4730, %v4675, %v4677
        %v4785 = vsel %vm4730, %v4672, %v4674
        %v4786 = vsel %vm4730, %v4673, %v4675
        %v4787 = vsel %vm4730, %v4670, %v4672
        %v4788 = vsel %vm4730, %v4671, %v4673
        %v4789 = vsel %vm4730, %v4668, %v4670
        %v4790 = vsel %vm4730, %v4669, %v4671
        %v4791 = vsel %vm4730, %v4666, %v4668
        %v4792 = vsel %vm4730, %v4667, %v4669
        %v4793 = vsel %vm4730, %v4728, %v4666
        %v4794 = vsel %vm4730, %v4729, %v4667
        %s4795 = scalar_lea.vmem %s3, 1536
        %v4796 = vld [vmem:[%s4795] sm:$0xff]
        %v4797 = vld [vmem:[%s4795 + $0x8] sm:$0xff]
        %v4798 = vld [vmem:[%s4795 + $0x10] sm:$0xff]
        %v4799 = vld [vmem:[%s4795 + $0x18] sm:$0xff]
        %v4800 = vld [vmem:[%s4795 + $0x20] sm:$0xff]
        %v4801 = vld [vmem:[%s4795 + $0x28] sm:$0xff]
        %v4802 = vld [vmem:[%s4795 + $0x30] sm:$0xff]
        %v4803 = vld [vmem:[%s4795 + $0x38] sm:$0xff]
        %v4804 = vld [vmem:[%s4795 + $0x40] sm:$0xff]
        %v4805 = vld [vmem:[%s4795 + $0x48] sm:$0xff]
        %v4806 = vld [vmem:[%s4795 + $0x50] sm:$0xff]
        %v4807 = vld [vmem:[%s4795 + $0x58] sm:$0xff]
        %v4808 = vld [vmem:[%s4795 + $0x60] sm:$0xff]
        %v4809 = vld [vmem:[%s4795 + $0x68] sm:$0xff]
        %v4810 = vld [vmem:[%s4795 + $0x70] sm:$0xff]
        %v4811 = vld [vmem:[%s4795 + $0x78] sm:$0xff]
        %v4812 = vld [vmem:[%s4795 + $0x80] sm:$0xff]
        %v4813 = vld [vmem:[%s4795 + $0x88] sm:$0xff]
        %v4814 = vld [vmem:[%s4795 + $0x90] sm:$0xff]
        %v4815 = vld [vmem:[%s4795 + $0x98] sm:$0xff]
        %v4816 = vld [vmem:[%s4795 + $0xa0] sm:$0xff]
        %v4817 = vld [vmem:[%s4795 + $0xa8] sm:$0xff]
        %v4818 = vld [vmem:[%s4795 + $0xb0] sm:$0xff]
        %v4819 = vld [vmem:[%s4795 + $0xb8] sm:$0xff]
        %v4820 = vld [vmem:[%s4795 + $0xc0] sm:$0xff]
        %v4821 = vld [vmem:[%s4795 + $0xc8] sm:$0xff]
        %v4822 = vld [vmem:[%s4795 + $0xd0] sm:$0xff]
        %v4823 = vld [vmem:[%s4795 + $0xd8] sm:$0xff]
        %v4824 = vld [vmem:[%s4795 + $0xe0] sm:$0xff]
        %v4825 = vld [vmem:[%s4795 + $0xe8] sm:$0xff]
        %v4826 = vld [vmem:[%s4795 + $0xf0] sm:$0xff]
        %v4827 = vld [vmem:[%s4795 + $0xf8] sm:$0xff]
        %v4828 = vld [vmem:[%s4795 + $0x100] sm:$0xff]
        %v4829 = vld [vmem:[%s4795 + $0x108] sm:$0xff]
        %v4830 = vld [vmem:[%s4795 + $0x110] sm:$0xff]
        %v4831 = vld [vmem:[%s4795 + $0x118] sm:$0xff]
        %v4832 = vld [vmem:[%s4795 + $0x120] sm:$0xff]
        %v4833 = vld [vmem:[%s4795 + $0x128] sm:$0xff]
        %v4834 = vld [vmem:[%s4795 + $0x130] sm:$0xff]
        %v4835 = vld [vmem:[%s4795 + $0x138] sm:$0xff]
        %v4836 = vld [vmem:[%s4795 + $0x140] sm:$0xff]
        %v4837 = vld [vmem:[%s4795 + $0x148] sm:$0xff]
        %v4838 = vld [vmem:[%s4795 + $0x150] sm:$0xff]
        %v4839 = vld [vmem:[%s4795 + $0x158] sm:$0xff]
        %v4840 = vld [vmem:[%s4795 + $0x160] sm:$0xff]
        %v4841 = vld [vmem:[%s4795 + $0x168] sm:$0xff]
        %v4842 = vld [vmem:[%s4795 + $0x170] sm:$0xff]
        %v4843 = vld [vmem:[%s4795 + $0x178] sm:$0xff]
        %v4844 = vld [vmem:[%s4795 + $0x180] sm:$0xff]
        %v4845 = vld [vmem:[%s4795 + $0x188] sm:$0xff]
        %v4846 = vld [vmem:[%s4795 + $0x190] sm:$0xff]
        %v4847 = vld [vmem:[%s4795 + $0x198] sm:$0xff]
        %v4848 = vld [vmem:[%s4795 + $0x1a0] sm:$0xff]
        %v4849 = vld [vmem:[%s4795 + $0x1a8] sm:$0xff]
        %v4850 = vld [vmem:[%s4795 + $0x1b0] sm:$0xff]
        %v4851 = vld [vmem:[%s4795 + $0x1b8] sm:$0xff]
        %v4852 = vld [vmem:[%s4795 + $0x1c0] sm:$0xff]
        %v4853 = vld [vmem:[%s4795 + $0x1c8] sm:$0xff]
        %v4854 = vld [vmem:[%s4795 + $0x1d0] sm:$0xff]
        %v4855 = vld [vmem:[%s4795 + $0x1d8] sm:$0xff]
        %v4856 = vld [vmem:[%s4795 + $0x1e0] sm:$0xff]
        %v4857 = vld [vmem:[%s4795 + $0x1e8] sm:$0xff]
        %v4858 = vld [vmem:[%s4795 + $0x1f0] sm:$0xff]
        %v4859 = vld [vmem:[%s4795 + $0x1f8] sm:$0xff]
        %4860 = vmatprep.subr.mxu0 %v4827
        %4861 = vmatpush1.msra.mxu0 %v4826
        %4862 = vmatprep.subr.mxu0 %v4825
        %4863 = vmatpush1.msra.mxu0 %v4824
        %4864 = vmatprep.subr.mxu0 %v4823
        %4865 = vmatpush1.msra.mxu0 %v4822
        %4866 = vmatprep.subr.mxu0 %v4821
        %4867 = vmatpush1.msra.mxu0 %v4820
        %4868 = vmatprep.subr.mxu0 %v4819
        %4869 = vmatpush1.msra.mxu0 %v4818
        %4870 = vmatprep.subr.mxu0 %v4817
        %4871 = vmatpush1.msra.mxu0 %v4816
        %4872 = vmatprep.subr.mxu0 %v4815
        %4873 = vmatpush1.msra.mxu0 %v4814
        %4874 = vmatprep.subr.mxu0 %v4813
        %4875 = vmatpush1.msra.mxu0 %v4812
        %4876 = vmatprep.subr.mxu0 %v4811
        %4877 = vmatpush1.msra.mxu0 %v4810
        %4878 = vmatprep.subr.mxu0 %v4809
        %4879 = vmatpush1.msra.mxu0 %v4808
        %4880 = vmatprep.subr.mxu0 %v4807
        %4881 = vmatpush1.msra.mxu0 %v4806
        %4882 = vmatprep.subr.mxu0 %v4805
        %4883 = vmatpush1.msra.mxu0 %v4804
        %4884 = vmatprep.subr.mxu0 %v4803
        %4885 = vmatpush1.msra.mxu0 %v4802
        %4886 = vmatprep.subr.mxu0 %v4801
        %4887 = vmatpush1.msra.mxu0 %v4800
        %4888 = vmatprep.subr.mxu0 %v4799
        %4889 = vmatpush1.msra.mxu0 %v4798
        %4890 = vmatprep.subr.mxu0 %v4797
        %4891 = vmatpush1.msra.mxu0 %v4796
        %4892 = vmatprep.subr.mxu0 %v4859
        %4893 = vmatpush2.msra.mxu0 %v4858
        %4894 = vmatprep.subr.mxu0 %v4857
        %4895 = vmatpush2.msra.mxu0 %v4856
        %4896 = vmatprep.subr.mxu0 %v4855
        %4897 = vmatpush2.msra.mxu0 %v4854
        %4898 = vmatprep.subr.mxu0 %v4853
        %4899 = vmatpush2.msra.mxu0 %v4852
        %4900 = vmatprep.subr.mxu0 %v4851
        %4901 = vmatpush2.msra.mxu0 %v4850
        %4902 = vmatprep.subr.mxu0 %v4849
        %4903 = vmatpush2.msra.mxu0 %v4848
        %4904 = vmatprep.subr.mxu0 %v4847
        %4905 = vmatpush2.msra.mxu0 %v4846
        %4906 = vmatprep.subr.mxu0 %v4845
        %4907 = vmatpush2.msra.mxu0 %v4844
        %4908 = vmatprep.subr.mxu0 %v4843
        %4909 = vmatpush2.msra.mxu0 %v4842
        %4910 = vmatprep.subr.mxu0 %v4841
        %4911 = vmatpush2.msra.mxu0 %v4840
        %4912 = vmatprep.subr.mxu0 %v4839
        %4913 = vmatpush2.msra.mxu0 %v4838
        %4914 = vmatprep.subr.mxu0 %v4837
        %4915 = vmatpush2.msra.mxu0 %v4836
        %4916 = vmatprep.subr.mxu0 %v4835
        %4917 = vmatpush2.msra.mxu0 %v4834
        %4918 = vmatprep.subr.mxu0 %v4833
        %4919 = vmatpush2.msra.mxu0 %v4832
        %4920 = vmatprep.subr.mxu0 %v4831
        %4921 = vmatpush2.msra.mxu0 %v4830
        %4922 = vmatprep.subr.mxu0 %v4829
        %4923 = vmatpush2.msra.mxu0 %v4828
        %4924 = vmatprep.mubr.f32.mxu0 %v4792
        %4925 = vmatmul.mubr.f32.gmra.mxu0 %v4791
        %v4926 = vpop.f32.mrf.mxu0
        %v4927 = vadd.f32 0.0, %v4926
        %v4928 = vpop.f32.mrf.mxu0
        %v4929 = vadd.f32 0.0, %v4928
        %4930 = vmatprep.mubr.f32.mxu0 %v4790
        %4931 = vmatmul.mubr.f32.gmra.mxu0 %v4789
        %v4932 = vpop.f32.mrf.mxu0
        %v4933 = vadd.f32 0.0, %v4932
        %v4934 = vpop.f32.mrf.mxu0
        %v4935 = vadd.f32 0.0, %v4934
        %4936 = vmatprep.mubr.f32.mxu0 %v4788
        %4937 = vmatmul.mubr.f32.gmra.mxu0 %v4787
        %v4938 = vpop.f32.mrf.mxu0
        %v4939 = vadd.f32 0.0, %v4938
        %v4940 = vpop.f32.mrf.mxu0
        %v4941 = vadd.f32 0.0, %v4940
        %4942 = vmatprep.mubr.f32.mxu0 %v4786
        %4943 = vmatmul.mubr.f32.gmra.mxu0 %v4785
        %v4944 = vpop.f32.mrf.mxu0
        %v4945 = vadd.f32 0.0, %v4944
        %v4946 = vpop.f32.mrf.mxu0
        %v4947 = vadd.f32 0.0, %v4946
        %4948 = vmatprep.mubr.f32.mxu0 %v4784
        %4949 = vmatmul.mubr.f32.gmra.mxu0 %v4783
        %v4950 = vpop.f32.mrf.mxu0
        %v4951 = vadd.f32 0.0, %v4950
        %v4952 = vpop.f32.mrf.mxu0
        %v4953 = vadd.f32 0.0, %v4952
        %4954 = vmatprep.mubr.f32.mxu0 %v4782
        %4955 = vmatmul.mubr.f32.gmra.mxu0 %v4781
        %v4956 = vpop.f32.mrf.mxu0
        %v4957 = vadd.f32 0.0, %v4956
        %v4958 = vpop.f32.mrf.mxu0
        %v4959 = vadd.f32 0.0, %v4958
        %4960 = vmatprep.mubr.f32.mxu0 %v4780
        %4961 = vmatmul.mubr.f32.gmra.mxu0 %v4779
        %v4962 = vpop.f32.mrf.mxu0
        %v4963 = vadd.f32 0.0, %v4962
        %v4964 = vpop.f32.mrf.mxu0
        %v4965 = vadd.f32 0.0, %v4964
        %4966 = vmatprep.mubr.f32.mxu0 %v4778
        %4967 = vmatmul.mubr.f32.gmra.mxu0 %v4777
        %v4968 = vpop.f32.mrf.mxu0
        %v4969 = vadd.f32 0.0, %v4968
        %v4970 = vpop.f32.mrf.mxu0
        %v4971 = vadd.f32 0.0, %v4970
        %4972 = vmatprep.mubr.f32.mxu0 %v4776
        %4973 = vmatmul.mubr.f32.gmra.mxu0 %v4775
        %v4974 = vpop.f32.mrf.mxu0
        %v4975 = vadd.f32 0.0, %v4974
        %v4976 = vpop.f32.mrf.mxu0
        %v4977 = vadd.f32 0.0, %v4976
        %4978 = vmatprep.mubr.f32.mxu0 %v4774
        %4979 = vmatmul.mubr.f32.gmra.mxu0 %v4773
        %v4980 = vpop.f32.mrf.mxu0
        %v4981 = vadd.f32 0.0, %v4980
        %v4982 = vpop.f32.mrf.mxu0
        %v4983 = vadd.f32 0.0, %v4982
        %4984 = vmatprep.mubr.f32.mxu0 %v4772
        %4985 = vmatmul.mubr.f32.gmra.mxu0 %v4771
        %v4986 = vpop.f32.mrf.mxu0
        %v4987 = vadd.f32 0.0, %v4986
        %v4988 = vpop.f32.mrf.mxu0
        %v4989 = vadd.f32 0.0, %v4988
        %4990 = vmatprep.mubr.f32.mxu0 %v4770
        %4991 = vmatmul.mubr.f32.gmra.mxu0 %v4769
        %v4992 = vpop.f32.mrf.mxu0
        %v4993 = vadd.f32 0.0, %v4992
        %v4994 = vpop.f32.mrf.mxu0
        %v4995 = vadd.f32 0.0, %v4994
        %4996 = vmatprep.mubr.f32.mxu0 %v4768
        %4997 = vmatmul.mubr.f32.gmra.mxu0 %v4767
        %v4998 = vpop.f32.mrf.mxu0
        %v4999 = vadd.f32 0.0, %v4998
        %v5000 = vpop.f32.mrf.mxu0
        %v5001 = vadd.f32 0.0, %v5000
        %5002 = vmatprep.mubr.f32.mxu0 %v4766
        %5003 = vmatmul.mubr.f32.gmra.mxu0 %v4765
        %v5004 = vpop.f32.mrf.mxu0
        %v5005 = vadd.f32 0.0, %v5004
        %v5006 = vpop.f32.mrf.mxu0
        %v5007 = vadd.f32 0.0, %v5006
        %5008 = vmatprep.mubr.f32.mxu0 %v4764
        %5009 = vmatmul.mubr.f32.gmra.mxu0 %v4763
        %v5010 = vpop.f32.mrf.mxu0
        %v5011 = vadd.f32 0.0, %v5010
        %v5012 = vpop.f32.mrf.mxu0
        %v5013 = vadd.f32 0.0, %v5012
        %5014 = vmatprep.mubr.f32.mxu0 %v4762
        %5015 = vmatmul.mubr.f32.gmra.mxu0 %v4761
        %v5016 = vpop.f32.mrf.mxu0
        %v5017 = vadd.f32 0.0, %v5016
        %v5018 = vpop.f32.mrf.mxu0
        %v5019 = vadd.f32 0.0, %v5018
        %5020 = vmatprep.mubr.f32.mxu0 %v4760
        %5021 = vmatmul.mubr.f32.gmra.mxu0 %v4759
        %v5022 = vpop.f32.mrf.mxu0
        %v5023 = vadd.f32 0.0, %v5022
        %v5024 = vpop.f32.mrf.mxu0
        %v5025 = vadd.f32 0.0, %v5024
        %5026 = vmatprep.mubr.f32.mxu0 %v4758
        %5027 = vmatmul.mubr.f32.gmra.mxu0 %v4757
        %v5028 = vpop.f32.mrf.mxu0
        %v5029 = vadd.f32 0.0, %v5028
        %v5030 = vpop.f32.mrf.mxu0
        %v5031 = vadd.f32 0.0, %v5030
        %5032 = vmatprep.mubr.f32.mxu0 %v4756
        %5033 = vmatmul.mubr.f32.gmra.mxu0 %v4755
        %v5034 = vpop.f32.mrf.mxu0
        %v5035 = vadd.f32 0.0, %v5034
        %v5036 = vpop.f32.mrf.mxu0
        %v5037 = vadd.f32 0.0, %v5036
        %5038 = vmatprep.mubr.f32.mxu0 %v4754
        %5039 = vmatmul.mubr.f32.gmra.mxu0 %v4753
        %v5040 = vpop.f32.mrf.mxu0
        %v5041 = vadd.f32 0.0, %v5040
        %v5042 = vpop.f32.mrf.mxu0
        %v5043 = vadd.f32 0.0, %v5042
        %5044 = vmatprep.mubr.f32.mxu0 %v4752
        %5045 = vmatmul.mubr.f32.gmra.mxu0 %v4751
        %v5046 = vpop.f32.mrf.mxu0
        %v5047 = vadd.f32 0.0, %v5046
        %v5048 = vpop.f32.mrf.mxu0
        %v5049 = vadd.f32 0.0, %v5048
        %5050 = vmatprep.mubr.f32.mxu0 %v4750
        %5051 = vmatmul.mubr.f32.gmra.mxu0 %v4749
        %v5052 = vpop.f32.mrf.mxu0
        %v5053 = vadd.f32 0.0, %v5052
        %v5054 = vpop.f32.mrf.mxu0
        %v5055 = vadd.f32 0.0, %v5054
        %5056 = vmatprep.mubr.f32.mxu0 %v4748
        %5057 = vmatmul.mubr.f32.gmra.mxu0 %v4747
        %v5058 = vpop.f32.mrf.mxu0
        %v5059 = vadd.f32 0.0, %v5058
        %v5060 = vpop.f32.mrf.mxu0
        %v5061 = vadd.f32 0.0, %v5060
        %5062 = vmatprep.mubr.f32.mxu0 %v4746
        %5063 = vmatmul.mubr.f32.gmra.mxu0 %v4745
        %v5064 = vpop.f32.mrf.mxu0
        %v5065 = vadd.f32 0.0, %v5064
        %v5066 = vpop.f32.mrf.mxu0
        %v5067 = vadd.f32 0.0, %v5066
        %5068 = vmatprep.mubr.f32.mxu0 %v4744
        %5069 = vmatmul.mubr.f32.gmra.mxu0 %v4743
        %v5070 = vpop.f32.mrf.mxu0
        %v5071 = vadd.f32 0.0, %v5070
        %v5072 = vpop.f32.mrf.mxu0
        %v5073 = vadd.f32 0.0, %v5072
        %5074 = vmatprep.mubr.f32.mxu0 %v4742
        %5075 = vmatmul.mubr.f32.gmra.mxu0 %v4741
        %v5076 = vpop.f32.mrf.mxu0
        %v5077 = vadd.f32 0.0, %v5076
        %v5078 = vpop.f32.mrf.mxu0
        %v5079 = vadd.f32 0.0, %v5078
        %5080 = vmatprep.mubr.f32.mxu0 %v4740
        %5081 = vmatmul.mubr.f32.gmra.mxu0 %v4739
        %v5082 = vpop.f32.mrf.mxu0
        %v5083 = vadd.f32 0.0, %v5082
        %v5084 = vpop.f32.mrf.mxu0
        %v5085 = vadd.f32 0.0, %v5084
        %5086 = vmatprep.mubr.f32.mxu0 %v4738
        %5087 = vmatmul.mubr.f32.gmra.mxu0 %v4737
        %v5088 = vpop.f32.mrf.mxu0
        %v5089 = vadd.f32 0.0, %v5088
        %v5090 = vpop.f32.mrf.mxu0
        %v5091 = vadd.f32 0.0, %v5090
        %5092 = vmatprep.mubr.f32.mxu0 %v4736
        %5093 = vmatmul.mubr.f32.gmra.mxu0 %v4735
        %v5094 = vpop.f32.mrf.mxu0
        %v5095 = vadd.f32 0.0, %v5094
        %v5096 = vpop.f32.mrf.mxu0
        %v5097 = vadd.f32 0.0, %v5096
        %5098 = vmatprep.mubr.f32.mxu0 %v4734
        %5099 = vmatmul.mubr.f32.gmra.mxu0 %v4733
        %v5100 = vpop.f32.mrf.mxu0
        %v5101 = vadd.f32 0.0, %v5100
        %v5102 = vpop.f32.mrf.mxu0
        %v5103 = vadd.f32 0.0, %v5102
        %5104 = vmatprep.mubr.f32.mxu0 %v4732
        %5105 = vmatmul.mubr.f32.gmra.mxu0 %v4731
        %v5106 = vpop.f32.mrf.mxu0
        %v5107 = vadd.f32 0.0, %v5106
        %v5108 = vpop.f32.mrf.mxu0
        %v5109 = vadd.f32 0.0, %v5108
        %5110 = vmatprep.mubr.f32.mxu0 %v4794
        %5111 = vmatmul.mubr.f32.gmra.mxu0 %v4793
        %v5112 = vpop.f32.mrf.mxu0
        %v5113 = vadd.f32 0.0, %v5112
        %v5114 = vpop.f32.mrf.mxu0
        %v5115 = vadd.f32 0.0, %v5114
        %5116 = vdwg.mxu0
        %v5117 = vadd.f32 %v4602, %v4927
        %v5118 = vadd.f32 %v4603, %v4929
        %v5119 = vadd.f32 %v4604, %v4933
        %v5120 = vadd.f32 %v4605, %v4935
        %v5121 = vadd.f32 %v4606, %v4939
        %v5122 = vadd.f32 %v4607, %v4941
        %v5123 = vadd.f32 %v4608, %v4945
        %v5124 = vadd.f32 %v4609, %v4947
        %v5125 = vadd.f32 %v4610, %v4951
        %v5126 = vadd.f32 %v4611, %v4953
        %v5127 = vadd.f32 %v4612, %v4957
        %v5128 = vadd.f32 %v4613, %v4959
        %v5129 = vadd.f32 %v4614, %v4963
        %v5130 = vadd.f32 %v4615, %v4965
        %v5131 = vadd.f32 %v4616, %v4969
        %v5132 = vadd.f32 %v4617, %v4971
        %v5133 = vadd.f32 %v4618, %v4975
        %v5134 = vadd.f32 %v4619, %v4977
        %v5135 = vadd.f32 %v4620, %v4981
        %v5136 = vadd.f32 %v4621, %v4983
        %v5137 = vadd.f32 %v4622, %v4987
        %v5138 = vadd.f32 %v4623, %v4989
        %v5139 = vadd.f32 %v4624, %v4993
        %v5140 = vadd.f32 %v4625, %v4995
        %v5141 = vadd.f32 %v4626, %v4999
        %v5142 = vadd.f32 %v4627, %v5001
        %v5143 = vadd.f32 %v4628, %v5005
        %v5144 = vadd.f32 %v4629, %v5007
        %v5145 = vadd.f32 %v4630, %v5011
        %v5146 = vadd.f32 %v4631, %v5013
        %v5147 = vadd.f32 %v4632, %v5017
        %v5148 = vadd.f32 %v4633, %v5019
        %v5149 = vadd.f32 %v4634, %v5023
        %v5150 = vadd.f32 %v4635, %v5025
        %v5151 = vadd.f32 %v4636, %v5029
        %v5152 = vadd.f32 %v4637, %v5031
        %v5153 = vadd.f32 %v4638, %v5035
        %v5154 = vadd.f32 %v4639, %v5037
        %v5155 = vadd.f32 %v4640, %v5041
        %v5156 = vadd.f32 %v4641, %v5043
        %v5157 = vadd.f32 %v4642, %v5047
        %v5158 = vadd.f32 %v4643, %v5049
        %v5159 = vadd.f32 %v4644, %v5053
        %v5160 = vadd.f32 %v4645, %v5055
        %v5161 = vadd.f32 %v4646, %v5059
        %v5162 = vadd.f32 %v4647, %v5061
        %v5163 = vadd.f32 %v4648, %v5065
        %v5164 = vadd.f32 %v4649, %v5067
        %v5165 = vadd.f32 %v4650, %v5071
        %v5166 = vadd.f32 %v4651, %v5073
        %v5167 = vadd.f32 %v4652, %v5077
        %v5168 = vadd.f32 %v4653, %v5079
        %v5169 = vadd.f32 %v4654, %v5083
        %v5170 = vadd.f32 %v4655, %v5085
        %v5171 = vadd.f32 %v4656, %v5089
        %v5172 = vadd.f32 %v4657, %v5091
        %v5173 = vadd.f32 %v4658, %v5095
        %v5174 = vadd.f32 %v4659, %v5097
        %v5175 = vadd.f32 %v4660, %v5101
        %v5176 = vadd.f32 %v4661, %v5103
        %v5177 = vadd.f32 %v4662, %v5107
        %v5178 = vadd.f32 %v4663, %v5109
        %v5179 = vadd.f32 %v4664, %v5113
        %v5180 = vadd.f32 %v4665, %v5115
        %s5181 = scalar_lea.vmem %s3, 2048
        %v5182 = vld [vmem:[%s5181] sm:$0xff]
        %v5183 = vld [vmem:[%s5181 + $0x8] sm:$0xff]
        %v5184 = vld [vmem:[%s5181 + $0x10] sm:$0xff]
        %v5185 = vld [vmem:[%s5181 + $0x18] sm:$0xff]
        %v5186 = vld [vmem:[%s5181 + $0x20] sm:$0xff]
        %v5187 = vld [vmem:[%s5181 + $0x28] sm:$0xff]
        %v5188 = vld [vmem:[%s5181 + $0x30] sm:$0xff]
        %v5189 = vld [vmem:[%s5181 + $0x38] sm:$0xff]
        %v5190 = vld [vmem:[%s5181 + $0x40] sm:$0xff]
        %v5191 = vld [vmem:[%s5181 + $0x48] sm:$0xff]
        %v5192 = vld [vmem:[%s5181 + $0x50] sm:$0xff]
        %v5193 = vld [vmem:[%s5181 + $0x58] sm:$0xff]
        %v5194 = vld [vmem:[%s5181 + $0x60] sm:$0xff]
        %v5195 = vld [vmem:[%s5181 + $0x68] sm:$0xff]
        %v5196 = vld [vmem:[%s5181 + $0x70] sm:$0xff]
        %v5197 = vld [vmem:[%s5181 + $0x78] sm:$0xff]
        %v5198 = vld [vmem:[%s5181 + $0x80] sm:$0xff]
        %v5199 = vld [vmem:[%s5181 + $0x88] sm:$0xff]
        %v5200 = vld [vmem:[%s5181 + $0x90] sm:$0xff]
        %v5201 = vld [vmem:[%s5181 + $0x98] sm:$0xff]
        %v5202 = vld [vmem:[%s5181 + $0xa0] sm:$0xff]
        %v5203 = vld [vmem:[%s5181 + $0xa8] sm:$0xff]
        %v5204 = vld [vmem:[%s5181 + $0xb0] sm:$0xff]
        %v5205 = vld [vmem:[%s5181 + $0xb8] sm:$0xff]
        %v5206 = vld [vmem:[%s5181 + $0xc0] sm:$0xff]
        %v5207 = vld [vmem:[%s5181 + $0xc8] sm:$0xff]
        %v5208 = vld [vmem:[%s5181 + $0xd0] sm:$0xff]
        %v5209 = vld [vmem:[%s5181 + $0xd8] sm:$0xff]
        %v5210 = vld [vmem:[%s5181 + $0xe0] sm:$0xff]
        %v5211 = vld [vmem:[%s5181 + $0xe8] sm:$0xff]
        %v5212 = vld [vmem:[%s5181 + $0xf0] sm:$0xff]
        %v5213 = vld [vmem:[%s5181 + $0xf8] sm:$0xff]
        %v5214 = vld [vmem:[%s5181 + $0x100] sm:$0xff]
        %v5215 = vld [vmem:[%s5181 + $0x108] sm:$0xff]
        %v5216 = vld [vmem:[%s5181 + $0x110] sm:$0xff]
        %v5217 = vld [vmem:[%s5181 + $0x118] sm:$0xff]
        %v5218 = vld [vmem:[%s5181 + $0x120] sm:$0xff]
        %v5219 = vld [vmem:[%s5181 + $0x128] sm:$0xff]
        %v5220 = vld [vmem:[%s5181 + $0x130] sm:$0xff]
        %v5221 = vld [vmem:[%s5181 + $0x138] sm:$0xff]
        %v5222 = vld [vmem:[%s5181 + $0x140] sm:$0xff]
        %v5223 = vld [vmem:[%s5181 + $0x148] sm:$0xff]
        %v5224 = vld [vmem:[%s5181 + $0x150] sm:$0xff]
        %v5225 = vld [vmem:[%s5181 + $0x158] sm:$0xff]
        %v5226 = vld [vmem:[%s5181 + $0x160] sm:$0xff]
        %v5227 = vld [vmem:[%s5181 + $0x168] sm:$0xff]
        %v5228 = vld [vmem:[%s5181 + $0x170] sm:$0xff]
        %v5229 = vld [vmem:[%s5181 + $0x178] sm:$0xff]
        %v5230 = vld [vmem:[%s5181 + $0x180] sm:$0xff]
        %v5231 = vld [vmem:[%s5181 + $0x188] sm:$0xff]
        %v5232 = vld [vmem:[%s5181 + $0x190] sm:$0xff]
        %v5233 = vld [vmem:[%s5181 + $0x198] sm:$0xff]
        %v5234 = vld [vmem:[%s5181 + $0x1a0] sm:$0xff]
        %v5235 = vld [vmem:[%s5181 + $0x1a8] sm:$0xff]
        %v5236 = vld [vmem:[%s5181 + $0x1b0] sm:$0xff]
        %v5237 = vld [vmem:[%s5181 + $0x1b8] sm:$0xff]
        %v5238 = vld [vmem:[%s5181 + $0x1c0] sm:$0xff]
        %v5239 = vld [vmem:[%s5181 + $0x1c8] sm:$0xff]
        %v5240 = vld [vmem:[%s5181 + $0x1d0] sm:$0xff]
        %v5241 = vld [vmem:[%s5181 + $0x1d8] sm:$0xff]
        %v5242 = vld [vmem:[%s5181 + $0x1e0] sm:$0xff]
        %v5243 = vld [vmem:[%s5181 + $0x1e8] sm:$0xff]
        %v5244 = vld [vmem:[%s5181 + $0x1f0] sm:$0xff]
        %v5245 = vld [vmem:[%s5181 + $0x1f8] sm:$0xff]
        %5246 = vmatprep.subr.mxu0 %v5213
        %5247 = vmatpush1.msra.mxu0 %v5212
        %5248 = vmatprep.subr.mxu0 %v5211
        %5249 = vmatpush1.msra.mxu0 %v5210
        %5250 = vmatprep.subr.mxu0 %v5209
        %5251 = vmatpush1.msra.mxu0 %v5208
        %5252 = vmatprep.subr.mxu0 %v5207
        %5253 = vmatpush1.msra.mxu0 %v5206
        %5254 = vmatprep.subr.mxu0 %v5205
        %5255 = vmatpush1.msra.mxu0 %v5204
        %5256 = vmatprep.subr.mxu0 %v5203
        %5257 = vmatpush1.msra.mxu0 %v5202
        %5258 = vmatprep.subr.mxu0 %v5201
        %5259 = vmatpush1.msra.mxu0 %v5200
        %5260 = vmatprep.subr.mxu0 %v5199
        %5261 = vmatpush1.msra.mxu0 %v5198
        %5262 = vmatprep.subr.mxu0 %v5197
        %5263 = vmatpush1.msra.mxu0 %v5196
        %5264 = vmatprep.subr.mxu0 %v5195
        %5265 = vmatpush1.msra.mxu0 %v5194
        %5266 = vmatprep.subr.mxu0 %v5193
        %5267 = vmatpush1.msra.mxu0 %v5192
        %5268 = vmatprep.subr.mxu0 %v5191
        %5269 = vmatpush1.msra.mxu0 %v5190
        %5270 = vmatprep.subr.mxu0 %v5189
        %5271 = vmatpush1.msra.mxu0 %v5188
        %5272 = vmatprep.subr.mxu0 %v5187
        %5273 = vmatpush1.msra.mxu0 %v5186
        %5274 = vmatprep.subr.mxu0 %v5185
        %5275 = vmatpush1.msra.mxu0 %v5184
        %5276 = vmatprep.subr.mxu0 %v5183
        %5277 = vmatpush1.msra.mxu0 %v5182
        %5278 = vmatprep.subr.mxu0 %v5245
        %5279 = vmatpush2.msra.mxu0 %v5244
        %5280 = vmatprep.subr.mxu0 %v5243
        %5281 = vmatpush2.msra.mxu0 %v5242
        %5282 = vmatprep.subr.mxu0 %v5241
        %5283 = vmatpush2.msra.mxu0 %v5240
        %5284 = vmatprep.subr.mxu0 %v5239
        %5285 = vmatpush2.msra.mxu0 %v5238
        %5286 = vmatprep.subr.mxu0 %v5237
        %5287 = vmatpush2.msra.mxu0 %v5236
        %5288 = vmatprep.subr.mxu0 %v5235
        %5289 = vmatpush2.msra.mxu0 %v5234
        %5290 = vmatprep.subr.mxu0 %v5233
        %5291 = vmatpush2.msra.mxu0 %v5232
        %5292 = vmatprep.subr.mxu0 %v5231
        %5293 = vmatpush2.msra.mxu0 %v5230
        %5294 = vmatprep.subr.mxu0 %v5229
        %5295 = vmatpush2.msra.mxu0 %v5228
        %5296 = vmatprep.subr.mxu0 %v5227
        %5297 = vmatpush2.msra.mxu0 %v5226
        %5298 = vmatprep.subr.mxu0 %v5225
        %5299 = vmatpush2.msra.mxu0 %v5224
        %5300 = vmatprep.subr.mxu0 %v5223
        %5301 = vmatpush2.msra.mxu0 %v5222
        %5302 = vmatprep.subr.mxu0 %v5221
        %5303 = vmatpush2.msra.mxu0 %v5220
        %5304 = vmatprep.subr.mxu0 %v5219
        %5305 = vmatpush2.msra.mxu0 %v5218
        %5306 = vmatprep.subr.mxu0 %v5217
        %5307 = vmatpush2.msra.mxu0 %v5216
        %5308 = vmatprep.subr.mxu0 %v5215
        %5309 = vmatpush2.msra.mxu0 %v5214
        %5310 = vmatprep.mubr.f32.mxu0 %v3320
        %5311 = vmatmul.mubr.f32.gmra.mxu0 %v3319
        %v5312 = vpop.f32.mrf.mxu0
        %v5313 = vadd.f32 0.0, %v5312
        %v5314 = vpop.f32.mrf.mxu0
        %v5315 = vadd.f32 0.0, %v5314
        %5316 = vmatprep.mubr.f32.mxu0 %v3322
        %5317 = vmatmul.mubr.f32.gmra.mxu0 %v3321
        %v5318 = vpop.f32.mrf.mxu0
        %v5319 = vadd.f32 0.0, %v5318
        %v5320 = vpop.f32.mrf.mxu0
        %v5321 = vadd.f32 0.0, %v5320
        %5322 = vmatprep.mubr.f32.mxu0 %v3324
        %5323 = vmatmul.mubr.f32.gmra.mxu0 %v3323
        %v5324 = vpop.f32.mrf.mxu0
        %v5325 = vadd.f32 0.0, %v5324
        %v5326 = vpop.f32.mrf.mxu0
        %v5327 = vadd.f32 0.0, %v5326
        %5328 = vmatprep.mubr.f32.mxu0 %v3326
        %5329 = vmatmul.mubr.f32.gmra.mxu0 %v3325
        %v5330 = vpop.f32.mrf.mxu0
        %v5331 = vadd.f32 0.0, %v5330
        %v5332 = vpop.f32.mrf.mxu0
        %v5333 = vadd.f32 0.0, %v5332
        %5334 = vmatprep.mubr.f32.mxu0 %v3328
        %5335 = vmatmul.mubr.f32.gmra.mxu0 %v3327
        %v5336 = vpop.f32.mrf.mxu0
        %v5337 = vadd.f32 0.0, %v5336
        %v5338 = vpop.f32.mrf.mxu0
        %v5339 = vadd.f32 0.0, %v5338
        %5340 = vmatprep.mubr.f32.mxu0 %v3330
        %5341 = vmatmul.mubr.f32.gmra.mxu0 %v3329
        %v5342 = vpop.f32.mrf.mxu0
        %v5343 = vadd.f32 0.0, %v5342
        %v5344 = vpop.f32.mrf.mxu0
        %v5345 = vadd.f32 0.0, %v5344
        %5346 = vmatprep.mubr.f32.mxu0 %v3332
        %5347 = vmatmul.mubr.f32.gmra.mxu0 %v3331
        %v5348 = vpop.f32.mrf.mxu0
        %v5349 = vadd.f32 0.0, %v5348
        %v5350 = vpop.f32.mrf.mxu0
        %v5351 = vadd.f32 0.0, %v5350
        %5352 = vmatprep.mubr.f32.mxu0 %v3334
        %5353 = vmatmul.mubr.f32.gmra.mxu0 %v3333
        %v5354 = vpop.f32.mrf.mxu0
        %v5355 = vadd.f32 0.0, %v5354
        %v5356 = vpop.f32.mrf.mxu0
        %v5357 = vadd.f32 0.0, %v5356
        %5358 = vmatprep.mubr.f32.mxu0 %v3336
        %5359 = vmatmul.mubr.f32.gmra.mxu0 %v3335
        %v5360 = vpop.f32.mrf.mxu0
        %v5361 = vadd.f32 0.0, %v5360
        %v5362 = vpop.f32.mrf.mxu0
        %v5363 = vadd.f32 0.0, %v5362
        %5364 = vmatprep.mubr.f32.mxu0 %v3338
        %5365 = vmatmul.mubr.f32.gmra.mxu0 %v3337
        %v5366 = vpop.f32.mrf.mxu0
        %v5367 = vadd.f32 0.0, %v5366
        %v5368 = vpop.f32.mrf.mxu0
        %v5369 = vadd.f32 0.0, %v5368
        %5370 = vmatprep.mubr.f32.mxu0 %v3340
        %5371 = vmatmul.mubr.f32.gmra.mxu0 %v3339
        %v5372 = vpop.f32.mrf.mxu0
        %v5373 = vadd.f32 0.0, %v5372
        %v5374 = vpop.f32.mrf.mxu0
        %v5375 = vadd.f32 0.0, %v5374
        %5376 = vmatprep.mubr.f32.mxu0 %v3342
        %5377 = vmatmul.mubr.f32.gmra.mxu0 %v3341
        %v5378 = vpop.f32.mrf.mxu0
        %v5379 = vadd.f32 0.0, %v5378
        %v5380 = vpop.f32.mrf.mxu0
        %v5381 = vadd.f32 0.0, %v5380
        %5382 = vmatprep.mubr.f32.mxu0 %v3344
        %5383 = vmatmul.mubr.f32.gmra.mxu0 %v3343
        %v5384 = vpop.f32.mrf.mxu0
        %v5385 = vadd.f32 0.0, %v5384
        %v5386 = vpop.f32.mrf.mxu0
        %v5387 = vadd.f32 0.0, %v5386
        %5388 = vmatprep.mubr.f32.mxu0 %v3346
        %5389 = vmatmul.mubr.f32.gmra.mxu0 %v3345
        %v5390 = vpop.f32.mrf.mxu0
        %v5391 = vadd.f32 0.0, %v5390
        %v5392 = vpop.f32.mrf.mxu0
        %v5393 = vadd.f32 0.0, %v5392
        %5394 = vmatprep.mubr.f32.mxu0 %v3348
        %5395 = vmatmul.mubr.f32.gmra.mxu0 %v3347
        %v5396 = vpop.f32.mrf.mxu0
        %v5397 = vadd.f32 0.0, %v5396
        %v5398 = vpop.f32.mrf.mxu0
        %v5399 = vadd.f32 0.0, %v5398
        %5400 = vmatprep.mubr.f32.mxu0 %v3350
        %5401 = vmatmul.mubr.f32.gmra.mxu0 %v3349
        %v5402 = vpop.f32.mrf.mxu0
        %v5403 = vadd.f32 0.0, %v5402
        %v5404 = vpop.f32.mrf.mxu0
        %v5405 = vadd.f32 0.0, %v5404
        %5406 = vmatprep.mubr.f32.mxu0 %v3352
        %5407 = vmatmul.mubr.f32.gmra.mxu0 %v3351
        %v5408 = vpop.f32.mrf.mxu0
        %v5409 = vadd.f32 0.0, %v5408
        %v5410 = vpop.f32.mrf.mxu0
        %v5411 = vadd.f32 0.0, %v5410
        %5412 = vmatprep.mubr.f32.mxu0 %v3354
        %5413 = vmatmul.mubr.f32.gmra.mxu0 %v3353
        %v5414 = vpop.f32.mrf.mxu0
        %v5415 = vadd.f32 0.0, %v5414
        %v5416 = vpop.f32.mrf.mxu0
        %v5417 = vadd.f32 0.0, %v5416
        %5418 = vmatprep.mubr.f32.mxu0 %v3356
        %5419 = vmatmul.mubr.f32.gmra.mxu0 %v3355
        %v5420 = vpop.f32.mrf.mxu0
        %v5421 = vadd.f32 0.0, %v5420
        %v5422 = vpop.f32.mrf.mxu0
        %v5423 = vadd.f32 0.0, %v5422
        %5424 = vmatprep.mubr.f32.mxu0 %v3358
        %5425 = vmatmul.mubr.f32.gmra.mxu0 %v3357
        %v5426 = vpop.f32.mrf.mxu0
        %v5427 = vadd.f32 0.0, %v5426
        %v5428 = vpop.f32.mrf.mxu0
        %v5429 = vadd.f32 0.0, %v5428
        %5430 = vmatprep.mubr.f32.mxu0 %v3360
        %5431 = vmatmul.mubr.f32.gmra.mxu0 %v3359
        %v5432 = vpop.f32.mrf.mxu0
        %v5433 = vadd.f32 0.0, %v5432
        %v5434 = vpop.f32.mrf.mxu0
        %v5435 = vadd.f32 0.0, %v5434
        %5436 = vmatprep.mubr.f32.mxu0 %v3362
        %5437 = vmatmul.mubr.f32.gmra.mxu0 %v3361
        %v5438 = vpop.f32.mrf.mxu0
        %v5439 = vadd.f32 0.0, %v5438
        %v5440 = vpop.f32.mrf.mxu0
        %v5441 = vadd.f32 0.0, %v5440
        %5442 = vmatprep.mubr.f32.mxu0 %v3364
        %5443 = vmatmul.mubr.f32.gmra.mxu0 %v3363
        %v5444 = vpop.f32.mrf.mxu0
        %v5445 = vadd.f32 0.0, %v5444
        %v5446 = vpop.f32.mrf.mxu0
        %v5447 = vadd.f32 0.0, %v5446
        %5448 = vmatprep.mubr.f32.mxu0 %v3366
        %5449 = vmatmul.mubr.f32.gmra.mxu0 %v3365
        %v5450 = vpop.f32.mrf.mxu0
        %v5451 = vadd.f32 0.0, %v5450
        %v5452 = vpop.f32.mrf.mxu0
        %v5453 = vadd.f32 0.0, %v5452
        %5454 = vmatprep.mubr.f32.mxu0 %v3368
        %5455 = vmatmul.mubr.f32.gmra.mxu0 %v3367
        %v5456 = vpop.f32.mrf.mxu0
        %v5457 = vadd.f32 0.0, %v5456
        %v5458 = vpop.f32.mrf.mxu0
        %v5459 = vadd.f32 0.0, %v5458
        %5460 = vmatprep.mubr.f32.mxu0 %v3370
        %5461 = vmatmul.mubr.f32.gmra.mxu0 %v3369
        %v5462 = vpop.f32.mrf.mxu0
        %v5463 = vadd.f32 0.0, %v5462
        %v5464 = vpop.f32.mrf.mxu0
        %v5465 = vadd.f32 0.0, %v5464
        %5466 = vmatprep.mubr.f32.mxu0 %v3372
        %5467 = vmatmul.mubr.f32.gmra.mxu0 %v3371
        %v5468 = vpop.f32.mrf.mxu0
        %v5469 = vadd.f32 0.0, %v5468
        %v5470 = vpop.f32.mrf.mxu0
        %v5471 = vadd.f32 0.0, %v5470
        %5472 = vmatprep.mubr.f32.mxu0 %v3374
        %5473 = vmatmul.mubr.f32.gmra.mxu0 %v3373
        %v5474 = vpop.f32.mrf.mxu0
        %v5475 = vadd.f32 0.0, %v5474
        %v5476 = vpop.f32.mrf.mxu0
        %v5477 = vadd.f32 0.0, %v5476
        %5478 = vmatprep.mubr.f32.mxu0 %v3376
        %5479 = vmatmul.mubr.f32.gmra.mxu0 %v3375
        %v5480 = vpop.f32.mrf.mxu0
        %v5481 = vadd.f32 0.0, %v5480
        %v5482 = vpop.f32.mrf.mxu0
        %v5483 = vadd.f32 0.0, %v5482
        %5484 = vmatprep.mubr.f32.mxu0 %v3378
        %5485 = vmatmul.mubr.f32.gmra.mxu0 %v3377
        %v5486 = vpop.f32.mrf.mxu0
        %v5487 = vadd.f32 0.0, %v5486
        %v5488 = vpop.f32.mrf.mxu0
        %v5489 = vadd.f32 0.0, %v5488
        %5490 = vmatprep.mubr.f32.mxu0 %v3380
        %5491 = vmatmul.mubr.f32.gmra.mxu0 %v3379
        %v5492 = vpop.f32.mrf.mxu0
        %v5493 = vadd.f32 0.0, %v5492
        %v5494 = vpop.f32.mrf.mxu0
        %v5495 = vadd.f32 0.0, %v5494
        %5496 = vmatprep.mubr.f32.mxu0 %v3318
        %5497 = vmatmul.mubr.f32.gmra.mxu0 %v3317
        %v5498 = vpop.f32.mrf.mxu0
        %v5499 = vadd.f32 0.0, %v5498
        %v5500 = vpop.f32.mrf.mxu0
        %v5501 = vadd.f32 0.0, %v5500
        %5502 = vdwg.mxu0
        %v5503 = vadd.f32 %v5117, %v5313
        %v5504 = vadd.f32 %v5118, %v5315
        %v5505 = vadd.f32 %v5119, %v5319
        %v5506 = vadd.f32 %v5120, %v5321
        %v5507 = vadd.f32 %v5121, %v5325
        %v5508 = vadd.f32 %v5122, %v5327
        %v5509 = vadd.f32 %v5123, %v5331
        %v5510 = vadd.f32 %v5124, %v5333
        %v5511 = vadd.f32 %v5125, %v5337
        %v5512 = vadd.f32 %v5126, %v5339
        %v5513 = vadd.f32 %v5127, %v5343
        %v5514 = vadd.f32 %v5128, %v5345
        %v5515 = vadd.f32 %v5129, %v5349
        %v5516 = vadd.f32 %v5130, %v5351
        %v5517 = vadd.f32 %v5131, %v5355
        %v5518 = vadd.f32 %v5132, %v5357
        %v5519 = vadd.f32 %v5133, %v5361
        %v5520 = vadd.f32 %v5134, %v5363
        %v5521 = vadd.f32 %v5135, %v5367
        %v5522 = vadd.f32 %v5136, %v5369
        %v5523 = vadd.f32 %v5137, %v5373
        %v5524 = vadd.f32 %v5138, %v5375
        %v5525 = vadd.f32 %v5139, %v5379
        %v5526 = vadd.f32 %v5140, %v5381
        %v5527 = vadd.f32 %v5141, %v5385
        %v5528 = vadd.f32 %v5142, %v5387
        %v5529 = vadd.f32 %v5143, %v5391
        %v5530 = vadd.f32 %v5144, %v5393
        %v5531 = vadd.f32 %v5145, %v5397
        %v5532 = vadd.f32 %v5146, %v5399
        %v5533 = vadd.f32 %v5147, %v5403
        %v5534 = vadd.f32 %v5148, %v5405
        %v5535 = vadd.f32 %v5149, %v5409
        %v5536 = vadd.f32 %v5150, %v5411
        %v5537 = vadd.f32 %v5151, %v5415
        %v5538 = vadd.f32 %v5152, %v5417
        %v5539 = vadd.f32 %v5153, %v5421
        %v5540 = vadd.f32 %v5154, %v5423
        %v5541 = vadd.f32 %v5155, %v5427
        %v5542 = vadd.f32 %v5156, %v5429
        %v5543 = vadd.f32 %v5157, %v5433
        %v5544 = vadd.f32 %v5158, %v5435
        %v5545 = vadd.f32 %v5159, %v5439
        %v5546 = vadd.f32 %v5160, %v5441
        %v5547 = vadd.f32 %v5161, %v5445
        %v5548 = vadd.f32 %v5162, %v5447
        %v5549 = vadd.f32 %v5163, %v5451
        %v5550 = vadd.f32 %v5164, %v5453
        %v5551 = vadd.f32 %v5165, %v5457
        %v5552 = vadd.f32 %v5166, %v5459
        %v5553 = vadd.f32 %v5167, %v5463
        %v5554 = vadd.f32 %v5168, %v5465
        %v5555 = vadd.f32 %v5169, %v5469
        %v5556 = vadd.f32 %v5170, %v5471
        %v5557 = vadd.f32 %v5171, %v5475
        %v5558 = vadd.f32 %v5172, %v5477
        %v5559 = vadd.f32 %v5173, %v5481
        %v5560 = vadd.f32 %v5174, %v5483
        %v5561 = vadd.f32 %v5175, %v5487
        %v5562 = vadd.f32 %v5176, %v5489
        %v5563 = vadd.f32 %v5177, %v5493
        %v5564 = vadd.f32 %v5178, %v5495
        %v5565 = vadd.f32 %v5179, %v5499
        %v5566 = vadd.f32 %v5180, %v5501
        %v5567 = vld [vmem:[%s4] sm:$0x3]
        %v5569 = vlaneseq
        %v5570 = vshrl.u32 %v5569, 7
        %v5571 = vsub.s32 0, %v5570
        %v5572 = vrot.slane %v5567, %v5571
        %v5573 = vlaneseq
        %v5574 = vshrl.u32 %v5573, 7
        %v5575 = vsub.s32 1, %v5574
        %v5576 = vrot.slane %v5567, %v5575
        %v5579 = vadd.f32 %v5503, %v5572
        %v5580 = vadd.f32 %v5504, %v5576
        %v5581 = vadd.f32 %v5505, %v5572
        %v5582 = vadd.f32 %v5506, %v5576
        %v5583 = vadd.f32 %v5507, %v5572
        %v5584 = vadd.f32 %v5508, %v5576
        %v5585 = vadd.f32 %v5509, %v5572
        %v5586 = vadd.f32 %v5510, %v5576
        %v5587 = vadd.f32 %v5511, %v5572
        %v5588 = vadd.f32 %v5512, %v5576
        %v5589 = vadd.f32 %v5513, %v5572
        %v5590 = vadd.f32 %v5514, %v5576
        %v5591 = vadd.f32 %v5515, %v5572
        %v5592 = vadd.f32 %v5516, %v5576
        %v5593 = vadd.f32 %v5517, %v5572
        %v5594 = vadd.f32 %v5518, %v5576
        %v5595 = vadd.f32 %v5519, %v5572
        %v5596 = vadd.f32 %v5520, %v5576
        %v5597 = vadd.f32 %v5521, %v5572
        %v5598 = vadd.f32 %v5522, %v5576
        %v5599 = vadd.f32 %v5523, %v5572
        %v5600 = vadd.f32 %v5524, %v5576
        %v5601 = vadd.f32 %v5525, %v5572
        %v5602 = vadd.f32 %v5526, %v5576
        %v5603 = vadd.f32 %v5527, %v5572
        %v5604 = vadd.f32 %v5528, %v5576
        %v5605 = vadd.f32 %v5529, %v5572
        %v5606 = vadd.f32 %v5530, %v5576
        %v5607 = vadd.f32 %v5531, %v5572
        %v5608 = vadd.f32 %v5532, %v5576
        %v5609 = vadd.f32 %v5533, %v5572
        %v5610 = vadd.f32 %v5534, %v5576
        %v5611 = vadd.f32 %v5535, %v5572
        %v5612 = vadd.f32 %v5536, %v5576
        %v5613 = vadd.f32 %v5537, %v5572
        %v5614 = vadd.f32 %v5538, %v5576
        %v5615 = vadd.f32 %v5539, %v5572
        %v5616 = vadd.f32 %v5540, %v5576
        %v5617 = vadd.f32 %v5541, %v5572
        %v5618 = vadd.f32 %v5542, %v5576
        %v5619 = vadd.f32 %v5543, %v5572
        %v5620 = vadd.f32 %v5544, %v5576
        %v5621 = vadd.f32 %v5545, %v5572
        %v5622 = vadd.f32 %v5546, %v5576
        %v5623 = vadd.f32 %v5547, %v5572
        %v5624 = vadd.f32 %v5548, %v5576
        %v5625 = vadd.f32 %v5549, %v5572
        %v5626 = vadd.f32 %v5550, %v5576
        %v5627 = vadd.f32 %v5551, %v5572
        %v5628 = vadd.f32 %v5552, %v5576
        %v5629 = vadd.f32 %v5553, %v5572
        %v5630 = vadd.f32 %v5554, %v5576
        %v5631 = vadd.f32 %v5555, %v5572
        %v5632 = vadd.f32 %v5556, %v5576
        %v5633 = vadd.f32 %v5557, %v5572
        %v5634 = vadd.f32 %v5558, %v5576
        %v5635 = vadd.f32 %v5559, %v5572
        %v5636 = vadd.f32 %v5560, %v5576
        %v5637 = vadd.f32 %v5561, %v5572
        %v5638 = vadd.f32 %v5562, %v5576
        %v5639 = vadd.f32 %v5563, %v5572
        %v5640 = vadd.f32 %v5564, %v5576
        %v5641 = vadd.f32 %v5565, %v5572
        %v5642 = vadd.f32 %v5566, %v5576
        %v5643 = vmax.f32 %v5579, 0.0
        %v5644 = vmax.f32 %v5580, 0.0
        %v5645 = vmax.f32 %v5581, 0.0
        %v5646 = vmax.f32 %v5582, 0.0
        %v5647 = vmax.f32 %v5583, 0.0
        %v5648 = vmax.f32 %v5584, 0.0
        %v5649 = vmax.f32 %v5585, 0.0
        %v5650 = vmax.f32 %v5586, 0.0
        %v5651 = vmax.f32 %v5587, 0.0
        %v5652 = vmax.f32 %v5588, 0.0
        %v5653 = vmax.f32 %v5589, 0.0
        %v5654 = vmax.f32 %v5590, 0.0
        %v5655 = vmax.f32 %v5591, 0.0
        %v5656 = vmax.f32 %v5592, 0.0
        %v5657 = vmax.f32 %v5593, 0.0
        %v5658 = vmax.f32 %v5594, 0.0
        %v5659 = vmax.f32 %v5595, 0.0
        %v5660 = vmax.f32 %v5596, 0.0
        %v5661 = vmax.f32 %v5597, 0.0
        %v5662 = vmax.f32 %v5598, 0.0
        %v5663 = vmax.f32 %v5599, 0.0
        %v5664 = vmax.f32 %v5600, 0.0
        %v5665 = vmax.f32 %v5601, 0.0
        %v5666 = vmax.f32 %v5602, 0.0
        %v5667 = vmax.f32 %v5603, 0.0
        %v5668 = vmax.f32 %v5604, 0.0
        %v5669 = vmax.f32 %v5605, 0.0
        %v5670 = vmax.f32 %v5606, 0.0
        %v5671 = vmax.f32 %v5607, 0.0
        %v5672 = vmax.f32 %v5608, 0.0
        %v5673 = vmax.f32 %v5609, 0.0
        %v5674 = vmax.f32 %v5610, 0.0
        %v5675 = vmax.f32 %v5611, 0.0
        %v5676 = vmax.f32 %v5612, 0.0
        %v5677 = vmax.f32 %v5613, 0.0
        %v5678 = vmax.f32 %v5614, 0.0
        %v5679 = vmax.f32 %v5615, 0.0
        %v5680 = vmax.f32 %v5616, 0.0
        %v5681 = vmax.f32 %v5617, 0.0
        %v5682 = vmax.f32 %v5618, 0.0
        %v5683 = vmax.f32 %v5619, 0.0
        %v5684 = vmax.f32 %v5620, 0.0
        %v5685 = vmax.f32 %v5621, 0.0
        %v5686 = vmax.f32 %v5622, 0.0
        %v5687 = vmax.f32 %v5623, 0.0
        %v5688 = vmax.f32 %v5624, 0.0
        %v5689 = vmax.f32 %v5625, 0.0
        %v5690 = vmax.f32 %v5626, 0.0
        %v5691 = vmax.f32 %v5627, 0.0
        %v5692 = vmax.f32 %v5628, 0.0
        %v5693 = vmax.f32 %v5629, 0.0
        %v5694 = vmax.f32 %v5630, 0.0
        %v5695 = vmax.f32 %v5631, 0.0
        %v5696 = vmax.f32 %v5632, 0.0
        %v5697 = vmax.f32 %v5633, 0.0
        %v5698 = vmax.f32 %v5634, 0.0
        %v5699 = vmax.f32 %v5635, 0.0
        %v5700 = vmax.f32 %v5636, 0.0
        %v5701 = vmax.f32 %v5637, 0.0
        %v5702 = vmax.f32 %v5638, 0.0
        %v5703 = vmax.f32 %v5639, 0.0
        %v5704 = vmax.f32 %v5640, 0.0
        %v5705 = vmax.f32 %v5641, 0.0
        %v5706 = vmax.f32 %v5642, 0.0
        %5707 = vrot.lane.b32.xlu0 %v5643, 112
        %v5708 = vpop.permute.xlu0 %5707
        %5709 = vrot.lane.b32.xlu0 %v5645, 112
        %v5710 = vpop.permute.xlu0 %5709
        %5711 = vrot.lane.b32.xlu0 %v5647, 112
        %v5712 = vpop.permute.xlu0 %5711
        %5713 = vrot.lane.b32.xlu0 %v5649, 112
        %v5714 = vpop.permute.xlu0 %5713
        %5715 = vrot.lane.b32.xlu0 %v5651, 112
        %v5716 = vpop.permute.xlu0 %5715
        %5717 = vrot.lane.b32.xlu0 %v5653, 112
        %v5718 = vpop.permute.xlu0 %5717
        %5719 = vrot.lane.b32.xlu0 %v5655, 112
        %v5720 = vpop.permute.xlu0 %5719
        %5721 = vrot.lane.b32.xlu0 %v5657, 112
        %v5722 = vpop.permute.xlu0 %5721
        %5723 = vrot.lane.b32.xlu0 %v5659, 112
        %v5724 = vpop.permute.xlu0 %5723
        %5725 = vrot.lane.b32.xlu0 %v5661, 112
        %v5726 = vpop.permute.xlu0 %5725
        %5727 = vrot.lane.b32.xlu0 %v5663, 112
        %v5728 = vpop.permute.xlu0 %5727
        %5729 = vrot.lane.b32.xlu0 %v5665, 112
        %v5730 = vpop.permute.xlu0 %5729
        %5731 = vrot.lane.b32.xlu0 %v5667, 112
        %v5732 = vpop.permute.xlu0 %5731
        %5733 = vrot.lane.b32.xlu0 %v5669, 112
        %v5734 = vpop.permute.xlu0 %5733
        %5735 = vrot.lane.b32.xlu0 %v5671, 112
        %v5736 = vpop.permute.xlu0 %5735
        %5737 = vrot.lane.b32.xlu0 %v5673, 112
        %v5738 = vpop.permute.xlu0 %5737
        %5739 = vrot.lane.b32.xlu0 %v5675, 112
        %v5740 = vpop.permute.xlu0 %5739
        %5741 = vrot.lane.b32.xlu0 %v5677, 112
        %v5742 = vpop.permute.xlu0 %5741
        %5743 = vrot.lane.b32.xlu0 %v5679, 112
        %v5744 = vpop.permute.xlu0 %5743
        %5745 = vrot.lane.b32.xlu0 %v5681, 112
        %v5746 = vpop.permute.xlu0 %5745
        %5747 = vrot.lane.b32.xlu0 %v5683, 112
        %v5748 = vpop.permute.xlu0 %5747
        %5749 = vrot.lane.b32.xlu0 %v5685, 112
        %v5750 = vpop.permute.xlu0 %5749
        %5751 = vrot.lane.b32.xlu0 %v5687, 112
        %v5752 = vpop.permute.xlu0 %5751
        %5753 = vrot.lane.b32.xlu0 %v5689, 112
        %v5754 = vpop.permute.xlu0 %5753
        %5755 = vrot.lane.b32.xlu0 %v5691, 112
        %v5756 = vpop.permute.xlu0 %5755
        %5757 = vrot.lane.b32.xlu0 %v5693, 112
        %v5758 = vpop.permute.xlu0 %5757
        %5759 = vrot.lane.b32.xlu0 %v5695, 112
        %v5760 = vpop.permute.xlu0 %5759
        %5761 = vrot.lane.b32.xlu0 %v5697, 112
        %v5762 = vpop.permute.xlu0 %5761
        %5763 = vrot.lane.b32.xlu0 %v5699, 112
        %v5764 = vpop.permute.xlu0 %5763
        %5765 = vrot.lane.b32.xlu0 %v5701, 112
        %v5766 = vpop.permute.xlu0 %5765
        %5767 = vrot.lane.b32.xlu0 %v5703, 112
        %v5768 = vpop.permute.xlu0 %5767
        %5769 = vrot.lane.b32.xlu0 %v5705, 112
        %v5770 = vpop.permute.xlu0 %5769
        %5771 = vrot.lane.b32.xlu0 %v5644, 112
        %v5772 = vpop.permute.xlu0 %5771
        %5773 = vrot.lane.b32.xlu0 %v5646, 112
        %v5774 = vpop.permute.xlu0 %5773
        %5775 = vrot.lane.b32.xlu0 %v5648, 112
        %v5776 = vpop.permute.xlu0 %5775
        %5777 = vrot.lane.b32.xlu0 %v5650, 112
        %v5778 = vpop.permute.xlu0 %5777
        %5779 = vrot.lane.b32.xlu0 %v5652, 112
        %v5780 = vpop.permute.xlu0 %5779
        %5781 = vrot.lane.b32.xlu0 %v5654, 112
        %v5782 = vpop.permute.xlu0 %5781
        %5783 = vrot.lane.b32.xlu0 %v5656, 112
        %v5784 = vpop.permute.xlu0 %5783
        %5785 = vrot.lane.b32.xlu0 %v5658, 112
        %v5786 = vpop.permute.xlu0 %5785
        %5787 = vrot.lane.b32.xlu0 %v5660, 112
        %v5788 = vpop.permute.xlu0 %5787
        %5789 = vrot.lane.b32.xlu0 %v5662, 112
        %v5790 = vpop.permute.xlu0 %5789
        %5791 = vrot.lane.b32.xlu0 %v5664, 112
        %v5792 = vpop.permute.xlu0 %5791
        %5793 = vrot.lane.b32.xlu0 %v5666, 112
        %v5794 = vpop.permute.xlu0 %5793
        %5795 = vrot.lane.b32.xlu0 %v5668, 112
        %v5796 = vpop.permute.xlu0 %5795
        %5797 = vrot.lane.b32.xlu0 %v5670, 112
        %v5798 = vpop.permute.xlu0 %5797
        %5799 = vrot.lane.b32.xlu0 %v5672, 112
        %v5800 = vpop.permute.xlu0 %5799
        %5801 = vrot.lane.b32.xlu0 %v5674, 112
        %v5802 = vpop.permute.xlu0 %5801
        %5803 = vrot.lane.b32.xlu0 %v5676, 112
        %v5804 = vpop.permute.xlu0 %5803
        %5805 = vrot.lane.b32.xlu0 %v5678, 112
        %v5806 = vpop.permute.xlu0 %5805
        %5807 = vrot.lane.b32.xlu0 %v5680, 112
        %v5808 = vpop.permute.xlu0 %5807
        %5809 = vrot.lane.b32.xlu0 %v5682, 112
        %v5810 = vpop.permute.xlu0 %5809
        %5811 = vrot.lane.b32.xlu0 %v5684, 112
        %v5812 = vpop.permute.xlu0 %5811
        %5813 = vrot.lane.b32.xlu0 %v5686, 112
        %v5814 = vpop.permute.xlu0 %5813
        %5815 = vrot.lane.b32.xlu0 %v5688, 112
        %v5816 = vpop.permute.xlu0 %5815
        %5817 = vrot.lane.b32.xlu0 %v5690, 112
        %v5818 = vpop.permute.xlu0 %5817
        %5819 = vrot.lane.b32.xlu0 %v5692, 112
        %v5820 = vpop.permute.xlu0 %5819
        %5821 = vrot.lane.b32.xlu0 %v5694, 112
        %v5822 = vpop.permute.xlu0 %5821
        %5823 = vrot.lane.b32.xlu0 %v5696, 112
        %v5824 = vpop.permute.xlu0 %5823
        %5825 = vrot.lane.b32.xlu0 %v5698, 112
        %v5826 = vpop.permute.xlu0 %5825
        %5827 = vrot.lane.b32.xlu0 %v5700, 112
        %v5828 = vpop.permute.xlu0 %5827
        %5829 = vrot.lane.b32.xlu0 %v5702, 112
        %v5830 = vpop.permute.xlu0 %5829
        %5831 = vrot.lane.b32.xlu0 %v5704, 112
        %v5832 = vpop.permute.xlu0 %5831
        %5833 = vrot.lane.b32.xlu0 %v5706, 112
        %v5834 = vpop.permute.xlu0 %5833
        %vm5835 = vcmp.lt.s32.totalorder %v3059, 112
        %v5836 = vsel %vm5835, %v5708, %v5772
        %v5837 = vsel %vm5835, %v5710, %v5774
        %v5838 = vsel %vm5835, %v5712, %v5776
        %v5839 = vsel %vm5835, %v5714, %v5778
        %v5840 = vsel %vm5835, %v5716, %v5780
        %v5841 = vsel %vm5835, %v5718, %v5782
        %v5842 = vsel %vm5835, %v5720, %v5784
        %v5843 = vsel %vm5835, %v5722, %v5786
        %v5844 = vsel %vm5835, %v5724, %v5788
        %v5845 = vsel %vm5835, %v5726, %v5790
        %v5846 = vsel %vm5835, %v5728, %v5792
        %v5847 = vsel %vm5835, %v5730, %v5794
        %v5848 = vsel %vm5835, %v5732, %v5796
        %v5849 = vsel %vm5835, %v5734, %v5798
        %v5850 = vsel %vm5835, %v5736, %v5800
        %v5851 = vsel %vm5835, %v5738, %v5802
        %v5852 = vsel %vm5835, %v5740, %v5804
        %v5853 = vsel %vm5835, %v5742, %v5806
        %v5854 = vsel %vm5835, %v5744, %v5808
        %v5855 = vsel %vm5835, %v5746, %v5810
        %v5856 = vsel %vm5835, %v5748, %v5812
        %v5857 = vsel %vm5835, %v5750, %v5814
        %v5858 = vsel %vm5835, %v5752, %v5816
        %v5859 = vsel %vm5835, %v5754, %v5818
        %v5860 = vsel %vm5835, %v5756, %v5820
        %v5861 = vsel %vm5835, %v5758, %v5822
        %v5862 = vsel %vm5835, %v5760, %v5824
        %v5863 = vsel %vm5835, %v5762, %v5826
        %v5864 = vsel %vm5835, %v5764, %v5828
        %v5865 = vsel %vm5835, %v5766, %v5830
        %v5866 = vsel %vm5835, %v5768, %v5832
        %v5867 = vsel %vm5835, %v5770, %v5834
        %v5868 = vsel %vm5835, %v5772, %v5708
        %v5869 = vsel %vm5835, %v5774, %v5710
        %v5870 = vsel %vm5835, %v5776, %v5712
        %v5871 = vsel %vm5835, %v5778, %v5714
        %v5872 = vsel %vm5835, %v5780, %v5716
        %v5873 = vsel %vm5835, %v5782, %v5718
        %v5874 = vsel %vm5835, %v5784, %v5720
        %v5875 = vsel %vm5835, %v5786, %v5722
        %v5876 = vsel %vm5835, %v5788, %v5724
        %v5877 = vsel %vm5835, %v5790, %v5726
        %v5878 = vsel %vm5835, %v5792, %v5728
        %v5879 = vsel %vm5835, %v5794, %v5730
        %v5880 = vsel %vm5835, %v5796, %v5732
        %v5881 = vsel %vm5835, %v5798, %v5734
        %v5882 = vsel %vm5835, %v5800, %v5736
        %v5883 = vsel %vm5835, %v5802, %v5738
        %v5884 = vsel %vm5835, %v5804, %v5740
        %v5885 = vsel %vm5835, %v5806, %v5742
        %v5886 = vsel %vm5835, %v5808, %v5744
        %v5887 = vsel %vm5835, %v5810, %v5746
        %v5888 = vsel %vm5835, %v5812, %v5748
        %v5889 = vsel %vm5835, %v5814, %v5750
        %v5890 = vsel %vm5835, %v5816, %v5752
        %v5891 = vsel %vm5835, %v5818, %v5754
        %v5892 = vsel %vm5835, %v5820, %v5756
        %v5893 = vsel %vm5835, %v5822, %v5758
        %v5894 = vsel %vm5835, %v5824, %v5760
        %v5895 = vsel %vm5835, %v5826, %v5762
        %v5896 = vsel %vm5835, %v5828, %v5764
        %v5897 = vsel %vm5835, %v5830, %v5766
        %v5898 = vsel %vm5835, %v5832, %v5768
        %v5899 = vsel %vm5835, %v5834, %v5770
        %v5900 = vmax.f32 %v5643, %v5836
        %v5901 = vmax.f32 %v5644, %v5868
        %v5902 = vmax.f32 %v5645, %v5837
        %v5903 = vmax.f32 %v5646, %v5869
        %v5904 = vmax.f32 %v5647, %v5838
        %v5905 = vmax.f32 %v5648, %v5870
        %v5906 = vmax.f32 %v5649, %v5839
        %v5907 = vmax.f32 %v5650, %v5871
        %v5908 = vmax.f32 %v5651, %v5840
        %v5909 = vmax.f32 %v5652, %v5872
        %v5910 = vmax.f32 %v5653, %v5841
        %v5911 = vmax.f32 %v5654, %v5873
        %v5912 = vmax.f32 %v5655, %v5842
        %v5913 = vmax.f32 %v5656, %v5874
        %v5914 = vmax.f32 %v5657, %v5843
        %v5915 = vmax.f32 %v5658, %v5875
        %v5916 = vmax.f32 %v5659, %v5844
        %v5917 = vmax.f32 %v5660, %v5876
        %v5918 = vmax.f32 %v5661, %v5845
        %v5919 = vmax.f32 %v5662, %v5877
        %v5920 = vmax.f32 %v5663, %v5846
        %v5921 = vmax.f32 %v5664, %v5878
        %v5922 = vmax.f32 %v5665, %v5847
        %v5923 = vmax.f32 %v5666, %v5879
        %v5924 = vmax.f32 %v5667, %v5848
        %v5925 = vmax.f32 %v5668, %v5880
        %v5926 = vmax.f32 %v5669, %v5849
        %v5927 = vmax.f32 %v5670, %v5881
        %v5928 = vmax.f32 %v5671, %v5850
        %v5929 = vmax.f32 %v5672, %v5882
        %v5930 = vmax.f32 %v5673, %v5851
        %v5931 = vmax.f32 %v5674, %v5883
        %v5932 = vmax.f32 %v5675, %v5852
        %v5933 = vmax.f32 %v5676, %v5884
        %v5934 = vmax.f32 %v5677, %v5853
        %v5935 = vmax.f32 %v5678, %v5885
        %v5936 = vmax.f32 %v5679, %v5854
        %v5937 = vmax.f32 %v5680, %v5886
        %v5938 = vmax.f32 %v5681, %v5855
        %v5939 = vmax.f32 %v5682, %v5887
        %v5940 = vmax.f32 %v5683, %v5856
        %v5941 = vmax.f32 %v5684, %v5888
        %v5942 = vmax.f32 %v5685, %v5857
        %v5943 = vmax.f32 %v5686, %v5889
        %v5944 = vmax.f32 %v5687, %v5858
        %v5945 = vmax.f32 %v5688, %v5890
        %v5946 = vmax.f32 %v5689, %v5859
        %v5947 = vmax.f32 %v5690, %v5891
        %v5948 = vmax.f32 %v5691, %v5860
        %v5949 = vmax.f32 %v5692, %v5892
        %v5950 = vmax.f32 %v5693, %v5861
        %v5951 = vmax.f32 %v5694, %v5893
        %v5952 = vmax.f32 %v5695, %v5862
        %v5953 = vmax.f32 %v5696, %v5894
        %v5954 = vmax.f32 %v5697, %v5863
        %v5955 = vmax.f32 %v5698, %v5895
        %v5956 = vmax.f32 %v5699, %v5864
        %v5957 = vmax.f32 %v5700, %v5896
        %v5958 = vmax.f32 %v5701, %v5865
        %v5959 = vmax.f32 %v5702, %v5897
        %v5960 = vmax.f32 %v5703, %v5866
        %v5961 = vmax.f32 %v5704, %v5898
        %v5962 = vmax.f32 %v5705, %v5867
        %v5963 = vmax.f32 %v5706, %v5899
        %v5964 = vrot.slane %v5900, 2
        %v5965 = vrot.slane %v5901, 2
        %v5966 = vrot.slane %v5902, 2
        %v5967 = vrot.slane %v5903, 2
        %v5968 = vrot.slane %v5904, 2
        %v5969 = vrot.slane %v5905, 2
        %v5970 = vrot.slane %v5906, 2
        %v5971 = vrot.slane %v5907, 2
        %v5972 = vrot.slane %v5908, 2
        %v5973 = vrot.slane %v5909, 2
        %v5974 = vrot.slane %v5910, 2
        %v5975 = vrot.slane %v5911, 2
        %v5976 = vrot.slane %v5912, 2
        %v5977 = vrot.slane %v5913, 2
        %v5978 = vrot.slane %v5914, 2
        %v5979 = vrot.slane %v5915, 2
        %v5980 = vrot.slane %v5916, 2
        %v5981 = vrot.slane %v5917, 2
        %v5982 = vrot.slane %v5918, 2
        %v5983 = vrot.slane %v5919, 2
        %v5984 = vrot.slane %v5920, 2
        %v5985 = vrot.slane %v5921, 2
        %v5986 = vrot.slane %v5922, 2
        %v5987 = vrot.slane %v5923, 2
        %v5988 = vrot.slane %v5924, 2
        %v5989 = vrot.slane %v5925, 2
        %v5990 = vrot.slane %v5926, 2
        %v5991 = vrot.slane %v5927, 2
        %v5992 = vrot.slane %v5928, 2
        %v5993 = vrot.slane %v5929, 2
        %v5994 = vrot.slane %v5930, 2
        %v5995 = vrot.slane %v5931, 2
        %v5996 = vrot.slane %v5932, 2
        %v5997 = vrot.slane %v5933, 2
        %v5998 = vrot.slane %v5934, 2
        %v5999 = vrot.slane %v5935, 2
        %v6000 = vrot.slane %v5936, 2
        %v6001 = vrot.slane %v5937, 2
        %v6002 = vrot.slane %v5938, 2
        %v6003 = vrot.slane %v5939, 2
        %v6004 = vrot.slane %v5940, 2
        %v6005 = vrot.slane %v5941, 2
        %v6006 = vrot.slane %v5942, 2
        %v6007 = vrot.slane %v5943, 2
        %v6008 = vrot.slane %v5944, 2
        %v6009 = vrot.slane %v5945, 2
        %v6010 = vrot.slane %v5946, 2
        %v6011 = vrot.slane %v5947, 2
        %v6012 = vrot.slane %v5948, 2
        %v6013 = vrot.slane %v5949, 2
        %v6014 = vrot.slane %v5950, 2
        %v6015 = vrot.slane %v5951, 2
        %v6016 = vrot.slane %v5952, 2
        %v6017 = vrot.slane %v5953, 2
        %v6018 = vrot.slane %v5954, 2
        %v6019 = vrot.slane %v5955, 2
        %v6020 = vrot.slane %v5956, 2
        %v6021 = vrot.slane %v5957, 2
        %v6022 = vrot.slane %v5958, 2
        %v6023 = vrot.slane %v5959, 2
        %v6024 = vrot.slane %v5960, 2
        %v6025 = vrot.slane %v5961, 2
        %v6026 = vrot.slane %v5962, 2
        %v6027 = vrot.slane %v5963, 2
        %v6028 = vsel %vm1301, %v6024, %v6026
        %v6029 = vsel %vm1301, %v6025, %v6027
        %v6030 = vsel %vm1301, %v6022, %v6024
        %v6031 = vsel %vm1301, %v6023, %v6025
        %v6032 = vsel %vm1301, %v6020, %v6022
        %v6033 = vsel %vm1301, %v6021, %v6023
        %v6034 = vsel %vm1301, %v6018, %v6020
        %v6035 = vsel %vm1301, %v6019, %v6021
        %v6036 = vsel %vm1301, %v6016, %v6018
        %v6037 = vsel %vm1301, %v6017, %v6019
        %v6038 = vsel %vm1301, %v6014, %v6016
        %v6039 = vsel %vm1301, %v6015, %v6017
        %v6040 = vsel %vm1301, %v6012, %v6014
        %v6041 = vsel %vm1301, %v6013, %v6015
        %v6042 = vsel %vm1301, %v6010, %v6012
        %v6043 = vsel %vm1301, %v6011, %v6013
        %v6044 = vsel %vm1301, %v6008, %v6010
        %v6045 = vsel %vm1301, %v6009, %v6011
        %v6046 = vsel %vm1301, %v6006, %v6008
        %v6047 = vsel %vm1301, %v6007, %v6009
        %v6048 = vsel %vm1301, %v6004, %v6006
        %v6049 = vsel %vm1301, %v6005, %v6007
        %v6050 = vsel %vm1301, %v6002, %v6004
        %v6051 = vsel %vm1301, %v6003, %v6005
        %v6052 = vsel %vm1301, %v6000, %v6002
        %v6053 = vsel %vm1301, %v6001, %v6003
        %v6054 = vsel %vm1301, %v5998, %v6000
        %v6055 = vsel %vm1301, %v5999, %v6001
        %v6056 = vsel %vm1301, %v5996, %v5998
        %v6057 = vsel %vm1301, %v5997, %v5999
        %v6058 = vsel %vm1301, %v5994, %v5996
        %v6059 = vsel %vm1301, %v5995, %v5997
        %v6060 = vsel %vm1301, %v5992, %v5994
        %v6061 = vsel %vm1301, %v5993, %v5995
        %v6062 = vsel %vm1301, %v5990, %v5992
        %v6063 = vsel %vm1301, %v5991, %v5993
        %v6064 = vsel %vm1301, %v5988, %v5990
        %v6065 = vsel %vm1301, %v5989, %v5991
        %v6066 = vsel %vm1301, %v5986, %v5988
        %v6067 = vsel %vm1301, %v5987, %v5989
        %v6068 = vsel %vm1301, %v5984, %v5986
        %v6069 = vsel %vm1301, %v5985, %v5987
        %v6070 = vsel %vm1301, %v5982, %v5984
        %v6071 = vsel %vm1301, %v5983, %v5985
        %v6072 = vsel %vm1301, %v5980, %v5982
        %v6073 = vsel %vm1301, %v5981, %v5983
        %v6074 = vsel %vm1301, %v5978, %v5980
        %v6075 = vsel %vm1301, %v5979, %v5981
        %v6076 = vsel %vm1301, %v5976, %v5978
        %v6077 = vsel %vm1301, %v5977, %v5979
        %v6078 = vsel %vm1301, %v5974, %v5976
        %v6079 = vsel %vm1301, %v5975, %v5977
        %v6080 = vsel %vm1301, %v5972, %v5974
        %v6081 = vsel %vm1301, %v5973, %v5975
        %v6082 = vsel %vm1301, %v5970, %v5972
        %v6083 = vsel %vm1301, %v5971, %v5973
        %v6084 = vsel %vm1301, %v5968, %v5970
        %v6085 = vsel %vm1301, %v5969, %v5971
        %v6086 = vsel %vm1301, %v5966, %v5968
        %v6087 = vsel %vm1301, %v5967, %v5969
        %v6088 = vsel %vm1301, %v5964, %v5966
        %v6089 = vsel %vm1301, %v5965, %v5967
        %v6090 = vsel %vm1301, %v6026, %v5964
        %v6091 = vsel %vm1301, %v6027, %v5965
        %v6092 = vmax.f32 %v5900, %v6088
        %v6093 = vmax.f32 %v5901, %v6089
        %v6094 = vmax.f32 %v5902, %v6086
        %v6095 = vmax.f32 %v5903, %v6087
        %v6096 = vmax.f32 %v5904, %v6084
        %v6097 = vmax.f32 %v5905, %v6085
        %v6098 = vmax.f32 %v5906, %v6082
        %v6099 = vmax.f32 %v5907, %v6083
        %v6100 = vmax.f32 %v5908, %v6080
        %v6101 = vmax.f32 %v5909, %v6081
        %v6102 = vmax.f32 %v5910, %v6078
        %v6103 = vmax.f32 %v5911, %v6079
        %v6104 = vmax.f32 %v5912, %v6076
        %v6105 = vmax.f32 %v5913, %v6077
        %v6106 = vmax.f32 %v5914, %v6074
        %v6107 = vmax.f32 %v5915, %v6075
        %v6108 = vmax.f32 %v5916, %v6072
        %v6109 = vmax.f32 %v5917, %v6073
        %v6110 = vmax.f32 %v5918, %v6070
        %v6111 = vmax.f32 %v5919, %v6071
        %v6112 = vmax.f32 %v5920, %v6068
        %v6113 = vmax.f32 %v5921, %v6069
        %v6114 = vmax.f32 %v5922, %v6066
        %v6115 = vmax.f32 %v5923, %v6067
        %v6116 = vmax.f32 %v5924, %v6064
        %v6117 = vmax.f32 %v5925, %v6065
        %v6118 = vmax.f32 %v5926, %v6062
        %v6119 = vmax.f32 %v5927, %v6063
        %v6120 = vmax.f32 %v5928, %v6060
        %v6121 = vmax.f32 %v5929, %v6061
        %v6122 = vmax.f32 %v5930, %v6058
        %v6123 = vmax.f32 %v5931, %v6059
        %v6124 = vmax.f32 %v5932, %v6056
        %v6125 = vmax.f32 %v5933, %v6057
        %v6126 = vmax.f32 %v5934, %v6054
        %v6127 = vmax.f32 %v5935, %v6055
        %v6128 = vmax.f32 %v5936, %v6052
        %v6129 = vmax.f32 %v5937, %v6053
        %v6130 = vmax.f32 %v5938, %v6050
        %v6131 = vmax.f32 %v5939, %v6051
        %v6132 = vmax.f32 %v5940, %v6048
        %v6133 = vmax.f32 %v5941, %v6049
        %v6134 = vmax.f32 %v5942, %v6046
        %v6135 = vmax.f32 %v5943, %v6047
        %v6136 = vmax.f32 %v5944, %v6044
        %v6137 = vmax.f32 %v5945, %v6045
        %v6138 = vmax.f32 %v5946, %v6042
        %v6139 = vmax.f32 %v5947, %v6043
        %v6140 = vmax.f32 %v5948, %v6040
        %v6141 = vmax.f32 %v5949, %v6041
        %v6142 = vmax.f32 %v5950, %v6038
        %v6143 = vmax.f32 %v5951, %v6039
        %v6144 = vmax.f32 %v5952, %v6036
        %v6145 = vmax.f32 %v5953, %v6037
        %v6146 = vmax.f32 %v5954, %v6034
        %v6147 = vmax.f32 %v5955, %v6035
        %v6148 = vmax.f32 %v5956, %v6032
        %v6149 = vmax.f32 %v5957, %v6033
        %v6150 = vmax.f32 %v5958, %v6030
        %v6151 = vmax.f32 %v5959, %v6031
        %v6152 = vmax.f32 %v5960, %v6028
        %v6153 = vmax.f32 %v5961, %v6029
        %v6154 = vmax.f32 %v5962, %v6090
        %v6155 = vmax.f32 %v5963, %v6091
        %v6156 = vld [vmem:[%s5] sm:$0xff]
        %v6157 = vld [vmem:[%s5 + $0x8] sm:$0xff]
        %v6158 = vld [vmem:[%s5 + $0x10] sm:$0xff]
        %v6159 = vld [vmem:[%s5 + $0x18] sm:$0xff]
        %v6160 = vld [vmem:[%s5 + $0x20] sm:$0xff]
        %v6161 = vld [vmem:[%s5 + $0x28] sm:$0xff]
        %v6162 = vld [vmem:[%s5 + $0x30] sm:$0xff]
        %v6163 = vld [vmem:[%s5 + $0x38] sm:$0xff]
        %v6164 = vld [vmem:[%s5 + $0x40] sm:$0xff]
        %v6165 = vld [vmem:[%s5 + $0x48] sm:$0xff]
        %v6166 = vld [vmem:[%s5 + $0x50] sm:$0xff]
        %v6167 = vld [vmem:[%s5 + $0x58] sm:$0xff]
        %v6168 = vld [vmem:[%s5 + $0x60] sm:$0xff]
        %v6169 = vld [vmem:[%s5 + $0x68] sm:$0xff]
        %v6170 = vld [vmem:[%s5 + $0x70] sm:$0xff]
        %v6171 = vld [vmem:[%s5 + $0x78] sm:$0xff]
        %v6172 = vld [vmem:[%s5 + $0x80] sm:$0xff]
        %v6173 = vld [vmem:[%s5 + $0x88] sm:$0xff]
        %v6174 = vld [vmem:[%s5 + $0x90] sm:$0xff]
        %v6175 = vld [vmem:[%s5 + $0x98] sm:$0xff]
        %v6176 = vld [vmem:[%s5 + $0xa0] sm:$0xff]
        %v6177 = vld [vmem:[%s5 + $0xa8] sm:$0xff]
        %v6178 = vld [vmem:[%s5 + $0xb0] sm:$0xff]
        %v6179 = vld [vmem:[%s5 + $0xb8] sm:$0xff]
        %v6180 = vld [vmem:[%s5 + $0xc0] sm:$0xff]
        %v6181 = vld [vmem:[%s5 + $0xc8] sm:$0xff]
        %v6182 = vld [vmem:[%s5 + $0xd0] sm:$0xff]
        %v6183 = vld [vmem:[%s5 + $0xd8] sm:$0xff]
        %v6184 = vld [vmem:[%s5 + $0xe0] sm:$0xff]
        %v6185 = vld [vmem:[%s5 + $0xe8] sm:$0xff]
        %v6186 = vld [vmem:[%s5 + $0xf0] sm:$0xff]
        %v6187 = vld [vmem:[%s5 + $0xf8] sm:$0xff]
        %v6188 = vrot.slane %v6092, 4
        %v6189 = vrot.slane %v6093, 4
        %v6190 = vrot.slane %v6094, 4
        %v6191 = vrot.slane %v6095, 4
        %v6192 = vrot.slane %v6096, 4
        %v6193 = vrot.slane %v6097, 4
        %v6194 = vrot.slane %v6098, 4
        %v6195 = vrot.slane %v6099, 4
        %v6196 = vrot.slane %v6100, 4
        %v6197 = vrot.slane %v6101, 4
        %v6198 = vrot.slane %v6102, 4
        %v6199 = vrot.slane %v6103, 4
        %v6200 = vrot.slane %v6104, 4
        %v6201 = vrot.slane %v6105, 4
        %v6202 = vrot.slane %v6106, 4
        %v6203 = vrot.slane %v6107, 4
        %v6204 = vrot.slane %v6108, 4
        %v6205 = vrot.slane %v6109, 4
        %v6206 = vrot.slane %v6110, 4
        %v6207 = vrot.slane %v6111, 4
        %v6208 = vrot.slane %v6112, 4
        %v6209 = vrot.slane %v6113, 4
        %v6210 = vrot.slane %v6114, 4
        %v6211 = vrot.slane %v6115, 4
        %v6212 = vrot.slane %v6116, 4
        %v6213 = vrot.slane %v6117, 4
        %v6214 = vrot.slane %v6118, 4
        %v6215 = vrot.slane %v6119, 4
        %v6216 = vrot.slane %v6120, 4
        %v6217 = vrot.slane %v6121, 4
        %v6218 = vrot.slane %v6122, 4
        %v6219 = vrot.slane %v6123, 4
        %v6220 = vrot.slane %v6124, 4
        %v6221 = vrot.slane %v6125, 4
        %v6222 = vrot.slane %v6126, 4
        %v6223 = vrot.slane %v6127, 4
        %v6224 = vrot.slane %v6128, 4
        %v6225 = vrot.slane %v6129, 4
        %v6226 = vrot.slane %v6130, 4
        %v6227 = vrot.slane %v6131, 4
        %v6228 = vrot.slane %v6132, 4
        %v6229 = vrot.slane %v6133, 4
        %v6230 = vrot.slane %v6134, 4
        %v6231 = vrot.slane %v6135, 4
        %v6232 = vrot.slane %v6136, 4
        %v6233 = vrot.slane %v6137, 4
        %v6234 = vrot.slane %v6138, 4
        %v6235 = vrot.slane %v6139, 4
        %v6236 = vrot.slane %v6140, 4
        %v6237 = vrot.slane %v6141, 4
        %v6238 = vrot.slane %v6142, 4
        %v6239 = vrot.slane %v6143, 4
        %v6240 = vrot.slane %v6144, 4
        %v6241 = vrot.slane %v6145, 4
        %v6242 = vrot.slane %v6146, 4
        %v6243 = vrot.slane %v6147, 4
        %v6244 = vrot.slane %v6148, 4
        %v6245 = vrot.slane %v6149, 4
        %v6246 = vrot.slane %v6150, 4
        %v6247 = vrot.slane %v6151, 4
        %v6248 = vrot.slane %v6152, 4
        %v6249 = vrot.slane %v6153, 4
        %v6250 = vrot.slane %v6154, 4
        %v6251 = vrot.slane %v6155, 4
        %v6252 = vsel %vm2315, %v6248, %v6250
        %v6253 = vsel %vm2315, %v6249, %v6251
        %v6254 = vsel %vm2315, %v6246, %v6248
        %v6255 = vsel %vm2315, %v6247, %v6249
        %v6256 = vsel %vm2315, %v6244, %v6246
        %v6257 = vsel %vm2315, %v6245, %v6247
        %v6258 = vsel %vm2315, %v6242, %v6244
        %v6259 = vsel %vm2315, %v6243, %v6245
        %v6260 = vsel %vm2315, %v6240, %v6242
        %v6261 = vsel %vm2315, %v6241, %v6243
        %v6262 = vsel %vm2315, %v6238, %v6240
        %v6263 = vsel %vm2315, %v6239, %v6241
        %v6264 = vsel %vm2315, %v6236, %v6238
        %v6265 = vsel %vm2315, %v6237, %v6239
        %v6266 = vsel %vm2315, %v6234, %v6236
        %v6267 = vsel %vm2315, %v6235, %v6237
        %v6268 = vsel %vm2315, %v6232, %v6234
        %v6269 = vsel %vm2315, %v6233, %v6235
        %v6270 = vsel %vm2315, %v6230, %v6232
        %v6271 = vsel %vm2315, %v6231, %v6233
        %v6272 = vsel %vm2315, %v6228, %v6230
        %v6273 = vsel %vm2315, %v6229, %v6231
        %v6274 = vsel %vm2315, %v6226, %v6228
        %v6275 = vsel %vm2315, %v6227, %v6229
        %v6276 = vsel %vm2315, %v6224, %v6226
        %v6277 = vsel %vm2315, %v6225, %v6227
        %v6278 = vsel %vm2315, %v6222, %v6224
        %v6279 = vsel %vm2315, %v6223, %v6225
        %v6280 = vsel %vm2315, %v6220, %v6222
        %v6281 = vsel %vm2315, %v6221, %v6223
        %v6282 = vsel %vm2315, %v6218, %v6220
        %v6283 = vsel %vm2315, %v6219, %v6221
        %v6284 = vsel %vm2315, %v6216, %v6218
        %v6285 = vsel %vm2315, %v6217, %v6219
        %v6286 = vsel %vm2315, %v6214, %v6216
        %v6287 = vsel %vm2315, %v6215, %v6217
        %v6288 = vsel %vm2315, %v6212, %v6214
        %v6289 = vsel %vm2315, %v6213, %v6215
        %v6290 = vsel %vm2315, %v6210, %v6212
        %v6291 = vsel %vm2315, %v6211, %v6213
        %v6292 = vsel %vm2315, %v6208, %v6210
        %v6293 = vsel %vm2315, %v6209, %v6211
        %v6294 = vsel %vm2315, %v6206, %v6208
        %v6295 = vsel %vm2315, %v6207, %v6209
        %v6296 = vsel %vm2315, %v6204, %v6206
        %v6297 = vsel %vm2315, %v6205, %v6207
        %v6298 = vsel %vm2315, %v6202, %v6204
        %v6299 = vsel %vm2315, %v6203, %v6205
        %v6300 = vsel %vm2315, %v6200, %v6202
        %v6301 = vsel %vm2315, %v6201, %v6203
        %v6302 = vsel %vm2315, %v6198, %v6200
        %v6303 = vsel %vm2315, %v6199, %v6201
        %v6304 = vsel %vm2315, %v6196, %v6198
        %v6305 = vsel %vm2315, %v6197, %v6199
        %v6306 = vsel %vm2315, %v6194, %v6196
        %v6307 = vsel %vm2315, %v6195, %v6197
        %v6308 = vsel %vm2315, %v6192, %v6194
        %v6309 = vsel %vm2315, %v6193, %v6195
        %v6310 = vsel %vm2315, %v6190, %v6192
        %v6311 = vsel %vm2315, %v6191, %v6193
        %v6312 = vsel %vm2315, %v6188, %v6190
        %v6313 = vsel %vm2315, %v6189, %v6191
        %v6314 = vsel %vm2315, %v6250, %v6188
        %v6315 = vsel %vm2315, %v6251, %v6189
        %s6316 = scalar_lea.vmem %s5, 256
        %v6317 = vld [vmem:[%s6316] sm:$0xff]
        %v6318 = vld [vmem:[%s6316 + $0x8] sm:$0xff]
        %v6319 = vld [vmem:[%s6316 + $0x10] sm:$0xff]
        %v6320 = vld [vmem:[%s6316 + $0x18] sm:$0xff]
        %v6321 = vld [vmem:[%s6316 + $0x20] sm:$0xff]
        %v6322 = vld [vmem:[%s6316 + $0x28] sm:$0xff]
        %v6323 = vld [vmem:[%s6316 + $0x30] sm:$0xff]
        %v6324 = vld [vmem:[%s6316 + $0x38] sm:$0xff]
        %v6325 = vld [vmem:[%s6316 + $0x40] sm:$0xff]
        %v6326 = vld [vmem:[%s6316 + $0x48] sm:$0xff]
        %v6327 = vld [vmem:[%s6316 + $0x50] sm:$0xff]
        %v6328 = vld [vmem:[%s6316 + $0x58] sm:$0xff]
        %v6329 = vld [vmem:[%s6316 + $0x60] sm:$0xff]
        %v6330 = vld [vmem:[%s6316 + $0x68] sm:$0xff]
        %v6331 = vld [vmem:[%s6316 + $0x70] sm:$0xff]
        %v6332 = vld [vmem:[%s6316 + $0x78] sm:$0xff]
        %v6333 = vld [vmem:[%s6316 + $0x80] sm:$0xff]
        %v6334 = vld [vmem:[%s6316 + $0x88] sm:$0xff]
        %v6335 = vld [vmem:[%s6316 + $0x90] sm:$0xff]
        %v6336 = vld [vmem:[%s6316 + $0x98] sm:$0xff]
        %v6337 = vld [vmem:[%s6316 + $0xa0] sm:$0xff]
        %v6338 = vld [vmem:[%s6316 + $0xa8] sm:$0xff]
        %v6339 = vld [vmem:[%s6316 + $0xb0] sm:$0xff]
        %v6340 = vld [vmem:[%s6316 + $0xb8] sm:$0xff]
        %v6341 = vld [vmem:[%s6316 + $0xc0] sm:$0xff]
        %v6342 = vld [vmem:[%s6316 + $0xc8] sm:$0xff]
        %v6343 = vld [vmem:[%s6316 + $0xd0] sm:$0xff]
        %v6344 = vld [vmem:[%s6316 + $0xd8] sm:$0xff]
        %v6345 = vld [vmem:[%s6316 + $0xe0] sm:$0xff]
        %v6346 = vld [vmem:[%s6316 + $0xe8] sm:$0xff]
        %v6347 = vld [vmem:[%s6316 + $0xf0] sm:$0xff]
        %v6348 = vld [vmem:[%s6316 + $0xf8] sm:$0xff]
        %6349 = vmatprep.subr.mxu0 0.0
        %6350 = vmatpush1.msra.mxu0 %v6332
        %6351 = vmatprep.subr.mxu0 0.0
        %6352 = vmatpush1.msra.mxu0 %v6331
        %6353 = vmatprep.subr.mxu0 0.0
        %6354 = vmatpush1.msra.mxu0 %v6330
        %6355 = vmatprep.subr.mxu0 0.0
        %6356 = vmatpush1.msra.mxu0 %v6329
        %6357 = vmatprep.subr.mxu0 0.0
        %6358 = vmatpush1.msra.mxu0 %v6328
        %6359 = vmatprep.subr.mxu0 0.0
        %6360 = vmatpush1.msra.mxu0 %v6327
        %6361 = vmatprep.subr.mxu0 0.0
        %6362 = vmatpush1.msra.mxu0 %v6326
        %6363 = vmatprep.subr.mxu0 0.0
        %6364 = vmatpush1.msra.mxu0 %v6325
        %6365 = vmatprep.subr.mxu0 0.0
        %6366 = vmatpush1.msra.mxu0 %v6324
        %6367 = vmatprep.subr.mxu0 0.0
        %6368 = vmatpush1.msra.mxu0 %v6323
        %6369 = vmatprep.subr.mxu0 0.0
        %6370 = vmatpush1.msra.mxu0 %v6322
        %6371 = vmatprep.subr.mxu0 0.0
        %6372 = vmatpush1.msra.mxu0 %v6321
        %6373 = vmatprep.subr.mxu0 0.0
        %6374 = vmatpush1.msra.mxu0 %v6320
        %6375 = vmatprep.subr.mxu0 0.0
        %6376 = vmatpush1.msra.mxu0 %v6319
        %6377 = vmatprep.subr.mxu0 0.0
        %6378 = vmatpush1.msra.mxu0 %v6318
        %6379 = vmatprep.subr.mxu0 0.0
        %6380 = vmatpush1.msra.mxu0 %v6317
        %6381 = vmatprep.subr.mxu0 0.0
        %6382 = vmatpush2.msra.mxu0 %v6348
        %6383 = vmatprep.subr.mxu0 0.0
        %6384 = vmatpush2.msra.mxu0 %v6347
        %6385 = vmatprep.subr.mxu0 0.0
        %6386 = vmatpush2.msra.mxu0 %v6346
        %6387 = vmatprep.subr.mxu0 0.0
        %6388 = vmatpush2.msra.mxu0 %v6345
        %6389 = vmatprep.subr.mxu0 0.0
        %6390 = vmatpush2.msra.mxu0 %v6344
        %6391 = vmatprep.subr.mxu0 0.0
        %6392 = vmatpush2.msra.mxu0 %v6343
        %6393 = vmatprep.subr.mxu0 0.0
        %6394 = vmatpush2.msra.mxu0 %v6342
        %6395 = vmatprep.subr.mxu0 0.0
        %6396 = vmatpush2.msra.mxu0 %v6341
        %6397 = vmatprep.subr.mxu0 0.0
        %6398 = vmatpush2.msra.mxu0 %v6340
        %6399 = vmatprep.subr.mxu0 0.0
        %6400 = vmatpush2.msra.mxu0 %v6339
        %6401 = vmatprep.subr.mxu0 0.0
        %6402 = vmatpush2.msra.mxu0 %v6338
        %6403 = vmatprep.subr.mxu0 0.0
        %6404 = vmatpush2.msra.mxu0 %v6337
        %6405 = vmatprep.subr.mxu0 0.0
        %6406 = vmatpush2.msra.mxu0 %v6336
        %6407 = vmatprep.subr.mxu0 0.0
        %6408 = vmatpush2.msra.mxu0 %v6335
        %6409 = vmatprep.subr.mxu0 0.0
        %6410 = vmatpush2.msra.mxu0 %v6334
        %6411 = vmatprep.subr.mxu0 0.0
        %6412 = vmatpush2.msra.mxu0 %v6333
        %6413 = vmatprep.mubr.f32.mxu0 %v6313
        %6414 = vmatmul.mubr.f32.gmra.mxu0 %v6312
        %v6415 = vpop.f32.mrf.mxu0
        %v6416 = vadd.f32 0.0, %v6415
        %v6417 = vpop.f32.mrf.mxu0
        %6418 = vmatprep.mubr.f32.mxu0 %v6311
        %6419 = vmatmul.mubr.f32.gmra.mxu0 %v6310
        %v6420 = vpop.f32.mrf.mxu0
        %v6421 = vadd.f32 0.0, %v6420
        %v6422 = vpop.f32.mrf.mxu0
        %6423 = vmatprep.mubr.f32.mxu0 %v6309
        %6424 = vmatmul.mubr.f32.gmra.mxu0 %v6308
        %v6425 = vpop.f32.mrf.mxu0
        %v6426 = vadd.f32 0.0, %v6425
        %v6427 = vpop.f32.mrf.mxu0
        %6428 = vmatprep.mubr.f32.mxu0 %v6307
        %6429 = vmatmul.mubr.f32.gmra.mxu0 %v6306
        %v6430 = vpop.f32.mrf.mxu0
        %v6431 = vadd.f32 0.0, %v6430
        %v6432 = vpop.f32.mrf.mxu0
        %6433 = vmatprep.mubr.f32.mxu0 %v6305
        %6434 = vmatmul.mubr.f32.gmra.mxu0 %v6304
        %v6435 = vpop.f32.mrf.mxu0
        %v6436 = vadd.f32 0.0, %v6435
        %v6437 = vpop.f32.mrf.mxu0
        %6438 = vmatprep.mubr.f32.mxu0 %v6303
        %6439 = vmatmul.mubr.f32.gmra.mxu0 %v6302
        %v6440 = vpop.f32.mrf.mxu0
        %v6441 = vadd.f32 0.0, %v6440
        %v6442 = vpop.f32.mrf.mxu0
        %6443 = vmatprep.mubr.f32.mxu0 %v6301
        %6444 = vmatmul.mubr.f32.gmra.mxu0 %v6300
        %v6445 = vpop.f32.mrf.mxu0
        %v6446 = vadd.f32 0.0, %v6445
        %v6447 = vpop.f32.mrf.mxu0
        %6448 = vmatprep.mubr.f32.mxu0 %v6299
        %6449 = vmatmul.mubr.f32.gmra.mxu0 %v6298
        %v6450 = vpop.f32.mrf.mxu0
        %v6451 = vadd.f32 0.0, %v6450
        %v6452 = vpop.f32.mrf.mxu0
        %6453 = vmatprep.mubr.f32.mxu0 %v6297
        %6454 = vmatmul.mubr.f32.gmra.mxu0 %v6296
        %v6455 = vpop.f32.mrf.mxu0
        %v6456 = vadd.f32 0.0, %v6455
        %v6457 = vpop.f32.mrf.mxu0
        %6458 = vmatprep.mubr.f32.mxu0 %v6295
        %6459 = vmatmul.mubr.f32.gmra.mxu0 %v6294
        %v6460 = vpop.f32.mrf.mxu0
        %v6461 = vadd.f32 0.0, %v6460
        %v6462 = vpop.f32.mrf.mxu0
        %6463 = vmatprep.mubr.f32.mxu0 %v6293
        %6464 = vmatmul.mubr.f32.gmra.mxu0 %v6292
        %v6465 = vpop.f32.mrf.mxu0
        %v6466 = vadd.f32 0.0, %v6465
        %v6467 = vpop.f32.mrf.mxu0
        %6468 = vmatprep.mubr.f32.mxu0 %v6291
        %6469 = vmatmul.mubr.f32.gmra.mxu0 %v6290
        %v6470 = vpop.f32.mrf.mxu0
        %v6471 = vadd.f32 0.0, %v6470
        %v6472 = vpop.f32.mrf.mxu0
        %6473 = vmatprep.mubr.f32.mxu0 %v6289
        %6474 = vmatmul.mubr.f32.gmra.mxu0 %v6288
        %v6475 = vpop.f32.mrf.mxu0
        %v6476 = vadd.f32 0.0, %v6475
        %v6477 = vpop.f32.mrf.mxu0
        %6478 = vmatprep.mubr.f32.mxu0 %v6287
        %6479 = vmatmul.mubr.f32.gmra.mxu0 %v6286
        %v6480 = vpop.f32.mrf.mxu0
        %v6481 = vadd.f32 0.0, %v6480
        %v6482 = vpop.f32.mrf.mxu0
        %6483 = vmatprep.mubr.f32.mxu0 %v6285
        %6484 = vmatmul.mubr.f32.gmra.mxu0 %v6284
        %v6485 = vpop.f32.mrf.mxu0
        %v6486 = vadd.f32 0.0, %v6485
        %v6487 = vpop.f32.mrf.mxu0
        %6488 = vmatprep.mubr.f32.mxu0 %v6283
        %6489 = vmatmul.mubr.f32.gmra.mxu0 %v6282
        %v6490 = vpop.f32.mrf.mxu0
        %v6491 = vadd.f32 0.0, %v6490
        %v6492 = vpop.f32.mrf.mxu0
        %6493 = vmatprep.mubr.f32.mxu0 %v6281
        %6494 = vmatmul.mubr.f32.gmra.mxu0 %v6280
        %v6495 = vpop.f32.mrf.mxu0
        %v6496 = vadd.f32 0.0, %v6495
        %v6497 = vpop.f32.mrf.mxu0
        %6498 = vmatprep.mubr.f32.mxu0 %v6279
        %6499 = vmatmul.mubr.f32.gmra.mxu0 %v6278
        %v6500 = vpop.f32.mrf.mxu0
        %v6501 = vadd.f32 0.0, %v6500
        %v6502 = vpop.f32.mrf.mxu0
        %6503 = vmatprep.mubr.f32.mxu0 %v6277
        %6504 = vmatmul.mubr.f32.gmra.mxu0 %v6276
        %v6505 = vpop.f32.mrf.mxu0
        %v6506 = vadd.f32 0.0, %v6505
        %v6507 = vpop.f32.mrf.mxu0
        %6508 = vmatprep.mubr.f32.mxu0 %v6275
        %6509 = vmatmul.mubr.f32.gmra.mxu0 %v6274
        %v6510 = vpop.f32.mrf.mxu0
        %v6511 = vadd.f32 0.0, %v6510
        %v6512 = vpop.f32.mrf.mxu0
        %6513 = vmatprep.mubr.f32.mxu0 %v6273
        %6514 = vmatmul.mubr.f32.gmra.mxu0 %v6272
        %v6515 = vpop.f32.mrf.mxu0
        %v6516 = vadd.f32 0.0, %v6515
        %v6517 = vpop.f32.mrf.mxu0
        %6518 = vmatprep.mubr.f32.mxu0 %v6271
        %6519 = vmatmul.mubr.f32.gmra.mxu0 %v6270
        %v6520 = vpop.f32.mrf.mxu0
        %v6521 = vadd.f32 0.0, %v6520
        %v6522 = vpop.f32.mrf.mxu0
        %6523 = vmatprep.mubr.f32.mxu0 %v6269
        %6524 = vmatmul.mubr.f32.gmra.mxu0 %v6268
        %v6525 = vpop.f32.mrf.mxu0
        %v6526 = vadd.f32 0.0, %v6525
        %v6527 = vpop.f32.mrf.mxu0
        %6528 = vmatprep.mubr.f32.mxu0 %v6267
        %6529 = vmatmul.mubr.f32.gmra.mxu0 %v6266
        %v6530 = vpop.f32.mrf.mxu0
        %v6531 = vadd.f32 0.0, %v6530
        %v6532 = vpop.f32.mrf.mxu0
        %6533 = vmatprep.mubr.f32.mxu0 %v6265
        %6534 = vmatmul.mubr.f32.gmra.mxu0 %v6264
        %v6535 = vpop.f32.mrf.mxu0
        %v6536 = vadd.f32 0.0, %v6535
        %v6537 = vpop.f32.mrf.mxu0
        %6538 = vmatprep.mubr.f32.mxu0 %v6263
        %6539 = vmatmul.mubr.f32.gmra.mxu0 %v6262
        %v6540 = vpop.f32.mrf.mxu0
        %v6541 = vadd.f32 0.0, %v6540
        %v6542 = vpop.f32.mrf.mxu0
        %6543 = vmatprep.mubr.f32.mxu0 %v6261
        %6544 = vmatmul.mubr.f32.gmra.mxu0 %v6260
        %v6545 = vpop.f32.mrf.mxu0
        %v6546 = vadd.f32 0.0, %v6545
        %v6547 = vpop.f32.mrf.mxu0
        %6548 = vmatprep.mubr.f32.mxu0 %v6259
        %6549 = vmatmul.mubr.f32.gmra.mxu0 %v6258
        %v6550 = vpop.f32.mrf.mxu0
        %v6551 = vadd.f32 0.0, %v6550
        %v6552 = vpop.f32.mrf.mxu0
        %6553 = vmatprep.mubr.f32.mxu0 %v6257
        %6554 = vmatmul.mubr.f32.gmra.mxu0 %v6256
        %v6555 = vpop.f32.mrf.mxu0
        %v6556 = vadd.f32 0.0, %v6555
        %v6557 = vpop.f32.mrf.mxu0
        %6558 = vmatprep.mubr.f32.mxu0 %v6255
        %6559 = vmatmul.mubr.f32.gmra.mxu0 %v6254
        %v6560 = vpop.f32.mrf.mxu0
        %v6561 = vadd.f32 0.0, %v6560
        %v6562 = vpop.f32.mrf.mxu0
        %6563 = vmatprep.mubr.f32.mxu0 %v6253
        %6564 = vmatmul.mubr.f32.gmra.mxu0 %v6252
        %v6565 = vpop.f32.mrf.mxu0
        %v6566 = vadd.f32 0.0, %v6565
        %v6567 = vpop.f32.mrf.mxu0
        %6568 = vmatprep.mubr.f32.mxu0 %v6315
        %6569 = vmatmul.mubr.f32.gmra.mxu0 %v6314
        %v6570 = vpop.f32.mrf.mxu0
        %v6571 = vadd.f32 0.0, %v6570
        %v6572 = vpop.f32.mrf.mxu0
        %6573 = vdwg.mxu0
        %6574 = vmatprep.subr.mxu0 0.0
        %6575 = vmatpush1.msra.mxu0 %v6171
        %6576 = vmatprep.subr.mxu0 0.0
        %6577 = vmatpush1.msra.mxu0 %v6170
        %6578 = vmatprep.subr.mxu0 0.0
        %6579 = vmatpush1.msra.mxu0 %v6169
        %6580 = vmatprep.subr.mxu0 0.0
        %6581 = vmatpush1.msra.mxu0 %v6168
        %6582 = vmatprep.subr.mxu0 0.0
        %6583 = vmatpush1.msra.mxu0 %v6167
        %6584 = vmatprep.subr.mxu0 0.0
        %6585 = vmatpush1.msra.mxu0 %v6166
        %6586 = vmatprep.subr.mxu0 0.0
        %6587 = vmatpush1.msra.mxu0 %v6165
        %6588 = vmatprep.subr.mxu0 0.0
        %6589 = vmatpush1.msra.mxu0 %v6164
        %6590 = vmatprep.subr.mxu0 0.0
        %6591 = vmatpush1.msra.mxu0 %v6163
        %6592 = vmatprep.subr.mxu0 0.0
        %6593 = vmatpush1.msra.mxu0 %v6162
        %6594 = vmatprep.subr.mxu0 0.0
        %6595 = vmatpush1.msra.mxu0 %v6161
        %6596 = vmatprep.subr.mxu0 0.0
        %6597 = vmatpush1.msra.mxu0 %v6160
        %6598 = vmatprep.subr.mxu0 0.0
        %6599 = vmatpush1.msra.mxu0 %v6159
        %6600 = vmatprep.subr.mxu0 0.0
        %6601 = vmatpush1.msra.mxu0 %v6158
        %6602 = vmatprep.subr.mxu0 0.0
        %6603 = vmatpush1.msra.mxu0 %v6157
        %6604 = vmatprep.subr.mxu0 0.0
        %6605 = vmatpush1.msra.mxu0 %v6156
        %6606 = vmatprep.subr.mxu0 0.0
        %6607 = vmatpush2.msra.mxu0 %v6187
        %6608 = vmatprep.subr.mxu0 0.0
        %6609 = vmatpush2.msra.mxu0 %v6186
        %6610 = vmatprep.subr.mxu0 0.0
        %6611 = vmatpush2.msra.mxu0 %v6185
        %6612 = vmatprep.subr.mxu0 0.0
        %6613 = vmatpush2.msra.mxu0 %v6184
        %6614 = vmatprep.subr.mxu0 0.0
        %6615 = vmatpush2.msra.mxu0 %v6183
        %6616 = vmatprep.subr.mxu0 0.0
        %6617 = vmatpush2.msra.mxu0 %v6182
        %6618 = vmatprep.subr.mxu0 0.0
        %6619 = vmatpush2.msra.mxu0 %v6181
        %6620 = vmatprep.subr.mxu0 0.0
        %6621 = vmatpush2.msra.mxu0 %v6180
        %6622 = vmatprep.subr.mxu0 0.0
        %6623 = vmatpush2.msra.mxu0 %v6179
        %6624 = vmatprep.subr.mxu0 0.0
        %6625 = vmatpush2.msra.mxu0 %v6178
        %6626 = vmatprep.subr.mxu0 0.0
        %6627 = vmatpush2.msra.mxu0 %v6177
        %6628 = vmatprep.subr.mxu0 0.0
        %6629 = vmatpush2.msra.mxu0 %v6176
        %6630 = vmatprep.subr.mxu0 0.0
        %6631 = vmatpush2.msra.mxu0 %v6175
        %6632 = vmatprep.subr.mxu0 0.0
        %6633 = vmatpush2.msra.mxu0 %v6174
        %6634 = vmatprep.subr.mxu0 0.0
        %6635 = vmatpush2.msra.mxu0 %v6173
        %6636 = vmatprep.subr.mxu0 0.0
        %6637 = vmatpush2.msra.mxu0 %v6172
        %6638 = vmatprep.mubr.f32.mxu0 %v6093
        %6639 = vmatmul.mubr.f32.gmra.mxu0 %v6092
        %v6640 = vpop.f32.mrf.mxu0
        %v6641 = vadd.f32 %v6416, %v6640
        %v6642 = vpop.f32.mrf.mxu0
        %6643 = vmatprep.mubr.f32.mxu0 %v6095
        %6644 = vmatmul.mubr.f32.gmra.mxu0 %v6094
        %v6645 = vpop.f32.mrf.mxu0
        %v6646 = vadd.f32 %v6421, %v6645
        %v6647 = vpop.f32.mrf.mxu0
        %6648 = vmatprep.mubr.f32.mxu0 %v6097
        %6649 = vmatmul.mubr.f32.gmra.mxu0 %v6096
        %v6650 = vpop.f32.mrf.mxu0
        %v6651 = vadd.f32 %v6426, %v6650
        %v6652 = vpop.f32.mrf.mxu0
        %6653 = vmatprep.mubr.f32.mxu0 %v6099
        %6654 = vmatmul.mubr.f32.gmra.mxu0 %v6098
        %v6655 = vpop.f32.mrf.mxu0
        %v6656 = vadd.f32 %v6431, %v6655
        %v6657 = vpop.f32.mrf.mxu0
        %6658 = vmatprep.mubr.f32.mxu0 %v6101
        %6659 = vmatmul.mubr.f32.gmra.mxu0 %v6100
        %v6660 = vpop.f32.mrf.mxu0
        %v6661 = vadd.f32 %v6436, %v6660
        %v6662 = vpop.f32.mrf.mxu0
        %6663 = vmatprep.mubr.f32.mxu0 %v6103
        %6664 = vmatmul.mubr.f32.gmra.mxu0 %v6102
        %v6665 = vpop.f32.mrf.mxu0
        %v6666 = vadd.f32 %v6441, %v6665
        %v6667 = vpop.f32.mrf.mxu0
        %6668 = vmatprep.mubr.f32.mxu0 %v6105
        %6669 = vmatmul.mubr.f32.gmra.mxu0 %v6104
        %v6670 = vpop.f32.mrf.mxu0
        %v6671 = vadd.f32 %v6446, %v6670
        %v6672 = vpop.f32.mrf.mxu0
        %6673 = vmatprep.mubr.f32.mxu0 %v6107
        %6674 = vmatmul.mubr.f32.gmra.mxu0 %v6106
        %v6675 = vpop.f32.mrf.mxu0
        %v6676 = vadd.f32 %v6451, %v6675
        %v6677 = vpop.f32.mrf.mxu0
        %6678 = vmatprep.mubr.f32.mxu0 %v6109
        %6679 = vmatmul.mubr.f32.gmra.mxu0 %v6108
        %v6680 = vpop.f32.mrf.mxu0
        %v6681 = vadd.f32 %v6456, %v6680
        %v6682 = vpop.f32.mrf.mxu0
        %6683 = vmatprep.mubr.f32.mxu0 %v6111
        %6684 = vmatmul.mubr.f32.gmra.mxu0 %v6110
        %v6685 = vpop.f32.mrf.mxu0
        %v6686 = vadd.f32 %v6461, %v6685
        %v6687 = vpop.f32.mrf.mxu0
        %6688 = vmatprep.mubr.f32.mxu0 %v6113
        %6689 = vmatmul.mubr.f32.gmra.mxu0 %v6112
        %v6690 = vpop.f32.mrf.mxu0
        %v6691 = vadd.f32 %v6466, %v6690
        %v6692 = vpop.f32.mrf.mxu0
        %6693 = vmatprep.mubr.f32.mxu0 %v6115
        %6694 = vmatmul.mubr.f32.gmra.mxu0 %v6114
        %v6695 = vpop.f32.mrf.mxu0
        %v6696 = vadd.f32 %v6471, %v6695
        %v6697 = vpop.f32.mrf.mxu0
        %6698 = vmatprep.mubr.f32.mxu0 %v6117
        %6699 = vmatmul.mubr.f32.gmra.mxu0 %v6116
        %v6700 = vpop.f32.mrf.mxu0
        %v6701 = vadd.f32 %v6476, %v6700
        %v6702 = vpop.f32.mrf.mxu0
        %6703 = vmatprep.mubr.f32.mxu0 %v6119
        %6704 = vmatmul.mubr.f32.gmra.mxu0 %v6118
        %v6705 = vpop.f32.mrf.mxu0
        %v6706 = vadd.f32 %v6481, %v6705
        %v6707 = vpop.f32.mrf.mxu0
        %6708 = vmatprep.mubr.f32.mxu0 %v6121
        %6709 = vmatmul.mubr.f32.gmra.mxu0 %v6120
        %v6710 = vpop.f32.mrf.mxu0
        %v6711 = vadd.f32 %v6486, %v6710
        %v6712 = vpop.f32.mrf.mxu0
        %6713 = vmatprep.mubr.f32.mxu0 %v6123
        %6714 = vmatmul.mubr.f32.gmra.mxu0 %v6122
        %v6715 = vpop.f32.mrf.mxu0
        %v6716 = vadd.f32 %v6491, %v6715
        %v6717 = vpop.f32.mrf.mxu0
        %6718 = vmatprep.mubr.f32.mxu0 %v6125
        %6719 = vmatmul.mubr.f32.gmra.mxu0 %v6124
        %v6720 = vpop.f32.mrf.mxu0
        %v6721 = vadd.f32 %v6496, %v6720
        %v6722 = vpop.f32.mrf.mxu0
        %6723 = vmatprep.mubr.f32.mxu0 %v6127
        %6724 = vmatmul.mubr.f32.gmra.mxu0 %v6126
        %v6725 = vpop.f32.mrf.mxu0
        %v6726 = vadd.f32 %v6501, %v6725
        %v6727 = vpop.f32.mrf.mxu0
        %6728 = vmatprep.mubr.f32.mxu0 %v6129
        %6729 = vmatmul.mubr.f32.gmra.mxu0 %v6128
        %v6730 = vpop.f32.mrf.mxu0
        %v6731 = vadd.f32 %v6506, %v6730
        %v6732 = vpop.f32.mrf.mxu0
        %6733 = vmatprep.mubr.f32.mxu0 %v6131
        %6734 = vmatmul.mubr.f32.gmra.mxu0 %v6130
        %v6735 = vpop.f32.mrf.mxu0
        %v6736 = vadd.f32 %v6511, %v6735
        %v6737 = vpop.f32.mrf.mxu0
        %6738 = vmatprep.mubr.f32.mxu0 %v6133
        %6739 = vmatmul.mubr.f32.gmra.mxu0 %v6132
        %v6740 = vpop.f32.mrf.mxu0
        %v6741 = vadd.f32 %v6516, %v6740
        %v6742 = vpop.f32.mrf.mxu0
        %6743 = vmatprep.mubr.f32.mxu0 %v6135
        %6744 = vmatmul.mubr.f32.gmra.mxu0 %v6134
        %v6745 = vpop.f32.mrf.mxu0
        %v6746 = vadd.f32 %v6521, %v6745
        %v6747 = vpop.f32.mrf.mxu0
        %6748 = vmatprep.mubr.f32.mxu0 %v6137
        %6749 = vmatmul.mubr.f32.gmra.mxu0 %v6136
        %v6750 = vpop.f32.mrf.mxu0
        %v6751 = vadd.f32 %v6526, %v6750
        %v6752 = vpop.f32.mrf.mxu0
        %6753 = vmatprep.mubr.f32.mxu0 %v6139
        %6754 = vmatmul.mubr.f32.gmra.mxu0 %v6138
        %v6755 = vpop.f32.mrf.mxu0
        %v6756 = vadd.f32 %v6531, %v6755
        %v6757 = vpop.f32.mrf.mxu0
        %6758 = vmatprep.mubr.f32.mxu0 %v6141
        %6759 = vmatmul.mubr.f32.gmra.mxu0 %v6140
        %v6760 = vpop.f32.mrf.mxu0
        %v6761 = vadd.f32 %v6536, %v6760
        %v6762 = vpop.f32.mrf.mxu0
        %6763 = vmatprep.mubr.f32.mxu0 %v6143
        %6764 = vmatmul.mubr.f32.gmra.mxu0 %v6142
        %v6765 = vpop.f32.mrf.mxu0
        %v6766 = vadd.f32 %v6541, %v6765
        %v6767 = vpop.f32.mrf.mxu0
        %6768 = vmatprep.mubr.f32.mxu0 %v6145
        %6769 = vmatmul.mubr.f32.gmra.mxu0 %v6144
        %v6770 = vpop.f32.mrf.mxu0
        %v6771 = vadd.f32 %v6546, %v6770
        %v6772 = vpop.f32.mrf.mxu0
        %6773 = vmatprep.mubr.f32.mxu0 %v6147
        %6774 = vmatmul.mubr.f32.gmra.mxu0 %v6146
        %v6775 = vpop.f32.mrf.mxu0
        %v6776 = vadd.f32 %v6551, %v6775
        %v6777 = vpop.f32.mrf.mxu0
        %6778 = vmatprep.mubr.f32.mxu0 %v6149
        %6779 = vmatmul.mubr.f32.gmra.mxu0 %v6148
        %v6780 = vpop.f32.mrf.mxu0
        %v6781 = vadd.f32 %v6556, %v6780
        %v6782 = vpop.f32.mrf.mxu0
        %6783 = vmatprep.mubr.f32.mxu0 %v6151
        %6784 = vmatmul.mubr.f32.gmra.mxu0 %v6150
        %v6785 = vpop.f32.mrf.mxu0
        %v6786 = vadd.f32 %v6561, %v6785
        %v6787 = vpop.f32.mrf.mxu0
        %6788 = vmatprep.mubr.f32.mxu0 %v6153
        %6789 = vmatmul.mubr.f32.gmra.mxu0 %v6152
        %v6790 = vpop.f32.mrf.mxu0
        %v6791 = vadd.f32 %v6566, %v6790
        %v6792 = vpop.f32.mrf.mxu0
        %6793 = vmatprep.mubr.f32.mxu0 %v6155
        %6794 = vmatmul.mubr.f32.gmra.mxu0 %v6154
        %v6795 = vpop.f32.mrf.mxu0
        %v6796 = vadd.f32 %v6571, %v6795
        %v6797 = vpop.f32.mrf.mxu0
        %6798 = vdwg.mxu0
        %s6799 = scalar_lea.vmem %s5, 512
        %v6800 = vld [vmem:[%s6799] sm:$0xff]
        %v6801 = vld [vmem:[%s6799 + $0x8] sm:$0xff]
        %v6802 = vld [vmem:[%s6799 + $0x10] sm:$0xff]
        %v6803 = vld [vmem:[%s6799 + $0x18] sm:$0xff]
        %v6804 = vld [vmem:[%s6799 + $0x20] sm:$0xff]
        %v6805 = vld [vmem:[%s6799 + $0x28] sm:$0xff]
        %v6806 = vld [vmem:[%s6799 + $0x30] sm:$0xff]
        %v6807 = vld [vmem:[%s6799 + $0x38] sm:$0xff]
        %v6808 = vld [vmem:[%s6799 + $0x40] sm:$0xff]
        %v6809 = vld [vmem:[%s6799 + $0x48] sm:$0xff]
        %v6810 = vld [vmem:[%s6799 + $0x50] sm:$0xff]
        %v6811 = vld [vmem:[%s6799 + $0x58] sm:$0xff]
        %v6812 = vld [vmem:[%s6799 + $0x60] sm:$0xff]
        %v6813 = vld [vmem:[%s6799 + $0x68] sm:$0xff]
        %v6814 = vld [vmem:[%s6799 + $0x70] sm:$0xff]
        %v6815 = vld [vmem:[%s6799 + $0x78] sm:$0xff]
        %v6816 = vld [vmem:[%s6799 + $0x80] sm:$0xff]
        %v6817 = vld [vmem:[%s6799 + $0x88] sm:$0xff]
        %v6818 = vld [vmem:[%s6799 + $0x90] sm:$0xff]
        %v6819 = vld [vmem:[%s6799 + $0x98] sm:$0xff]
        %v6820 = vld [vmem:[%s6799 + $0xa0] sm:$0xff]
        %v6821 = vld [vmem:[%s6799 + $0xa8] sm:$0xff]
        %v6822 = vld [vmem:[%s6799 + $0xb0] sm:$0xff]
        %v6823 = vld [vmem:[%s6799 + $0xb8] sm:$0xff]
        %v6824 = vld [vmem:[%s6799 + $0xc0] sm:$0xff]
        %v6825 = vld [vmem:[%s6799 + $0xc8] sm:$0xff]
        %v6826 = vld [vmem:[%s6799 + $0xd0] sm:$0xff]
        %v6827 = vld [vmem:[%s6799 + $0xd8] sm:$0xff]
        %v6828 = vld [vmem:[%s6799 + $0xe0] sm:$0xff]
        %v6829 = vld [vmem:[%s6799 + $0xe8] sm:$0xff]
        %v6830 = vld [vmem:[%s6799 + $0xf0] sm:$0xff]
        %v6831 = vld [vmem:[%s6799 + $0xf8] sm:$0xff]
        %6832 = vmatprep.subr.mxu0 0.0
        %6833 = vmatpush1.msra.mxu0 %v6815
        %6834 = vmatprep.subr.mxu0 0.0
        %6835 = vmatpush1.msra.mxu0 %v6814
        %6836 = vmatprep.subr.mxu0 0.0
        %6837 = vmatpush1.msra.mxu0 %v6813
        %6838 = vmatprep.subr.mxu0 0.0
        %6839 = vmatpush1.msra.mxu0 %v6812
        %6840 = vmatprep.subr.mxu0 0.0
        %6841 = vmatpush1.msra.mxu0 %v6811
        %6842 = vmatprep.subr.mxu0 0.0
        %6843 = vmatpush1.msra.mxu0 %v6810
        %6844 = vmatprep.subr.mxu0 0.0
        %6845 = vmatpush1.msra.mxu0 %v6809
        %6846 = vmatprep.subr.mxu0 0.0
        %6847 = vmatpush1.msra.mxu0 %v6808
        %6848 = vmatprep.subr.mxu0 0.0
        %6849 = vmatpush1.msra.mxu0 %v6807
        %6850 = vmatprep.subr.mxu0 0.0
        %6851 = vmatpush1.msra.mxu0 %v6806
        %6852 = vmatprep.subr.mxu0 0.0
        %6853 = vmatpush1.msra.mxu0 %v6805
        %6854 = vmatprep.subr.mxu0 0.0
        %6855 = vmatpush1.msra.mxu0 %v6804
        %6856 = vmatprep.subr.mxu0 0.0
        %6857 = vmatpush1.msra.mxu0 %v6803
        %6858 = vmatprep.subr.mxu0 0.0
        %6859 = vmatpush1.msra.mxu0 %v6802
        %6860 = vmatprep.subr.mxu0 0.0
        %6861 = vmatpush1.msra.mxu0 %v6801
        %6862 = vmatprep.subr.mxu0 0.0
        %6863 = vmatpush1.msra.mxu0 %v6800
        %6864 = vmatprep.subr.mxu0 0.0
        %6865 = vmatpush2.msra.mxu0 %v6831
        %6866 = vmatprep.subr.mxu0 0.0
        %6867 = vmatpush2.msra.mxu0 %v6830
        %6868 = vmatprep.subr.mxu0 0.0
        %6869 = vmatpush2.msra.mxu0 %v6829
        %6870 = vmatprep.subr.mxu0 0.0
        %6871 = vmatpush2.msra.mxu0 %v6828
        %6872 = vmatprep.subr.mxu0 0.0
        %6873 = vmatpush2.msra.mxu0 %v6827
        %6874 = vmatprep.subr.mxu0 0.0
        %6875 = vmatpush2.msra.mxu0 %v6826
        %6876 = vmatprep.subr.mxu0 0.0
        %6877 = vmatpush2.msra.mxu0 %v6825
        %6878 = vmatprep.subr.mxu0 0.0
        %6879 = vmatpush2.msra.mxu0 %v6824
        %6880 = vmatprep.subr.mxu0 0.0
        %6881 = vmatpush2.msra.mxu0 %v6823
        %6882 = vmatprep.subr.mxu0 0.0
        %6883 = vmatpush2.msra.mxu0 %v6822
        %6884 = vmatprep.subr.mxu0 0.0
        %6885 = vmatpush2.msra.mxu0 %v6821
        %6886 = vmatprep.subr.mxu0 0.0
        %6887 = vmatpush2.msra.mxu0 %v6820
        %6888 = vmatprep.subr.mxu0 0.0
        %6889 = vmatpush2.msra.mxu0 %v6819
        %6890 = vmatprep.subr.mxu0 0.0
        %6891 = vmatpush2.msra.mxu0 %v6818
        %6892 = vmatprep.subr.mxu0 0.0
        %6893 = vmatpush2.msra.mxu0 %v6817
        %6894 = vmatprep.subr.mxu0 0.0
        %6895 = vmatpush2.msra.mxu0 %v6816
        %6896 = vmatprep.mubr.f32.mxu0 %v6095
        %6897 = vmatmul.mubr.f32.gmra.mxu0 %v6094
        %v6898 = vpop.f32.mrf.mxu0
        %v6899 = vadd.f32 0.0, %v6898
        %v6900 = vpop.f32.mrf.mxu0
        %6901 = vmatprep.mubr.f32.mxu0 %v6097
        %6902 = vmatmul.mubr.f32.gmra.mxu0 %v6096
        %v6903 = vpop.f32.mrf.mxu0
        %v6904 = vadd.f32 0.0, %v6903
        %v6905 = vpop.f32.mrf.mxu0
        %6906 = vmatprep.mubr.f32.mxu0 %v6099
        %6907 = vmatmul.mubr.f32.gmra.mxu0 %v6098
        %v6908 = vpop.f32.mrf.mxu0
        %v6909 = vadd.f32 0.0, %v6908
        %v6910 = vpop.f32.mrf.mxu0
        %6911 = vmatprep.mubr.f32.mxu0 %v6101
        %6912 = vmatmul.mubr.f32.gmra.mxu0 %v6100
        %v6913 = vpop.f32.mrf.mxu0
        %v6914 = vadd.f32 0.0, %v6913
        %v6915 = vpop.f32.mrf.mxu0
        %6916 = vmatprep.mubr.f32.mxu0 %v6103
        %6917 = vmatmul.mubr.f32.gmra.mxu0 %v6102
        %v6918 = vpop.f32.mrf.mxu0
        %v6919 = vadd.f32 0.0, %v6918
        %v6920 = vpop.f32.mrf.mxu0
        %6921 = vmatprep.mubr.f32.mxu0 %v6105
        %6922 = vmatmul.mubr.f32.gmra.mxu0 %v6104
        %v6923 = vpop.f32.mrf.mxu0
        %v6924 = vadd.f32 0.0, %v6923
        %v6925 = vpop.f32.mrf.mxu0
        %6926 = vmatprep.mubr.f32.mxu0 %v6107
        %6927 = vmatmul.mubr.f32.gmra.mxu0 %v6106
        %v6928 = vpop.f32.mrf.mxu0
        %v6929 = vadd.f32 0.0, %v6928
        %v6930 = vpop.f32.mrf.mxu0
        %6931 = vmatprep.mubr.f32.mxu0 %v6109
        %6932 = vmatmul.mubr.f32.gmra.mxu0 %v6108
        %v6933 = vpop.f32.mrf.mxu0
        %v6934 = vadd.f32 0.0, %v6933
        %v6935 = vpop.f32.mrf.mxu0
        %6936 = vmatprep.mubr.f32.mxu0 %v6111
        %6937 = vmatmul.mubr.f32.gmra.mxu0 %v6110
        %v6938 = vpop.f32.mrf.mxu0
        %v6939 = vadd.f32 0.0, %v6938
        %v6940 = vpop.f32.mrf.mxu0
        %6941 = vmatprep.mubr.f32.mxu0 %v6113
        %6942 = vmatmul.mubr.f32.gmra.mxu0 %v6112
        %v6943 = vpop.f32.mrf.mxu0
        %v6944 = vadd.f32 0.0, %v6943
        %v6945 = vpop.f32.mrf.mxu0
        %6946 = vmatprep.mubr.f32.mxu0 %v6115
        %6947 = vmatmul.mubr.f32.gmra.mxu0 %v6114
        %v6948 = vpop.f32.mrf.mxu0
        %v6949 = vadd.f32 0.0, %v6948
        %v6950 = vpop.f32.mrf.mxu0
        %6951 = vmatprep.mubr.f32.mxu0 %v6117
        %6952 = vmatmul.mubr.f32.gmra.mxu0 %v6116
        %v6953 = vpop.f32.mrf.mxu0
        %v6954 = vadd.f32 0.0, %v6953
        %v6955 = vpop.f32.mrf.mxu0
        %6956 = vmatprep.mubr.f32.mxu0 %v6119
        %6957 = vmatmul.mubr.f32.gmra.mxu0 %v6118
        %v6958 = vpop.f32.mrf.mxu0
        %v6959 = vadd.f32 0.0, %v6958
        %v6960 = vpop.f32.mrf.mxu0
        %6961 = vmatprep.mubr.f32.mxu0 %v6121
        %6962 = vmatmul.mubr.f32.gmra.mxu0 %v6120
        %v6963 = vpop.f32.mrf.mxu0
        %v6964 = vadd.f32 0.0, %v6963
        %v6965 = vpop.f32.mrf.mxu0
        %6966 = vmatprep.mubr.f32.mxu0 %v6123
        %6967 = vmatmul.mubr.f32.gmra.mxu0 %v6122
        %v6968 = vpop.f32.mrf.mxu0
        %v6969 = vadd.f32 0.0, %v6968
        %v6970 = vpop.f32.mrf.mxu0
        %6971 = vmatprep.mubr.f32.mxu0 %v6125
        %6972 = vmatmul.mubr.f32.gmra.mxu0 %v6124
        %v6973 = vpop.f32.mrf.mxu0
        %v6974 = vadd.f32 0.0, %v6973
        %v6975 = vpop.f32.mrf.mxu0
        %6976 = vmatprep.mubr.f32.mxu0 %v6127
        %6977 = vmatmul.mubr.f32.gmra.mxu0 %v6126
        %v6978 = vpop.f32.mrf.mxu0
        %v6979 = vadd.f32 0.0, %v6978
        %v6980 = vpop.f32.mrf.mxu0
        %6981 = vmatprep.mubr.f32.mxu0 %v6129
        %6982 = vmatmul.mubr.f32.gmra.mxu0 %v6128
        %v6983 = vpop.f32.mrf.mxu0
        %v6984 = vadd.f32 0.0, %v6983
        %v6985 = vpop.f32.mrf.mxu0
        %6986 = vmatprep.mubr.f32.mxu0 %v6131
        %6987 = vmatmul.mubr.f32.gmra.mxu0 %v6130
        %v6988 = vpop.f32.mrf.mxu0
        %v6989 = vadd.f32 0.0, %v6988
        %v6990 = vpop.f32.mrf.mxu0
        %6991 = vmatprep.mubr.f32.mxu0 %v6133
        %6992 = vmatmul.mubr.f32.gmra.mxu0 %v6132
        %v6993 = vpop.f32.mrf.mxu0
        %v6994 = vadd.f32 0.0, %v6993
        %v6995 = vpop.f32.mrf.mxu0
        %6996 = vmatprep.mubr.f32.mxu0 %v6135
        %6997 = vmatmul.mubr.f32.gmra.mxu0 %v6134
        %v6998 = vpop.f32.mrf.mxu0
        %v6999 = vadd.f32 0.0, %v6998
        %v7000 = vpop.f32.mrf.mxu0
        %7001 = vmatprep.mubr.f32.mxu0 %v6137
        %7002 = vmatmul.mubr.f32.gmra.mxu0 %v6136
        %v7003 = vpop.f32.mrf.mxu0
        %v7004 = vadd.f32 0.0, %v7003
        %v7005 = vpop.f32.mrf.mxu0
        %7006 = vmatprep.mubr.f32.mxu0 %v6139
        %7007 = vmatmul.mubr.f32.gmra.mxu0 %v6138
        %v7008 = vpop.f32.mrf.mxu0
        %v7009 = vadd.f32 0.0, %v7008
        %v7010 = vpop.f32.mrf.mxu0
        %7011 = vmatprep.mubr.f32.mxu0 %v6141
        %7012 = vmatmul.mubr.f32.gmra.mxu0 %v6140
        %v7013 = vpop.f32.mrf.mxu0
        %v7014 = vadd.f32 0.0, %v7013
        %v7015 = vpop.f32.mrf.mxu0
        %7016 = vmatprep.mubr.f32.mxu0 %v6143
        %7017 = vmatmul.mubr.f32.gmra.mxu0 %v6142
        %v7018 = vpop.f32.mrf.mxu0
        %v7019 = vadd.f32 0.0, %v7018
        %v7020 = vpop.f32.mrf.mxu0
        %7021 = vmatprep.mubr.f32.mxu0 %v6145
        %7022 = vmatmul.mubr.f32.gmra.mxu0 %v6144
        %v7023 = vpop.f32.mrf.mxu0
        %v7024 = vadd.f32 0.0, %v7023
        %v7025 = vpop.f32.mrf.mxu0
        %7026 = vmatprep.mubr.f32.mxu0 %v6147
        %7027 = vmatmul.mubr.f32.gmra.mxu0 %v6146
        %v7028 = vpop.f32.mrf.mxu0
        %v7029 = vadd.f32 0.0, %v7028
        %v7030 = vpop.f32.mrf.mxu0
        %7031 = vmatprep.mubr.f32.mxu0 %v6149
        %7032 = vmatmul.mubr.f32.gmra.mxu0 %v6148
        %v7033 = vpop.f32.mrf.mxu0
        %v7034 = vadd.f32 0.0, %v7033
        %v7035 = vpop.f32.mrf.mxu0
        %7036 = vmatprep.mubr.f32.mxu0 %v6151
        %7037 = vmatmul.mubr.f32.gmra.mxu0 %v6150
        %v7038 = vpop.f32.mrf.mxu0
        %v7039 = vadd.f32 0.0, %v7038
        %v7040 = vpop.f32.mrf.mxu0
        %7041 = vmatprep.mubr.f32.mxu0 %v6153
        %7042 = vmatmul.mubr.f32.gmra.mxu0 %v6152
        %v7043 = vpop.f32.mrf.mxu0
        %v7044 = vadd.f32 0.0, %v7043
        %v7045 = vpop.f32.mrf.mxu0
        %7046 = vmatprep.mubr.f32.mxu0 %v6155
        %7047 = vmatmul.mubr.f32.gmra.mxu0 %v6154
        %v7048 = vpop.f32.mrf.mxu0
        %v7049 = vadd.f32 0.0, %v7048
        %v7050 = vpop.f32.mrf.mxu0
        %7051 = vmatprep.mubr.f32.mxu0 %v6093
        %7052 = vmatmul.mubr.f32.gmra.mxu0 %v6092
        %v7053 = vpop.f32.mrf.mxu0
        %v7054 = vadd.f32 0.0, %v7053
        %v7055 = vpop.f32.mrf.mxu0
        %7056 = vdwg.mxu0
        %v7057 = vadd.f32 %v6641, %v6899
        %v7058 = vadd.f32 %v6646, %v6904
        %v7059 = vadd.f32 %v6651, %v6909
        %v7060 = vadd.f32 %v6656, %v6914
        %v7061 = vadd.f32 %v6661, %v6919
        %v7062 = vadd.f32 %v6666, %v6924
        %v7063 = vadd.f32 %v6671, %v6929
        %v7064 = vadd.f32 %v6676, %v6934
        %v7065 = vadd.f32 %v6681, %v6939
        %v7066 = vadd.f32 %v6686, %v6944
        %v7067 = vadd.f32 %v6691, %v6949
        %v7068 = vadd.f32 %v6696, %v6954
        %v7069 = vadd.f32 %v6701, %v6959
        %v7070 = vadd.f32 %v6706, %v6964
        %v7071 = vadd.f32 %v6711, %v6969
        %v7072 = vadd.f32 %v6716, %v6974
        %v7073 = vadd.f32 %v6721, %v6979
        %v7074 = vadd.f32 %v6726, %v6984
        %v7075 = vadd.f32 %v6731, %v6989
        %v7076 = vadd.f32 %v6736, %v6994
        %v7077 = vadd.f32 %v6741, %v6999
        %v7078 = vadd.f32 %v6746, %v7004
        %v7079 = vadd.f32 %v6751, %v7009
        %v7080 = vadd.f32 %v6756, %v7014
        %v7081 = vadd.f32 %v6761, %v7019
        %v7082 = vadd.f32 %v6766, %v7024
        %v7083 = vadd.f32 %v6771, %v7029
        %v7084 = vadd.f32 %v6776, %v7034
        %v7085 = vadd.f32 %v6781, %v7039
        %v7086 = vadd.f32 %v6786, %v7044
        %v7087 = vadd.f32 %v6791, %v7049
        %v7088 = vadd.f32 %v6796, %v7054
        %s7089 = scalar_lea.vmem %s5, 768
        %v7090 = vld [vmem:[%s7089] sm:$0xff]
        %v7091 = vld [vmem:[%s7089 + $0x8] sm:$0xff]
        %v7092 = vld [vmem:[%s7089 + $0x10] sm:$0xff]
        %v7093 = vld [vmem:[%s7089 + $0x18] sm:$0xff]
        %v7094 = vld [vmem:[%s7089 + $0x20] sm:$0xff]
        %v7095 = vld [vmem:[%s7089 + $0x28] sm:$0xff]
        %v7096 = vld [vmem:[%s7089 + $0x30] sm:$0xff]
        %v7097 = vld [vmem:[%s7089 + $0x38] sm:$0xff]
        %v7098 = vld [vmem:[%s7089 + $0x40] sm:$0xff]
        %v7099 = vld [vmem:[%s7089 + $0x48] sm:$0xff]
        %v7100 = vld [vmem:[%s7089 + $0x50] sm:$0xff]
        %v7101 = vld [vmem:[%s7089 + $0x58] sm:$0xff]
        %v7102 = vld [vmem:[%s7089 + $0x60] sm:$0xff]
        %v7103 = vld [vmem:[%s7089 + $0x68] sm:$0xff]
        %v7104 = vld [vmem:[%s7089 + $0x70] sm:$0xff]
        %v7105 = vld [vmem:[%s7089 + $0x78] sm:$0xff]
        %v7106 = vld [vmem:[%s7089 + $0x80] sm:$0xff]
        %v7107 = vld [vmem:[%s7089 + $0x88] sm:$0xff]
        %v7108 = vld [vmem:[%s7089 + $0x90] sm:$0xff]
        %v7109 = vld [vmem:[%s7089 + $0x98] sm:$0xff]
        %v7110 = vld [vmem:[%s7089 + $0xa0] sm:$0xff]
        %v7111 = vld [vmem:[%s7089 + $0xa8] sm:$0xff]
        %v7112 = vld [vmem:[%s7089 + $0xb0] sm:$0xff]
        %v7113 = vld [vmem:[%s7089 + $0xb8] sm:$0xff]
        %v7114 = vld [vmem:[%s7089 + $0xc0] sm:$0xff]
        %v7115 = vld [vmem:[%s7089 + $0xc8] sm:$0xff]
        %v7116 = vld [vmem:[%s7089 + $0xd0] sm:$0xff]
        %v7117 = vld [vmem:[%s7089 + $0xd8] sm:$0xff]
        %v7118 = vld [vmem:[%s7089 + $0xe0] sm:$0xff]
        %v7119 = vld [vmem:[%s7089 + $0xe8] sm:$0xff]
        %v7120 = vld [vmem:[%s7089 + $0xf0] sm:$0xff]
        %v7121 = vld [vmem:[%s7089 + $0xf8] sm:$0xff]
        %7122 = vmatprep.subr.mxu0 0.0
        %7123 = vmatpush1.msra.mxu0 %v7105
        %7124 = vmatprep.subr.mxu0 0.0
        %7125 = vmatpush1.msra.mxu0 %v7104
        %7126 = vmatprep.subr.mxu0 0.0
        %7127 = vmatpush1.msra.mxu0 %v7103
        %7128 = vmatprep.subr.mxu0 0.0
        %7129 = vmatpush1.msra.mxu0 %v7102
        %7130 = vmatprep.subr.mxu0 0.0
        %7131 = vmatpush1.msra.mxu0 %v7101
        %7132 = vmatprep.subr.mxu0 0.0
        %7133 = vmatpush1.msra.mxu0 %v7100
        %7134 = vmatprep.subr.mxu0 0.0
        %7135 = vmatpush1.msra.mxu0 %v7099
        %7136 = vmatprep.subr.mxu0 0.0
        %7137 = vmatpush1.msra.mxu0 %v7098
        %7138 = vmatprep.subr.mxu0 0.0
        %7139 = vmatpush1.msra.mxu0 %v7097
        %7140 = vmatprep.subr.mxu0 0.0
        %7141 = vmatpush1.msra.mxu0 %v7096
        %7142 = vmatprep.subr.mxu0 0.0
        %7143 = vmatpush1.msra.mxu0 %v7095
        %7144 = vmatprep.subr.mxu0 0.0
        %7145 = vmatpush1.msra.mxu0 %v7094
        %7146 = vmatprep.subr.mxu0 0.0
        %7147 = vmatpush1.msra.mxu0 %v7093
        %7148 = vmatprep.subr.mxu0 0.0
        %7149 = vmatpush1.msra.mxu0 %v7092
        %7150 = vmatprep.subr.mxu0 0.0
        %7151 = vmatpush1.msra.mxu0 %v7091
        %7152 = vmatprep.subr.mxu0 0.0
        %7153 = vmatpush1.msra.mxu0 %v7090
        %7154 = vmatprep.subr.mxu0 0.0
        %7155 = vmatpush2.msra.mxu0 %v7121
        %7156 = vmatprep.subr.mxu0 0.0
        %7157 = vmatpush2.msra.mxu0 %v7120
        %7158 = vmatprep.subr.mxu0 0.0
        %7159 = vmatpush2.msra.mxu0 %v7119
        %7160 = vmatprep.subr.mxu0 0.0
        %7161 = vmatpush2.msra.mxu0 %v7118
        %7162 = vmatprep.subr.mxu0 0.0
        %7163 = vmatpush2.msra.mxu0 %v7117
        %7164 = vmatprep.subr.mxu0 0.0
        %7165 = vmatpush2.msra.mxu0 %v7116
        %7166 = vmatprep.subr.mxu0 0.0
        %7167 = vmatpush2.msra.mxu0 %v7115
        %7168 = vmatprep.subr.mxu0 0.0
        %7169 = vmatpush2.msra.mxu0 %v7114
        %7170 = vmatprep.subr.mxu0 0.0
        %7171 = vmatpush2.msra.mxu0 %v7113
        %7172 = vmatprep.subr.mxu0 0.0
        %7173 = vmatpush2.msra.mxu0 %v7112
        %7174 = vmatprep.subr.mxu0 0.0
        %7175 = vmatpush2.msra.mxu0 %v7111
        %7176 = vmatprep.subr.mxu0 0.0
        %7177 = vmatpush2.msra.mxu0 %v7110
        %7178 = vmatprep.subr.mxu0 0.0
        %7179 = vmatpush2.msra.mxu0 %v7109
        %7180 = vmatprep.subr.mxu0 0.0
        %7181 = vmatpush2.msra.mxu0 %v7108
        %7182 = vmatprep.subr.mxu0 0.0
        %7183 = vmatpush2.msra.mxu0 %v7107
        %7184 = vmatprep.subr.mxu0 0.0
        %7185 = vmatpush2.msra.mxu0 %v7106
        %7186 = vmatprep.mubr.f32.mxu0 %v6311
        %7187 = vmatmul.mubr.f32.gmra.mxu0 %v6310
        %v7188 = vpop.f32.mrf.mxu0
        %v7189 = vadd.f32 0.0, %v7188
        %v7190 = vpop.f32.mrf.mxu0
        %7191 = vmatprep.mubr.f32.mxu0 %v6309
        %7192 = vmatmul.mubr.f32.gmra.mxu0 %v6308
        %v7193 = vpop.f32.mrf.mxu0
        %v7194 = vadd.f32 0.0, %v7193
        %v7195 = vpop.f32.mrf.mxu0
        %7196 = vmatprep.mubr.f32.mxu0 %v6307
        %7197 = vmatmul.mubr.f32.gmra.mxu0 %v6306
        %v7198 = vpop.f32.mrf.mxu0
        %v7199 = vadd.f32 0.0, %v7198
        %v7200 = vpop.f32.mrf.mxu0
        %7201 = vmatprep.mubr.f32.mxu0 %v6305
        %7202 = vmatmul.mubr.f32.gmra.mxu0 %v6304
        %v7203 = vpop.f32.mrf.mxu0
        %v7204 = vadd.f32 0.0, %v7203
        %v7205 = vpop.f32.mrf.mxu0
        %7206 = vmatprep.mubr.f32.mxu0 %v6303
        %7207 = vmatmul.mubr.f32.gmra.mxu0 %v6302
        %v7208 = vpop.f32.mrf.mxu0
        %v7209 = vadd.f32 0.0, %v7208
        %v7210 = vpop.f32.mrf.mxu0
        %7211 = vmatprep.mubr.f32.mxu0 %v6301
        %7212 = vmatmul.mubr.f32.gmra.mxu0 %v6300
        %v7213 = vpop.f32.mrf.mxu0
        %v7214 = vadd.f32 0.0, %v7213
        %v7215 = vpop.f32.mrf.mxu0
        %7216 = vmatprep.mubr.f32.mxu0 %v6299
        %7217 = vmatmul.mubr.f32.gmra.mxu0 %v6298
        %v7218 = vpop.f32.mrf.mxu0
        %v7219 = vadd.f32 0.0, %v7218
        %v7220 = vpop.f32.mrf.mxu0
        %7221 = vmatprep.mubr.f32.mxu0 %v6297
        %7222 = vmatmul.mubr.f32.gmra.mxu0 %v6296
        %v7223 = vpop.f32.mrf.mxu0
        %v7224 = vadd.f32 0.0, %v7223
        %v7225 = vpop.f32.mrf.mxu0
        %7226 = vmatprep.mubr.f32.mxu0 %v6295
        %7227 = vmatmul.mubr.f32.gmra.mxu0 %v6294
        %v7228 = vpop.f32.mrf.mxu0
        %v7229 = vadd.f32 0.0, %v7228
        %v7230 = vpop.f32.mrf.mxu0
        %7231 = vmatprep.mubr.f32.mxu0 %v6293
        %7232 = vmatmul.mubr.f32.gmra.mxu0 %v6292
        %v7233 = vpop.f32.mrf.mxu0
        %v7234 = vadd.f32 0.0, %v7233
        %v7235 = vpop.f32.mrf.mxu0
        %7236 = vmatprep.mubr.f32.mxu0 %v6291
        %7237 = vmatmul.mubr.f32.gmra.mxu0 %v6290
        %v7238 = vpop.f32.mrf.mxu0
        %v7239 = vadd.f32 0.0, %v7238
        %v7240 = vpop.f32.mrf.mxu0
        %7241 = vmatprep.mubr.f32.mxu0 %v6289
        %7242 = vmatmul.mubr.f32.gmra.mxu0 %v6288
        %v7243 = vpop.f32.mrf.mxu0
        %v7244 = vadd.f32 0.0, %v7243
        %v7245 = vpop.f32.mrf.mxu0
        %7246 = vmatprep.mubr.f32.mxu0 %v6287
        %7247 = vmatmul.mubr.f32.gmra.mxu0 %v6286
        %v7248 = vpop.f32.mrf.mxu0
        %v7249 = vadd.f32 0.0, %v7248
        %v7250 = vpop.f32.mrf.mxu0
        %7251 = vmatprep.mubr.f32.mxu0 %v6285
        %7252 = vmatmul.mubr.f32.gmra.mxu0 %v6284
        %v7253 = vpop.f32.mrf.mxu0
        %v7254 = vadd.f32 0.0, %v7253
        %v7255 = vpop.f32.mrf.mxu0
        %7256 = vmatprep.mubr.f32.mxu0 %v6283
        %7257 = vmatmul.mubr.f32.gmra.mxu0 %v6282
        %v7258 = vpop.f32.mrf.mxu0
        %v7259 = vadd.f32 0.0, %v7258
        %v7260 = vpop.f32.mrf.mxu0
        %7261 = vmatprep.mubr.f32.mxu0 %v6281
        %7262 = vmatmul.mubr.f32.gmra.mxu0 %v6280
        %v7263 = vpop.f32.mrf.mxu0
        %v7264 = vadd.f32 0.0, %v7263
        %v7265 = vpop.f32.mrf.mxu0
        %7266 = vmatprep.mubr.f32.mxu0 %v6279
        %7267 = vmatmul.mubr.f32.gmra.mxu0 %v6278
        %v7268 = vpop.f32.mrf.mxu0
        %v7269 = vadd.f32 0.0, %v7268
        %v7270 = vpop.f32.mrf.mxu0
        %7271 = vmatprep.mubr.f32.mxu0 %v6277
        %7272 = vmatmul.mubr.f32.gmra.mxu0 %v6276
        %v7273 = vpop.f32.mrf.mxu0
        %v7274 = vadd.f32 0.0, %v7273
        %v7275 = vpop.f32.mrf.mxu0
        %7276 = vmatprep.mubr.f32.mxu0 %v6275
        %7277 = vmatmul.mubr.f32.gmra.mxu0 %v6274
        %v7278 = vpop.f32.mrf.mxu0
        %v7279 = vadd.f32 0.0, %v7278
        %v7280 = vpop.f32.mrf.mxu0
        %7281 = vmatprep.mubr.f32.mxu0 %v6273
        %7282 = vmatmul.mubr.f32.gmra.mxu0 %v6272
        %v7283 = vpop.f32.mrf.mxu0
        %v7284 = vadd.f32 0.0, %v7283
        %v7285 = vpop.f32.mrf.mxu0
        %7286 = vmatprep.mubr.f32.mxu0 %v6271
        %7287 = vmatmul.mubr.f32.gmra.mxu0 %v6270
        %v7288 = vpop.f32.mrf.mxu0
        %v7289 = vadd.f32 0.0, %v7288
        %v7290 = vpop.f32.mrf.mxu0
        %7291 = vmatprep.mubr.f32.mxu0 %v6269
        %7292 = vmatmul.mubr.f32.gmra.mxu0 %v6268
        %v7293 = vpop.f32.mrf.mxu0
        %v7294 = vadd.f32 0.0, %v7293
        %v7295 = vpop.f32.mrf.mxu0
        %7296 = vmatprep.mubr.f32.mxu0 %v6267
        %7297 = vmatmul.mubr.f32.gmra.mxu0 %v6266
        %v7298 = vpop.f32.mrf.mxu0
        %v7299 = vadd.f32 0.0, %v7298
        %v7300 = vpop.f32.mrf.mxu0
        %7301 = vmatprep.mubr.f32.mxu0 %v6265
        %7302 = vmatmul.mubr.f32.gmra.mxu0 %v6264
        %v7303 = vpop.f32.mrf.mxu0
        %v7304 = vadd.f32 0.0, %v7303
        %v7305 = vpop.f32.mrf.mxu0
        %7306 = vmatprep.mubr.f32.mxu0 %v6263
        %7307 = vmatmul.mubr.f32.gmra.mxu0 %v6262
        %v7308 = vpop.f32.mrf.mxu0
        %v7309 = vadd.f32 0.0, %v7308
        %v7310 = vpop.f32.mrf.mxu0
        %7311 = vmatprep.mubr.f32.mxu0 %v6261
        %7312 = vmatmul.mubr.f32.gmra.mxu0 %v6260
        %v7313 = vpop.f32.mrf.mxu0
        %v7314 = vadd.f32 0.0, %v7313
        %v7315 = vpop.f32.mrf.mxu0
        %7316 = vmatprep.mubr.f32.mxu0 %v6259
        %7317 = vmatmul.mubr.f32.gmra.mxu0 %v6258
        %v7318 = vpop.f32.mrf.mxu0
        %v7319 = vadd.f32 0.0, %v7318
        %v7320 = vpop.f32.mrf.mxu0
        %7321 = vmatprep.mubr.f32.mxu0 %v6257
        %7322 = vmatmul.mubr.f32.gmra.mxu0 %v6256
        %v7323 = vpop.f32.mrf.mxu0
        %v7324 = vadd.f32 0.0, %v7323
        %v7325 = vpop.f32.mrf.mxu0
        %7326 = vmatprep.mubr.f32.mxu0 %v6255
        %7327 = vmatmul.mubr.f32.gmra.mxu0 %v6254
        %v7328 = vpop.f32.mrf.mxu0
        %v7329 = vadd.f32 0.0, %v7328
        %v7330 = vpop.f32.mrf.mxu0
        %7331 = vmatprep.mubr.f32.mxu0 %v6253
        %7332 = vmatmul.mubr.f32.gmra.mxu0 %v6252
        %v7333 = vpop.f32.mrf.mxu0
        %v7334 = vadd.f32 0.0, %v7333
        %v7335 = vpop.f32.mrf.mxu0
        %7336 = vmatprep.mubr.f32.mxu0 %v6315
        %7337 = vmatmul.mubr.f32.gmra.mxu0 %v6314
        %v7338 = vpop.f32.mrf.mxu0
        %v7339 = vadd.f32 0.0, %v7338
        %v7340 = vpop.f32.mrf.mxu0
        %7341 = vmatprep.mubr.f32.mxu0 %v6313
        %7342 = vmatmul.mubr.f32.gmra.mxu0 %v6312
        %v7343 = vpop.f32.mrf.mxu0
        %v7344 = vadd.f32 0.0, %v7343
        %v7345 = vpop.f32.mrf.mxu0
        %7346 = vdwg.mxu0
        %v7347 = vadd.f32 %v7057, %v7189
        %v7348 = vadd.f32 %v7058, %v7194
        %v7349 = vadd.f32 %v7059, %v7199
        %v7350 = vadd.f32 %v7060, %v7204
        %v7351 = vadd.f32 %v7061, %v7209
        %v7352 = vadd.f32 %v7062, %v7214
        %v7353 = vadd.f32 %v7063, %v7219
        %v7354 = vadd.f32 %v7064, %v7224
        %v7355 = vadd.f32 %v7065, %v7229
        %v7356 = vadd.f32 %v7066, %v7234
        %v7357 = vadd.f32 %v7067, %v7239
        %v7358 = vadd.f32 %v7068, %v7244
        %v7359 = vadd.f32 %v7069, %v7249
        %v7360 = vadd.f32 %v7070, %v7254
        %v7361 = vadd.f32 %v7071, %v7259
        %v7362 = vadd.f32 %v7072, %v7264
        %v7363 = vadd.f32 %v7073, %v7269
        %v7364 = vadd.f32 %v7074, %v7274
        %v7365 = vadd.f32 %v7075, %v7279
        %v7366 = vadd.f32 %v7076, %v7284
        %v7367 = vadd.f32 %v7077, %v7289
        %v7368 = vadd.f32 %v7078, %v7294
        %v7369 = vadd.f32 %v7079, %v7299
        %v7370 = vadd.f32 %v7080, %v7304
        %v7371 = vadd.f32 %v7081, %v7309
        %v7372 = vadd.f32 %v7082, %v7314
        %v7373 = vadd.f32 %v7083, %v7319
        %v7374 = vadd.f32 %v7084, %v7324
        %v7375 = vadd.f32 %v7085, %v7329
        %v7376 = vadd.f32 %v7086, %v7334
        %v7377 = vadd.f32 %v7087, %v7339
        %v7378 = vadd.f32 %v7088, %v7344
        %s7379 = scalar_lea.vmem %s5, 1024
        %v7380 = vld [vmem:[%s7379] sm:$0xff]
        %v7381 = vld [vmem:[%s7379 + $0x8] sm:$0xff]
        %v7382 = vld [vmem:[%s7379 + $0x10] sm:$0xff]
        %v7383 = vld [vmem:[%s7379 + $0x18] sm:$0xff]
        %v7384 = vld [vmem:[%s7379 + $0x20] sm:$0xff]
        %v7385 = vld [vmem:[%s7379 + $0x28] sm:$0xff]
        %v7386 = vld [vmem:[%s7379 + $0x30] sm:$0xff]
        %v7387 = vld [vmem:[%s7379 + $0x38] sm:$0xff]
        %v7388 = vld [vmem:[%s7379 + $0x40] sm:$0xff]
        %v7389 = vld [vmem:[%s7379 + $0x48] sm:$0xff]
        %v7390 = vld [vmem:[%s7379 + $0x50] sm:$0xff]
        %v7391 = vld [vmem:[%s7379 + $0x58] sm:$0xff]
        %v7392 = vld [vmem:[%s7379 + $0x60] sm:$0xff]
        %v7393 = vld [vmem:[%s7379 + $0x68] sm:$0xff]
        %v7394 = vld [vmem:[%s7379 + $0x70] sm:$0xff]
        %v7395 = vld [vmem:[%s7379 + $0x78] sm:$0xff]
        %v7396 = vld [vmem:[%s7379 + $0x80] sm:$0xff]
        %v7397 = vld [vmem:[%s7379 + $0x88] sm:$0xff]
        %v7398 = vld [vmem:[%s7379 + $0x90] sm:$0xff]
        %v7399 = vld [vmem:[%s7379 + $0x98] sm:$0xff]
        %v7400 = vld [vmem:[%s7379 + $0xa0] sm:$0xff]
        %v7401 = vld [vmem:[%s7379 + $0xa8] sm:$0xff]
        %v7402 = vld [vmem:[%s7379 + $0xb0] sm:$0xff]
        %v7403 = vld [vmem:[%s7379 + $0xb8] sm:$0xff]
        %v7404 = vld [vmem:[%s7379 + $0xc0] sm:$0xff]
        %v7405 = vld [vmem:[%s7379 + $0xc8] sm:$0xff]
        %v7406 = vld [vmem:[%s7379 + $0xd0] sm:$0xff]
        %v7407 = vld [vmem:[%s7379 + $0xd8] sm:$0xff]
        %v7408 = vld [vmem:[%s7379 + $0xe0] sm:$0xff]
        %v7409 = vld [vmem:[%s7379 + $0xe8] sm:$0xff]
        %v7410 = vld [vmem:[%s7379 + $0xf0] sm:$0xff]
        %v7411 = vld [vmem:[%s7379 + $0xf8] sm:$0xff]
        %7412 = vmatprep.subr.mxu0 0.0
        %7413 = vmatpush1.msra.mxu0 %v7395
        %7414 = vmatprep.subr.mxu0 0.0
        %7415 = vmatpush1.msra.mxu0 %v7394
        %7416 = vmatprep.subr.mxu0 0.0
        %7417 = vmatpush1.msra.mxu0 %v7393
        %7418 = vmatprep.subr.mxu0 0.0
        %7419 = vmatpush1.msra.mxu0 %v7392
        %7420 = vmatprep.subr.mxu0 0.0
        %7421 = vmatpush1.msra.mxu0 %v7391
        %7422 = vmatprep.subr.mxu0 0.0
        %7423 = vmatpush1.msra.mxu0 %v7390
        %7424 = vmatprep.subr.mxu0 0.0
        %7425 = vmatpush1.msra.mxu0 %v7389
        %7426 = vmatprep.subr.mxu0 0.0
        %7427 = vmatpush1.msra.mxu0 %v7388
        %7428 = vmatprep.subr.mxu0 0.0
        %7429 = vmatpush1.msra.mxu0 %v7387
        %7430 = vmatprep.subr.mxu0 0.0
        %7431 = vmatpush1.msra.mxu0 %v7386
        %7432 = vmatprep.subr.mxu0 0.0
        %7433 = vmatpush1.msra.mxu0 %v7385
        %7434 = vmatprep.subr.mxu0 0.0
        %7435 = vmatpush1.msra.mxu0 %v7384
        %7436 = vmatprep.subr.mxu0 0.0
        %7437 = vmatpush1.msra.mxu0 %v7383
        %7438 = vmatprep.subr.mxu0 0.0
        %7439 = vmatpush1.msra.mxu0 %v7382
        %7440 = vmatprep.subr.mxu0 0.0
        %7441 = vmatpush1.msra.mxu0 %v7381
        %7442 = vmatprep.subr.mxu0 0.0
        %7443 = vmatpush1.msra.mxu0 %v7380
        %7444 = vmatprep.subr.mxu0 0.0
        %7445 = vmatpush2.msra.mxu0 %v7411
        %7446 = vmatprep.subr.mxu0 0.0
        %7447 = vmatpush2.msra.mxu0 %v7410
        %7448 = vmatprep.subr.mxu0 0.0
        %7449 = vmatpush2.msra.mxu0 %v7409
        %7450 = vmatprep.subr.mxu0 0.0
        %7451 = vmatpush2.msra.mxu0 %v7408
        %7452 = vmatprep.subr.mxu0 0.0
        %7453 = vmatpush2.msra.mxu0 %v7407
        %7454 = vmatprep.subr.mxu0 0.0
        %7455 = vmatpush2.msra.mxu0 %v7406
        %7456 = vmatprep.subr.mxu0 0.0
        %7457 = vmatpush2.msra.mxu0 %v7405
        %7458 = vmatprep.subr.mxu0 0.0
        %7459 = vmatpush2.msra.mxu0 %v7404
        %7460 = vmatprep.subr.mxu0 0.0
        %7461 = vmatpush2.msra.mxu0 %v7403
        %7462 = vmatprep.subr.mxu0 0.0
        %7463 = vmatpush2.msra.mxu0 %v7402
        %7464 = vmatprep.subr.mxu0 0.0
        %7465 = vmatpush2.msra.mxu0 %v7401
        %7466 = vmatprep.subr.mxu0 0.0
        %7467 = vmatpush2.msra.mxu0 %v7400
        %7468 = vmatprep.subr.mxu0 0.0
        %7469 = vmatpush2.msra.mxu0 %v7399
        %7470 = vmatprep.subr.mxu0 0.0
        %7471 = vmatpush2.msra.mxu0 %v7398
        %7472 = vmatprep.subr.mxu0 0.0
        %7473 = vmatpush2.msra.mxu0 %v7397
        %7474 = vmatprep.subr.mxu0 0.0
        %7475 = vmatpush2.msra.mxu0 %v7396
        %7476 = vmatprep.mubr.f32.mxu0 %v6097
        %7477 = vmatmul.mubr.f32.gmra.mxu0 %v6096
        %v7478 = vpop.f32.mrf.mxu0
        %v7479 = vadd.f32 0.0, %v7478
        %v7480 = vpop.f32.mrf.mxu0
        %7481 = vmatprep.mubr.f32.mxu0 %v6099
        %7482 = vmatmul.mubr.f32.gmra.mxu0 %v6098
        %v7483 = vpop.f32.mrf.mxu0
        %v7484 = vadd.f32 0.0, %v7483
        %v7485 = vpop.f32.mrf.mxu0
        %7486 = vmatprep.mubr.f32.mxu0 %v6101
        %7487 = vmatmul.mubr.f32.gmra.mxu0 %v6100
        %v7488 = vpop.f32.mrf.mxu0
        %v7489 = vadd.f32 0.0, %v7488
        %v7490 = vpop.f32.mrf.mxu0
        %7491 = vmatprep.mubr.f32.mxu0 %v6103
        %7492 = vmatmul.mubr.f32.gmra.mxu0 %v6102
        %v7493 = vpop.f32.mrf.mxu0
        %v7494 = vadd.f32 0.0, %v7493
        %v7495 = vpop.f32.mrf.mxu0
        %7496 = vmatprep.mubr.f32.mxu0 %v6105
        %7497 = vmatmul.mubr.f32.gmra.mxu0 %v6104
        %v7498 = vpop.f32.mrf.mxu0
        %v7499 = vadd.f32 0.0, %v7498
        %v7500 = vpop.f32.mrf.mxu0
        %7501 = vmatprep.mubr.f32.mxu0 %v6107
        %7502 = vmatmul.mubr.f32.gmra.mxu0 %v6106
        %v7503 = vpop.f32.mrf.mxu0
        %v7504 = vadd.f32 0.0, %v7503
        %v7505 = vpop.f32.mrf.mxu0
        %7506 = vmatprep.mubr.f32.mxu0 %v6109
        %7507 = vmatmul.mubr.f32.gmra.mxu0 %v6108
        %v7508 = vpop.f32.mrf.mxu0
        %v7509 = vadd.f32 0.0, %v7508
        %v7510 = vpop.f32.mrf.mxu0
        %7511 = vmatprep.mubr.f32.mxu0 %v6111
        %7512 = vmatmul.mubr.f32.gmra.mxu0 %v6110
        %v7513 = vpop.f32.mrf.mxu0
        %v7514 = vadd.f32 0.0, %v7513
        %v7515 = vpop.f32.mrf.mxu0
        %7516 = vmatprep.mubr.f32.mxu0 %v6113
        %7517 = vmatmul.mubr.f32.gmra.mxu0 %v6112
        %v7518 = vpop.f32.mrf.mxu0
        %v7519 = vadd.f32 0.0, %v7518
        %v7520 = vpop.f32.mrf.mxu0
        %7521 = vmatprep.mubr.f32.mxu0 %v6115
        %7522 = vmatmul.mubr.f32.gmra.mxu0 %v6114
        %v7523 = vpop.f32.mrf.mxu0
        %v7524 = vadd.f32 0.0, %v7523
        %v7525 = vpop.f32.mrf.mxu0
        %7526 = vmatprep.mubr.f32.mxu0 %v6117
        %7527 = vmatmul.mubr.f32.gmra.mxu0 %v6116
        %v7528 = vpop.f32.mrf.mxu0
        %v7529 = vadd.f32 0.0, %v7528
        %v7530 = vpop.f32.mrf.mxu0
        %7531 = vmatprep.mubr.f32.mxu0 %v6119
        %7532 = vmatmul.mubr.f32.gmra.mxu0 %v6118
        %v7533 = vpop.f32.mrf.mxu0
        %v7534 = vadd.f32 0.0, %v7533
        %v7535 = vpop.f32.mrf.mxu0
        %7536 = vmatprep.mubr.f32.mxu0 %v6121
        %7537 = vmatmul.mubr.f32.gmra.mxu0 %v6120
        %v7538 = vpop.f32.mrf.mxu0
        %v7539 = vadd.f32 0.0, %v7538
        %v7540 = vpop.f32.mrf.mxu0
        %7541 = vmatprep.mubr.f32.mxu0 %v6123
        %7542 = vmatmul.mubr.f32.gmra.mxu0 %v6122
        %v7543 = vpop.f32.mrf.mxu0
        %v7544 = vadd.f32 0.0, %v7543
        %v7545 = vpop.f32.mrf.mxu0
        %7546 = vmatprep.mubr.f32.mxu0 %v6125
        %7547 = vmatmul.mubr.f32.gmra.mxu0 %v6124
        %v7548 = vpop.f32.mrf.mxu0
        %v7549 = vadd.f32 0.0, %v7548
        %v7550 = vpop.f32.mrf.mxu0
        %7551 = vmatprep.mubr.f32.mxu0 %v6127
        %7552 = vmatmul.mubr.f32.gmra.mxu0 %v6126
        %v7553 = vpop.f32.mrf.mxu0
        %v7554 = vadd.f32 0.0, %v7553
        %v7555 = vpop.f32.mrf.mxu0
        %7556 = vmatprep.mubr.f32.mxu0 %v6129
        %7557 = vmatmul.mubr.f32.gmra.mxu0 %v6128
        %v7558 = vpop.f32.mrf.mxu0
        %v7559 = vadd.f32 0.0, %v7558
        %v7560 = vpop.f32.mrf.mxu0
        %7561 = vmatprep.mubr.f32.mxu0 %v6131
        %7562 = vmatmul.mubr.f32.gmra.mxu0 %v6130
        %v7563 = vpop.f32.mrf.mxu0
        %v7564 = vadd.f32 0.0, %v7563
        %v7565 = vpop.f32.mrf.mxu0
        %7566 = vmatprep.mubr.f32.mxu0 %v6133
        %7567 = vmatmul.mubr.f32.gmra.mxu0 %v6132
        %v7568 = vpop.f32.mrf.mxu0
        %v7569 = vadd.f32 0.0, %v7568
        %v7570 = vpop.f32.mrf.mxu0
        %7571 = vmatprep.mubr.f32.mxu0 %v6135
        %7572 = vmatmul.mubr.f32.gmra.mxu0 %v6134
        %v7573 = vpop.f32.mrf.mxu0
        %v7574 = vadd.f32 0.0, %v7573
        %v7575 = vpop.f32.mrf.mxu0
        %7576 = vmatprep.mubr.f32.mxu0 %v6137
        %7577 = vmatmul.mubr.f32.gmra.mxu0 %v6136
        %v7578 = vpop.f32.mrf.mxu0
        %v7579 = vadd.f32 0.0, %v7578
        %v7580 = vpop.f32.mrf.mxu0
        %7581 = vmatprep.mubr.f32.mxu0 %v6139
        %7582 = vmatmul.mubr.f32.gmra.mxu0 %v6138
        %v7583 = vpop.f32.mrf.mxu0
        %v7584 = vadd.f32 0.0, %v7583
        %v7585 = vpop.f32.mrf.mxu0
        %7586 = vmatprep.mubr.f32.mxu0 %v6141
        %7587 = vmatmul.mubr.f32.gmra.mxu0 %v6140
        %v7588 = vpop.f32.mrf.mxu0
        %v7589 = vadd.f32 0.0, %v7588
        %v7590 = vpop.f32.mrf.mxu0
        %7591 = vmatprep.mubr.f32.mxu0 %v6143
        %7592 = vmatmul.mubr.f32.gmra.mxu0 %v6142
        %v7593 = vpop.f32.mrf.mxu0
        %v7594 = vadd.f32 0.0, %v7593
        %v7595 = vpop.f32.mrf.mxu0
        %7596 = vmatprep.mubr.f32.mxu0 %v6145
        %7597 = vmatmul.mubr.f32.gmra.mxu0 %v6144
        %v7598 = vpop.f32.mrf.mxu0
        %v7599 = vadd.f32 0.0, %v7598
        %v7600 = vpop.f32.mrf.mxu0
        %7601 = vmatprep.mubr.f32.mxu0 %v6147
        %7602 = vmatmul.mubr.f32.gmra.mxu0 %v6146
        %v7603 = vpop.f32.mrf.mxu0
        %v7604 = vadd.f32 0.0, %v7603
        %v7605 = vpop.f32.mrf.mxu0
        %7606 = vmatprep.mubr.f32.mxu0 %v6149
        %7607 = vmatmul.mubr.f32.gmra.mxu0 %v6148
        %v7608 = vpop.f32.mrf.mxu0
        %v7609 = vadd.f32 0.0, %v7608
        %v7610 = vpop.f32.mrf.mxu0
        %7611 = vmatprep.mubr.f32.mxu0 %v6151
        %7612 = vmatmul.mubr.f32.gmra.mxu0 %v6150
        %v7613 = vpop.f32.mrf.mxu0
        %v7614 = vadd.f32 0.0, %v7613
        %v7615 = vpop.f32.mrf.mxu0
        %7616 = vmatprep.mubr.f32.mxu0 %v6153
        %7617 = vmatmul.mubr.f32.gmra.mxu0 %v6152
        %v7618 = vpop.f32.mrf.mxu0
        %v7619 = vadd.f32 0.0, %v7618
        %v7620 = vpop.f32.mrf.mxu0
        %7621 = vmatprep.mubr.f32.mxu0 %v6155
        %7622 = vmatmul.mubr.f32.gmra.mxu0 %v6154
        %v7623 = vpop.f32.mrf.mxu0
        %v7624 = vadd.f32 0.0, %v7623
        %v7625 = vpop.f32.mrf.mxu0
        %7626 = vmatprep.mubr.f32.mxu0 %v6093
        %7627 = vmatmul.mubr.f32.gmra.mxu0 %v6092
        %v7628 = vpop.f32.mrf.mxu0
        %v7629 = vadd.f32 0.0, %v7628
        %v7630 = vpop.f32.mrf.mxu0
        %7631 = vmatprep.mubr.f32.mxu0 %v6095
        %7632 = vmatmul.mubr.f32.gmra.mxu0 %v6094
        %v7633 = vpop.f32.mrf.mxu0
        %v7634 = vadd.f32 0.0, %v7633
        %v7635 = vpop.f32.mrf.mxu0
        %7636 = vdwg.mxu0
        %v7637 = vadd.f32 %v7347, %v7479
        %v7638 = vadd.f32 %v7348, %v7484
        %v7639 = vadd.f32 %v7349, %v7489
        %v7640 = vadd.f32 %v7350, %v7494
        %v7641 = vadd.f32 %v7351, %v7499
        %v7642 = vadd.f32 %v7352, %v7504
        %v7643 = vadd.f32 %v7353, %v7509
        %v7644 = vadd.f32 %v7354, %v7514
        %v7645 = vadd.f32 %v7355, %v7519
        %v7646 = vadd.f32 %v7356, %v7524
        %v7647 = vadd.f32 %v7357, %v7529
        %v7648 = vadd.f32 %v7358, %v7534
        %v7649 = vadd.f32 %v7359, %v7539
        %v7650 = vadd.f32 %v7360, %v7544
        %v7651 = vadd.f32 %v7361, %v7549
        %v7652 = vadd.f32 %v7362, %v7554
        %v7653 = vadd.f32 %v7363, %v7559
        %v7654 = vadd.f32 %v7364, %v7564
        %v7655 = vadd.f32 %v7365, %v7569
        %v7656 = vadd.f32 %v7366, %v7574
        %v7657 = vadd.f32 %v7367, %v7579
        %v7658 = vadd.f32 %v7368, %v7584
        %v7659 = vadd.f32 %v7369, %v7589
        %v7660 = vadd.f32 %v7370, %v7594
        %v7661 = vadd.f32 %v7371, %v7599
        %v7662 = vadd.f32 %v7372, %v7604
        %v7663 = vadd.f32 %v7373, %v7609
        %v7664 = vadd.f32 %v7374, %v7614
        %v7665 = vadd.f32 %v7375, %v7619
        %v7666 = vadd.f32 %v7376, %v7624
        %v7667 = vadd.f32 %v7377, %v7629
        %v7668 = vadd.f32 %v7378, %v7634
        %v7669 = vld [vmem:[%s7] sm:$0xff]
        %v7670 = vld [vmem:[%s7 + $0x8] sm:$0xff]
        %v7671 = vld [vmem:[%s6] sm:$0x1]
        %v7673 = vlaneseq
        %v7674 = vshrl.u32 %v7673, 7
        %v7675 = vsub.s32 0, %v7674
        %v7676 = vrot.slane %v7671, %v7675
        %7678 = vmatprep.subr.mxu0 0.0
        %7679 = vmatpush1.msra.mxu0 %v7652
        %7680 = vmatprep.subr.mxu0 0.0
        %7681 = vmatpush1.msra.mxu0 %v7651
        %7682 = vmatprep.subr.mxu0 0.0
        %7683 = vmatpush1.msra.mxu0 %v7650
        %7684 = vmatprep.subr.mxu0 0.0
        %7685 = vmatpush1.msra.mxu0 %v7649
        %7686 = vmatprep.subr.mxu0 0.0
        %7687 = vmatpush1.msra.mxu0 %v7648
        %7688 = vmatprep.subr.mxu0 0.0
        %7689 = vmatpush1.msra.mxu0 %v7647
        %7690 = vmatprep.subr.mxu0 0.0
        %7691 = vmatpush1.msra.mxu0 %v7646
        %7692 = vmatprep.subr.mxu0 0.0
        %7693 = vmatpush1.msra.mxu0 %v7645
        %7694 = vmatprep.subr.mxu0 0.0
        %7695 = vmatpush1.msra.mxu0 %v7644
        %7696 = vmatprep.subr.mxu0 0.0
        %7697 = vmatpush1.msra.mxu0 %v7643
        %7698 = vmatprep.subr.mxu0 0.0
        %7699 = vmatpush1.msra.mxu0 %v7642
        %7700 = vmatprep.subr.mxu0 0.0
        %7701 = vmatpush1.msra.mxu0 %v7641
        %7702 = vmatprep.subr.mxu0 0.0
        %7703 = vmatpush1.msra.mxu0 %v7640
        %7704 = vmatprep.subr.mxu0 0.0
        %7705 = vmatpush1.msra.mxu0 %v7639
        %7706 = vmatprep.subr.mxu0 0.0
        %7707 = vmatpush1.msra.mxu0 %v7638
        %7708 = vmatprep.subr.mxu0 0.0
        %7709 = vmatpush1.msra.mxu0 %v7637
        %7710 = vmatprep.subr.mxu0 0.0
        %7711 = vmatpush2.msra.mxu0 %v7668
        %7712 = vmatprep.subr.mxu0 0.0
        %7713 = vmatpush2.msra.mxu0 %v7667
        %7714 = vmatprep.subr.mxu0 0.0
        %7715 = vmatpush2.msra.mxu0 %v7666
        %7716 = vmatprep.subr.mxu0 0.0
        %7717 = vmatpush2.msra.mxu0 %v7665
        %7718 = vmatprep.subr.mxu0 0.0
        %7719 = vmatpush2.msra.mxu0 %v7664
        %7720 = vmatprep.subr.mxu0 0.0
        %7721 = vmatpush2.msra.mxu0 %v7663
        %7722 = vmatprep.subr.mxu0 0.0
        %7723 = vmatpush2.msra.mxu0 %v7662
        %7724 = vmatprep.subr.mxu0 0.0
        %7725 = vmatpush2.msra.mxu0 %v7661
        %7726 = vmatprep.subr.mxu0 0.0
        %7727 = vmatpush2.msra.mxu0 %v7660
        %7728 = vmatprep.subr.mxu0 0.0
        %7729 = vmatpush2.msra.mxu0 %v7659
        %7730 = vmatprep.subr.mxu0 0.0
        %7731 = vmatpush2.msra.mxu0 %v7658
        %7732 = vmatprep.subr.mxu0 0.0
        %7733 = vmatpush2.msra.mxu0 %v7657
        %7734 = vmatprep.subr.mxu0 0.0
        %7735 = vmatpush2.msra.mxu0 %v7656
        %7736 = vmatprep.subr.mxu0 0.0
        %7737 = vmatpush2.msra.mxu0 %v7655
        %7738 = vmatprep.subr.mxu0 0.0
        %7739 = vmatpush2.msra.mxu0 %v7654
        %7740 = vmatprep.subr.mxu0 0.0
        %7741 = vmatpush2.msra.mxu0 %v7653
        %7742 = vmatprep.mubr.f32.mxu0 %v7670
        %7743 = vmatmul.mubr.f32.gmra.mxu0 %v7669
        %v7744 = vpop.f32.mrf.mxu0
        %v7745 = vadd.f32 %v7676, %v7744
        %v7746 = vpop.f32.mrf.mxu0
        %7747 = vdwg.mxu0
        %v7748 = vmax.f32 %v7745, 0.0
        %v7749 = vld [vmem:[%s8] sm:$0xff]
        %v7750 = vld [vmem:[%s8 + $0x8] sm:$0xff]
        %v7751 = vld [vmem:[%s8 + $0x10] sm:$0xff]
        %v7752 = vld [vmem:[%s8 + $0x18] sm:$0xff]
        %v7753 = vld [vmem:[%s8 + $0x20] sm:$0xff]
        %v7754 = vld [vmem:[%s8 + $0x28] sm:$0xff]
        %v7755 = vld [vmem:[%s8 + $0x30] sm:$0xff]
        %v7756 = vld [vmem:[%s8 + $0x38] sm:$0xff]
        %v7757 = vld [vmem:[%s8 + $0x40] sm:$0xff]
        %v7758 = vld [vmem:[%s8 + $0x48] sm:$0xff]
        %v7759 = vld [vmem:[%s8 + $0x50] sm:$0xff]
        %v7760 = vld [vmem:[%s8 + $0x58] sm:$0xff]
        %v7761 = vld [vmem:[%s8 + $0x60] sm:$0xff]
        %v7762 = vld [vmem:[%s8 + $0x68] sm:$0xff]
        %v7763 = vld [vmem:[%s8 + $0x70] sm:$0xff]
        %v7764 = vld [vmem:[%s9] sm:$0x1]
        %v7766 = vlaneseq
        %v7767 = vshrl.u32 %v7766, 7
        %v7768 = vsub.s32 0, %v7767
        %v7769 = vrot.slane %v7764, %v7768
        %vm7771 = vcmask 982016
        %v7773 = vsel %vm7771, %v7748, 0
        %7775 = vmatprep.subr.mxu0 0.0
        %7776 = vmatpush1.msra.mxu0 0.0
        %7777 = vmatprep.subr.mxu0 0.0
        %7778 = vmatpush1.msra.mxu0 %v7763
        %7779 = vmatprep.subr.mxu0 0.0
        %7780 = vmatpush1.msra.mxu0 %v7762
        %7781 = vmatprep.subr.mxu0 0.0
        %7782 = vmatpush1.msra.mxu0 %v7761
        %7783 = vmatprep.subr.mxu0 0.0
        %7784 = vmatpush1.msra.mxu0 %v7760
        %7785 = vmatprep.subr.mxu0 0.0
        %7786 = vmatpush1.msra.mxu0 %v7759
        %7787 = vmatprep.subr.mxu0 0.0
        %7788 = vmatpush1.msra.mxu0 %v7758
        %7789 = vmatprep.subr.mxu0 0.0
        %7790 = vmatpush1.msra.mxu0 %v7757
        %7791 = vmatprep.subr.mxu0 0.0
        %7792 = vmatpush1.msra.mxu0 %v7756
        %7793 = vmatprep.subr.mxu0 0.0
        %7794 = vmatpush1.msra.mxu0 %v7755
        %7795 = vmatprep.subr.mxu0 0.0
        %7796 = vmatpush1.msra.mxu0 %v7754
        %7797 = vmatprep.subr.mxu0 0.0
        %7798 = vmatpush1.msra.mxu0 %v7753
        %7799 = vmatprep.subr.mxu0 0.0
        %7800 = vmatpush1.msra.mxu0 %v7752
        %7801 = vmatprep.subr.mxu0 0.0
        %7802 = vmatpush1.msra.mxu0 %v7751
        %7803 = vmatprep.subr.mxu0 0.0
        %7804 = vmatpush1.msra.mxu0 %v7750
        %7805 = vmatprep.subr.mxu0 0.0
        %7806 = vmatpush1.msra.mxu0 %v7749
        %7807 = vmatprep.subr.mxu0 0.0
        %7808 = vmatpush2.msra.mxu0 0.0
        %7809 = vmatprep.subr.mxu0 0.0
        %7810 = vmatpush2.msra.mxu0 0.0
        %7811 = vmatprep.subr.mxu0 0.0
        %7812 = vmatpush2.msra.mxu0 0.0
        %7813 = vmatprep.subr.mxu0 0.0
        %7814 = vmatpush2.msra.mxu0 0.0
        %7815 = vmatprep.subr.mxu0 0.0
        %7816 = vmatpush2.msra.mxu0 0.0
        %7817 = vmatprep.subr.mxu0 0.0
        %7818 = vmatpush2.msra.mxu0 0.0
        %7819 = vmatprep.subr.mxu0 0.0
        %7820 = vmatpush2.msra.mxu0 0.0
        %7821 = vmatprep.subr.mxu0 0.0
        %7822 = vmatpush2.msra.mxu0 0.0
        %7823 = vmatprep.subr.mxu0 0.0
        %7824 = vmatpush2.msra.mxu0 0.0
        %7825 = vmatprep.subr.mxu0 0.0
        %7826 = vmatpush2.msra.mxu0 0.0
        %7827 = vmatprep.subr.mxu0 0.0
        %7828 = vmatpush2.msra.mxu0 0.0
        %7829 = vmatprep.subr.mxu0 0.0
        %7830 = vmatpush2.msra.mxu0 0.0
        %7831 = vmatprep.subr.mxu0 0.0
        %7832 = vmatpush2.msra.mxu0 0.0
        %7833 = vmatprep.subr.mxu0 0.0
        %7834 = vmatpush2.msra.mxu0 0.0
        %7835 = vmatprep.subr.mxu0 0.0
        %7836 = vmatpush2.msra.mxu0 0.0
        %7837 = vmatprep.subr.mxu0 0.0
        %7838 = vmatpush2.msra.mxu0 0.0
        %7839 = vmatprep.mubr.f32.mxu0 0.0
        %7840 = vmatmul.mubr.f32.gmra.mxu0 %v7773
        %v7841 = vpop.f32.mrf.mxu0
        %v7842 = vadd.f32 %v7769, %v7841
        %v7843 = vpop.f32.mrf.mxu0
        %7844 = vdwg.mxu0
        %v7845 = vmax.f32 %v7842, 0.0
        %v7846 = vld [vmem:[%s10] sm:$0xff]
        %v7847 = vld [vmem:[%s10 + $0x8] sm:$0xff]
        %v7848 = vld [vmem:[%s10 + $0x10] sm:$0xff]
        %v7849 = vld [vmem:[%s10 + $0x18] sm:$0xff]
        %v7850 = vld [vmem:[%s10 + $0x20] sm:$0xff]
        %v7851 = vld [vmem:[%s10 + $0x28] sm:$0xff]
        %v7852 = vld [vmem:[%s10 + $0x30] sm:$0xff]
        %v7853 = vld [vmem:[%s10 + $0x38] sm:$0xff]
        %v7854 = vld [vmem:[%s10 + $0x40] sm:$0xff]
        %v7855 = vld [vmem:[%s10 + $0x48] sm:$0xff]
        %v7856 = vld [vmem:[%s10 + $0x50] sm:$0xf]
        %v7857 = vld [vmem:[%s11] sm:$0x1]
        %v7859 = vlaneseq
        %v7860 = vshrl.u32 %v7859, 7
        %v7861 = vsub.s32 0, %v7860
        %v7862 = vrot.slane %v7857, %v7861
        %vm7864 = vcmask 687104
        %v7866 = vsel %vm7864, %v7845, 0
        %vm7868 = vcmask 1043456
        %v7870 = vsel %vm7868, %v7856, 0
        %7872 = vmatprep.subr.mxu0 0.0
        %7873 = vmatpush1.msra.mxu0 0.0
        %7874 = vmatprep.subr.mxu0 0.0
        %7875 = vmatpush1.msra.mxu0 0.0
        %7876 = vmatprep.subr.mxu0 0.0
        %7877 = vmatpush1.msra.mxu0 0.0
        %7878 = vmatprep.subr.mxu0 0.0
        %7879 = vmatpush1.msra.mxu0 0.0
        %7880 = vmatprep.subr.mxu0 0.0
        %7881 = vmatpush1.msra.mxu0 0.0
        %7882 = vmatprep.subr.mxu0 0.0
        %7883 = vmatpush1.msra.mxu0 %v7870
        %7884 = vmatprep.subr.mxu0 0.0
        %7885 = vmatpush1.msra.mxu0 %v7855
        %7886 = vmatprep.subr.mxu0 0.0
        %7887 = vmatpush1.msra.mxu0 %v7854
        %7888 = vmatprep.subr.mxu0 0.0
        %7889 = vmatpush1.msra.mxu0 %v7853
        %7890 = vmatprep.subr.mxu0 0.0
        %7891 = vmatpush1.msra.mxu0 %v7852
        %7892 = vmatprep.subr.mxu0 0.0
        %7893 = vmatpush1.msra.mxu0 %v7851
        %7894 = vmatprep.subr.mxu0 0.0
        %7895 = vmatpush1.msra.mxu0 %v7850
        %7896 = vmatprep.subr.mxu0 0.0
        %7897 = vmatpush1.msra.mxu0 %v7849
        %7898 = vmatprep.subr.mxu0 0.0
        %7899 = vmatpush1.msra.mxu0 %v7848
        %7900 = vmatprep.subr.mxu0 0.0
        %7901 = vmatpush1.msra.mxu0 %v7847
        %7902 = vmatprep.subr.mxu0 0.0
        %7903 = vmatpush1.msra.mxu0 %v7846
        %7904 = vmatprep.subr.mxu0 0.0
        %7905 = vmatpush2.msra.mxu0 0.0
        %7906 = vmatprep.subr.mxu0 0.0
        %7907 = vmatpush2.msra.mxu0 0.0
        %7908 = vmatprep.subr.mxu0 0.0
        %7909 = vmatpush2.msra.mxu0 0.0
        %7910 = vmatprep.subr.mxu0 0.0
        %7911 = vmatpush2.msra.mxu0 0.0
        %7912 = vmatprep.subr.mxu0 0.0
        %7913 = vmatpush2.msra.mxu0 0.0
        %7914 = vmatprep.subr.mxu0 0.0
        %7915 = vmatpush2.msra.mxu0 0.0
        %7916 = vmatprep.subr.mxu0 0.0
        %7917 = vmatpush2.msra.mxu0 0.0
        %7918 = vmatprep.subr.mxu0 0.0
        %7919 = vmatpush2.msra.mxu0 0.0
        %7920 = vmatprep.subr.mxu0 0.0
        %7921 = vmatpush2.msra.mxu0 0.0
        %7922 = vmatprep.subr.mxu0 0.0
        %7923 = vmatpush2.msra.mxu0 0.0
        %7924 = vmatprep.subr.mxu0 0.0
        %7925 = vmatpush2.msra.mxu0 0.0
        %7926 = vmatprep.subr.mxu0 0.0
        %7927 = vmatpush2.msra.mxu0 0.0
        %7928 = vmatprep.subr.mxu0 0.0
        %7929 = vmatpush2.msra.mxu0 0.0
        %7930 = vmatprep.subr.mxu0 0.0
        %7931 = vmatpush2.msra.mxu0 0.0
        %7932 = vmatprep.subr.mxu0 0.0
        %7933 = vmatpush2.msra.mxu0 0.0
        %7934 = vmatprep.subr.mxu0 0.0
        %7935 = vmatpush2.msra.mxu0 0.0
        %7936 = vmatprep.mubr.f32.mxu0 0.0
        %7937 = vmatmul.mubr.f32.gmra.mxu0 %v7866
        %v7938 = vpop.f32.mrf.mxu0
        %v7939 = vadd.f32 %v7862, %v7938
        %v7940 = vpop.f32.mrf.mxu0
        %7941 = vdwg.mxu0
        %7942 = vst [vmem:[%s407] sm:$0xff] %v7939
        %s7943 = sand.u32 %s291, 1
        %s7944 = scalar_lea.sflag [#allocation3], %s7943
        %s7945 = sand.u32 %s291, 1
        %s7946 = smul.addr %s7945, 8
        %s7947 = scalar_lea.vmem [#allocation2], %s7946
        // Predicated region
        $region69: #{lenet_forward.1} parent=67 // pred_check
          %p7948 = pneg %p301
        $region70: #{lenet_forward.1} parent=67 // pred_check_branch
          %7950 = sbr.rel (%p7948) target = $region72
        $region71: #{lenet_forward.1} parent=67 // pred_region
          %s7952 = ssub.s32 128, 128
          %7953 = vsyncadd %s7944, %s7952
          %s7954 = smul.addr %s26, 128
          %s7955 = scalar_lea.hbm %s12, %s7954
          %s7957 = sshll.u32 %s7947, 4
          %s7958 = int_to_ptr.vmem [resolvable:$true] %s7957
          %7960 = dma.vmem_to_hbm [thread:$0]  %s7958, 128, %s7955, %s7944
        $region72: #{lenet_forward.1} parent=67 // pred_fallthru
          _
      $region68: #{lenet_forward.1} parent=5 // pred_fallthru
        _
      %p7961 = scmp.le.s32.totalorder 2, %s21
      // Predicated region
      $region73: #{lenet_forward.1} parent=5 // pred_check
        %p7962 = pneg %p7961
      $region74: #{lenet_forward.1} parent=5 // pred_check_branch
        %7964 = sbr.rel (%p7962) target = $region76
      $region75: #{lenet_forward.1} parent=5 // pred_region
        %s7965 = ssub.s32 %s21, 2
        // Predicated region
        $region77: #{lenet_forward.1} parent=75 // pred_check
          %p7966 = pneg %p307
        $region78: #{lenet_forward.1} parent=75 // pred_check_branch
          %7968 = sbr.rel (%p7966) target = $region80
        $region79: #{lenet_forward.1} parent=75 // pred_region
          %s7969 = sand.u32 %s292, 1
          %s7970 = scalar_lea.sflag [#allocation3], %s7969
          %s7971 = sand.u32 %s292, 1
          %s7972 = smul.addr %s7971, 8
          %s7973 = scalar_lea.vmem [#allocation2], %s7972
          %7974 = dma.done %s7970, 128
        $region80: #{lenet_forward.1} parent=75 // pred_fallthru
          _
      $region76: #{lenet_forward.1} parent=5 // pred_fallthru
        _
    $region6: #{lenet_forward.1} parent=1 // loop_footer
      %s25 = sadd.s32 1, %s21
    $region7: #{lenet_forward.1} parent=1 // loop_footer_branch
      %20 = sbr.rel target = $region3
    $region8: #{lenet_forward.1} parent=1 // loop_exit
      _
    %7975 = vsyncpa [#allocation3], 1
    %s7976 = scalar_lea.sflag [#allocation3], 1
    %7977 = vsyncpa %s7976, 1

</llo_original>
